<compile_context>
chip_gen: v6e
topology: v6e:2x2x1
jax: 0.10.0
libtpu: 0.0.40
codegen_flags: <defaults>
</compile_context>

<pallas_src>
import functools

import jax
import jax.numpy as jnp
import numpy as np
from jax.experimental import pallas as pl
from jax.experimental.pallas import tpu as pltpu

EPS = 1e-5  # torch.nn.GroupNorm default eps


# --------------------------------- kernel -----------------------------------


def _upsample_block_kernel(dims, upsample, *refs):
    H, W, CP = dims
    if upsample:
        (x_ref, pe_ref,
         w13_ref, g1_ref, be1_ref, g3_ref, be3_ref,
         w2_ref, g2_ref, be2_ref,
         o_ref, xcol_ref) = refs
    else:
        (x_ref, pe_ref,
         w1_ref, g1_ref, be1_ref,
         w2_ref, g2_ref, be2_ref,
         o_ref, xcol_ref) = refs

    # Zero ONLY the never-written borders of the persistent bf16 im2col
    # scratch, once per grid step (scratch contents persist across steps).
    zrow = jnp.zeros((1, W, 3 * CP), jnp.bfloat16)
    xcol_ref[0:1, :, :] = zrow                       # top halo row
    xcol_ref[H + 1:H + 2, :, :] = zrow               # bottom halo row
    zcol = jnp.zeros((H, 1, CP), jnp.bfloat16)
    xcol_ref[1:H + 1, 0:1, 0:CP] = zcol              # w=0 col of kw=-1 block
    xcol_ref[1:H + 1, W - 1:W, 2 * CP:3 * CP] = zcol  # w=W-1 col of kw=+1 block

    def build_im2col(v):
        """xcol[r, w, kw*CP + ci] = v[r-1, w+kw-1, ci] (zero outside), bf16."""
        v_bf = v.astype(jnp.bfloat16)                 # one cast per conv input
        xcol_ref[1:H + 1, :, CP:2 * CP] = v_bf                        # kw =  0
        xcol_ref[1:H + 1, 1:W, 0:CP] = v_bf[:, 0:W - 1, :]            # kw = -1
        xcol_ref[1:H + 1, 0:W - 1, 2 * CP:3 * CP] = v_bf[:, 1:W, :]   # kw = +1
        # TODO(synk): replace the two W-shifted stores with pltpu.roll along
        # axis=1 + full-width aligned stores (moves the sublane shift onto the
        # otherwise-idle XLU) once the roll direction is validated on the
        # target jax build.

    def conv_taps(w_ref):
        """3x3 'same' conv against the current im2col: 3 wide-K MXU matmuls.

        Bias is intentionally omitted: the following per-channel GroupNorm
        subtracts the mean over H*W, which exactly cancels it.
        """
        acc = jnp.dot(xcol_ref[0:H, :, :].reshape(H * W, 3 * CP), w_ref[0],
                      preferred_element_type=jnp.float32)
        for kh in (1, 2):
            acc = acc + jnp.dot(
                xcol_ref[kh:kh + H, :, :].reshape(H * W, 3 * CP), w_ref[kh],
                preferred_element_type=jnp.float32)
        return acc                                    # (H*W, n_out) f32

    inv_n = 1.0 / (H * W)

    def group_norm(y, g_row, be_row):
        # GroupNorm with num_groups == num_channels: per-channel stats over
        # H*W, single pass (sum + sum-of-squares), clamped variance.
        mean = jnp.sum(y, axis=0, keepdims=True) * inv_n
        var = jnp.sum(y * y, axis=0, keepdims=True) * inv_n - mean * mean
        var = jnp.maximum(var, 0.0)                   # f32 cancellation guard
        return (y - mean) * jax.lax.rsqrt(var + EPS) * g_row + be_row

    # x_ref block: (1, H, W, CP) for one batch element.  pe is constant over
    # (H, W), so it is a per-channel row added once here.
    x = x_ref[0].astype(jnp.float32) + pe_ref[...][None]           # (H, W, CP)

    # One im2col of x feeds BOTH the block conv1 and the upsample-branch conv3
    # (their output channels are fused into one (3*CP, 2*CP) RHS).
    build_im2col(x)
    if upsample:
        acc13 = conv_taps(w13_ref)                                  # (H*W, 2CP)
        h1 = group_norm(acc13[:, 0:CP], g1_ref[...], be1_ref[...])
        res = group_norm(acc13[:, CP:2 * CP], g3_ref[...], be3_ref[...])
    else:
        h1 = group_norm(conv_taps(w1_ref), g1_ref[...], be1_ref[...])
        res = x.reshape(H * W, CP)        # module guarantees Cin == Cout here
    h1 = jnp.maximum(h1, 0.0)

    # Reuse the scratch: h1's im2col overwrites every non-border region.
    build_im2col(h1.reshape(H, W, CP))
    blk = group_norm(conv_taps(w2_ref), g2_ref[...], be2_ref[...])

    o_ref[0] = jnp.maximum(res + blk, 0.0).reshape(H, W, CP).astype(o_ref.dtype)


# --------------------------------- glue -------------------------------------


def time_encoding_vec(dim, t):
    """time_encoding2d reduces to a per-channel vector (constant over H, W)."""
    half = dim // 2
    denom = jnp.power(10000.0, 2.0 * jnp.arange(half, dtype=jnp.float32) / dim)
    pe = jnp.zeros((dim,), jnp.float32)
    pe = pe.at[0::2].set(jnp.sin(t) / denom)
    pe = pe.at[1::2].set(jnp.cos(t) / denom)
    return pe


def ct_to_conv_hwio(w_ct):
    """ConvTranspose2d weight (Ci, Co, 3, 3) -> equivalent 'same' conv HWIO."""
    return jnp.transpose(w_ct[:, :, ::-1, ::-1], (2, 3, 0, 1))   # (3, 3, Ci, Co)


def _pack_taps(w_hwio, cp):
    """(3, 3, Ci, Co) -> (3, 3*cp, cp) bf16; K-row index = kw*cp + ci."""
    ci, co = w_hwio.shape[2], w_hwio.shape[3]
    w = jnp.pad(w_hwio, ((0, 0), (0, 0), (0, cp - ci), (0, cp - co)))
    return w.reshape(3, 3 * cp, cp).astype(jnp.bfloat16)


def _pad_row(v, cp):
    """(C,) -> (1, cp) f32 (lane-dense parameter row)."""
    return jnp.pad(v.astype(jnp.float32), (0, cp - v.shape[0]))[None, :]


def _vmem_limit_bytes(H, W, CP, upsample):
    img = H * W * CP * 4                                   # one f32 image block
    est = 2 * 2 * img                                      # in/out, 2 buffers
    est += (H + 2) * W * 3 * CP * 2                        # bf16 im2col scratch
    est += 3 * (3 * CP) * ((2 * CP) if upsample else CP) * 2 * 2   # w13 / w1
    est += 3 * (3 * CP) * CP * 2 * 2                       # w2
    est += 8 * img                                         # live f32 values
    est = int(est * 1.5) + (4 << 20)
    return max(32 << 20, min(est, 64 << 20))


def upsample_block_forward(x_nchw, t, params):
    """Mirrors UpsampleBlock.forward (idx=None). `params` holds the raw
    ConvTranspose2d weights (Ci, Co, 3, 3), biases and GroupNorm gamma/beta.
    Conv biases are accepted but unused by the kernel (GroupNorm cancels them).
    """
    B, C, H, W = x_nchw.shape
    Cin, Cout = params["w1"].shape[0], params["w1"].shape[1]
    assert C == Cin
    upsample = Cin != Cout                 # same rule as the PyTorch module

    # Lane-dense channel padding (multiple of 128).
    CP = ((max(Cin, Cout) + 127) // 128) * 128

    pe = _pad_row(time_encoding_vec(Cin, t), CP)                       # (1, CP)
    x_hwc = jnp.transpose(x_nchw, (0, 2, 3, 1)).astype(jnp.float32)    # NHWC
    x_hwc = jnp.pad(x_hwc, ((0, 0), (0, 0), (0, 0), (0, CP - Cin)))

    g1, be1 = _pad_row(params["g1"], CP), _pad_row(params["be1"], CP)
    g2, be2 = _pad_row(params["g2"], CP), _pad_row(params["be2"], CP)
    w1 = _pack_taps(ct_to_conv_hwio(params["w1"]), CP)
    w2 = _pack_taps(ct_to_conv_hwio(params["w2"]), CP)

    if upsample:
        w3 = _pack_taps(ct_to_conv_hwio(params["w3"]), CP)
        w13 = jnp.concatenate([w1, w3], axis=-1)          # (3, 3*CP, 2*CP)
        g3, be3 = _pad_row(params["g3"], CP), _pad_row(params["be3"], CP)
        ins = [x_hwc, pe, w13, g1, be1, g3, be3, w2, g2, be2]
    else:
        ins = [x_hwc, pe, w1, g1, be1, w2, g2, be2]

    def const_spec(a):
        nd = a.ndim
        return pl.BlockSpec(a.shape, lambda b, _nd=nd: (0,) * _nd)

    in_specs = ([pl.BlockSpec((1, H, W, CP), lambda b: (b, 0, 0, 0))]
                + [const_spec(a) for a in ins[1:]])
    out_spec = pl.BlockSpec((1, H, W, CP), lambda b: (b, 0, 0, 0))

    z_hwc = pl.pallas_call(
        functools.partial(_upsample_block_kernel, (H, W, CP), upsample),
        out_shape=jax.ShapeDtypeStruct((B, H, W, CP), jnp.float32),
        grid_spec=pltpu.PrefetchScalarGridSpec(
            num_scalar_prefetch=0, grid=(B,),
            in_specs=in_specs, out_specs=out_spec,
            scratch_shapes=[pltpu.VMEM((H + 2, W, 3 * CP), jnp.bfloat16)]),
        compiler_params=pltpu.CompilerParams(
            dimension_semantics=("parallel",),
            vmem_limit_bytes=_vmem_limit_bytes(H, W, CP, upsample)),
    )(*ins)

    z = jnp.transpose(z_hwc[..., :Cout], (0, 3, 1, 2))   # drop pad, back NCHW
    return z, t


# ------------------------------ pure-JAX reference ---------------------------


def reference_forward(x_nchw, t, params):
    Cin, Cout = params["w1"].shape[0], params["w1"].shape[1]
    upsample = Cin != Cout
    B, C, H, W = x_nchw.shape
    pe = time_encoding_vec(C, t)
    x = jnp.transpose(x_nchw, (0, 2, 3, 1)).astype(jnp.float32)
    x = x + pe[None, None, None, :]

    def q(a):  # kernel feeds the MXU bf16 operands (f32 accumulation)
        return a.astype(jnp.bfloat16).astype(jnp.float32)

    def conv(xa, w_ct, b):
        w = ct_to_conv_hwio(w_ct)                       # (3, 3, Ci, Co) HWIO
        y = jax.lax.conv_general_dilated(
            q(xa), q(w), window_strides=(1, 1), padding=((1, 1), (1, 1)),
            dimension_numbers=("NHWC", "HWIO", "NHWC"))
        return y + b                                    # bias kept (module spec)

    def gn(y, g, bt):
        mean = y.mean(axis=(1, 2), keepdims=True)
        var = ((y - mean) ** 2).mean(axis=(1, 2), keepdims=True)
        return (y - mean) * jax.lax.rsqrt(var + EPS) * g + bt

    h1 = jax.nn.relu(gn(conv(x, params["w1"], params["b1"]),
                        params["g1"], params["be1"]))
    blk = gn(conv(h1, params["w2"], params["b2"]), params["g2"], params["be2"])
    if upsample:
        res = gn(conv(x, params["w3"], params["b3"]),
                 params["g3"], params["be3"])
    else:
        res = x
    z = jax.nn.relu(res + blk)
    return jnp.transpose(z, (0, 3, 1, 2)), t


# ---------------------------------- main -------------------------------------

if __name__ == "__main__":
    key = jax.random.PRNGKey(0)
    keys = jax.random.split(key, 24)

    def make_params(ks, cin, cout, upsample):
        # ConvTranspose2d weight layout in PyTorch: (in_ch, out_ch, 3, 3)
        p = dict(
            w1=0.1 * jax.random.normal(ks[0], (cin, cout, 3, 3), jnp.float32),
            b1=0.1 * jax.random.normal(ks[1], (cout,), jnp.float32),
            g1=1.0 + 0.1 * jax.random.normal(ks[2], (cout,), jnp.float32),
            be1=0.1 * jax.random.normal(ks[3], (cout,), jnp.float32),
            w2=0.1 * jax.random.normal(ks[4], (cout, cout, 3, 3), jnp.float32),
            b2=0.1 * jax.random.normal(ks[5], (cout,), jnp.float32),
            g2=1.0 + 0.1 * jax.random.normal(ks[6], (cout,), jnp.float32),
            be2=0.1 * jax.random.normal(ks[7], (cout,), jnp.float32))
        if upsample:
            p.update(
                w3=0.1 * jax.random.normal(ks[8], (cin, cout, 3, 3), jnp.float32),
                b3=0.1 * jax.random.normal(ks[9], (cout,), jnp.float32),
                g3=1.0 + 0.1 * jax.random.normal(ks[10], (cout,), jnp.float32),
                be3=0.1 * jax.random.normal(ks[11], (cout,), jnp.float32))
        return p

    B, H, W = 2, 16, 16
    t = jnp.array(0.7, jnp.float32)  # scalar timestep (time_encoding2d usage)

    # in_channels=4 != out_channels=8 -> upsample path (as in the module).
    Cin, Cout = 4, 8
    x = jax.random.normal(keys[0], (B, Cin, H, W), jnp.float32)
    params = make_params(keys[1:13], Cin, Cout, upsample=True)
    z, _ = upsample_block_forward(x, t, params)
    jax.block_until_ready(z)
    z_ref, _ = reference_forward(x, t, params)
    np.testing.assert_allclose(np.asarray(z), np.asarray(z_ref),
                               atol=2e-2, rtol=2e-2)

    # in_channels == out_channels -> identity-residual path.
    C2 = 8
    x2 = jax.random.normal(keys[13], (B, C2, H, W), jnp.float32)
    params2 = make_params(keys[14:22], C2, C2, upsample=False)
    z2, _ = upsample_block_forward(x2, t, params2)
    jax.block_until_ready(z2)
    z2_ref, _ = reference_forward(x2, t, params2)
    np.testing.assert_allclose(np.asarray(z2), np.asarray(z2_ref),
                               atol=2e-2, rtol=2e-2)

    print("KERNEL_OK")
</pallas_src>

<mosaic_0001>
module attributes {stable_mosaic.version = 11 : i64} {
  func.func @_upsample_block_kernel(%arg0: i32, %arg1: memref<1x16x16x128xf32, #tpu.memory_space<vmem>>, %arg2: memref<1x128xf32, #tpu.memory_space<vmem>>, %arg3: memref<3x384x256xbf16, #tpu.memory_space<vmem>>, %arg4: memref<1x128xf32, #tpu.memory_space<vmem>>, %arg5: memref<1x128xf32, #tpu.memory_space<vmem>>, %arg6: memref<1x128xf32, #tpu.memory_space<vmem>>, %arg7: memref<1x128xf32, #tpu.memory_space<vmem>>, %arg8: memref<3x384x128xbf16, #tpu.memory_space<vmem>>, %arg9: memref<1x128xf32, #tpu.memory_space<vmem>>, %arg10: memref<1x128xf32, #tpu.memory_space<vmem>>, %arg11: memref<1x16x16x128xf32, #tpu.memory_space<vmem>>, %arg12: memref<18x16x384xbf16, #tpu.memory_space<vmem>>) attributes {dimension_semantics = [#tpu.dimension_semantics<parallel>], iteration_bounds = array<i64: 2>, scalar_prefetch = 0 : i64, scratch_operands = 1 : i64, tpu.core_type = #tpu.core_type<tc>, window_params = [{transform_indices = @transform_0, window_bounds = array<i64: 1, 16, 16, 128>}, {pipeline_mode = #tpu.pipeline_mode<synchronous>, transform_indices = @transform_1, window_bounds = array<i64: 1, 128>}, {pipeline_mode = #tpu.pipeline_mode<synchronous>, transform_indices = @transform_2, window_bounds = array<i64: 3, 384, 256>}, {pipeline_mode = #tpu.pipeline_mode<synchronous>, transform_indices = @transform_3, window_bounds = array<i64: 1, 128>}, {pipeline_mode = #tpu.pipeline_mode<synchronous>, transform_indices = @transform_4, window_bounds = array<i64: 1, 128>}, {pipeline_mode = #tpu.pipeline_mode<synchronous>, transform_indices = @transform_5, window_bounds = array<i64: 1, 128>}, {pipeline_mode = #tpu.pipeline_mode<synchronous>, transform_indices = @transform_6, window_bounds = array<i64: 1, 128>}, {pipeline_mode = #tpu.pipeline_mode<synchronous>, transform_indices = @transform_7, window_bounds = array<i64: 3, 384, 128>}, {pipeline_mode = #tpu.pipeline_mode<synchronous>, transform_indices = @transform_8, window_bounds = array<i64: 1, 128>}, {pipeline_mode = #tpu.pipeline_mode<synchronous>, transform_indices = @transform_9, window_bounds = array<i64: 1, 128>}, {transform_indices = @transform_10, window_bounds = array<i64: 1, 16, 16, 128>}]} {
    %cst = arith.constant 0.000000e+00 : bf16
    %0 = vector.broadcast %cst : bf16 to vector<1x16x384xbf16>
    %c0 = arith.constant 0 : index
    %c0_0 = arith.constant 0 : index
    %c0_1 = arith.constant 0 : index
    %1 = vector.load %arg12[%c0, %c0_0, %c0_1] : memref<18x16x384xbf16, #tpu.memory_space<vmem>>, vector<1x16x384xbf16>
    tpu.vector_store %arg12[%c0, %c0_0, %c0_1], %0 {strides = array<i32>} : memref<18x16x384xbf16, #tpu.memory_space<vmem>>, vector<1x16x384xbf16>,
    %c17 = arith.constant 17 : index
    %c0_2 = arith.constant 0 : index
    %c0_3 = arith.constant 0 : index
    %2 = vector.load %arg12[%c17, %c0_2, %c0_3] : memref<18x16x384xbf16, #tpu.memory_space<vmem>>, vector<1x16x384xbf16>
    tpu.vector_store %arg12[%c17, %c0_2, %c0_3], %0 {strides = array<i32>} : memref<18x16x384xbf16, #tpu.memory_space<vmem>>, vector<1x16x384xbf16>,
    %cst_4 = arith.constant 0.000000e+00 : bf16
    %3 = vector.broadcast %cst_4 : bf16 to vector<16x1x128xbf16>
    %c1 = arith.constant 1 : index
    %c0_5 = arith.constant 0 : index
    %c0_6 = arith.constant 0 : index
    %4 = vector.load %arg12[%c1, %c0_5, %c0_6] : memref<18x16x384xbf16, #tpu.memory_space<vmem>>, vector<16x1x128xbf16>
    tpu.vector_store %arg12[%c1, %c0_5, %c0_6], %3 {strides = array<i32>} : memref<18x16x384xbf16, #tpu.memory_space<vmem>>, vector<16x1x128xbf16>,
    %c1_7 = arith.constant 1 : index
    %c15 = arith.constant 15 : index
    %c256 = arith.constant 256 : index
    %5 = vector.load %arg12[%c1_7, %c15, %c256] : memref<18x16x384xbf16, #tpu.memory_space<vmem>>, vector<16x1x128xbf16>
    tpu.vector_store %arg12[%c1_7, %c15, %c256], %3 {strides = array<i32>} : memref<18x16x384xbf16, #tpu.memory_space<vmem>>, vector<16x1x128xbf16>,
    %c0_8 = arith.constant 0 : index
    %c0_9 = arith.constant 0 : index
    %c0_10 = arith.constant 0 : index
    %c0_11 = arith.constant 0 : index
    %6 = vector.load %arg1[%c0_8, %c0_9, %c0_10, %c0_11] : memref<1x16x16x128xf32, #tpu.memory_space<vmem>>, vector<1x16x16x128xf32>
    %7 = vector.shape_cast %6 : vector<1x16x16x128xf32> to vector<16x16x128xf32>
    %c0_12 = arith.constant 0 : index
    %c0_13 = arith.constant 0 : index
    %8 = vector.load %arg2[%c0_12, %c0_13] : memref<1x128xf32, #tpu.memory_space<vmem>>, vector<1x128xf32>
    %9 = vector.shape_cast %8 : vector<1x128xf32> to vector<1x1x128xf32>
    %10 = vector.broadcast %9 : vector<1x1x128xf32> to vector<16x16x128xf32>
    %11 = arith.addf %7, %10 : vector<16x16x128xf32>
    %12 = arith.truncf %11 : vector<16x16x128xf32> to vector<16x16x128xbf16>
    %c1_14 = arith.constant 1 : index
    %c0_15 = arith.constant 0 : index
    %c128 = arith.constant 128 : index
    %13 = vector.load %arg12[%c1_14, %c0_15, %c128] : memref<18x16x384xbf16, #tpu.memory_space<vmem>>, vector<16x16x128xbf16>
    tpu.vector_store %arg12[%c1_14, %c0_15, %c128], %12 {strides = array<i32>} : memref<18x16x384xbf16, #tpu.memory_space<vmem>>, vector<16x16x128xbf16>,
    %14 = vector.extract_strided_slice %12 {offsets = [0, 0, 0], sizes = [16, 15, 128], strides = [1, 1, 1]} : vector<16x16x128xbf16> to vector<16x15x128xbf16>
    %c1_16 = arith.constant 1 : index
    %c1_17 = arith.constant 1 : index
    %c0_18 = arith.constant 0 : index
    %15 = vector.load %arg12[%c1_16, %c1_17, %c0_18] : memref<18x16x384xbf16, #tpu.memory_space<vmem>>, vector<16x15x128xbf16>
    tpu.vector_store %arg12[%c1_16, %c1_17, %c0_18], %14 {strides = array<i32>} : memref<18x16x384xbf16, #tpu.memory_space<vmem>>, vector<16x15x128xbf16>,
    %16 = vector.extract_strided_slice %12 {offsets = [0, 1, 0], sizes = [16, 15, 128], strides = [1, 1, 1]} : vector<16x16x128xbf16> to vector<16x15x128xbf16>
    %c1_19 = arith.constant 1 : index
    %c0_20 = arith.constant 0 : index
    %c256_21 = arith.constant 256 : index
    %17 = vector.load %arg12[%c1_19, %c0_20, %c256_21] : memref<18x16x384xbf16, #tpu.memory_space<vmem>>, vector<16x15x128xbf16>
    tpu.vector_store %arg12[%c1_19, %c0_20, %c256_21], %16 {strides = array<i32>} : memref<18x16x384xbf16, #tpu.memory_space<vmem>>, vector<16x15x128xbf16>,
    %c0_22 = arith.constant 0 : index
    %c0_23 = arith.constant 0 : index
    %c0_24 = arith.constant 0 : index
    %18 = vector.load %arg12[%c0_22, %c0_23, %c0_24] : memref<18x16x384xbf16, #tpu.memory_space<vmem>>, vector<16x16x384xbf16>
    %19 = vector.shape_cast %18 : vector<16x16x384xbf16> to vector<256x384xbf16>
    %c0_25 = arith.constant 0 : index
    %c0_26 = arith.constant 0 : index
    %c0_27 = arith.constant 0 : index
    %20 = vector.load %arg3[%c0_25, %c0_26, %c0_27] : memref<3x384x256xbf16, #tpu.memory_space<vmem>>, vector<1x384x256xbf16>
    %21 = vector.shape_cast %20 : vector<1x384x256xbf16> to vector<384x256xbf16>
    %cst_28 = arith.constant dense<0.000000e+00> : vector<256x256xf32>
    %22 = tpu.matmul %19, %21, %cst_28 {dimension_numbers = #tpu.dot_dimension_numbers<[1], [0], [0], [1], [0, 0, 1, 1], [], []>} : vector<256x384xbf16>, vector<384x256xbf16>, vector<256x256xf32> -> vector<256x256xf32>
    %c1_29 = arith.constant 1 : index
    %c0_30 = arith.constant 0 : index
    %c0_31 = arith.constant 0 : index
    %23 = vector.load %arg12[%c1_29, %c0_30, %c0_31] : memref<18x16x384xbf16, #tpu.memory_space<vmem>>, vector<16x16x384xbf16>
    %24 = vector.shape_cast %23 : vector<16x16x384xbf16> to vector<256x384xbf16>
    %c1_32 = arith.constant 1 : index
    %c0_33 = arith.constant 0 : index
    %c0_34 = arith.constant 0 : index
    %25 = vector.load %arg3[%c1_32, %c0_33, %c0_34] : memref<3x384x256xbf16, #tpu.memory_space<vmem>>, vector<1x384x256xbf16>
    %26 = vector.shape_cast %25 : vector<1x384x256xbf16> to vector<384x256xbf16>
    %cst_35 = arith.constant dense<0.000000e+00> : vector<256x256xf32>
    %27 = tpu.matmul %24, %26, %cst_35 {dimension_numbers = #tpu.dot_dimension_numbers<[1], [0], [0], [1], [0, 0, 1, 1], [], []>} : vector<256x384xbf16>, vector<384x256xbf16>, vector<256x256xf32> -> vector<256x256xf32>
    %28 = arith.addf %22, %27 : vector<256x256xf32>
    %c2 = arith.constant 2 : index
    %c0_36 = arith.constant 0 : index
    %c0_37 = arith.constant 0 : index
    %29 = vector.load %arg12[%c2, %c0_36, %c0_37] : memref<18x16x384xbf16, #tpu.memory_space<vmem>>, vector<16x16x384xbf16>
    %30 = vector.shape_cast %29 : vector<16x16x384xbf16> to vector<256x384xbf16>
    %c2_38 = arith.constant 2 : index
    %c0_39 = arith.constant 0 : index
    %c0_40 = arith.constant 0 : index
    %31 = vector.load %arg3[%c2_38, %c0_39, %c0_40] : memref<3x384x256xbf16, #tpu.memory_space<vmem>>, vector<1x384x256xbf16>
    %32 = vector.shape_cast %31 : vector<1x384x256xbf16> to vector<384x256xbf16>
    %cst_41 = arith.constant dense<0.000000e+00> : vector<256x256xf32>
    %33 = tpu.matmul %30, %32, %cst_41 {dimension_numbers = #tpu.dot_dimension_numbers<[1], [0], [0], [1], [0, 0, 1, 1], [], []>} : vector<256x384xbf16>, vector<384x256xbf16>, vector<256x256xf32> -> vector<256x256xf32>
    %34 = arith.addf %28, %33 : vector<256x256xf32>
    %35 = vector.extract_strided_slice %34 {offsets = [0, 0], sizes = [256, 128], strides = [1, 1]} : vector<256x256xf32> to vector<256x128xf32>
    %c0_42 = arith.constant 0 : index
    %c0_43 = arith.constant 0 : index
    %36 = vector.load %arg4[%c0_42, %c0_43] : memref<1x128xf32, #tpu.memory_space<vmem>>, vector<1x128xf32>
    %c0_44 = arith.constant 0 : index
    %c0_45 = arith.constant 0 : index
    %37 = vector.load %arg5[%c0_44, %c0_45] : memref<1x128xf32, #tpu.memory_space<vmem>>, vector<1x128xf32>
    %cst_46 = arith.constant dense<0.000000e+00> : vector<128xf32>
    %38 = vector.multi_reduction <add>, %35, %cst_46 [0] : vector<256x128xf32> to vector<128xf32>
    %39 = vector.shape_cast %38 : vector<128xf32> to vector<1x128xf32>
    %cst_47 = arith.constant 3.906250e-03 : f32
    %40 = vector.broadcast %cst_47 : f32 to vector<1x128xf32>
    %41 = arith.mulf %39, %40 : vector<1x128xf32>
    %42 = arith.mulf %35, %35 : vector<256x128xf32>
    %cst_48 = arith.constant dense<0.000000e+00> : vector<128xf32>
    %43 = vector.multi_reduction <add>, %42, %cst_48 [0] : vector<256x128xf32> to vector<128xf32>
    %44 = vector.shape_cast %43 : vector<128xf32> to vector<1x128xf32>
    %cst_49 = arith.constant 3.906250e-03 : f32
    %45 = vector.broadcast %cst_49 : f32 to vector<1x128xf32>
    %46 = arith.mulf %44, %45 : vector<1x128xf32>
    %47 = arith.mulf %41, %41 : vector<1x128xf32>
    %48 = arith.subf %46, %47 : vector<1x128xf32>
    %cst_50 = arith.constant 0.000000e+00 : f32
    %49 = vector.broadcast %cst_50 : f32 to vector<1x128xf32>
    %50 = arith.maximumf %48, %49 : vector<1x128xf32>
    %51 = vector.broadcast %41 : vector<1x128xf32> to vector<256x128xf32>
    %52 = arith.subf %35, %51 : vector<256x128xf32>
    %cst_51 = arith.constant 9.99999974E-6 : f32
    %53 = vector.broadcast %cst_51 : f32 to vector<1x128xf32>
    %54 = arith.addf %50, %53 : vector<1x128xf32>
    %55 = math.rsqrt %54 : vector<1x128xf32>
    %56 = vector.broadcast %55 : vector<1x128xf32> to vector<256x128xf32>
    %57 = arith.mulf %52, %56 : vector<256x128xf32>
    %58 = vector.broadcast %36 : vector<1x128xf32> to vector<256x128xf32>
    %59 = arith.mulf %57, %58 : vector<256x128xf32>
    %60 = vector.broadcast %37 : vector<1x128xf32> to vector<256x128xf32>
    %61 = arith.addf %59, %60 : vector<256x128xf32>
    %62 = vector.extract_strided_slice %34 {offsets = [0, 128], sizes = [256, 128], strides = [1, 1]} : vector<256x256xf32> to vector<256x128xf32>
    %c0_52 = arith.constant 0 : index
    %c0_53 = arith.constant 0 : index
    %63 = vector.load %arg6[%c0_52, %c0_53] : memref<1x128xf32, #tpu.memory_space<vmem>>, vector<1x128xf32>
    %c0_54 = arith.constant 0 : index
    %c0_55 = arith.constant 0 : index
    %64 = vector.load %arg7[%c0_54, %c0_55] : memref<1x128xf32, #tpu.memory_space<vmem>>, vector<1x128xf32>
    %cst_56 = arith.constant dense<0.000000e+00> : vector<128xf32>
    %65 = vector.multi_reduction <add>, %62, %cst_56 [0] : vector<256x128xf32> to vector<128xf32>
    %66 = vector.shape_cast %65 : vector<128xf32> to vector<1x128xf32>
    %cst_57 = arith.constant 3.906250e-03 : f32
    %67 = vector.broadcast %cst_57 : f32 to vector<1x128xf32>
    %68 = arith.mulf %66, %67 : vector<1x128xf32>
    %69 = arith.mulf %62, %62 : vector<256x128xf32>
    %cst_58 = arith.constant dense<0.000000e+00> : vector<128xf32>
    %70 = vector.multi_reduction <add>, %69, %cst_58 [0] : vector<256x128xf32> to vector<128xf32>
    %71 = vector.shape_cast %70 : vector<128xf32> to vector<1x128xf32>
    %cst_59 = arith.constant 3.906250e-03 : f32
    %72 = vector.broadcast %cst_59 : f32 to vector<1x128xf32>
    %73 = arith.mulf %71, %72 : vector<1x128xf32>
    %74 = arith.mulf %68, %68 : vector<1x128xf32>
    %75 = arith.subf %73, %74 : vector<1x128xf32>
    %cst_60 = arith.constant 0.000000e+00 : f32
    %76 = vector.broadcast %cst_60 : f32 to vector<1x128xf32>
    %77 = arith.maximumf %75, %76 : vector<1x128xf32>
    %78 = vector.broadcast %68 : vector<1x128xf32> to vector<256x128xf32>
    %79 = arith.subf %62, %78 : vector<256x128xf32>
    %cst_61 = arith.constant 9.99999974E-6 : f32
    %80 = vector.broadcast %cst_61 : f32 to vector<1x128xf32>
    %81 = arith.addf %77, %80 : vector<1x128xf32>
    %82 = math.rsqrt %81 : vector<1x128xf32>
    %83 = vector.broadcast %82 : vector<1x128xf32> to vector<256x128xf32>
    %84 = arith.mulf %79, %83 : vector<256x128xf32>
    %85 = vector.broadcast %63 : vector<1x128xf32> to vector<256x128xf32>
    %86 = arith.mulf %84, %85 : vector<256x128xf32>
    %87 = vector.broadcast %64 : vector<1x128xf32> to vector<256x128xf32>
    %88 = arith.addf %86, %87 : vector<256x128xf32>
    %cst_62 = arith.constant 0.000000e+00 : f32
    %89 = vector.broadcast %cst_62 : f32 to vector<256x128xf32>
    %90 = arith.maximumf %61, %89 : vector<256x128xf32>
    %91 = vector.shape_cast %90 : vector<256x128xf32> to vector<16x16x128xf32>
    %92 = arith.truncf %91 : vector<16x16x128xf32> to vector<16x16x128xbf16>
    %c1_63 = arith.constant 1 : index
    %c0_64 = arith.constant 0 : index
    %c128_65 = arith.constant 128 : index
    %93 = vector.load %arg12[%c1_63, %c0_64, %c128_65] : memref<18x16x384xbf16, #tpu.memory_space<vmem>>, vector<16x16x128xbf16>
    tpu.vector_store %arg12[%c1_63, %c0_64, %c128_65], %92 {strides = array<i32>} : memref<18x16x384xbf16, #tpu.memory_space<vmem>>, vector<16x16x128xbf16>,
    %94 = vector.extract_strided_slice %92 {offsets = [0, 0, 0], sizes = [16, 15, 128], strides = [1, 1, 1]} : vector<16x16x128xbf16> to vector<16x15x128xbf16>
    %c1_66 = arith.constant 1 : index
    %c1_67 = arith.constant 1 : index
    %c0_68 = arith.constant 0 : index
    %95 = vector.load %arg12[%c1_66, %c1_67, %c0_68] : memref<18x16x384xbf16, #tpu.memory_space<vmem>>, vector<16x15x128xbf16>
    tpu.vector_store %arg12[%c1_66, %c1_67, %c0_68], %94 {strides = array<i32>} : memref<18x16x384xbf16, #tpu.memory_space<vmem>>, vector<16x15x128xbf16>,
    %96 = vector.extract_strided_slice %92 {offsets = [0, 1, 0], sizes = [16, 15, 128], strides = [1, 1, 1]} : vector<16x16x128xbf16> to vector<16x15x128xbf16>
    %c1_69 = arith.constant 1 : index
    %c0_70 = arith.constant 0 : index
    %c256_71 = arith.constant 256 : index
    %97 = vector.load %arg12[%c1_69, %c0_70, %c256_71] : memref<18x16x384xbf16, #tpu.memory_space<vmem>>, vector<16x15x128xbf16>
    tpu.vector_store %arg12[%c1_69, %c0_70, %c256_71], %96 {strides = array<i32>} : memref<18x16x384xbf16, #tpu.memory_space<vmem>>, vector<16x15x128xbf16>,
    %c0_72 = arith.constant 0 : index
    %c0_73 = arith.constant 0 : index
    %c0_74 = arith.constant 0 : index
    %98 = vector.load %arg12[%c0_72, %c0_73, %c0_74] : memref<18x16x384xbf16, #tpu.memory_space<vmem>>, vector<16x16x384xbf16>
    %99 = vector.shape_cast %98 : vector<16x16x384xbf16> to vector<256x384xbf16>
    %c0_75 = arith.constant 0 : index
    %c0_76 = arith.constant 0 : index
    %c0_77 = arith.constant 0 : index
    %100 = vector.load %arg8[%c0_75, %c0_76, %c0_77] : memref<3x384x128xbf16, #tpu.memory_space<vmem>>, vector<1x384x128xbf16>
    %101 = vector.shape_cast %100 : vector<1x384x128xbf16> to vector<384x128xbf16>
    %cst_78 = arith.constant dense<0.000000e+00> : vector<256x128xf32>
    %102 = tpu.matmul %99, %101, %cst_78 {dimension_numbers = #tpu.dot_dimension_numbers<[1], [0], [0], [1], [0, 0, 1, 1], [], []>} : vector<256x384xbf16>, vector<384x128xbf16>, vector<256x128xf32> -> vector<256x128xf32>
    %c1_79 = arith.constant 1 : index
    %c0_80 = arith.constant 0 : index
    %c0_81 = arith.constant 0 : index
    %103 = vector.load %arg12[%c1_79, %c0_80, %c0_81] : memref<18x16x384xbf16, #tpu.memory_space<vmem>>, vector<16x16x384xbf16>
    %104 = vector.shape_cast %103 : vector<16x16x384xbf16> to vector<256x384xbf16>
    %c1_82 = arith.constant 1 : index
    %c0_83 = arith.constant 0 : index
    %c0_84 = arith.constant 0 : index
    %105 = vector.load %arg8[%c1_82, %c0_83, %c0_84] : memref<3x384x128xbf16, #tpu.memory_space<vmem>>, vector<1x384x128xbf16>
    %106 = vector.shape_cast %105 : vector<1x384x128xbf16> to vector<384x128xbf16>
    %cst_85 = arith.constant dense<0.000000e+00> : vector<256x128xf32>
    %107 = tpu.matmul %104, %106, %cst_85 {dimension_numbers = #tpu.dot_dimension_numbers<[1], [0], [0], [1], [0, 0, 1, 1], [], []>} : vector<256x384xbf16>, vector<384x128xbf16>, vector<256x128xf32> -> vector<256x128xf32>
    %108 = arith.addf %102, %107 : vector<256x128xf32>
    %c2_86 = arith.constant 2 : index
    %c0_87 = arith.constant 0 : index
    %c0_88 = arith.constant 0 : index
    %109 = vector.load %arg12[%c2_86, %c0_87, %c0_88] : memref<18x16x384xbf16, #tpu.memory_space<vmem>>, vector<16x16x384xbf16>
    %110 = vector.shape_cast %109 : vector<16x16x384xbf16> to vector<256x384xbf16>
    %c2_89 = arith.constant 2 : index
    %c0_90 = arith.constant 0 : index
    %c0_91 = arith.constant 0 : index
    %111 = vector.load %arg8[%c2_89, %c0_90, %c0_91] : memref<3x384x128xbf16, #tpu.memory_space<vmem>>, vector<1x384x128xbf16>
    %112 = vector.shape_cast %111 : vector<1x384x128xbf16> to vector<384x128xbf16>
    %cst_92 = arith.constant dense<0.000000e+00> : vector<256x128xf32>
    %113 = tpu.matmul %110, %112, %cst_92 {dimension_numbers = #tpu.dot_dimension_numbers<[1], [0], [0], [1], [0, 0, 1, 1], [], []>} : vector<256x384xbf16>, vector<384x128xbf16>, vector<256x128xf32> -> vector<256x128xf32>
    %114 = arith.addf %108, %113 : vector<256x128xf32>
    %c0_93 = arith.constant 0 : index
    %c0_94 = arith.constant 0 : index
    %115 = vector.load %arg9[%c0_93, %c0_94] : memref<1x128xf32, #tpu.memory_space<vmem>>, vector<1x128xf32>
    %c0_95 = arith.constant 0 : index
    %c0_96 = arith.constant 0 : index
    %116 = vector.load %arg10[%c0_95, %c0_96] : memref<1x128xf32, #tpu.memory_space<vmem>>, vector<1x128xf32>
    %cst_97 = arith.constant dense<0.000000e+00> : vector<128xf32>
    %117 = vector.multi_reduction <add>, %114, %cst_97 [0] : vector<256x128xf32> to vector<128xf32>
    %118 = vector.shape_cast %117 : vector<128xf32> to vector<1x128xf32>
    %cst_98 = arith.constant 3.906250e-03 : f32
    %119 = vector.broadcast %cst_98 : f32 to vector<1x128xf32>
    %120 = arith.mulf %118, %119 : vector<1x128xf32>
    %121 = arith.mulf %114, %114 : vector<256x128xf32>
    %cst_99 = arith.constant dense<0.000000e+00> : vector<128xf32>
    %122 = vector.multi_reduction <add>, %121, %cst_99 [0] : vector<256x128xf32> to vector<128xf32>
    %123 = vector.shape_cast %122 : vector<128xf32> to vector<1x128xf32>
    %cst_100 = arith.constant 3.906250e-03 : f32
    %124 = vector.broadcast %cst_100 : f32 to vector<1x128xf32>
    %125 = arith.mulf %123, %124 : vector<1x128xf32>
    %126 = arith.mulf %120, %120 : vector<1x128xf32>
    %127 = arith.subf %125, %126 : vector<1x128xf32>
    %cst_101 = arith.constant 0.000000e+00 : f32
    %128 = vector.broadcast %cst_101 : f32 to vector<1x128xf32>
    %129 = arith.maximumf %127, %128 : vector<1x128xf32>
    %130 = vector.broadcast %120 : vector<1x128xf32> to vector<256x128xf32>
    %131 = arith.subf %114, %130 : vector<256x128xf32>
    %cst_102 = arith.constant 9.99999974E-6 : f32
    %132 = vector.broadcast %cst_102 : f32 to vector<1x128xf32>
    %133 = arith.addf %129, %132 : vector<1x128xf32>
    %134 = math.rsqrt %133 : vector<1x128xf32>
    %135 = vector.broadcast %134 : vector<1x128xf32> to vector<256x128xf32>
    %136 = arith.mulf %131, %135 : vector<256x128xf32>
    %137 = vector.broadcast %115 : vector<1x128xf32> to vector<256x128xf32>
    %138 = arith.mulf %136, %137 : vector<256x128xf32>
    %139 = vector.broadcast %116 : vector<1x128xf32> to vector<256x128xf32>
    %140 = arith.addf %138, %139 : vector<256x128xf32>
    %141 = arith.addf %88, %140 : vector<256x128xf32>
    %cst_103 = arith.constant 0.000000e+00 : f32
    %142 = vector.broadcast %cst_103 : f32 to vector<256x128xf32>
    %143 = arith.maximumf %141, %142 : vector<256x128xf32>
    %144 = vector.shape_cast %143 : vector<256x128xf32> to vector<16x16x128xf32>
    %c0_104 = arith.constant 0 : index
    %c0_105 = arith.constant 0 : index
    %c0_106 = arith.constant 0 : index
    %c0_107 = arith.constant 0 : index
    %145 = vector.load %arg11[%c0_104, %c0_105, %c0_106, %c0_107] : memref<1x16x16x128xf32, #tpu.memory_space<vmem>>, vector<1x16x16x128xf32>
    %146 = vector.shape_cast %145 : vector<1x16x16x128xf32> to vector<16x16x128xf32>
    %147 = vector.shape_cast %144 : vector<16x16x128xf32> to vector<1x16x16x128xf32>
    tpu.vector_store %arg11[%c0_104, %c0_105, %c0_106, %c0_107], %147 {strides = array<i32>} : memref<1x16x16x128xf32, #tpu.memory_space<vmem>>, vector<1x16x16x128xf32>,
    return
  }
  func.func @transform_0(%arg0: i32) -> (i32, i32, i32, i32) {
    %c0_i32 = arith.constant 0 : i32
    %c0_i32_0 = arith.constant 0 : i32
    %c0_i32_1 = arith.constant 0 : i32
    %c0_i32_2 = arith.constant 0 : i32
    return %arg0, %c0_i32, %c0_i32_0, %c0_i32_1 : i32, i32, i32, i32
  }
  func.func @transform_1(%arg0: i32) -> (i32, i32) {
    %c0_i32 = arith.constant 0 : i32
    %c0_i32_0 = arith.constant 0 : i32
    %c0_i32_1 = arith.constant 0 : i32
    return %c0_i32, %c0_i32_0 : i32, i32
  }
  func.func @transform_2(%arg0: i32) -> (i32, i32, i32) {
    %c0_i32 = arith.constant 0 : i32
    %c0_i32_0 = arith.constant 0 : i32
    %c0_i32_1 = arith.constant 0 : i32
    %c0_i32_2 = arith.constant 0 : i32
    return %c0_i32, %c0_i32_0, %c0_i32_1 : i32, i32, i32
  }
  func.func @transform_3(%arg0: i32) -> (i32, i32) {
    %c0_i32 = arith.constant 0 : i32
    %c0_i32_0 = arith.constant 0 : i32
    %c0_i32_1 = arith.constant 0 : i32
    return %c0_i32, %c0_i32_0 : i32, i32
  }
  func.func @transform_4(%arg0: i32) -> (i32, i32) {
    %c0_i32 = arith.constant 0 : i32
    %c0_i32_0 = arith.constant 0 : i32
    %c0_i32_1 = arith.constant 0 : i32
    return %c0_i32, %c0_i32_0 : i32, i32
  }
  func.func @transform_5(%arg0: i32) -> (i32, i32) {
    %c0_i32 = arith.constant 0 : i32
    %c0_i32_0 = arith.constant 0 : i32
    %c0_i32_1 = arith.constant 0 : i32
    return %c0_i32, %c0_i32_0 : i32, i32
  }
  func.func @transform_6(%arg0: i32) -> (i32, i32) {
    %c0_i32 = arith.constant 0 : i32
    %c0_i32_0 = arith.constant 0 : i32
    %c0_i32_1 = arith.constant 0 : i32
    return %c0_i32, %c0_i32_0 : i32, i32
  }
  func.func @transform_7(%arg0: i32) -> (i32, i32, i32) {
    %c0_i32 = arith.constant 0 : i32
    %c0_i32_0 = arith.constant 0 : i32
    %c0_i32_1 = arith.constant 0 : i32
    %c0_i32_2 = arith.constant 0 : i32
    return %c0_i32, %c0_i32_0, %c0_i32_1 : i32, i32, i32
  }
  func.func @transform_8(%arg0: i32) -> (i32, i32) {
    %c0_i32 = arith.constant 0 : i32
    %c0_i32_0 = arith.constant 0 : i32
    %c0_i32_1 = arith.constant 0 : i32
    return %c0_i32, %c0_i32_0 : i32, i32
  }
  func.func @transform_9(%arg0: i32) -> (i32, i32) {
    %c0_i32 = arith.constant 0 : i32
    %c0_i32_0 = arith.constant 0 : i32
    %c0_i32_1 = arith.constant 0 : i32
    return %c0_i32, %c0_i32_0 : i32, i32
  }
  func.func @transform_10(%arg0: i32) -> (i32, i32, i32, i32) {
    %c0_i32 = arith.constant 0 : i32
    %c0_i32_0 = arith.constant 0 : i32
    %c0_i32_1 = arith.constant 0 : i32
    %c0_i32_2 = arith.constant 0 : i32
    return %arg0, %c0_i32, %c0_i32_0, %c0_i32_1 : i32, i32, i32, i32
  }
}

</mosaic_0001>

<llo_original>
// kernel: tpu_custom_call.1
$region0: #{tpu_custom_call.1}
  #allocation0 [shape = 'u32[]', space=smem, size = 0x4, offset = 0x4, fixed_abs, tag = 'smem constant byte address 0x4 - core index']
  #allocation1 [shape = 'u32[144,128]{1,0:T(1,128)}', space=vmem, size = 0x12000, scoped, tag = 'internal scratch']
  #allocation2 [shape = 'bf16[18,16,384]{2,1,0:T(8,128)(2,1)}', space=vmem, size = 0x36000, scoped, tag = 'scratch operand']
  %s0 = inlined_call_operand.hbm [shape: f32[2,16,16,128], index: 0, kind: input, shape index: {}]
  %s1 = inlined_call_operand.vmem [shape: f32[1,128], index: 1, kind: input, shape index: {}]
  %s2 = inlined_call_operand.hbm [shape: bf16[3,384,256], index: 2, kind: input, shape index: {}]
  %s3 = inlined_call_operand.vmem [shape: f32[1,128], index: 3, kind: input, shape index: {}]
  %s4 = inlined_call_operand.vmem [shape: f32[1,128], index: 4, kind: input, shape index: {}]
  %s5 = inlined_call_operand.vmem [shape: f32[1,128], index: 5, kind: input, shape index: {}]
  %s6 = inlined_call_operand.vmem [shape: f32[1,128], index: 6, kind: input, shape index: {}]
  %s7 = inlined_call_operand.hbm [shape: bf16[3,384,128], index: 7, kind: input, shape index: {}]
  %s8 = inlined_call_operand.vmem [shape: f32[1,128], index: 8, kind: input, shape index: {}]
  %s9 = inlined_call_operand.vmem [shape: f32[1,128], index: 9, kind: input, shape index: {}]
  %s10 = inlined_call_operand.hbm [shape: f32[2,16,16,128], index: 10, kind: output, shape index: {}]
  %s11 = sld [smem:[#allocation0]]
  $region85: #{tpu_custom_call.1} parent=0
    _
  %s13 = ssub.s32 1, %s11
  %s14 = scalar_select 0, %s13, %s11
  $region1: #{tpu_custom_call.1} parent=0
    #allocation3 [shape = 'u8[262144]{0}', space=vmem, size = 0x40000, scoped, tag = 'input window, operand 0']
    #allocation4 [shape = 's32[2]{0}', space=sflag, size = 0x8, scoped, tag = 'scoped memory for tpu_custom_call.1']
    #allocation5 [shape = 's32[2]{0}', space=sflag, size = 0x8, scoped, tag = 'scoped memory for tpu_custom_call.1']
    #allocation6 [shape = 'u8[589824]{0}', space=vmem, size = 0x90000, scoped, tag = 'input window, operand 2, single buffered']
    #allocation7 [shape = 's32[1]{0}', space=sflag, size = 0x4, scoped, tag = 'scoped memory for tpu_custom_call.1']
    #allocation8 [shape = 'u8[294912]{0}', space=vmem, size = 0x48000, scoped, tag = 'input window, operand 7, single buffered']
    #allocation9 [shape = 'u8[262144]{0}', space=vmem, size = 0x40000, scoped, tag = 'output window, operand 0']
    %15 = vsyncpa [#allocation4], 0
    %s16 = scalar_lea.sflag [#allocation4], 1
    %17 = vsyncpa %s16, 0
    %18 = vsyncpa [#allocation7], 0
    %19 = vsyncpa [#allocation5], 0
    %s20 = scalar_lea.sflag [#allocation5], 1
    %21 = vsyncpa %s20, 0
    loop: start=0, step=1, limit=4
    $region2: #{tpu_custom_call.1} parent=1 // loop_pre_header
      _
    $region3: #{tpu_custom_call.1} parent=1 // loop_header
      %s23 = sphi 0, %s27
      %p24 = scmp.ge.s32.totalorder %s23, 4
      %s33 = sphi 0, %s35
      %s36 = sphi 0, %s33
      %s37 = sphi 0, %s36
      %s53 = sphi 0, %s37
      %s57 = sphi 0, %s57
      %s59 = sphi 0, %s57
      %s60 = sphi 0, %s59
      %s74 = sphi 0, %s60
      %s78 = sphi 0, %s78
      %s80 = sphi 0, %s78
      %s81 = sphi 0, %s80
      %s95 = sphi 0, %s81
      %s99 = sphi 0, %s99
      %s101 = sphi 0, %s99
      %s102 = sphi 0, %s101
      %s116 = sphi 0, %s102
      %s120 = sphi 0, %s120
      %s122 = sphi 0, %s120
      %s123 = sphi 0, %s122
      %s137 = sphi 0, %s123
      %s141 = sphi 0, %s141
      %s143 = sphi 0, %s141
      %s144 = sphi 0, %s143
      %s158 = sphi 0, %s144
      %s162 = sphi 0, %s162
      %s164 = sphi 0, %s162
      %s165 = sphi 0, %s164
      %s179 = sphi 0, %s165
      %s183 = sphi 0, %s183
      %s185 = sphi 0, %s183
      %s186 = sphi 0, %s185
      %s200 = sphi 0, %s186
      %s204 = sphi 0, %s204
      %s206 = sphi 0, %s204
      %s207 = sphi 0, %s206
      %s221 = sphi 0, %s207
      %s225 = sphi 0, %s225
      %s227 = sphi 0, %s225
      %s228 = sphi 0, %s227
      %s242 = sphi 0, %s228
      %s248 = sphi 0, %s250
      %s251 = sphi 0, %s248
      %s252 = sphi 0, %s251
      %s268 = sphi 0, %s252
    $region4: #{tpu_custom_call.1} parent=1 // loop_header_branch
      %26 = sbr.rel (%p24) target = $region8
    $region5: #{tpu_custom_call.1} parent=1 // loop_body
      %s28 = ssub.s32 %s23, 1
      %s29 = ssub.s32 %s23, 2
      %s30 = sadd.s32 %s23, 1
      %s31 = ssub.s32 %s23, %s30
      %p32 = scmp.eq.s32.totalorder %s31, 0
      %s34 = sadd.s32 %s33, 1
      %s35 = scalar_select %p32, %s33, %s34
      %p38 = pneg %p32
      %p39 = scmp.eq.s32.totalorder %s23, 1
      %p40 = por %p38, %p39
      %p41 = scmp.ne.s32.totalorder %s33, %s36
      %p42 = scmp.eq.s32.totalorder %s23, 0
      %p43 = por %p41, %p42
      %p44 = scmp.ne.s32.totalorder %s33, %s36
      %p45 = scmp.eq.s32.totalorder %s28, 1
      %p46 = por %p44, %p45
      %p47 = scmp.ne.s32.totalorder %s36, %s37
      %p48 = scmp.eq.s32.totalorder %s28, 0
      %p49 = por %p47, %p48
      %p50 = scmp.ne.s32.totalorder %s36, %s37
      %p51 = scmp.eq.s32.totalorder %s29, 1
      %p52 = por %p50, %p51
      %p54 = scmp.ne.s32.totalorder %s37, %s53
      %p55 = scmp.eq.s32.totalorder %s29, 0
      %p56 = por %p54, %p55
      %s58 = sadd.s32 %s57, 1
      %p61 = scmp.eq.s32.totalorder %s23, 1
      %p62 = scmp.ne.s32.totalorder %s57, %s59
      %p63 = scmp.eq.s32.totalorder %s23, 0
      %p64 = por %p62, %p63
      %p65 = scmp.ne.s32.totalorder %s57, %s59
      %p66 = scmp.eq.s32.totalorder %s28, 1
      %p67 = por %p65, %p66
      %p68 = scmp.ne.s32.totalorder %s59, %s60
      %p69 = scmp.eq.s32.totalorder %s28, 0
      %p70 = por %p68, %p69
      %p71 = scmp.ne.s32.totalorder %s59, %s60
      %p72 = scmp.eq.s32.totalorder %s29, 1
      %p73 = por %p71, %p72
      %p75 = scmp.ne.s32.totalorder %s60, %s74
      %p76 = scmp.eq.s32.totalorder %s29, 0
      %p77 = por %p75, %p76
      %s79 = sadd.s32 %s78, 1
      %p82 = scmp.eq.s32.totalorder %s23, 1
      %p83 = scmp.ne.s32.totalorder %s78, %s80
      %p84 = scmp.eq.s32.totalorder %s23, 0
      %p85 = por %p83, %p84
      %p86 = scmp.ne.s32.totalorder %s78, %s80
      %p87 = scmp.eq.s32.totalorder %s28, 1
      %p88 = por %p86, %p87
      %p89 = scmp.ne.s32.totalorder %s80, %s81
      %p90 = scmp.eq.s32.totalorder %s28, 0
      %p91 = por %p89, %p90
      %p92 = scmp.ne.s32.totalorder %s80, %s81
      %p93 = scmp.eq.s32.totalorder %s29, 1
      %p94 = por %p92, %p93
      %p96 = scmp.ne.s32.totalorder %s81, %s95
      %p97 = scmp.eq.s32.totalorder %s29, 0
      %p98 = por %p96, %p97
      %s100 = sadd.s32 %s99, 1
      %p103 = scmp.eq.s32.totalorder %s23, 1
      %p104 = scmp.ne.s32.totalorder %s99, %s101
      %p105 = scmp.eq.s32.totalorder %s23, 0
      %p106 = por %p104, %p105
      %p107 = scmp.ne.s32.totalorder %s99, %s101
      %p108 = scmp.eq.s32.totalorder %s28, 1
      %p109 = por %p107, %p108
      %p110 = scmp.ne.s32.totalorder %s101, %s102
      %p111 = scmp.eq.s32.totalorder %s28, 0
      %p112 = por %p110, %p111
      %p113 = scmp.ne.s32.totalorder %s101, %s102
      %p114 = scmp.eq.s32.totalorder %s29, 1
      %p115 = por %p113, %p114
      %p117 = scmp.ne.s32.totalorder %s102, %s116
      %p118 = scmp.eq.s32.totalorder %s29, 0
      %p119 = por %p117, %p118
      %s121 = sadd.s32 %s120, 1
      %p124 = scmp.eq.s32.totalorder %s23, 1
      %p125 = scmp.ne.s32.totalorder %s120, %s122
      %p126 = scmp.eq.s32.totalorder %s23, 0
      %p127 = por %p125, %p126
      %p128 = scmp.ne.s32.totalorder %s120, %s122
      %p129 = scmp.eq.s32.totalorder %s28, 1
      %p130 = por %p128, %p129
      %p131 = scmp.ne.s32.totalorder %s122, %s123
      %p132 = scmp.eq.s32.totalorder %s28, 0
      %p133 = por %p131, %p132
      %p134 = scmp.ne.s32.totalorder %s122, %s123
      %p135 = scmp.eq.s32.totalorder %s29, 1
      %p136 = por %p134, %p135
      %p138 = scmp.ne.s32.totalorder %s123, %s137
      %p139 = scmp.eq.s32.totalorder %s29, 0
      %p140 = por %p138, %p139
      %s142 = sadd.s32 %s141, 1
      %p145 = scmp.eq.s32.totalorder %s23, 1
      %p146 = scmp.ne.s32.totalorder %s141, %s143
      %p147 = scmp.eq.s32.totalorder %s23, 0
      %p148 = por %p146, %p147
      %p149 = scmp.ne.s32.totalorder %s141, %s143
      %p150 = scmp.eq.s32.totalorder %s28, 1
      %p151 = por %p149, %p150
      %p152 = scmp.ne.s32.totalorder %s143, %s144
      %p153 = scmp.eq.s32.totalorder %s28, 0
      %p154 = por %p152, %p153
      %p155 = scmp.ne.s32.totalorder %s143, %s144
      %p156 = scmp.eq.s32.totalorder %s29, 1
      %p157 = por %p155, %p156
      %p159 = scmp.ne.s32.totalorder %s144, %s158
      %p160 = scmp.eq.s32.totalorder %s29, 0
      %p161 = por %p159, %p160
      %s163 = sadd.s32 %s162, 1
      %p166 = scmp.eq.s32.totalorder %s23, 1
      %p167 = scmp.ne.s32.totalorder %s162, %s164
      %p168 = scmp.eq.s32.totalorder %s23, 0
      %p169 = por %p167, %p168
      %p170 = scmp.ne.s32.totalorder %s162, %s164
      %p171 = scmp.eq.s32.totalorder %s28, 1
      %p172 = por %p170, %p171
      %p173 = scmp.ne.s32.totalorder %s164, %s165
      %p174 = scmp.eq.s32.totalorder %s28, 0
      %p175 = por %p173, %p174
      %p176 = scmp.ne.s32.totalorder %s164, %s165
      %p177 = scmp.eq.s32.totalorder %s29, 1
      %p178 = por %p176, %p177
      %p180 = scmp.ne.s32.totalorder %s165, %s179
      %p181 = scmp.eq.s32.totalorder %s29, 0
      %p182 = por %p180, %p181
      %s184 = sadd.s32 %s183, 1
      %p187 = scmp.eq.s32.totalorder %s23, 1
      %p188 = scmp.ne.s32.totalorder %s183, %s185
      %p189 = scmp.eq.s32.totalorder %s23, 0
      %p190 = por %p188, %p189
      %p191 = scmp.ne.s32.totalorder %s183, %s185
      %p192 = scmp.eq.s32.totalorder %s28, 1
      %p193 = por %p191, %p192
      %p194 = scmp.ne.s32.totalorder %s185, %s186
      %p195 = scmp.eq.s32.totalorder %s28, 0
      %p196 = por %p194, %p195
      %p197 = scmp.ne.s32.totalorder %s185, %s186
      %p198 = scmp.eq.s32.totalorder %s29, 1
      %p199 = por %p197, %p198
      %p201 = scmp.ne.s32.totalorder %s186, %s200
      %p202 = scmp.eq.s32.totalorder %s29, 0
      %p203 = por %p201, %p202
      %s205 = sadd.s32 %s204, 1
      %p208 = scmp.eq.s32.totalorder %s23, 1
      %p209 = scmp.ne.s32.totalorder %s204, %s206
      %p210 = scmp.eq.s32.totalorder %s23, 0
      %p211 = por %p209, %p210
      %p212 = scmp.ne.s32.totalorder %s204, %s206
      %p213 = scmp.eq.s32.totalorder %s28, 1
      %p214 = por %p212, %p213
      %p215 = scmp.ne.s32.totalorder %s206, %s207
      %p216 = scmp.eq.s32.totalorder %s28, 0
      %p217 = por %p215, %p216
      %p218 = scmp.ne.s32.totalorder %s206, %s207
      %p219 = scmp.eq.s32.totalorder %s29, 1
      %p220 = por %p218, %p219
      %p222 = scmp.ne.s32.totalorder %s207, %s221
      %p223 = scmp.eq.s32.totalorder %s29, 0
      %p224 = por %p222, %p223
      %s226 = sadd.s32 %s225, 1
      %p229 = scmp.eq.s32.totalorder %s23, 1
      %p230 = scmp.ne.s32.totalorder %s225, %s227
      %p231 = scmp.eq.s32.totalorder %s23, 0
      %p232 = por %p230, %p231
      %p233 = scmp.ne.s32.totalorder %s225, %s227
      %p234 = scmp.eq.s32.totalorder %s28, 1
      %p235 = por %p233, %p234
      %p236 = scmp.ne.s32.totalorder %s227, %s228
      %p237 = scmp.eq.s32.totalorder %s28, 0
      %p238 = por %p236, %p237
      %p239 = scmp.ne.s32.totalorder %s227, %s228
      %p240 = scmp.eq.s32.totalorder %s29, 1
      %p241 = por %p239, %p240
      %p243 = scmp.ne.s32.totalorder %s228, %s242
      %p244 = scmp.eq.s32.totalorder %s29, 0
      %p245 = por %p243, %p244
      %s246 = ssub.s32 %s23, %s30
      %p247 = scmp.eq.s32.totalorder %s246, 0
      %s249 = sadd.s32 %s248, 1
      %s250 = scalar_select %p247, %s248, %s249
      %p253 = pneg %p247
      %p254 = scmp.eq.s32.totalorder %s23, 1
      %p255 = por %p253, %p254
      %p256 = scmp.ne.s32.totalorder %s248, %s251
      %p257 = scmp.eq.s32.totalorder %s23, 0
      %p258 = por %p256, %p257
      %p259 = scmp.ne.s32.totalorder %s248, %s251
      %p260 = scmp.eq.s32.totalorder %s28, 1
      %p261 = por %p259, %p260
      %p262 = scmp.ne.s32.totalorder %s251, %s252
      %p263 = scmp.eq.s32.totalorder %s28, 0
      %p264 = por %p262, %p263
      %p265 = scmp.ne.s32.totalorder %s251, %s252
      %p266 = scmp.eq.s32.totalorder %s29, 1
      %p267 = por %p265, %p266
      %p269 = scmp.ne.s32.totalorder %s252, %s268
      %p270 = scmp.eq.s32.totalorder %s29, 0
      %p271 = por %p269, %p270
      %p272 = scmp.le.s32.totalorder 1, %s23
      %p273 = scmp.lt.s32.totalorder %s23, 3
      %p274 = pnand %p272, %p273
      %p275 = pneg %p274
      // Predicated region
      $region9: #{tpu_custom_call.1} parent=5 // pred_check
        _
      $region10: #{tpu_custom_call.1} parent=5 // pred_check_branch
        %277 = sbr.rel (%p274) target = $region12
      $region11: #{tpu_custom_call.1} parent=5 // pred_region
        %s278 = ssub.s32 %s23, 1
        // Predicated region
        $region13: #{tpu_custom_call.1} parent=11 // pred_check
          %p279 = pneg %p70
        $region14: #{tpu_custom_call.1} parent=11 // pred_check_branch
          %281 = sbr.rel (%p279) target = $region16
        $region15: #{tpu_custom_call.1} parent=11 // pred_region
          _
        $region16: #{tpu_custom_call.1} parent=11 // pred_fallthru
          _
        // Predicated region
        $region17: #{tpu_custom_call.1} parent=11 // pred_check
          %p282 = pneg %p91
        $region18: #{tpu_custom_call.1} parent=11 // pred_check_branch
          %284 = sbr.rel (%p282) target = $region20
        $region19: #{tpu_custom_call.1} parent=11 // pred_region
          %s286 = ssub.s32 18432, 18432
          %287 = vsyncadd [#allocation7], %s286
          %s288 = sshll.u32 [#allocation6], 4
          %s289 = int_to_ptr.vmem [resolvable:$true] %s288
          %294 = dma.hbm_to_vmem [thread:$0]  %s2, 18432, %s289, [#allocation7], 128, 128, 8
        $region20: #{tpu_custom_call.1} parent=11 // pred_fallthru
          _
        // Predicated region
        $region21: #{tpu_custom_call.1} parent=11 // pred_check
          %p295 = pneg %p112
        $region22: #{tpu_custom_call.1} parent=11 // pred_check_branch
          %297 = sbr.rel (%p295) target = $region24
        $region23: #{tpu_custom_call.1} parent=11 // pred_region
          _
        $region24: #{tpu_custom_call.1} parent=11 // pred_fallthru
          _
        // Predicated region
        $region25: #{tpu_custom_call.1} parent=11 // pred_check
          %p298 = pneg %p133
        $region26: #{tpu_custom_call.1} parent=11 // pred_check_branch
          %300 = sbr.rel (%p298) target = $region28
        $region27: #{tpu_custom_call.1} parent=11 // pred_region
          _
        $region28: #{tpu_custom_call.1} parent=11 // pred_fallthru
          _
        // Predicated region
        $region29: #{tpu_custom_call.1} parent=11 // pred_check
          %p301 = pneg %p154
        $region30: #{tpu_custom_call.1} parent=11 // pred_check_branch
          %303 = sbr.rel (%p301) target = $region32
        $region31: #{tpu_custom_call.1} parent=11 // pred_region
          _
        $region32: #{tpu_custom_call.1} parent=11 // pred_fallthru
          _
        // Predicated region
        $region33: #{tpu_custom_call.1} parent=11 // pred_check
          %p304 = pneg %p175
        $region34: #{tpu_custom_call.1} parent=11 // pred_check_branch
          %306 = sbr.rel (%p304) target = $region36
        $region35: #{tpu_custom_call.1} parent=11 // pred_region
          _
        $region36: #{tpu_custom_call.1} parent=11 // pred_fallthru
          _
        // Predicated region
        $region37: #{tpu_custom_call.1} parent=11 // pred_check
          %p307 = pneg %p196
        $region38: #{tpu_custom_call.1} parent=11 // pred_check_branch
          %309 = sbr.rel (%p307) target = $region40
        $region39: #{tpu_custom_call.1} parent=11 // pred_region
          %s311 = ssub.s32 9216, 9216
          %312 = vsyncadd [#allocation7], %s311
          %s313 = sshll.u32 [#allocation8], 4
          %s314 = int_to_ptr.vmem [resolvable:$true] %s313
          %319 = dma.hbm_to_vmem [thread:$0]  %s7, 9216, %s314, [#allocation7], 64, 64, 4
        $region40: #{tpu_custom_call.1} parent=11 // pred_fallthru
          _
        // Predicated region
        $region41: #{tpu_custom_call.1} parent=11 // pred_check
          %p320 = pneg %p217
        $region42: #{tpu_custom_call.1} parent=11 // pred_check_branch
          %322 = sbr.rel (%p320) target = $region44
        $region43: #{tpu_custom_call.1} parent=11 // pred_region
          _
        $region44: #{tpu_custom_call.1} parent=11 // pred_fallthru
          _
        // Predicated region
        $region45: #{tpu_custom_call.1} parent=11 // pred_check
          %p323 = pneg %p238
        $region46: #{tpu_custom_call.1} parent=11 // pred_check_branch
          %325 = sbr.rel (%p323) target = $region48
        $region47: #{tpu_custom_call.1} parent=11 // pred_region
          _
        $region48: #{tpu_custom_call.1} parent=11 // pred_fallthru
          _
      $region12: #{tpu_custom_call.1} parent=5 // pred_fallthru
        _
      %p326 = scmp.lt.s32.totalorder %s23, 2
      // Predicated region
      $region49: #{tpu_custom_call.1} parent=5 // pred_check
        %p327 = pneg %p326
      $region50: #{tpu_custom_call.1} parent=5 // pred_check_branch
        %329 = sbr.rel (%p327) target = $region52
      $region51: #{tpu_custom_call.1} parent=5 // pred_region
        // Predicated region
        $region53: #{tpu_custom_call.1} parent=51 // pred_check
          %p330 = pneg %p43
        $region54: #{tpu_custom_call.1} parent=51 // pred_check_branch
          %332 = sbr.rel (%p330) target = $region56
        $region55: #{tpu_custom_call.1} parent=51 // pred_region
          %s333 = sand.u32 %s33, 1
          %s334 = scalar_lea.sflag [#allocation4], %s333
          %s335 = sand.u32 %s33, 1
          %s336 = smul.addr %s335, 256
          %s337 = scalar_lea.vmem [#allocation3], %s336
          %s339 = ssub.s32 4096, 4096
          %340 = vsyncadd %s334, %s339
          %s341 = smul.addr %s23, 32
          %s342 = smul.addr %s341, 128
          %s343 = scalar_lea.hbm %s0, %s342
          %s344 = sshll.u32 %s337, 4
          %s345 = int_to_ptr.vmem [resolvable:$true] %s344
          %350 = dma.hbm_to_vmem [thread:$0]  %s343, 4096, %s345, %s334, 128, 128, 8
        $region56: #{tpu_custom_call.1} parent=51 // pred_fallthru
          _
      $region52: #{tpu_custom_call.1} parent=5 // pred_fallthru
        _
      %p351 = scmp.le.s32.totalorder 1, %s23
      %p352 = scmp.lt.s32.totalorder %s23, 3
      %p353 = pnand %p351, %p352
      %p354 = pneg %p353
      // Predicated region
      $region57: #{tpu_custom_call.1} parent=5 // pred_check
        _
      $region58: #{tpu_custom_call.1} parent=5 // pred_check_branch
        %356 = sbr.rel (%p353) target = $region60
      $region59: #{tpu_custom_call.1} parent=5 // pred_region
        %s357 = ssub.s32 %s23, 1
        %s358 = sand.u32 %s36, 1
        %s359 = scalar_lea.sflag [#allocation4], %s358
        %s360 = sand.u32 %s36, 1
        %s361 = smul.addr %s360, 256
        %s362 = scalar_lea.vmem [#allocation3], %s361
        // Predicated region
        $region61: #{tpu_custom_call.1} parent=59 // pred_check
          %p363 = pneg %p49
        $region62: #{tpu_custom_call.1} parent=59 // pred_check_branch
          %365 = sbr.rel (%p363) target = $region64
        $region63: #{tpu_custom_call.1} parent=59 // pred_region
          %366 = dma.done %s359, 4096
        $region64: #{tpu_custom_call.1} parent=59 // pred_fallthru
          _
        // Predicated region
        $region65: #{tpu_custom_call.1} parent=59 // pred_check
          %p367 = pneg %p91
        $region66: #{tpu_custom_call.1} parent=59 // pred_check_branch
          %369 = sbr.rel (%p367) target = $region68
        $region67: #{tpu_custom_call.1} parent=59 // pred_region
          %370 = dma.done [#allocation7], 18432
        $region68: #{tpu_custom_call.1} parent=59 // pred_fallthru
          _
        // Predicated region
        $region69: #{tpu_custom_call.1} parent=59 // pred_check
          %p371 = pneg %p196
        $region70: #{tpu_custom_call.1} parent=59 // pred_check_branch
          %373 = sbr.rel (%p371) target = $region72
        $region71: #{tpu_custom_call.1} parent=59 // pred_region
          %374 = dma.done [#allocation7], 9216
        $region72: #{tpu_custom_call.1} parent=59 // pred_fallthru
          _
        %s375 = sand.u32 %s36, 1
        %s376 = scalar_lea.sflag [#allocation4], %s375
        %s377 = sand.u32 %s36, 1
        %s378 = smul.addr %s377, 256
        %s379 = scalar_lea.vmem [#allocation3], %s378
        %p380 = pneg %p49
        %p381 = pneg %p46
        %p382 = pneg %p70
        %p383 = pneg %p67
        %p384 = pneg %p91
        %p385 = pneg %p88
        %p386 = pneg %p112
        %p387 = pneg %p109
        %p388 = pneg %p133
        %p389 = pneg %p130
        %p390 = pneg %p154
        %p391 = pneg %p151
        %p392 = pneg %p175
        %p393 = pneg %p172
        %p394 = pneg %p196
        %p395 = pneg %p193
        %p396 = pneg %p217
        %p397 = pneg %p214
        %p398 = pneg %p238
        %p399 = pneg %p235
        %p400 = pneg %p264
        %p401 = pneg %p261
        %s402 = sand.u32 %s251, 1
        %s403 = scalar_lea.sflag [#allocation5], %s402
        %s404 = sand.u32 %s251, 1
        %s405 = smul.addr %s404, 256
        %s406 = scalar_lea.vmem [#allocation9], %s405
        %408 = vst [vmem:[#allocation2] sm:$0xff] 0
        %409 = vst [vmem:[#allocation2 + $0x8] sm:$0xf] 0
        %410 = vst [vmem:[#allocation2 + $0xc] sm:$0xff] 0
        %411 = vst [vmem:[#allocation2 + $0x14] sm:$0xf] 0
        %s412 = scalar_lea.vmem [#allocation2], 408
        %413 = vst [vmem:[%s412] sm:$0xff] 0
        %414 = vst [vmem:[%s412 + $0x8] sm:$0xf] 0
        %415 = vst [vmem:[%s412 + $0xc] sm:$0xff] 0
        %416 = vst [vmem:[%s412 + $0x14] sm:$0xf] 0
        %s417 = scalar_lea.vmem [#allocation2], 24
        %vm418 = vcmask 1040384
        %vm419 = vsmask.f32 256
        %vm420 = vmand %vm418, %vm419
        %v421 = vld [vmem:[%s417] sm:$0x1]
        %v422 = vsel %vm420, 0, %v421
        %423 = vst [vmem:[%s417] sm:$0x1] %v422
        %v424 = vld [vmem:[%s417 + $0x18] sm:$0x1]
        %v425 = vsel %vm420, 0, %v424
        %426 = vst [vmem:[%s417 + $0x18] sm:$0x1] %v425
        %v427 = vld [vmem:[%s417 + $0x30] sm:$0x1]
        %v428 = vsel %vm420, 0, %v427
        %429 = vst [vmem:[%s417 + $0x30] sm:$0x1] %v428
        %v430 = vld [vmem:[%s417 + $0x48] sm:$0x1]
        %v431 = vsel %vm420, 0, %v430
        %432 = vst [vmem:[%s417 + $0x48] sm:$0x1] %v431
        %v433 = vld [vmem:[%s417 + $0x60] sm:$0x1]
        %v434 = vsel %vm420, 0, %v433
        %435 = vst [vmem:[%s417 + $0x60] sm:$0x1] %v434
        %v436 = vld [vmem:[%s417 + $0x78] sm:$0x1]
        %v437 = vsel %vm420, 0, %v436
        %438 = vst [vmem:[%s417 + $0x78] sm:$0x1] %v437
        %v439 = vld [vmem:[%s417 + $0x90] sm:$0x1]
        %v440 = vsel %vm420, 0, %v439
        %441 = vst [vmem:[%s417 + $0x90] sm:$0x1] %v440
        %v442 = vld [vmem:[%s417 + $0xa8] sm:$0x1]
        %v443 = vsel %vm420, 0, %v442
        %444 = vst [vmem:[%s417 + $0xa8] sm:$0x1] %v443
        %v445 = vld [vmem:[%s417 + $0xc0] sm:$0x1]
        %v446 = vsel %vm420, 0, %v445
        %447 = vst [vmem:[%s417 + $0xc0] sm:$0x1] %v446
        %v448 = vld [vmem:[%s417 + $0xd8] sm:$0x1]
        %v449 = vsel %vm420, 0, %v448
        %450 = vst [vmem:[%s417 + $0xd8] sm:$0x1] %v449
        %v451 = vld [vmem:[%s417 + $0xf0] sm:$0x1]
        %v452 = vsel %vm420, 0, %v451
        %453 = vst [vmem:[%s417 + $0xf0] sm:$0x1] %v452
        %v454 = vld [vmem:[%s417 + $0x108] sm:$0x1]
        %v455 = vsel %vm420, 0, %v454
        %456 = vst [vmem:[%s417 + $0x108] sm:$0x1] %v455
        %v457 = vld [vmem:[%s417 + $0x120] sm:$0x1]
        %v458 = vsel %vm420, 0, %v457
        %459 = vst [vmem:[%s417 + $0x120] sm:$0x1] %v458
        %v460 = vld [vmem:[%s417 + $0x138] sm:$0x1]
        %v461 = vsel %vm420, 0, %v460
        %462 = vst [vmem:[%s417 + $0x138] sm:$0x1] %v461
        %v463 = vld [vmem:[%s417 + $0x150] sm:$0x1]
        %v464 = vsel %vm420, 0, %v463
        %465 = vst [vmem:[%s417 + $0x150] sm:$0x1] %v464
        %v466 = vld [vmem:[%s417 + $0x168] sm:$0x1]
        %v467 = vsel %vm420, 0, %v466
        %468 = vst [vmem:[%s417 + $0x168] sm:$0x1] %v467
        %vm469 = vcmask 1043459
        %vm470 = vsmask.f32 7950
        %vm471 = vmand %vm469, %vm470
        %v472 = vld [vmem:[%s417 + $0x14] sm:$0x8]
        %v473 = vsel %vm471, 0, %v472
        %474 = vst [vmem:[%s417 + $0x14] sm:$0x8] %v473
        %v475 = vld [vmem:[%s417 + $0x2c] sm:$0x8]
        %v476 = vsel %vm471, 0, %v475
        %477 = vst [vmem:[%s417 + $0x2c] sm:$0x8] %v476
        %v478 = vld [vmem:[%s417 + $0x44] sm:$0x8]
        %v479 = vsel %vm471, 0, %v478
        %480 = vst [vmem:[%s417 + $0x44] sm:$0x8] %v479
        %v481 = vld [vmem:[%s417 + $0x5c] sm:$0x8]
        %v482 = vsel %vm471, 0, %v481
        %483 = vst [vmem:[%s417 + $0x5c] sm:$0x8] %v482
        %v484 = vld [vmem:[%s417 + $0x74] sm:$0x8]
        %v485 = vsel %vm471, 0, %v484
        %486 = vst [vmem:[%s417 + $0x74] sm:$0x8] %v485
        %v487 = vld [vmem:[%s417 + $0x8c] sm:$0x8]
        %v488 = vsel %vm471, 0, %v487
        %489 = vst [vmem:[%s417 + $0x8c] sm:$0x8] %v488
        %v490 = vld [vmem:[%s417 + $0xa4] sm:$0x8]
        %v491 = vsel %vm471, 0, %v490
        %492 = vst [vmem:[%s417 + $0xa4] sm:$0x8] %v491
        %v493 = vld [vmem:[%s417 + $0xbc] sm:$0x8]
        %v494 = vsel %vm471, 0, %v493
        %495 = vst [vmem:[%s417 + $0xbc] sm:$0x8] %v494
        %v496 = vld [vmem:[%s417 + $0xd4] sm:$0x8]
        %v497 = vsel %vm471, 0, %v496
        %498 = vst [vmem:[%s417 + $0xd4] sm:$0x8] %v497
        %v499 = vld [vmem:[%s417 + $0xec] sm:$0x8]
        %v500 = vsel %vm471, 0, %v499
        %501 = vst [vmem:[%s417 + $0xec] sm:$0x8] %v500
        %v502 = vld [vmem:[%s417 + $0x104] sm:$0x8]
        %v503 = vsel %vm471, 0, %v502
        %504 = vst [vmem:[%s417 + $0x104] sm:$0x8] %v503
        %v505 = vld [vmem:[%s417 + $0x11c] sm:$0x8]
        %v506 = vsel %vm471, 0, %v505
        %507 = vst [vmem:[%s417 + $0x11c] sm:$0x8] %v506
        %v508 = vld [vmem:[%s417 + $0x134] sm:$0x8]
        %v509 = vsel %vm471, 0, %v508
        %510 = vst [vmem:[%s417 + $0x134] sm:$0x8] %v509
        %v511 = vld [vmem:[%s417 + $0x14c] sm:$0x8]
        %v512 = vsel %vm471, 0, %v511
        %513 = vst [vmem:[%s417 + $0x14c] sm:$0x8] %v512
        %v514 = vld [vmem:[%s417 + $0x164] sm:$0x8]
        %v515 = vsel %vm471, 0, %v514
        %516 = vst [vmem:[%s417 + $0x164] sm:$0x8] %v515
        %v517 = vld [vmem:[%s417 + $0x17c] sm:$0x8]
        %v518 = vsel %vm471, 0, %v517
        %519 = vst [vmem:[%s417 + $0x17c] sm:$0x8] %v518
        %v520 = vld [vmem:[%s362] sm:$0xff]
        %v521 = vld [vmem:[%s362 + $0x8] sm:$0xff]
        %v522 = vld [vmem:[%s362 + $0x10] sm:$0xff]
        %v523 = vld [vmem:[%s362 + $0x18] sm:$0xff]
        %v524 = vld [vmem:[%s362 + $0x20] sm:$0xff]
        %v525 = vld [vmem:[%s362 + $0x28] sm:$0xff]
        %v526 = vld [vmem:[%s362 + $0x30] sm:$0xff]
        %v527 = vld [vmem:[%s362 + $0x38] sm:$0xff]
        %v528 = vld [vmem:[%s362 + $0x40] sm:$0xff]
        %v529 = vld [vmem:[%s362 + $0x48] sm:$0xff]
        %v530 = vld [vmem:[%s362 + $0x50] sm:$0xff]
        %v531 = vld [vmem:[%s362 + $0x58] sm:$0xff]
        %v532 = vld [vmem:[%s362 + $0x60] sm:$0xff]
        %v533 = vld [vmem:[%s362 + $0x68] sm:$0xff]
        %v534 = vld [vmem:[%s362 + $0x70] sm:$0xff]
        %v535 = vld [vmem:[%s362 + $0x78] sm:$0xff]
        %v536 = vld [vmem:[%s362 + $0x80] sm:$0xff]
        %v537 = vld [vmem:[%s362 + $0x88] sm:$0xff]
        %v538 = vld [vmem:[%s362 + $0x90] sm:$0xff]
        %v539 = vld [vmem:[%s362 + $0x98] sm:$0xff]
        %v540 = vld [vmem:[%s362 + $0xa0] sm:$0xff]
        %v541 = vld [vmem:[%s362 + $0xa8] sm:$0xff]
        %v542 = vld [vmem:[%s362 + $0xb0] sm:$0xff]
        %v543 = vld [vmem:[%s362 + $0xb8] sm:$0xff]
        %v544 = vld [vmem:[%s362 + $0xc0] sm:$0xff]
        %v545 = vld [vmem:[%s362 + $0xc8] sm:$0xff]
        %v546 = vld [vmem:[%s362 + $0xd0] sm:$0xff]
        %v547 = vld [vmem:[%s362 + $0xd8] sm:$0xff]
        %v548 = vld [vmem:[%s362 + $0xe0] sm:$0xff]
        %v549 = vld [vmem:[%s362 + $0xe8] sm:$0xff]
        %v550 = vld [vmem:[%s362 + $0xf0] sm:$0xff]
        %v551 = vld [vmem:[%s362 + $0xf8] sm:$0xff]
        %v552 = vld [vmem:[%s1] sm:$0x1]
        %v554 = vlaneseq
        %v555 = vshrl.u32 %v554, 7
        %v556 = vsub.s32 0, %v555
        %v557 = vrot.slane %v552, %v556
        %v559 = vadd.f32 %v520, %v557
        %v560 = vadd.f32 %v521, %v557
        %v561 = vadd.f32 %v522, %v557
        %v562 = vadd.f32 %v523, %v557
        %v563 = vadd.f32 %v524, %v557
        %v564 = vadd.f32 %v525, %v557
        %v565 = vadd.f32 %v526, %v557
        %v566 = vadd.f32 %v527, %v557
        %v567 = vadd.f32 %v528, %v557
        %v568 = vadd.f32 %v529, %v557
        %v569 = vadd.f32 %v530, %v557
        %v570 = vadd.f32 %v531, %v557
        %v571 = vadd.f32 %v532, %v557
        %v572 = vadd.f32 %v533, %v557
        %v573 = vadd.f32 %v534, %v557
        %v574 = vadd.f32 %v535, %v557
        %v575 = vadd.f32 %v536, %v557
        %v576 = vadd.f32 %v537, %v557
        %v577 = vadd.f32 %v538, %v557
        %v578 = vadd.f32 %v539, %v557
        %v579 = vadd.f32 %v540, %v557
        %v580 = vadd.f32 %v541, %v557
        %v581 = vadd.f32 %v542, %v557
        %v582 = vadd.f32 %v543, %v557
        %v583 = vadd.f32 %v544, %v557
        %v584 = vadd.f32 %v545, %v557
        %v585 = vadd.f32 %v546, %v557
        %v586 = vadd.f32 %v547, %v557
        %v587 = vadd.f32 %v548, %v557
        %v588 = vadd.f32 %v549, %v557
        %v589 = vadd.f32 %v550, %v557
        %v590 = vadd.f32 %v551, %v557
        %v591 = vpack.c.bf16 %v560, %v559
        %v592 = vpack.c.bf16 %v562, %v561
        %v593 = vpack.c.bf16 %v564, %v563
        %v594 = vpack.c.bf16 %v566, %v565
        %v595 = vpack.c.bf16 %v568, %v567
        %v596 = vpack.c.bf16 %v570, %v569
        %v597 = vpack.c.bf16 %v572, %v571
        %v598 = vpack.c.bf16 %v574, %v573
        %v599 = vpack.c.bf16 %v576, %v575
        %v600 = vpack.c.bf16 %v578, %v577
        %v601 = vpack.c.bf16 %v580, %v579
        %v602 = vpack.c.bf16 %v582, %v581
        %v603 = vpack.c.bf16 %v584, %v583
        %v604 = vpack.c.bf16 %v586, %v585
        %v605 = vpack.c.bf16 %v588, %v587
        %v606 = vpack.c.bf16 %v590, %v589
        %v623 = vunpack.c.l.b16 %v591
        %v624 = vunpack.c.h.b16 %v591
        %v625 = vunpack.c.l.b16 %v592
        %v626 = vunpack.c.h.b16 %v592
        %v627 = vunpack.c.l.b16 %v593
        %v628 = vunpack.c.h.b16 %v593
        %v629 = vunpack.c.l.b16 %v594
        %v630 = vunpack.c.h.b16 %v594
        %v631 = vunpack.c.l.b16 %v595
        %v632 = vunpack.c.h.b16 %v595
        %v633 = vunpack.c.l.b16 %v596
        %v634 = vunpack.c.h.b16 %v596
        %v635 = vunpack.c.l.b16 %v597
        %v636 = vunpack.c.h.b16 %v597
        %v637 = vunpack.c.l.b16 %v598
        %v638 = vunpack.c.h.b16 %v598
        %v639 = vunpack.c.l.b16 %v599
        %v640 = vunpack.c.h.b16 %v599
        %v641 = vunpack.c.l.b16 %v600
        %v642 = vunpack.c.h.b16 %v600
        %v643 = vunpack.c.l.b16 %v601
        %v644 = vunpack.c.h.b16 %v601
        %v645 = vunpack.c.l.b16 %v602
        %v646 = vunpack.c.h.b16 %v602
        %v647 = vunpack.c.l.b16 %v603
        %v648 = vunpack.c.h.b16 %v603
        %v649 = vunpack.c.l.b16 %v604
        %v650 = vunpack.c.h.b16 %v604
        %v651 = vunpack.c.l.b16 %v605
        %v652 = vunpack.c.h.b16 %v605
        %v653 = vunpack.c.l.b16 %v606
        %v654 = vunpack.c.h.b16 %v606
        %v655 = vpack.c.b16 %v623, %v623
        %v656 = vpack.c.b16 %v624, %v624
        %v657 = vpack.c.b16 %v625, %v625
        %v658 = vpack.c.b16 %v626, %v626
        %v659 = vpack.c.b16 %v627, %v627
        %v660 = vpack.c.b16 %v628, %v628
        %v661 = vpack.c.b16 %v629, %v629
        %v662 = vpack.c.b16 %v630, %v630
        %v663 = vpack.c.b16 %v631, %v631
        %v664 = vpack.c.b16 %v632, %v632
        %v665 = vpack.c.b16 %v633, %v633
        %v666 = vpack.c.b16 %v634, %v634
        %v667 = vpack.c.b16 %v635, %v635
        %v668 = vpack.c.b16 %v636, %v636
        %v669 = vpack.c.b16 %v637, %v637
        %v670 = vpack.c.b16 %v638, %v638
        %v671 = vpack.c.b16 %v639, %v639
        %v672 = vpack.c.b16 %v640, %v640
        %v673 = vpack.c.b16 %v641, %v641
        %v674 = vpack.c.b16 %v642, %v642
        %v675 = vpack.c.b16 %v643, %v643
        %v676 = vpack.c.b16 %v644, %v644
        %v677 = vpack.c.b16 %v645, %v645
        %v678 = vpack.c.b16 %v646, %v646
        %v679 = vpack.c.b16 %v647, %v647
        %v680 = vpack.c.b16 %v648, %v648
        %v681 = vpack.c.b16 %v649, %v649
        %v682 = vpack.c.b16 %v650, %v650
        %v683 = vpack.c.b16 %v651, %v651
        %v684 = vpack.c.b16 %v652, %v652
        %v685 = vpack.c.b16 %v653, %v653
        %v686 = vpack.c.b16 %v654, %v654
        %719 = vst [vmem:[%s417 + $0x4] sm:$0xf] %v655
        %720 = vst [vmem:[%s417 + $0x10] sm:$0xf] %v656
        %721 = vst [vmem:[%s417 + $0x1c] sm:$0xf] %v657
        %722 = vst [vmem:[%s417 + $0x28] sm:$0xf] %v658
        %723 = vst [vmem:[%s417 + $0x34] sm:$0xf] %v659
        %724 = vst [vmem:[%s417 + $0x40] sm:$0xf] %v660
        %725 = vst [vmem:[%s417 + $0x4c] sm:$0xf] %v661
        %726 = vst [vmem:[%s417 + $0x58] sm:$0xf] %v662
        %727 = vst [vmem:[%s417 + $0x64] sm:$0xf] %v663
        %728 = vst [vmem:[%s417 + $0x70] sm:$0xf] %v664
        %729 = vst [vmem:[%s417 + $0x7c] sm:$0xf] %v665
        %730 = vst [vmem:[%s417 + $0x88] sm:$0xf] %v666
        %731 = vst [vmem:[%s417 + $0x94] sm:$0xf] %v667
        %732 = vst [vmem:[%s417 + $0xa0] sm:$0xf] %v668
        %733 = vst [vmem:[%s417 + $0xac] sm:$0xf] %v669
        %734 = vst [vmem:[%s417 + $0xb8] sm:$0xf] %v670
        %735 = vst [vmem:[%s417 + $0xc4] sm:$0xf] %v671
        %736 = vst [vmem:[%s417 + $0xd0] sm:$0xf] %v672
        %737 = vst [vmem:[%s417 + $0xdc] sm:$0xf] %v673
        %738 = vst [vmem:[%s417 + $0xe8] sm:$0xf] %v674
        %739 = vst [vmem:[%s417 + $0xf4] sm:$0xf] %v675
        %740 = vst [vmem:[%s417 + $0x100] sm:$0xf] %v676
        %741 = vst [vmem:[%s417 + $0x10c] sm:$0xf] %v677
        %742 = vst [vmem:[%s417 + $0x118] sm:$0xf] %v678
        %743 = vst [vmem:[%s417 + $0x124] sm:$0xf] %v679
        %744 = vst [vmem:[%s417 + $0x130] sm:$0xf] %v680
        %745 = vst [vmem:[%s417 + $0x13c] sm:$0xf] %v681
        %746 = vst [vmem:[%s417 + $0x148] sm:$0xf] %v682
        %747 = vst [vmem:[%s417 + $0x154] sm:$0xf] %v683
        %748 = vst [vmem:[%s417 + $0x160] sm:$0xf] %v684
        %749 = vst [vmem:[%s417 + $0x16c] sm:$0xf] %v685
        %750 = vst [vmem:[%s417 + $0x178] sm:$0xf] %v686
        %vm751 = vsmask.f32 4368
        %vm752 = vmor %vm419, %vm751
        %v754 = vshrl.u32 %v655, 16
        %v756 = vrot.slane %v754, 7
        %v757 = vshll.u32 %v655, 16
        %v759 = vor.u32 %v756, %v757
        %v760 = vrot.slane %v756, 4
        %v762 = vshrl.u32 %v656, 16
        %v764 = vrot.slane %v762, 7
        %v765 = vshll.u32 %v656, 16
        %v767 = vor.u32 %v764, %v765
        %v768 = vsel %vm752, %v760, %v767
        %v770 = vshrl.u32 %v657, 16
        %v772 = vrot.slane %v770, 7
        %v773 = vshll.u32 %v657, 16
        %v775 = vor.u32 %v772, %v773
        %v776 = vrot.slane %v772, 4
        %v778 = vshrl.u32 %v658, 16
        %v780 = vrot.slane %v778, 7
        %v781 = vshll.u32 %v658, 16
        %v783 = vor.u32 %v780, %v781
        %v784 = vsel %vm752, %v776, %v783
        %v786 = vshrl.u32 %v659, 16
        %v788 = vrot.slane %v786, 7
        %v789 = vshll.u32 %v659, 16
        %v791 = vor.u32 %v788, %v789
        %v792 = vrot.slane %v788, 4
        %v794 = vshrl.u32 %v660, 16
        %v796 = vrot.slane %v794, 7
        %v797 = vshll.u32 %v660, 16
        %v799 = vor.u32 %v796, %v797
        %v800 = vsel %vm752, %v792, %v799
        %v802 = vshrl.u32 %v661, 16
        %v804 = vrot.slane %v802, 7
        %v805 = vshll.u32 %v661, 16
        %v807 = vor.u32 %v804, %v805
        %v808 = vrot.slane %v804, 4
        %v810 = vshrl.u32 %v662, 16
        %v812 = vrot.slane %v810, 7
        %v813 = vshll.u32 %v662, 16
        %v815 = vor.u32 %v812, %v813
        %v816 = vsel %vm752, %v808, %v815
        %v818 = vshrl.u32 %v663, 16
        %v820 = vrot.slane %v818, 7
        %v821 = vshll.u32 %v663, 16
        %v823 = vor.u32 %v820, %v821
        %v824 = vrot.slane %v820, 4
        %v826 = vshrl.u32 %v664, 16
        %v828 = vrot.slane %v826, 7
        %v829 = vshll.u32 %v664, 16
        %v831 = vor.u32 %v828, %v829
        %v832 = vsel %vm752, %v824, %v831
        %v834 = vshrl.u32 %v665, 16
        %v836 = vrot.slane %v834, 7
        %v837 = vshll.u32 %v665, 16
        %v839 = vor.u32 %v836, %v837
        %v840 = vrot.slane %v836, 4
        %v842 = vshrl.u32 %v666, 16
        %v844 = vrot.slane %v842, 7
        %v845 = vshll.u32 %v666, 16
        %v847 = vor.u32 %v844, %v845
        %v848 = vsel %vm752, %v840, %v847
        %v850 = vshrl.u32 %v667, 16
        %v852 = vrot.slane %v850, 7
        %v853 = vshll.u32 %v667, 16
        %v855 = vor.u32 %v852, %v853
        %v856 = vrot.slane %v852, 4
        %v858 = vshrl.u32 %v668, 16
        %v860 = vrot.slane %v858, 7
        %v861 = vshll.u32 %v668, 16
        %v863 = vor.u32 %v860, %v861
        %v864 = vsel %vm752, %v856, %v863
        %v866 = vshrl.u32 %v669, 16
        %v868 = vrot.slane %v866, 7
        %v869 = vshll.u32 %v669, 16
        %v871 = vor.u32 %v868, %v869
        %v872 = vrot.slane %v868, 4
        %v874 = vshrl.u32 %v670, 16
        %v876 = vrot.slane %v874, 7
        %v877 = vshll.u32 %v670, 16
        %v879 = vor.u32 %v876, %v877
        %v880 = vsel %vm752, %v872, %v879
        %v882 = vshrl.u32 %v671, 16
        %v884 = vrot.slane %v882, 7
        %v885 = vshll.u32 %v671, 16
        %v887 = vor.u32 %v884, %v885
        %v888 = vrot.slane %v884, 4
        %v890 = vshrl.u32 %v672, 16
        %v892 = vrot.slane %v890, 7
        %v893 = vshll.u32 %v672, 16
        %v895 = vor.u32 %v892, %v893
        %v896 = vsel %vm752, %v888, %v895
        %v898 = vshrl.u32 %v673, 16
        %v900 = vrot.slane %v898, 7
        %v901 = vshll.u32 %v673, 16
        %v903 = vor.u32 %v900, %v901
        %v904 = vrot.slane %v900, 4
        %v906 = vshrl.u32 %v674, 16
        %v908 = vrot.slane %v906, 7
        %v909 = vshll.u32 %v674, 16
        %v911 = vor.u32 %v908, %v909
        %v912 = vsel %vm752, %v904, %v911
        %v914 = vshrl.u32 %v675, 16
        %v916 = vrot.slane %v914, 7
        %v917 = vshll.u32 %v675, 16
        %v919 = vor.u32 %v916, %v917
        %v920 = vrot.slane %v916, 4
        %v922 = vshrl.u32 %v676, 16
        %v924 = vrot.slane %v922, 7
        %v925 = vshll.u32 %v676, 16
        %v927 = vor.u32 %v924, %v925
        %v928 = vsel %vm752, %v920, %v927
        %v930 = vshrl.u32 %v677, 16
        %v932 = vrot.slane %v930, 7
        %v933 = vshll.u32 %v677, 16
        %v935 = vor.u32 %v932, %v933
        %v936 = vrot.slane %v932, 4
        %v938 = vshrl.u32 %v678, 16
        %v940 = vrot.slane %v938, 7
        %v941 = vshll.u32 %v678, 16
        %v943 = vor.u32 %v940, %v941
        %v944 = vsel %vm752, %v936, %v943
        %v946 = vshrl.u32 %v679, 16
        %v948 = vrot.slane %v946, 7
        %v949 = vshll.u32 %v679, 16
        %v951 = vor.u32 %v948, %v949
        %v952 = vrot.slane %v948, 4
        %v954 = vshrl.u32 %v680, 16
        %v956 = vrot.slane %v954, 7
        %v957 = vshll.u32 %v680, 16
        %v959 = vor.u32 %v956, %v957
        %v960 = vsel %vm752, %v952, %v959
        %v962 = vshrl.u32 %v681, 16
        %v964 = vrot.slane %v962, 7
        %v965 = vshll.u32 %v681, 16
        %v967 = vor.u32 %v964, %v965
        %v968 = vrot.slane %v964, 4
        %v970 = vshrl.u32 %v682, 16
        %v972 = vrot.slane %v970, 7
        %v973 = vshll.u32 %v682, 16
        %v975 = vor.u32 %v972, %v973
        %v976 = vsel %vm752, %v968, %v975
        %v978 = vshrl.u32 %v683, 16
        %v980 = vrot.slane %v978, 7
        %v981 = vshll.u32 %v683, 16
        %v983 = vor.u32 %v980, %v981
        %v984 = vrot.slane %v980, 4
        %v986 = vshrl.u32 %v684, 16
        %v988 = vrot.slane %v986, 7
        %v989 = vshll.u32 %v684, 16
        %v991 = vor.u32 %v988, %v989
        %v992 = vsel %vm752, %v984, %v991
        %v994 = vshrl.u32 %v685, 16
        %v996 = vrot.slane %v994, 7
        %v997 = vshll.u32 %v685, 16
        %v999 = vor.u32 %v996, %v997
        %v1000 = vrot.slane %v996, 4
        %v1002 = vshrl.u32 %v686, 16
        %v1004 = vrot.slane %v1002, 7
        %v1005 = vshll.u32 %v686, 16
        %v1007 = vor.u32 %v1004, %v1005
        %v1008 = vsel %vm752, %v1000, %v1007
        %vm1041 = vcmask 1043456
        %vm1042 = vsmask.f32 7938
        %vm1043 = vmand %vm1041, %vm1042
        %v1044 = vld [vmem:[%s417] sm:$0xf]
        %v1045 = vsel %vm1043, %v759, %v1044
        %1046 = vst [vmem:[%s417] sm:$0xf] %v1045
        %1047 = vst [vmem:[%s417 + $0xc] sm:$0xf] %v768
        %v1048 = vld [vmem:[%s417 + $0x18] sm:$0xf]
        %v1049 = vsel %vm1043, %v775, %v1048
        %1050 = vst [vmem:[%s417 + $0x18] sm:$0xf] %v1049
        %1051 = vst [vmem:[%s417 + $0x24] sm:$0xf] %v784
        %v1052 = vld [vmem:[%s417 + $0x30] sm:$0xf]
        %v1053 = vsel %vm1043, %v791, %v1052
        %1054 = vst [vmem:[%s417 + $0x30] sm:$0xf] %v1053
        %1055 = vst [vmem:[%s417 + $0x3c] sm:$0xf] %v800
        %v1056 = vld [vmem:[%s417 + $0x48] sm:$0xf]
        %v1057 = vsel %vm1043, %v807, %v1056
        %1058 = vst [vmem:[%s417 + $0x48] sm:$0xf] %v1057
        %1059 = vst [vmem:[%s417 + $0x54] sm:$0xf] %v816
        %v1060 = vld [vmem:[%s417 + $0x60] sm:$0xf]
        %v1061 = vsel %vm1043, %v823, %v1060
        %1062 = vst [vmem:[%s417 + $0x60] sm:$0xf] %v1061
        %1063 = vst [vmem:[%s417 + $0x6c] sm:$0xf] %v832
        %v1064 = vld [vmem:[%s417 + $0x78] sm:$0xf]
        %v1065 = vsel %vm1043, %v839, %v1064
        %1066 = vst [vmem:[%s417 + $0x78] sm:$0xf] %v1065
        %1067 = vst [vmem:[%s417 + $0x84] sm:$0xf] %v848
        %v1068 = vld [vmem:[%s417 + $0x90] sm:$0xf]
        %v1069 = vsel %vm1043, %v855, %v1068
        %1070 = vst [vmem:[%s417 + $0x90] sm:$0xf] %v1069
        %1071 = vst [vmem:[%s417 + $0x9c] sm:$0xf] %v864
        %v1072 = vld [vmem:[%s417 + $0xa8] sm:$0xf]
        %v1073 = vsel %vm1043, %v871, %v1072
        %1074 = vst [vmem:[%s417 + $0xa8] sm:$0xf] %v1073
        %1075 = vst [vmem:[%s417 + $0xb4] sm:$0xf] %v880
        %v1076 = vld [vmem:[%s417 + $0xc0] sm:$0xf]
        %v1077 = vsel %vm1043, %v887, %v1076
        %1078 = vst [vmem:[%s417 + $0xc0] sm:$0xf] %v1077
        %1079 = vst [vmem:[%s417 + $0xcc] sm:$0xf] %v896
        %v1080 = vld [vmem:[%s417 + $0xd8] sm:$0xf]
        %v1081 = vsel %vm1043, %v903, %v1080
        %1082 = vst [vmem:[%s417 + $0xd8] sm:$0xf] %v1081
        %1083 = vst [vmem:[%s417 + $0xe4] sm:$0xf] %v912
        %v1084 = vld [vmem:[%s417 + $0xf0] sm:$0xf]
        %v1085 = vsel %vm1043, %v919, %v1084
        %1086 = vst [vmem:[%s417 + $0xf0] sm:$0xf] %v1085
        %1087 = vst [vmem:[%s417 + $0xfc] sm:$0xf] %v928
        %v1088 = vld [vmem:[%s417 + $0x108] sm:$0xf]
        %v1089 = vsel %vm1043, %v935, %v1088
        %1090 = vst [vmem:[%s417 + $0x108] sm:$0xf] %v1089
        %1091 = vst [vmem:[%s417 + $0x114] sm:$0xf] %v944
        %v1092 = vld [vmem:[%s417 + $0x120] sm:$0xf]
        %v1093 = vsel %vm1043, %v951, %v1092
        %1094 = vst [vmem:[%s417 + $0x120] sm:$0xf] %v1093
        %1095 = vst [vmem:[%s417 + $0x12c] sm:$0xf] %v960
        %v1096 = vld [vmem:[%s417 + $0x138] sm:$0xf]
        %v1097 = vsel %vm1043, %v967, %v1096
        %1098 = vst [vmem:[%s417 + $0x138] sm:$0xf] %v1097
        %1099 = vst [vmem:[%s417 + $0x144] sm:$0xf] %v976
        %v1100 = vld [vmem:[%s417 + $0x150] sm:$0xf]
        %v1101 = vsel %vm1043, %v983, %v1100
        %1102 = vst [vmem:[%s417 + $0x150] sm:$0xf] %v1101
        %1103 = vst [vmem:[%s417 + $0x15c] sm:$0xf] %v992
        %v1104 = vld [vmem:[%s417 + $0x168] sm:$0xf]
        %v1105 = vsel %vm1043, %v999, %v1104
        %1106 = vst [vmem:[%s417 + $0x168] sm:$0xf] %v1105
        %1107 = vst [vmem:[%s417 + $0x174] sm:$0xf] %v1008
        %vm1108 = vsmask.f32 3328
        %vm1109 = vsmask.f32 7440
        %vm1110 = vmor %vm1108, %vm1109
        %v1111 = vrot.slane %v754, 4
        %v1112 = vrot.slane %v757, 5
        %v1113 = vor.u32 %v1111, %v1112
        %v1114 = vrot.slane %v1113, 4
        %v1115 = vrot.slane %v765, 5
        %v1116 = vsel %vm1110, %v1114, %v1115
        %v1117 = vrot.slane %v762, 4
        %v1118 = vor.u32 %v1117, %v1115
        %v1119 = vrot.slane %v1118, 4
        %v1120 = vrot.slane %v770, 4
        %v1121 = vrot.slane %v773, 5
        %v1122 = vor.u32 %v1120, %v1121
        %v1123 = vrot.slane %v1122, 4
        %v1124 = vrot.slane %v781, 5
        %v1125 = vsel %vm1110, %v1123, %v1124
        %v1126 = vrot.slane %v778, 4
        %v1127 = vor.u32 %v1126, %v1124
        %v1128 = vrot.slane %v1127, 4
        %v1129 = vrot.slane %v786, 4
        %v1130 = vrot.slane %v789, 5
        %v1131 = vor.u32 %v1129, %v1130
        %v1132 = vrot.slane %v1131, 4
        %v1133 = vrot.slane %v797, 5
        %v1134 = vsel %vm1110, %v1132, %v1133
        %v1135 = vrot.slane %v794, 4
        %v1136 = vor.u32 %v1135, %v1133
        %v1137 = vrot.slane %v1136, 4
        %v1138 = vrot.slane %v802, 4
        %v1139 = vrot.slane %v805, 5
        %v1140 = vor.u32 %v1138, %v1139
        %v1141 = vrot.slane %v1140, 4
        %v1142 = vrot.slane %v813, 5
        %v1143 = vsel %vm1110, %v1141, %v1142
        %v1144 = vrot.slane %v810, 4
        %v1145 = vor.u32 %v1144, %v1142
        %v1146 = vrot.slane %v1145, 4
        %v1147 = vrot.slane %v818, 4
        %v1148 = vrot.slane %v821, 5
        %v1149 = vor.u32 %v1147, %v1148
        %v1150 = vrot.slane %v1149, 4
        %v1151 = vrot.slane %v829, 5
        %v1152 = vsel %vm1110, %v1150, %v1151
        %v1153 = vrot.slane %v826, 4
        %v1154 = vor.u32 %v1153, %v1151
        %v1155 = vrot.slane %v1154, 4
        %v1156 = vrot.slane %v834, 4
        %v1157 = vrot.slane %v837, 5
        %v1158 = vor.u32 %v1156, %v1157
        %v1159 = vrot.slane %v1158, 4
        %v1160 = vrot.slane %v845, 5
        %v1161 = vsel %vm1110, %v1159, %v1160
        %v1162 = vrot.slane %v842, 4
        %v1163 = vor.u32 %v1162, %v1160
        %v1164 = vrot.slane %v1163, 4
        %v1165 = vrot.slane %v850, 4
        %v1166 = vrot.slane %v853, 5
        %v1167 = vor.u32 %v1165, %v1166
        %v1168 = vrot.slane %v1167, 4
        %v1169 = vrot.slane %v861, 5
        %v1170 = vsel %vm1110, %v1168, %v1169
        %v1171 = vrot.slane %v858, 4
        %v1172 = vor.u32 %v1171, %v1169
        %v1173 = vrot.slane %v1172, 4
        %v1174 = vrot.slane %v866, 4
        %v1175 = vrot.slane %v869, 5
        %v1176 = vor.u32 %v1174, %v1175
        %v1177 = vrot.slane %v1176, 4
        %v1178 = vrot.slane %v877, 5
        %v1179 = vsel %vm1110, %v1177, %v1178
        %v1180 = vrot.slane %v874, 4
        %v1181 = vor.u32 %v1180, %v1178
        %v1182 = vrot.slane %v1181, 4
        %v1183 = vrot.slane %v882, 4
        %v1184 = vrot.slane %v885, 5
        %v1185 = vor.u32 %v1183, %v1184
        %v1186 = vrot.slane %v1185, 4
        %v1187 = vrot.slane %v893, 5
        %v1188 = vsel %vm1110, %v1186, %v1187
        %v1189 = vrot.slane %v890, 4
        %v1190 = vor.u32 %v1189, %v1187
        %v1191 = vrot.slane %v1190, 4
        %v1192 = vrot.slane %v898, 4
        %v1193 = vrot.slane %v901, 5
        %v1194 = vor.u32 %v1192, %v1193
        %v1195 = vrot.slane %v1194, 4
        %v1196 = vrot.slane %v909, 5
        %v1197 = vsel %vm1110, %v1195, %v1196
        %v1198 = vrot.slane %v906, 4
        %v1199 = vor.u32 %v1198, %v1196
        %v1200 = vrot.slane %v1199, 4
        %v1201 = vrot.slane %v914, 4
        %v1202 = vrot.slane %v917, 5
        %v1203 = vor.u32 %v1201, %v1202
        %v1204 = vrot.slane %v1203, 4
        %v1205 = vrot.slane %v925, 5
        %v1206 = vsel %vm1110, %v1204, %v1205
        %v1207 = vrot.slane %v922, 4
        %v1208 = vor.u32 %v1207, %v1205
        %v1209 = vrot.slane %v1208, 4
        %v1210 = vrot.slane %v930, 4
        %v1211 = vrot.slane %v933, 5
        %v1212 = vor.u32 %v1210, %v1211
        %v1213 = vrot.slane %v1212, 4
        %v1214 = vrot.slane %v941, 5
        %v1215 = vsel %vm1110, %v1213, %v1214
        %v1216 = vrot.slane %v938, 4
        %v1217 = vor.u32 %v1216, %v1214
        %v1218 = vrot.slane %v1217, 4
        %v1219 = vrot.slane %v946, 4
        %v1220 = vrot.slane %v949, 5
        %v1221 = vor.u32 %v1219, %v1220
        %v1222 = vrot.slane %v1221, 4
        %v1223 = vrot.slane %v957, 5
        %v1224 = vsel %vm1110, %v1222, %v1223
        %v1225 = vrot.slane %v954, 4
        %v1226 = vor.u32 %v1225, %v1223
        %v1227 = vrot.slane %v1226, 4
        %v1228 = vrot.slane %v962, 4
        %v1229 = vrot.slane %v965, 5
        %v1230 = vor.u32 %v1228, %v1229
        %v1231 = vrot.slane %v1230, 4
        %v1232 = vrot.slane %v973, 5
        %v1233 = vsel %vm1110, %v1231, %v1232
        %v1234 = vrot.slane %v970, 4
        %v1235 = vor.u32 %v1234, %v1232
        %v1236 = vrot.slane %v1235, 4
        %v1237 = vrot.slane %v978, 4
        %v1238 = vrot.slane %v981, 5
        %v1239 = vor.u32 %v1237, %v1238
        %v1240 = vrot.slane %v1239, 4
        %v1241 = vrot.slane %v989, 5
        %v1242 = vsel %vm1110, %v1240, %v1241
        %v1243 = vrot.slane %v986, 4
        %v1244 = vor.u32 %v1243, %v1241
        %v1245 = vrot.slane %v1244, 4
        %v1246 = vrot.slane %v994, 4
        %v1247 = vrot.slane %v997, 5
        %v1248 = vor.u32 %v1246, %v1247
        %v1249 = vrot.slane %v1248, 4
        %v1250 = vrot.slane %v1005, 5
        %v1251 = vsel %vm1110, %v1249, %v1250
        %v1252 = vrot.slane %v1002, 4
        %v1253 = vor.u32 %v1252, %v1250
        %v1254 = vrot.slane %v1253, 4
        %1287 = vst [vmem:[%s417 + $0x8] sm:$0xf] %v1116
        %vm1288 = vmand %vm1041, %vm1108
        %v1289 = vld [vmem:[%s417 + $0x14] sm:$0xf]
        %v1290 = vsel %vm1288, %v1119, %v1289
        %1291 = vst [vmem:[%s417 + $0x14] sm:$0xf] %v1290
        %1292 = vst [vmem:[%s417 + $0x20] sm:$0xf] %v1125
        %v1293 = vld [vmem:[%s417 + $0x2c] sm:$0xf]
        %v1294 = vsel %vm1288, %v1128, %v1293
        %1295 = vst [vmem:[%s417 + $0x2c] sm:$0xf] %v1294
        %1296 = vst [vmem:[%s417 + $0x38] sm:$0xf] %v1134
        %v1297 = vld [vmem:[%s417 + $0x44] sm:$0xf]
        %v1298 = vsel %vm1288, %v1137, %v1297
        %1299 = vst [vmem:[%s417 + $0x44] sm:$0xf] %v1298
        %1300 = vst [vmem:[%s417 + $0x50] sm:$0xf] %v1143
        %v1301 = vld [vmem:[%s417 + $0x5c] sm:$0xf]
        %v1302 = vsel %vm1288, %v1146, %v1301
        %1303 = vst [vmem:[%s417 + $0x5c] sm:$0xf] %v1302
        %1304 = vst [vmem:[%s417 + $0x68] sm:$0xf] %v1152
        %v1305 = vld [vmem:[%s417 + $0x74] sm:$0xf]
        %v1306 = vsel %vm1288, %v1155, %v1305
        %1307 = vst [vmem:[%s417 + $0x74] sm:$0xf] %v1306
        %1308 = vst [vmem:[%s417 + $0x80] sm:$0xf] %v1161
        %v1309 = vld [vmem:[%s417 + $0x8c] sm:$0xf]
        %v1310 = vsel %vm1288, %v1164, %v1309
        %1311 = vst [vmem:[%s417 + $0x8c] sm:$0xf] %v1310
        %1312 = vst [vmem:[%s417 + $0x98] sm:$0xf] %v1170
        %v1313 = vld [vmem:[%s417 + $0xa4] sm:$0xf]
        %v1314 = vsel %vm1288, %v1173, %v1313
        %1315 = vst [vmem:[%s417 + $0xa4] sm:$0xf] %v1314
        %1316 = vst [vmem:[%s417 + $0xb0] sm:$0xf] %v1179
        %v1317 = vld [vmem:[%s417 + $0xbc] sm:$0xf]
        %v1318 = vsel %vm1288, %v1182, %v1317
        %1319 = vst [vmem:[%s417 + $0xbc] sm:$0xf] %v1318
        %1320 = vst [vmem:[%s417 + $0xc8] sm:$0xf] %v1188
        %v1321 = vld [vmem:[%s417 + $0xd4] sm:$0xf]
        %v1322 = vsel %vm1288, %v1191, %v1321
        %1323 = vst [vmem:[%s417 + $0xd4] sm:$0xf] %v1322
        %1324 = vst [vmem:[%s417 + $0xe0] sm:$0xf] %v1197
        %v1325 = vld [vmem:[%s417 + $0xec] sm:$0xf]
        %v1326 = vsel %vm1288, %v1200, %v1325
        %1327 = vst [vmem:[%s417 + $0xec] sm:$0xf] %v1326
        %1328 = vst [vmem:[%s417 + $0xf8] sm:$0xf] %v1206
        %v1329 = vld [vmem:[%s417 + $0x104] sm:$0xf]
        %v1330 = vsel %vm1288, %v1209, %v1329
        %1331 = vst [vmem:[%s417 + $0x104] sm:$0xf] %v1330
        %1332 = vst [vmem:[%s417 + $0x110] sm:$0xf] %v1215
        %v1333 = vld [vmem:[%s417 + $0x11c] sm:$0xf]
        %v1334 = vsel %vm1288, %v1218, %v1333
        %1335 = vst [vmem:[%s417 + $0x11c] sm:$0xf] %v1334
        %1336 = vst [vmem:[%s417 + $0x128] sm:$0xf] %v1224
        %v1337 = vld [vmem:[%s417 + $0x134] sm:$0xf]
        %v1338 = vsel %vm1288, %v1227, %v1337
        %1339 = vst [vmem:[%s417 + $0x134] sm:$0xf] %v1338
        %1340 = vst [vmem:[%s417 + $0x140] sm:$0xf] %v1233
        %v1341 = vld [vmem:[%s417 + $0x14c] sm:$0xf]
        %v1342 = vsel %vm1288, %v1236, %v1341
        %1343 = vst [vmem:[%s417 + $0x14c] sm:$0xf] %v1342
        %1344 = vst [vmem:[%s417 + $0x158] sm:$0xf] %v1242
        %v1345 = vld [vmem:[%s417 + $0x164] sm:$0xf]
        %v1346 = vsel %vm1288, %v1245, %v1345
        %1347 = vst [vmem:[%s417 + $0x164] sm:$0xf] %v1346
        %1348 = vst [vmem:[%s417 + $0x170] sm:$0xf] %v1251
        %v1349 = vld [vmem:[%s417 + $0x17c] sm:$0xf]
        %v1350 = vsel %vm1288, %v1254, %v1349
        %1351 = vst [vmem:[%s417 + $0x17c] sm:$0xf] %v1350
        %v1352 = vld [vmem:[#allocation2] sm:$0xff]
        %v1353 = vld [vmem:[#allocation2 + $0x8] sm:$0xf]
        %v1354 = vld [vmem:[#allocation2 + $0xc] sm:$0xff]
        %v1355 = vld [vmem:[#allocation2 + $0x14] sm:$0xf]
        %v1356 = vld [vmem:[#allocation2 + $0x18] sm:$0xff]
        %v1357 = vld [vmem:[#allocation2 + $0x20] sm:$0xf]
        %v1358 = vld [vmem:[#allocation2 + $0x24] sm:$0xff]
        %v1359 = vld [vmem:[#allocation2 + $0x2c] sm:$0xf]
        %v1360 = vld [vmem:[#allocation2 + $0x30] sm:$0xff]
        %v1361 = vld [vmem:[#allocation2 + $0x38] sm:$0xf]
        %v1362 = vld [vmem:[#allocation2 + $0x3c] sm:$0xff]
        %v1363 = vld [vmem:[#allocation2 + $0x44] sm:$0xf]
        %v1364 = vld [vmem:[#allocation2 + $0x48] sm:$0xff]
        %v1365 = vld [vmem:[#allocation2 + $0x50] sm:$0xf]
        %v1366 = vld [vmem:[#allocation2 + $0x54] sm:$0xff]
        %v1367 = vld [vmem:[#allocation2 + $0x5c] sm:$0xf]
        %v1368 = vld [vmem:[#allocation2 + $0x60] sm:$0xff]
        %v1369 = vld [vmem:[#allocation2 + $0x68] sm:$0xf]
        %v1370 = vld [vmem:[#allocation2 + $0x6c] sm:$0xff]
        %v1371 = vld [vmem:[#allocation2 + $0x74] sm:$0xf]
        %v1372 = vld [vmem:[#allocation2 + $0x78] sm:$0xff]
        %v1373 = vld [vmem:[#allocation2 + $0x80] sm:$0xf]
        %v1374 = vld [vmem:[#allocation2 + $0x84] sm:$0xff]
        %v1375 = vld [vmem:[#allocation2 + $0x8c] sm:$0xf]
        %v1376 = vld [vmem:[#allocation2 + $0x90] sm:$0xff]
        %v1377 = vld [vmem:[#allocation2 + $0x98] sm:$0xf]
        %v1378 = vld [vmem:[#allocation2 + $0x9c] sm:$0xff]
        %v1379 = vld [vmem:[#allocation2 + $0xa4] sm:$0xf]
        %v1380 = vld [vmem:[#allocation2 + $0xa8] sm:$0xff]
        %v1381 = vld [vmem:[#allocation2 + $0xb0] sm:$0xf]
        %v1382 = vld [vmem:[#allocation2 + $0xb4] sm:$0xff]
        %v1383 = vld [vmem:[#allocation2 + $0xbc] sm:$0xf]
        %v1384 = vld [vmem:[#allocation2 + $0xc0] sm:$0xff]
        %v1385 = vld [vmem:[#allocation2 + $0xc8] sm:$0xf]
        %v1386 = vld [vmem:[#allocation2 + $0xcc] sm:$0xff]
        %v1387 = vld [vmem:[#allocation2 + $0xd4] sm:$0xf]
        %v1388 = vld [vmem:[#allocation2 + $0xd8] sm:$0xff]
        %v1389 = vld [vmem:[#allocation2 + $0xe0] sm:$0xf]
        %v1390 = vld [vmem:[#allocation2 + $0xe4] sm:$0xff]
        %v1391 = vld [vmem:[#allocation2 + $0xec] sm:$0xf]
        %v1392 = vld [vmem:[#allocation2 + $0xf0] sm:$0xff]
        %v1393 = vld [vmem:[#allocation2 + $0xf8] sm:$0xf]
        %v1394 = vld [vmem:[#allocation2 + $0xfc] sm:$0xff]
        %v1395 = vld [vmem:[#allocation2 + $0x104] sm:$0xf]
        %v1396 = vld [vmem:[#allocation2 + $0x108] sm:$0xff]
        %v1397 = vld [vmem:[#allocation2 + $0x110] sm:$0xf]
        %v1398 = vld [vmem:[#allocation2 + $0x114] sm:$0xff]
        %v1399 = vld [vmem:[#allocation2 + $0x11c] sm:$0xf]
        %v1400 = vld [vmem:[#allocation2 + $0x120] sm:$0xff]
        %v1401 = vld [vmem:[#allocation2 + $0x128] sm:$0xf]
        %v1402 = vld [vmem:[#allocation2 + $0x12c] sm:$0xff]
        %v1403 = vld [vmem:[#allocation2 + $0x134] sm:$0xf]
        %v1404 = vld [vmem:[#allocation2 + $0x138] sm:$0xff]
        %v1405 = vld [vmem:[#allocation2 + $0x140] sm:$0xf]
        %v1406 = vld [vmem:[#allocation2 + $0x144] sm:$0xff]
        %v1407 = vld [vmem:[#allocation2 + $0x14c] sm:$0xf]
        %v1408 = vld [vmem:[#allocation2 + $0x150] sm:$0xff]
        %v1409 = vld [vmem:[#allocation2 + $0x158] sm:$0xf]
        %v1410 = vld [vmem:[#allocation2 + $0x15c] sm:$0xff]
        %v1411 = vld [vmem:[#allocation2 + $0x164] sm:$0xf]
        %v1412 = vld [vmem:[#allocation2 + $0x168] sm:$0xff]
        %v1413 = vld [vmem:[#allocation2 + $0x170] sm:$0xf]
        %v1414 = vld [vmem:[#allocation2 + $0x174] sm:$0xff]
        %v1415 = vld [vmem:[#allocation2 + $0x17c] sm:$0xf]
        %v1416 = vld [vmem:[#allocation6] sm:$0xff]
        %v1417 = vld [vmem:[#allocation6 + $0x8] sm:$0xff]
        %v1418 = vld [vmem:[#allocation6 + $0x10] sm:$0xff]
        %v1419 = vld [vmem:[#allocation6 + $0x18] sm:$0xff]
        %v1420 = vld [vmem:[#allocation6 + $0x20] sm:$0xff]
        %v1421 = vld [vmem:[#allocation6 + $0x28] sm:$0xff]
        %v1422 = vld [vmem:[#allocation6 + $0x30] sm:$0xff]
        %v1423 = vld [vmem:[#allocation6 + $0x38] sm:$0xff]
        %v1424 = vld [vmem:[#allocation6 + $0x40] sm:$0xff]
        %v1425 = vld [vmem:[#allocation6 + $0x48] sm:$0xff]
        %v1426 = vld [vmem:[#allocation6 + $0x50] sm:$0xff]
        %v1427 = vld [vmem:[#allocation6 + $0x58] sm:$0xff]
        %v1428 = vld [vmem:[#allocation6 + $0x60] sm:$0xff]
        %v1429 = vld [vmem:[#allocation6 + $0x68] sm:$0xff]
        %v1430 = vld [vmem:[#allocation6 + $0x70] sm:$0xff]
        %v1431 = vld [vmem:[#allocation6 + $0x78] sm:$0xff]
        %v1432 = vld [vmem:[#allocation6 + $0x80] sm:$0xff]
        %v1433 = vld [vmem:[#allocation6 + $0x88] sm:$0xff]
        %v1434 = vld [vmem:[#allocation6 + $0x90] sm:$0xff]
        %v1435 = vld [vmem:[#allocation6 + $0x98] sm:$0xff]
        %v1436 = vld [vmem:[#allocation6 + $0xa0] sm:$0xff]
        %v1437 = vld [vmem:[#allocation6 + $0xa8] sm:$0xff]
        %v1438 = vld [vmem:[#allocation6 + $0xb0] sm:$0xff]
        %v1439 = vld [vmem:[#allocation6 + $0xb8] sm:$0xff]
        %v1440 = vld [vmem:[#allocation6 + $0xc0] sm:$0xff]
        %v1441 = vld [vmem:[#allocation6 + $0xc8] sm:$0xff]
        %v1442 = vld [vmem:[#allocation6 + $0xd0] sm:$0xff]
        %v1443 = vld [vmem:[#allocation6 + $0xd8] sm:$0xff]
        %v1444 = vld [vmem:[#allocation6 + $0xe0] sm:$0xff]
        %v1445 = vld [vmem:[#allocation6 + $0xe8] sm:$0xff]
        %v1446 = vld [vmem:[#allocation6 + $0xf0] sm:$0xff]
        %v1447 = vld [vmem:[#allocation6 + $0xf8] sm:$0xff]
        %v1448 = vld [vmem:[#allocation6 + $0x100] sm:$0xff]
        %v1449 = vld [vmem:[#allocation6 + $0x108] sm:$0xff]
        %v1450 = vld [vmem:[#allocation6 + $0x110] sm:$0xff]
        %v1451 = vld [vmem:[#allocation6 + $0x118] sm:$0xff]
        %v1452 = vld [vmem:[#allocation6 + $0x120] sm:$0xff]
        %v1453 = vld [vmem:[#allocation6 + $0x128] sm:$0xff]
        %v1454 = vld [vmem:[#allocation6 + $0x130] sm:$0xff]
        %v1455 = vld [vmem:[#allocation6 + $0x138] sm:$0xff]
        %v1456 = vld [vmem:[#allocation6 + $0x140] sm:$0xff]
        %v1457 = vld [vmem:[#allocation6 + $0x148] sm:$0xff]
        %v1458 = vld [vmem:[#allocation6 + $0x150] sm:$0xff]
        %v1459 = vld [vmem:[#allocation6 + $0x158] sm:$0xff]
        %v1460 = vld [vmem:[#allocation6 + $0x160] sm:$0xff]
        %v1461 = vld [vmem:[#allocation6 + $0x168] sm:$0xff]
        %v1462 = vld [vmem:[#allocation6 + $0x170] sm:$0xff]
        %v1463 = vld [vmem:[#allocation6 + $0x178] sm:$0xff]
        %v1464 = vld [vmem:[%s417] sm:$0xff]
        %v1465 = vld [vmem:[%s417 + $0x8] sm:$0xf]
        %v1466 = vld [vmem:[%s417 + $0xc] sm:$0xff]
        %v1467 = vld [vmem:[%s417 + $0x14] sm:$0xf]
        %v1468 = vld [vmem:[%s417 + $0x18] sm:$0xff]
        %v1469 = vld [vmem:[%s417 + $0x20] sm:$0xf]
        %v1470 = vld [vmem:[%s417 + $0x24] sm:$0xff]
        %v1471 = vld [vmem:[%s417 + $0x2c] sm:$0xf]
        %v1472 = vld [vmem:[%s417 + $0x30] sm:$0xff]
        %v1473 = vld [vmem:[%s417 + $0x38] sm:$0xf]
        %v1474 = vld [vmem:[%s417 + $0x3c] sm:$0xff]
        %v1475 = vld [vmem:[%s417 + $0x44] sm:$0xf]
        %v1476 = vld [vmem:[%s417 + $0x48] sm:$0xff]
        %v1477 = vld [vmem:[%s417 + $0x50] sm:$0xf]
        %v1478 = vld [vmem:[%s417 + $0x54] sm:$0xff]
        %v1479 = vld [vmem:[%s417 + $0x5c] sm:$0xf]
        %v1480 = vld [vmem:[%s417 + $0x60] sm:$0xff]
        %v1481 = vld [vmem:[%s417 + $0x68] sm:$0xf]
        %v1482 = vld [vmem:[%s417 + $0x6c] sm:$0xff]
        %v1483 = vld [vmem:[%s417 + $0x74] sm:$0xf]
        %v1484 = vld [vmem:[%s417 + $0x78] sm:$0xff]
        %v1485 = vld [vmem:[%s417 + $0x80] sm:$0xf]
        %v1486 = vld [vmem:[%s417 + $0x84] sm:$0xff]
        %v1487 = vld [vmem:[%s417 + $0x8c] sm:$0xf]
        %v1488 = vld [vmem:[%s417 + $0x90] sm:$0xff]
        %v1489 = vld [vmem:[%s417 + $0x98] sm:$0xf]
        %v1490 = vld [vmem:[%s417 + $0x9c] sm:$0xff]
        %v1491 = vld [vmem:[%s417 + $0xa4] sm:$0xf]
        %v1492 = vld [vmem:[%s417 + $0xa8] sm:$0xff]
        %v1493 = vld [vmem:[%s417 + $0xb0] sm:$0xf]
        %v1494 = vld [vmem:[%s417 + $0xb4] sm:$0xff]
        %v1495 = vld [vmem:[%s417 + $0xbc] sm:$0xf]
        %v1496 = vld [vmem:[%s417 + $0xc0] sm:$0xff]
        %v1497 = vld [vmem:[%s417 + $0xc8] sm:$0xf]
        %v1498 = vld [vmem:[%s417 + $0xcc] sm:$0xff]
        %v1499 = vld [vmem:[%s417 + $0xd4] sm:$0xf]
        %v1500 = vld [vmem:[%s417 + $0xd8] sm:$0xff]
        %v1501 = vld [vmem:[%s417 + $0xe0] sm:$0xf]
        %v1502 = vld [vmem:[%s417 + $0xe4] sm:$0xff]
        %v1503 = vld [vmem:[%s417 + $0xec] sm:$0xf]
        %v1504 = vld [vmem:[%s417 + $0xf0] sm:$0xff]
        %v1505 = vld [vmem:[%s417 + $0xf8] sm:$0xf]
        %v1506 = vld [vmem:[%s417 + $0xfc] sm:$0xff]
        %v1507 = vld [vmem:[%s417 + $0x104] sm:$0xf]
        %v1508 = vld [vmem:[%s417 + $0x108] sm:$0xff]
        %v1509 = vld [vmem:[%s417 + $0x110] sm:$0xf]
        %v1510 = vld [vmem:[%s417 + $0x114] sm:$0xff]
        %v1511 = vld [vmem:[%s417 + $0x11c] sm:$0xf]
        %v1512 = vld [vmem:[%s417 + $0x120] sm:$0xff]
        %v1513 = vld [vmem:[%s417 + $0x128] sm:$0xf]
        %v1514 = vld [vmem:[%s417 + $0x12c] sm:$0xff]
        %v1515 = vld [vmem:[%s417 + $0x134] sm:$0xf]
        %v1516 = vld [vmem:[%s417 + $0x138] sm:$0xff]
        %v1517 = vld [vmem:[%s417 + $0x140] sm:$0xf]
        %v1518 = vld [vmem:[%s417 + $0x144] sm:$0xff]
        %v1519 = vld [vmem:[%s417 + $0x14c] sm:$0xf]
        %v1520 = vld [vmem:[%s417 + $0x150] sm:$0xff]
        %v1521 = vld [vmem:[%s417 + $0x158] sm:$0xf]
        %v1522 = vld [vmem:[%s417 + $0x15c] sm:$0xff]
        %v1523 = vld [vmem:[%s417 + $0x164] sm:$0xf]
        %v1524 = vld [vmem:[%s417 + $0x168] sm:$0xff]
        %v1525 = vld [vmem:[%s417 + $0x170] sm:$0xf]
        %v1526 = vld [vmem:[%s417 + $0x174] sm:$0xff]
        %v1527 = vld [vmem:[%s417 + $0x17c] sm:$0xf]
        %s1528 = scalar_lea.vmem [#allocation6], 384
        %v1529 = vld [vmem:[%s1528] sm:$0xff]
        %v1530 = vld [vmem:[%s1528 + $0x8] sm:$0xff]
        %v1531 = vld [vmem:[%s1528 + $0x10] sm:$0xff]
        %v1532 = vld [vmem:[%s1528 + $0x18] sm:$0xff]
        %v1533 = vld [vmem:[%s1528 + $0x20] sm:$0xff]
        %v1534 = vld [vmem:[%s1528 + $0x28] sm:$0xff]
        %v1535 = vld [vmem:[%s1528 + $0x30] sm:$0xff]
        %v1536 = vld [vmem:[%s1528 + $0x38] sm:$0xff]
        %v1537 = vld [vmem:[%s1528 + $0x40] sm:$0xff]
        %v1538 = vld [vmem:[%s1528 + $0x48] sm:$0xff]
        %v1539 = vld [vmem:[%s1528 + $0x50] sm:$0xff]
        %v1540 = vld [vmem:[%s1528 + $0x58] sm:$0xff]
        %v1541 = vld [vmem:[%s1528 + $0x60] sm:$0xff]
        %v1542 = vld [vmem:[%s1528 + $0x68] sm:$0xff]
        %v1543 = vld [vmem:[%s1528 + $0x70] sm:$0xff]
        %v1544 = vld [vmem:[%s1528 + $0x78] sm:$0xff]
        %v1545 = vld [vmem:[%s1528 + $0x80] sm:$0xff]
        %v1546 = vld [vmem:[%s1528 + $0x88] sm:$0xff]
        %v1547 = vld [vmem:[%s1528 + $0x90] sm:$0xff]
        %v1548 = vld [vmem:[%s1528 + $0x98] sm:$0xff]
        %v1549 = vld [vmem:[%s1528 + $0xa0] sm:$0xff]
        %v1550 = vld [vmem:[%s1528 + $0xa8] sm:$0xff]
        %v1551 = vld [vmem:[%s1528 + $0xb0] sm:$0xff]
        %v1552 = vld [vmem:[%s1528 + $0xb8] sm:$0xff]
        %v1553 = vld [vmem:[%s1528 + $0xc0] sm:$0xff]
        %v1554 = vld [vmem:[%s1528 + $0xc8] sm:$0xff]
        %v1555 = vld [vmem:[%s1528 + $0xd0] sm:$0xff]
        %v1556 = vld [vmem:[%s1528 + $0xd8] sm:$0xff]
        %v1557 = vld [vmem:[%s1528 + $0xe0] sm:$0xff]
        %v1558 = vld [vmem:[%s1528 + $0xe8] sm:$0xff]
        %v1559 = vld [vmem:[%s1528 + $0xf0] sm:$0xff]
        %v1560 = vld [vmem:[%s1528 + $0xf8] sm:$0xff]
        %v1561 = vld [vmem:[%s1528 + $0x100] sm:$0xff]
        %v1562 = vld [vmem:[%s1528 + $0x108] sm:$0xff]
        %v1563 = vld [vmem:[%s1528 + $0x110] sm:$0xff]
        %v1564 = vld [vmem:[%s1528 + $0x118] sm:$0xff]
        %v1565 = vld [vmem:[%s1528 + $0x120] sm:$0xff]
        %v1566 = vld [vmem:[%s1528 + $0x128] sm:$0xff]
        %v1567 = vld [vmem:[%s1528 + $0x130] sm:$0xff]
        %v1568 = vld [vmem:[%s1528 + $0x138] sm:$0xff]
        %v1569 = vld [vmem:[%s1528 + $0x140] sm:$0xff]
        %v1570 = vld [vmem:[%s1528 + $0x148] sm:$0xff]
        %v1571 = vld [vmem:[%s1528 + $0x150] sm:$0xff]
        %v1572 = vld [vmem:[%s1528 + $0x158] sm:$0xff]
        %v1573 = vld [vmem:[%s1528 + $0x160] sm:$0xff]
        %v1574 = vld [vmem:[%s1528 + $0x168] sm:$0xff]
        %v1575 = vld [vmem:[%s1528 + $0x170] sm:$0xff]
        %v1576 = vld [vmem:[%s1528 + $0x178] sm:$0xff]
        %v1641 = vunpack.c.l.b16 %v1464
        %v1642 = vunpack.c.h.b16 %v1464
        %v1643 = vunpack.c.l.b16 %v1465
        %v1644 = vunpack.c.l.b16 %v1466
        %v1645 = vunpack.c.h.b16 %v1466
        %v1646 = vunpack.c.l.b16 %v1467
        %v1647 = vunpack.c.l.b16 %v1468
        %v1648 = vunpack.c.h.b16 %v1468
        %v1649 = vunpack.c.l.b16 %v1469
        %v1650 = vunpack.c.l.b16 %v1470
        %v1651 = vunpack.c.h.b16 %v1470
        %v1652 = vunpack.c.l.b16 %v1471
        %v1653 = vunpack.c.l.b16 %v1472
        %v1654 = vunpack.c.h.b16 %v1472
        %v1655 = vunpack.c.l.b16 %v1473
        %v1656 = vunpack.c.l.b16 %v1474
        %v1657 = vunpack.c.h.b16 %v1474
        %v1658 = vunpack.c.l.b16 %v1475
        %v1659 = vunpack.c.l.b16 %v1476
        %v1660 = vunpack.c.h.b16 %v1476
        %v1661 = vunpack.c.l.b16 %v1477
        %v1662 = vunpack.c.l.b16 %v1478
        %v1663 = vunpack.c.h.b16 %v1478
        %v1664 = vunpack.c.l.b16 %v1479
        %v1665 = vunpack.c.l.b16 %v1480
        %v1666 = vunpack.c.h.b16 %v1480
        %v1667 = vunpack.c.l.b16 %v1481
        %v1668 = vunpack.c.l.b16 %v1482
        %v1669 = vunpack.c.h.b16 %v1482
        %v1670 = vunpack.c.l.b16 %v1483
        %v1671 = vunpack.c.l.b16 %v1484
        %v1672 = vunpack.c.h.b16 %v1484
        %v1673 = vunpack.c.l.b16 %v1485
        %v1674 = vunpack.c.l.b16 %v1486
        %v1675 = vunpack.c.h.b16 %v1486
        %v1676 = vunpack.c.l.b16 %v1487
        %v1677 = vunpack.c.l.b16 %v1488
        %v1678 = vunpack.c.h.b16 %v1488
        %v1679 = vunpack.c.l.b16 %v1489
        %v1680 = vunpack.c.l.b16 %v1490
        %v1681 = vunpack.c.h.b16 %v1490
        %v1682 = vunpack.c.l.b16 %v1491
        %v1683 = vunpack.c.l.b16 %v1492
        %v1684 = vunpack.c.h.b16 %v1492
        %v1685 = vunpack.c.l.b16 %v1493
        %v1686 = vunpack.c.l.b16 %v1494
        %v1687 = vunpack.c.h.b16 %v1494
        %v1688 = vunpack.c.l.b16 %v1495
        %v1689 = vunpack.c.l.b16 %v1496
        %v1690 = vunpack.c.h.b16 %v1496
        %v1691 = vunpack.c.l.b16 %v1497
        %v1692 = vunpack.c.l.b16 %v1498
        %v1693 = vunpack.c.h.b16 %v1498
        %v1694 = vunpack.c.l.b16 %v1499
        %v1695 = vunpack.c.l.b16 %v1500
        %v1696 = vunpack.c.h.b16 %v1500
        %v1697 = vunpack.c.l.b16 %v1501
        %v1698 = vunpack.c.l.b16 %v1502
        %v1699 = vunpack.c.h.b16 %v1502
        %v1700 = vunpack.c.l.b16 %v1503
        %v1701 = vunpack.c.l.b16 %v1504
        %v1702 = vunpack.c.h.b16 %v1504
        %v1703 = vunpack.c.l.b16 %v1505
        %v1704 = vunpack.c.l.b16 %v1506
        %v1705 = vunpack.c.h.b16 %v1506
        %v1706 = vunpack.c.l.b16 %v1507
        %v1707 = vunpack.c.l.b16 %v1508
        %v1708 = vunpack.c.h.b16 %v1508
        %v1709 = vunpack.c.l.b16 %v1509
        %v1710 = vunpack.c.l.b16 %v1510
        %v1711 = vunpack.c.h.b16 %v1510
        %v1712 = vunpack.c.l.b16 %v1511
        %v1713 = vunpack.c.l.b16 %v1512
        %v1714 = vunpack.c.h.b16 %v1512
        %v1715 = vunpack.c.l.b16 %v1513
        %v1716 = vunpack.c.l.b16 %v1514
        %v1717 = vunpack.c.h.b16 %v1514
        %v1718 = vunpack.c.l.b16 %v1515
        %v1719 = vunpack.c.l.b16 %v1516
        %v1720 = vunpack.c.h.b16 %v1516
        %v1721 = vunpack.c.l.b16 %v1517
        %v1722 = vunpack.c.l.b16 %v1518
        %v1723 = vunpack.c.h.b16 %v1518
        %v1724 = vunpack.c.l.b16 %v1519
        %v1725 = vunpack.c.l.b16 %v1520
        %v1726 = vunpack.c.h.b16 %v1520
        %v1727 = vunpack.c.l.b16 %v1521
        %v1728 = vunpack.c.l.b16 %v1522
        %v1729 = vunpack.c.h.b16 %v1522
        %v1730 = vunpack.c.l.b16 %v1523
        %v1731 = vunpack.c.l.b16 %v1524
        %v1732 = vunpack.c.h.b16 %v1524
        %v1733 = vunpack.c.l.b16 %v1525
        %v1734 = vunpack.c.l.b16 %v1526
        %v1735 = vunpack.c.h.b16 %v1526
        %v1736 = vunpack.c.l.b16 %v1527
        %v1737 = vpack.c.b16 %v1644, %v1641
        %v1738 = vpack.c.b16 %v1645, %v1642
        %v1739 = vpack.c.b16 %v1646, %v1643
        %v1740 = vpack.c.b16 %v1650, %v1647
        %v1741 = vpack.c.b16 %v1651, %v1648
        %v1742 = vpack.c.b16 %v1652, %v1649
        %v1743 = vpack.c.b16 %v1656, %v1653
        %v1744 = vpack.c.b16 %v1657, %v1654
        %v1745 = vpack.c.b16 %v1658, %v1655
        %v1746 = vpack.c.b16 %v1662, %v1659
        %v1747 = vpack.c.b16 %v1663, %v1660
        %v1748 = vpack.c.b16 %v1664, %v1661
        %v1749 = vpack.c.b16 %v1668, %v1665
        %v1750 = vpack.c.b16 %v1669, %v1666
        %v1751 = vpack.c.b16 %v1670, %v1667
        %v1752 = vpack.c.b16 %v1674, %v1671
        %v1753 = vpack.c.b16 %v1675, %v1672
        %v1754 = vpack.c.b16 %v1676, %v1673
        %v1755 = vpack.c.b16 %v1680, %v1677
        %v1756 = vpack.c.b16 %v1681, %v1678
        %v1757 = vpack.c.b16 %v1682, %v1679
        %v1758 = vpack.c.b16 %v1686, %v1683
        %v1759 = vpack.c.b16 %v1687, %v1684
        %v1760 = vpack.c.b16 %v1688, %v1685
        %v1761 = vpack.c.b16 %v1692, %v1689
        %v1762 = vpack.c.b16 %v1693, %v1690
        %v1763 = vpack.c.b16 %v1694, %v1691
        %v1764 = vpack.c.b16 %v1698, %v1695
        %v1765 = vpack.c.b16 %v1699, %v1696
        %v1766 = vpack.c.b16 %v1700, %v1697
        %v1767 = vpack.c.b16 %v1704, %v1701
        %v1768 = vpack.c.b16 %v1705, %v1702
        %v1769 = vpack.c.b16 %v1706, %v1703
        %v1770 = vpack.c.b16 %v1710, %v1707
        %v1771 = vpack.c.b16 %v1711, %v1708
        %v1772 = vpack.c.b16 %v1712, %v1709
        %v1773 = vpack.c.b16 %v1716, %v1713
        %v1774 = vpack.c.b16 %v1717, %v1714
        %v1775 = vpack.c.b16 %v1718, %v1715
        %v1776 = vpack.c.b16 %v1722, %v1719
        %v1777 = vpack.c.b16 %v1723, %v1720
        %v1778 = vpack.c.b16 %v1724, %v1721
        %v1779 = vpack.c.b16 %v1728, %v1725
        %v1780 = vpack.c.b16 %v1729, %v1726
        %v1781 = vpack.c.b16 %v1730, %v1727
        %v1782 = vpack.c.b16 %v1734, %v1731
        %v1783 = vpack.c.b16 %v1735, %v1732
        %v1784 = vpack.c.b16 %v1736, %v1733
        %v1881 = vunpack.c.l.b16 %v1529
        %v1882 = vunpack.c.h.b16 %v1529
        %v1883 = vunpack.c.l.b16 %v1530
        %v1884 = vunpack.c.h.b16 %v1530
        %v1885 = vunpack.c.l.b16 %v1531
        %v1886 = vunpack.c.h.b16 %v1531
        %v1887 = vunpack.c.l.b16 %v1532
        %v1888 = vunpack.c.h.b16 %v1532
        %v1889 = vunpack.c.l.b16 %v1533
        %v1890 = vunpack.c.h.b16 %v1533
        %v1891 = vunpack.c.l.b16 %v1534
        %v1892 = vunpack.c.h.b16 %v1534
        %v1893 = vunpack.c.l.b16 %v1535
        %v1894 = vunpack.c.h.b16 %v1535
        %v1895 = vunpack.c.l.b16 %v1536
        %v1896 = vunpack.c.h.b16 %v1536
        %v1897 = vunpack.c.l.b16 %v1537
        %v1898 = vunpack.c.h.b16 %v1537
        %v1899 = vunpack.c.l.b16 %v1538
        %v1900 = vunpack.c.h.b16 %v1538
        %v1901 = vunpack.c.l.b16 %v1539
        %v1902 = vunpack.c.h.b16 %v1539
        %v1903 = vunpack.c.l.b16 %v1540
        %v1904 = vunpack.c.h.b16 %v1540
        %v1905 = vunpack.c.l.b16 %v1541
        %v1906 = vunpack.c.h.b16 %v1541
        %v1907 = vunpack.c.l.b16 %v1542
        %v1908 = vunpack.c.h.b16 %v1542
        %v1909 = vunpack.c.l.b16 %v1543
        %v1910 = vunpack.c.h.b16 %v1543
        %v1911 = vunpack.c.l.b16 %v1544
        %v1912 = vunpack.c.h.b16 %v1544
        %v1913 = vunpack.c.l.b16 %v1545
        %v1914 = vunpack.c.h.b16 %v1545
        %v1915 = vunpack.c.l.b16 %v1546
        %v1916 = vunpack.c.h.b16 %v1546
        %v1917 = vunpack.c.l.b16 %v1547
        %v1918 = vunpack.c.h.b16 %v1547
        %v1919 = vunpack.c.l.b16 %v1548
        %v1920 = vunpack.c.h.b16 %v1548
        %v1921 = vunpack.c.l.b16 %v1549
        %v1922 = vunpack.c.h.b16 %v1549
        %v1923 = vunpack.c.l.b16 %v1550
        %v1924 = vunpack.c.h.b16 %v1550
        %v1925 = vunpack.c.l.b16 %v1551
        %v1926 = vunpack.c.h.b16 %v1551
        %v1927 = vunpack.c.l.b16 %v1552
        %v1928 = vunpack.c.h.b16 %v1552
        %v1929 = vunpack.c.l.b16 %v1553
        %v1930 = vunpack.c.h.b16 %v1553
        %v1931 = vunpack.c.l.b16 %v1554
        %v1932 = vunpack.c.h.b16 %v1554
        %v1933 = vunpack.c.l.b16 %v1555
        %v1934 = vunpack.c.h.b16 %v1555
        %v1935 = vunpack.c.l.b16 %v1556
        %v1936 = vunpack.c.h.b16 %v1556
        %v1937 = vunpack.c.l.b16 %v1557
        %v1938 = vunpack.c.h.b16 %v1557
        %v1939 = vunpack.c.l.b16 %v1558
        %v1940 = vunpack.c.h.b16 %v1558
        %v1941 = vunpack.c.l.b16 %v1559
        %v1942 = vunpack.c.h.b16 %v1559
        %v1943 = vunpack.c.l.b16 %v1560
        %v1944 = vunpack.c.h.b16 %v1560
        %v1945 = vunpack.c.l.b16 %v1561
        %v1946 = vunpack.c.h.b16 %v1561
        %v1947 = vunpack.c.l.b16 %v1562
        %v1948 = vunpack.c.h.b16 %v1562
        %v1949 = vunpack.c.l.b16 %v1563
        %v1950 = vunpack.c.h.b16 %v1563
        %v1951 = vunpack.c.l.b16 %v1564
        %v1952 = vunpack.c.h.b16 %v1564
        %v1953 = vunpack.c.l.b16 %v1565
        %v1954 = vunpack.c.h.b16 %v1565
        %v1955 = vunpack.c.l.b16 %v1566
        %v1956 = vunpack.c.h.b16 %v1566
        %v1957 = vunpack.c.l.b16 %v1567
        %v1958 = vunpack.c.h.b16 %v1567
        %v1959 = vunpack.c.l.b16 %v1568
        %v1960 = vunpack.c.h.b16 %v1568
        %v1961 = vunpack.c.l.b16 %v1569
        %v1962 = vunpack.c.h.b16 %v1569
        %v1963 = vunpack.c.l.b16 %v1570
        %v1964 = vunpack.c.h.b16 %v1570
        %v1965 = vunpack.c.l.b16 %v1571
        %v1966 = vunpack.c.h.b16 %v1571
        %v1967 = vunpack.c.l.b16 %v1572
        %v1968 = vunpack.c.h.b16 %v1572
        %v1969 = vunpack.c.l.b16 %v1573
        %v1970 = vunpack.c.h.b16 %v1573
        %v1971 = vunpack.c.l.b16 %v1574
        %v1972 = vunpack.c.h.b16 %v1574
        %v1973 = vunpack.c.l.b16 %v1575
        %v1974 = vunpack.c.h.b16 %v1575
        %v1975 = vunpack.c.l.b16 %v1576
        %v1976 = vunpack.c.h.b16 %v1576
        %v1977 = vpack.c.b16 %v1883, %v1881
        %v1978 = vpack.c.b16 %v1884, %v1882
        %v1979 = vpack.c.b16 %v1887, %v1885
        %v1980 = vpack.c.b16 %v1888, %v1886
        %v1981 = vpack.c.b16 %v1891, %v1889
        %v1982 = vpack.c.b16 %v1892, %v1890
        %v1983 = vpack.c.b16 %v1895, %v1893
        %v1984 = vpack.c.b16 %v1896, %v1894
        %v1985 = vpack.c.b16 %v1899, %v1897
        %v1986 = vpack.c.b16 %v1900, %v1898
        %v1987 = vpack.c.b16 %v1903, %v1901
        %v1988 = vpack.c.b16 %v1904, %v1902
        %v1989 = vpack.c.b16 %v1907, %v1905
        %v1990 = vpack.c.b16 %v1908, %v1906
        %v1991 = vpack.c.b16 %v1911, %v1909
        %v1992 = vpack.c.b16 %v1912, %v1910
        %v1993 = vpack.c.b16 %v1915, %v1913
        %v1994 = vpack.c.b16 %v1916, %v1914
        %v1995 = vpack.c.b16 %v1919, %v1917
        %v1996 = vpack.c.b16 %v1920, %v1918
        %v1997 = vpack.c.b16 %v1923, %v1921
        %v1998 = vpack.c.b16 %v1924, %v1922
        %v1999 = vpack.c.b16 %v1927, %v1925
        %v2000 = vpack.c.b16 %v1928, %v1926
        %v2001 = vpack.c.b16 %v1931, %v1929
        %v2002 = vpack.c.b16 %v1932, %v1930
        %v2003 = vpack.c.b16 %v1935, %v1933
        %v2004 = vpack.c.b16 %v1936, %v1934
        %v2005 = vpack.c.b16 %v1939, %v1937
        %v2006 = vpack.c.b16 %v1940, %v1938
        %v2007 = vpack.c.b16 %v1943, %v1941
        %v2008 = vpack.c.b16 %v1944, %v1942
        %v2009 = vpack.c.b16 %v1947, %v1945
        %v2010 = vpack.c.b16 %v1948, %v1946
        %v2011 = vpack.c.b16 %v1951, %v1949
        %v2012 = vpack.c.b16 %v1952, %v1950
        %v2013 = vpack.c.b16 %v1955, %v1953
        %v2014 = vpack.c.b16 %v1956, %v1954
        %v2015 = vpack.c.b16 %v1959, %v1957
        %v2016 = vpack.c.b16 %v1960, %v1958
        %v2017 = vpack.c.b16 %v1963, %v1961
        %v2018 = vpack.c.b16 %v1964, %v1962
        %v2019 = vpack.c.b16 %v1967, %v1965
        %v2020 = vpack.c.b16 %v1968, %v1966
        %v2021 = vpack.c.b16 %v1971, %v1969
        %v2022 = vpack.c.b16 %v1972, %v1970
        %v2023 = vpack.c.b16 %v1975, %v1973
        %v2024 = vpack.c.b16 %v1976, %v1974
        %2073 = vmatprep.subr.bf16.mxu0 %v1992
        %2074 = vmatpush1.bf16.msra.mxu0 %v1991
        %2075 = vmatprep.subr.bf16.mxu0 %v1990
        %2076 = vmatpush1.bf16.msra.mxu0 %v1989
        %2077 = vmatprep.subr.bf16.mxu0 %v1988
        %2078 = vmatpush1.bf16.msra.mxu0 %v1987
        %2079 = vmatprep.subr.bf16.mxu0 %v1986
        %2080 = vmatpush1.bf16.msra.mxu0 %v1985
        %2081 = vmatprep.subr.bf16.mxu0 %v1984
        %2082 = vmatpush1.bf16.msra.mxu0 %v1983
        %2083 = vmatprep.subr.bf16.mxu0 %v1982
        %2084 = vmatpush1.bf16.msra.mxu0 %v1981
        %2085 = vmatprep.subr.bf16.mxu0 %v1980
        %2086 = vmatpush1.bf16.msra.mxu0 %v1979
        %2087 = vmatprep.subr.bf16.mxu0 %v1978
        %2088 = vmatpush1.bf16.msra.mxu0 %v1977
        %2089 = vmatprep.subr.bf16.mxu0 %v2008
        %2090 = vmatpush2.bf16.msra.mxu0 %v2007
        %2091 = vmatprep.subr.bf16.mxu0 %v2006
        %2092 = vmatpush2.bf16.msra.mxu0 %v2005
        %2093 = vmatprep.subr.bf16.mxu0 %v2004
        %2094 = vmatpush2.bf16.msra.mxu0 %v2003
        %2095 = vmatprep.subr.bf16.mxu0 %v2002
        %2096 = vmatpush2.bf16.msra.mxu0 %v2001
        %2097 = vmatprep.subr.bf16.mxu0 %v2000
        %2098 = vmatpush2.bf16.msra.mxu0 %v1999
        %2099 = vmatprep.subr.bf16.mxu0 %v1998
        %2100 = vmatpush2.bf16.msra.mxu0 %v1997
        %2101 = vmatprep.subr.bf16.mxu0 %v1996
        %2102 = vmatpush2.bf16.msra.mxu0 %v1995
        %2103 = vmatprep.subr.bf16.mxu0 %v1994
        %2104 = vmatpush2.bf16.msra.mxu0 %v1993
        %2105 = vmatprep.mubr.bf16.mxu0 %v1738
        %2106 = vmatmul.mubr.bf16.gmra.mxu0 %v1737
        %v2107 = vpop.f32.mrf.mxu0
        %v2108 = vadd.f32 0.0, %v2107
        %v2109 = vpop.f32.mrf.mxu0
        %v2110 = vadd.f32 0.0, %v2109
        %v2111 = vpop.f32.mrf.mxu0
        %v2112 = vadd.f32 0.0, %v2111
        %v2113 = vpop.f32.mrf.mxu0
        %v2114 = vadd.f32 0.0, %v2113
        %2115 = vmatprep.mubr.bf16.mxu0 %v1741
        %2116 = vmatmul.mubr.bf16.gmra.mxu0 %v1740
        %v2117 = vpop.f32.mrf.mxu0
        %v2118 = vadd.f32 0.0, %v2117
        %v2119 = vpop.f32.mrf.mxu0
        %v2120 = vadd.f32 0.0, %v2119
        %v2121 = vpop.f32.mrf.mxu0
        %v2122 = vadd.f32 0.0, %v2121
        %v2123 = vpop.f32.mrf.mxu0
        %v2124 = vadd.f32 0.0, %v2123
        %2125 = vmatprep.mubr.bf16.mxu0 %v1744
        %2126 = vmatmul.mubr.bf16.gmra.mxu0 %v1743
        %v2127 = vpop.f32.mrf.mxu0
        %v2128 = vadd.f32 0.0, %v2127
        %v2129 = vpop.f32.mrf.mxu0
        %v2130 = vadd.f32 0.0, %v2129
        %v2131 = vpop.f32.mrf.mxu0
        %v2132 = vadd.f32 0.0, %v2131
        %v2133 = vpop.f32.mrf.mxu0
        %v2134 = vadd.f32 0.0, %v2133
        %2135 = vmatprep.mubr.bf16.mxu0 %v1747
        %2136 = vmatmul.mubr.bf16.gmra.mxu0 %v1746
        %v2137 = vpop.f32.mrf.mxu0
        %v2138 = vadd.f32 0.0, %v2137
        %v2139 = vpop.f32.mrf.mxu0
        %v2140 = vadd.f32 0.0, %v2139
        %v2141 = vpop.f32.mrf.mxu0
        %v2142 = vadd.f32 0.0, %v2141
        %v2143 = vpop.f32.mrf.mxu0
        %v2144 = vadd.f32 0.0, %v2143
        %2145 = vmatprep.mubr.bf16.mxu0 %v1750
        %2146 = vmatmul.mubr.bf16.gmra.mxu0 %v1749
        %v2147 = vpop.f32.mrf.mxu0
        %v2148 = vadd.f32 0.0, %v2147
        %v2149 = vpop.f32.mrf.mxu0
        %v2150 = vadd.f32 0.0, %v2149
        %v2151 = vpop.f32.mrf.mxu0
        %v2152 = vadd.f32 0.0, %v2151
        %v2153 = vpop.f32.mrf.mxu0
        %v2154 = vadd.f32 0.0, %v2153
        %2155 = vmatprep.mubr.bf16.mxu0 %v1753
        %2156 = vmatmul.mubr.bf16.gmra.mxu0 %v1752
        %v2157 = vpop.f32.mrf.mxu0
        %v2158 = vadd.f32 0.0, %v2157
        %v2159 = vpop.f32.mrf.mxu0
        %v2160 = vadd.f32 0.0, %v2159
        %v2161 = vpop.f32.mrf.mxu0
        %v2162 = vadd.f32 0.0, %v2161
        %v2163 = vpop.f32.mrf.mxu0
        %v2164 = vadd.f32 0.0, %v2163
        %2165 = vmatprep.mubr.bf16.mxu0 %v1756
        %2166 = vmatmul.mubr.bf16.gmra.mxu0 %v1755
        %v2167 = vpop.f32.mrf.mxu0
        %v2168 = vadd.f32 0.0, %v2167
        %v2169 = vpop.f32.mrf.mxu0
        %v2170 = vadd.f32 0.0, %v2169
        %v2171 = vpop.f32.mrf.mxu0
        %v2172 = vadd.f32 0.0, %v2171
        %v2173 = vpop.f32.mrf.mxu0
        %v2174 = vadd.f32 0.0, %v2173
        %2175 = vmatprep.mubr.bf16.mxu0 %v1759
        %2176 = vmatmul.mubr.bf16.gmra.mxu0 %v1758
        %v2177 = vpop.f32.mrf.mxu0
        %v2178 = vadd.f32 0.0, %v2177
        %v2179 = vpop.f32.mrf.mxu0
        %v2180 = vadd.f32 0.0, %v2179
        %v2181 = vpop.f32.mrf.mxu0
        %v2182 = vadd.f32 0.0, %v2181
        %v2183 = vpop.f32.mrf.mxu0
        %v2184 = vadd.f32 0.0, %v2183
        %2185 = vmatprep.mubr.bf16.mxu0 %v1762
        %2186 = vmatmul.mubr.bf16.gmra.mxu0 %v1761
        %v2187 = vpop.f32.mrf.mxu0
        %v2188 = vadd.f32 0.0, %v2187
        %v2189 = vpop.f32.mrf.mxu0
        %v2190 = vadd.f32 0.0, %v2189
        %v2191 = vpop.f32.mrf.mxu0
        %v2192 = vadd.f32 0.0, %v2191
        %v2193 = vpop.f32.mrf.mxu0
        %v2194 = vadd.f32 0.0, %v2193
        %2195 = vmatprep.mubr.bf16.mxu0 %v1765
        %2196 = vmatmul.mubr.bf16.gmra.mxu0 %v1764
        %v2197 = vpop.f32.mrf.mxu0
        %v2198 = vadd.f32 0.0, %v2197
        %v2199 = vpop.f32.mrf.mxu0
        %v2200 = vadd.f32 0.0, %v2199
        %v2201 = vpop.f32.mrf.mxu0
        %v2202 = vadd.f32 0.0, %v2201
        %v2203 = vpop.f32.mrf.mxu0
        %v2204 = vadd.f32 0.0, %v2203
        %2205 = vmatprep.mubr.bf16.mxu0 %v1768
        %2206 = vmatmul.mubr.bf16.gmra.mxu0 %v1767
        %v2207 = vpop.f32.mrf.mxu0
        %v2208 = vadd.f32 0.0, %v2207
        %v2209 = vpop.f32.mrf.mxu0
        %v2210 = vadd.f32 0.0, %v2209
        %v2211 = vpop.f32.mrf.mxu0
        %v2212 = vadd.f32 0.0, %v2211
        %v2213 = vpop.f32.mrf.mxu0
        %v2214 = vadd.f32 0.0, %v2213
        %2215 = vmatprep.mubr.bf16.mxu0 %v1771
        %2216 = vmatmul.mubr.bf16.gmra.mxu0 %v1770
        %v2217 = vpop.f32.mrf.mxu0
        %v2218 = vadd.f32 0.0, %v2217
        %v2219 = vpop.f32.mrf.mxu0
        %v2220 = vadd.f32 0.0, %v2219
        %v2221 = vpop.f32.mrf.mxu0
        %v2222 = vadd.f32 0.0, %v2221
        %v2223 = vpop.f32.mrf.mxu0
        %v2224 = vadd.f32 0.0, %v2223
        %2225 = vmatprep.mubr.bf16.mxu0 %v1774
        %2226 = vmatmul.mubr.bf16.gmra.mxu0 %v1773
        %v2227 = vpop.f32.mrf.mxu0
        %v2228 = vadd.f32 0.0, %v2227
        %v2229 = vpop.f32.mrf.mxu0
        %v2230 = vadd.f32 0.0, %v2229
        %v2231 = vpop.f32.mrf.mxu0
        %v2232 = vadd.f32 0.0, %v2231
        %v2233 = vpop.f32.mrf.mxu0
        %v2234 = vadd.f32 0.0, %v2233
        %2235 = vmatprep.mubr.bf16.mxu0 %v1777
        %2236 = vmatmul.mubr.bf16.gmra.mxu0 %v1776
        %v2237 = vpop.f32.mrf.mxu0
        %v2238 = vadd.f32 0.0, %v2237
        %v2239 = vpop.f32.mrf.mxu0
        %v2240 = vadd.f32 0.0, %v2239
        %v2241 = vpop.f32.mrf.mxu0
        %v2242 = vadd.f32 0.0, %v2241
        %v2243 = vpop.f32.mrf.mxu0
        %v2244 = vadd.f32 0.0, %v2243
        %2245 = vmatprep.mubr.bf16.mxu0 %v1780
        %2246 = vmatmul.mubr.bf16.gmra.mxu0 %v1779
        %v2247 = vpop.f32.mrf.mxu0
        %v2248 = vadd.f32 0.0, %v2247
        %v2249 = vpop.f32.mrf.mxu0
        %v2250 = vadd.f32 0.0, %v2249
        %v2251 = vpop.f32.mrf.mxu0
        %v2252 = vadd.f32 0.0, %v2251
        %v2253 = vpop.f32.mrf.mxu0
        %v2254 = vadd.f32 0.0, %v2253
        %2255 = vmatprep.mubr.bf16.mxu0 %v1783
        %2256 = vmatmul.mubr.bf16.gmra.mxu0 %v1782
        %v2257 = vpop.f32.mrf.mxu0
        %v2258 = vadd.f32 0.0, %v2257
        %v2259 = vpop.f32.mrf.mxu0
        %v2260 = vadd.f32 0.0, %v2259
        %v2261 = vpop.f32.mrf.mxu0
        %v2262 = vadd.f32 0.0, %v2261
        %v2263 = vpop.f32.mrf.mxu0
        %v2264 = vadd.f32 0.0, %v2263
        %2265 = vdwg.mxu0
        %2266 = vmatprep.subr.bf16.mxu0 %v2024
        %2267 = vmatpush1.bf16.msra.mxu0 %v2023
        %2268 = vmatprep.subr.bf16.mxu0 %v2022
        %2269 = vmatpush1.bf16.msra.mxu0 %v2021
        %2270 = vmatprep.subr.bf16.mxu0 %v2020
        %2271 = vmatpush1.bf16.msra.mxu0 %v2019
        %2272 = vmatprep.subr.bf16.mxu0 %v2018
        %2273 = vmatpush1.bf16.msra.mxu0 %v2017
        %2274 = vmatprep.subr.bf16.mxu0 %v2016
        %2275 = vmatpush1.bf16.msra.mxu0 %v2015
        %2276 = vmatprep.subr.bf16.mxu0 %v2014
        %2277 = vmatpush1.bf16.msra.mxu0 %v2013
        %2278 = vmatprep.subr.bf16.mxu0 %v2012
        %2279 = vmatpush1.bf16.msra.mxu0 %v2011
        %2280 = vmatprep.subr.bf16.mxu0 %v2010
        %2281 = vmatpush1.bf16.msra.mxu0 %v2009
        %2282 = vmatprep.subr.bf16.mxu0 0
        %2283 = vmatpush2.bf16.msra.mxu0 0
        %2284 = vmatprep.subr.bf16.mxu0 0
        %2285 = vmatpush2.bf16.msra.mxu0 0
        %2286 = vmatprep.subr.bf16.mxu0 0
        %2287 = vmatpush2.bf16.msra.mxu0 0
        %2288 = vmatprep.subr.bf16.mxu0 0
        %2289 = vmatpush2.bf16.msra.mxu0 0
        %2290 = vmatprep.subr.bf16.mxu0 0
        %2291 = vmatpush2.bf16.msra.mxu0 0
        %2292 = vmatprep.subr.bf16.mxu0 0
        %2293 = vmatpush2.bf16.msra.mxu0 0
        %2294 = vmatprep.subr.bf16.mxu0 0
        %2295 = vmatpush2.bf16.msra.mxu0 0
        %2296 = vmatprep.subr.bf16.mxu0 0
        %2297 = vmatpush2.bf16.msra.mxu0 0
        %2298 = vmatprep.mubr.bf16.mxu0 0
        %2299 = vmatmul.mubr.bf16.gmra.mxu0 %v1739
        %v2300 = vpop.f32.mrf.mxu0
        %v2301 = vadd.f32 %v2108, %v2300
        %v2302 = vpop.f32.mrf.mxu0
        %v2303 = vadd.f32 %v2110, %v2302
        %v2304 = vpop.f32.mrf.mxu0
        %v2305 = vadd.f32 %v2112, %v2304
        %v2306 = vpop.f32.mrf.mxu0
        %v2307 = vadd.f32 %v2114, %v2306
        %2308 = vmatprep.mubr.bf16.mxu0 0
        %2309 = vmatmul.mubr.bf16.gmra.mxu0 %v1742
        %v2310 = vpop.f32.mrf.mxu0
        %v2311 = vadd.f32 %v2118, %v2310
        %v2312 = vpop.f32.mrf.mxu0
        %v2313 = vadd.f32 %v2120, %v2312
        %v2314 = vpop.f32.mrf.mxu0
        %v2315 = vadd.f32 %v2122, %v2314
        %v2316 = vpop.f32.mrf.mxu0
        %v2317 = vadd.f32 %v2124, %v2316
        %2318 = vmatprep.mubr.bf16.mxu0 0
        %2319 = vmatmul.mubr.bf16.gmra.mxu0 %v1745
        %v2320 = vpop.f32.mrf.mxu0
        %v2321 = vadd.f32 %v2128, %v2320
        %v2322 = vpop.f32.mrf.mxu0
        %v2323 = vadd.f32 %v2130, %v2322
        %v2324 = vpop.f32.mrf.mxu0
        %v2325 = vadd.f32 %v2132, %v2324
        %v2326 = vpop.f32.mrf.mxu0
        %v2327 = vadd.f32 %v2134, %v2326
        %2328 = vmatprep.mubr.bf16.mxu0 0
        %2329 = vmatmul.mubr.bf16.gmra.mxu0 %v1748
        %v2330 = vpop.f32.mrf.mxu0
        %v2331 = vadd.f32 %v2138, %v2330
        %v2332 = vpop.f32.mrf.mxu0
        %v2333 = vadd.f32 %v2140, %v2332
        %v2334 = vpop.f32.mrf.mxu0
        %v2335 = vadd.f32 %v2142, %v2334
        %v2336 = vpop.f32.mrf.mxu0
        %v2337 = vadd.f32 %v2144, %v2336
        %2338 = vmatprep.mubr.bf16.mxu0 0
        %2339 = vmatmul.mubr.bf16.gmra.mxu0 %v1751
        %v2340 = vpop.f32.mrf.mxu0
        %v2341 = vadd.f32 %v2148, %v2340
        %v2342 = vpop.f32.mrf.mxu0
        %v2343 = vadd.f32 %v2150, %v2342
        %v2344 = vpop.f32.mrf.mxu0
        %v2345 = vadd.f32 %v2152, %v2344
        %v2346 = vpop.f32.mrf.mxu0
        %v2347 = vadd.f32 %v2154, %v2346
        %2348 = vmatprep.mubr.bf16.mxu0 0
        %2349 = vmatmul.mubr.bf16.gmra.mxu0 %v1754
        %v2350 = vpop.f32.mrf.mxu0
        %v2351 = vadd.f32 %v2158, %v2350
        %v2352 = vpop.f32.mrf.mxu0
        %v2353 = vadd.f32 %v2160, %v2352
        %v2354 = vpop.f32.mrf.mxu0
        %v2355 = vadd.f32 %v2162, %v2354
        %v2356 = vpop.f32.mrf.mxu0
        %v2357 = vadd.f32 %v2164, %v2356
        %2358 = vmatprep.mubr.bf16.mxu0 0
        %2359 = vmatmul.mubr.bf16.gmra.mxu0 %v1757
        %v2360 = vpop.f32.mrf.mxu0
        %v2361 = vadd.f32 %v2168, %v2360
        %v2362 = vpop.f32.mrf.mxu0
        %v2363 = vadd.f32 %v2170, %v2362
        %v2364 = vpop.f32.mrf.mxu0
        %v2365 = vadd.f32 %v2172, %v2364
        %v2366 = vpop.f32.mrf.mxu0
        %v2367 = vadd.f32 %v2174, %v2366
        %2368 = vmatprep.mubr.bf16.mxu0 0
        %2369 = vmatmul.mubr.bf16.gmra.mxu0 %v1760
        %v2370 = vpop.f32.mrf.mxu0
        %v2371 = vadd.f32 %v2178, %v2370
        %v2372 = vpop.f32.mrf.mxu0
        %v2373 = vadd.f32 %v2180, %v2372
        %v2374 = vpop.f32.mrf.mxu0
        %v2375 = vadd.f32 %v2182, %v2374
        %v2376 = vpop.f32.mrf.mxu0
        %v2377 = vadd.f32 %v2184, %v2376
        %2378 = vmatprep.mubr.bf16.mxu0 0
        %2379 = vmatmul.mubr.bf16.gmra.mxu0 %v1763
        %v2380 = vpop.f32.mrf.mxu0
        %v2381 = vadd.f32 %v2188, %v2380
        %v2382 = vpop.f32.mrf.mxu0
        %v2383 = vadd.f32 %v2190, %v2382
        %v2384 = vpop.f32.mrf.mxu0
        %v2385 = vadd.f32 %v2192, %v2384
        %v2386 = vpop.f32.mrf.mxu0
        %v2387 = vadd.f32 %v2194, %v2386
        %2388 = vmatprep.mubr.bf16.mxu0 0
        %2389 = vmatmul.mubr.bf16.gmra.mxu0 %v1766
        %v2390 = vpop.f32.mrf.mxu0
        %v2391 = vadd.f32 %v2198, %v2390
        %v2392 = vpop.f32.mrf.mxu0
        %v2393 = vadd.f32 %v2200, %v2392
        %v2394 = vpop.f32.mrf.mxu0
        %v2395 = vadd.f32 %v2202, %v2394
        %v2396 = vpop.f32.mrf.mxu0
        %v2397 = vadd.f32 %v2204, %v2396
        %2398 = vmatprep.mubr.bf16.mxu0 0
        %2399 = vmatmul.mubr.bf16.gmra.mxu0 %v1769
        %v2400 = vpop.f32.mrf.mxu0
        %v2401 = vadd.f32 %v2208, %v2400
        %v2402 = vpop.f32.mrf.mxu0
        %v2403 = vadd.f32 %v2210, %v2402
        %v2404 = vpop.f32.mrf.mxu0
        %v2405 = vadd.f32 %v2212, %v2404
        %v2406 = vpop.f32.mrf.mxu0
        %v2407 = vadd.f32 %v2214, %v2406
        %2408 = vmatprep.mubr.bf16.mxu0 0
        %2409 = vmatmul.mubr.bf16.gmra.mxu0 %v1772
        %v2410 = vpop.f32.mrf.mxu0
        %v2411 = vadd.f32 %v2218, %v2410
        %v2412 = vpop.f32.mrf.mxu0
        %v2413 = vadd.f32 %v2220, %v2412
        %v2414 = vpop.f32.mrf.mxu0
        %v2415 = vadd.f32 %v2222, %v2414
        %v2416 = vpop.f32.mrf.mxu0
        %v2417 = vadd.f32 %v2224, %v2416
        %2418 = vmatprep.mubr.bf16.mxu0 0
        %2419 = vmatmul.mubr.bf16.gmra.mxu0 %v1775
        %v2420 = vpop.f32.mrf.mxu0
        %v2421 = vadd.f32 %v2228, %v2420
        %v2422 = vpop.f32.mrf.mxu0
        %v2423 = vadd.f32 %v2230, %v2422
        %v2424 = vpop.f32.mrf.mxu0
        %v2425 = vadd.f32 %v2232, %v2424
        %v2426 = vpop.f32.mrf.mxu0
        %v2427 = vadd.f32 %v2234, %v2426
        %2428 = vmatprep.mubr.bf16.mxu0 0
        %2429 = vmatmul.mubr.bf16.gmra.mxu0 %v1778
        %v2430 = vpop.f32.mrf.mxu0
        %v2431 = vadd.f32 %v2238, %v2430
        %v2432 = vpop.f32.mrf.mxu0
        %v2433 = vadd.f32 %v2240, %v2432
        %v2434 = vpop.f32.mrf.mxu0
        %v2435 = vadd.f32 %v2242, %v2434
        %v2436 = vpop.f32.mrf.mxu0
        %v2437 = vadd.f32 %v2244, %v2436
        %2438 = vmatprep.mubr.bf16.mxu0 0
        %2439 = vmatmul.mubr.bf16.gmra.mxu0 %v1781
        %v2440 = vpop.f32.mrf.mxu0
        %v2441 = vadd.f32 %v2248, %v2440
        %v2442 = vpop.f32.mrf.mxu0
        %v2443 = vadd.f32 %v2250, %v2442
        %v2444 = vpop.f32.mrf.mxu0
        %v2445 = vadd.f32 %v2252, %v2444
        %v2446 = vpop.f32.mrf.mxu0
        %v2447 = vadd.f32 %v2254, %v2446
        %2448 = vmatprep.mubr.bf16.mxu0 0
        %2449 = vmatmul.mubr.bf16.gmra.mxu0 %v1784
        %v2450 = vpop.f32.mrf.mxu0
        %v2451 = vadd.f32 %v2258, %v2450
        %v2452 = vpop.f32.mrf.mxu0
        %v2453 = vadd.f32 %v2260, %v2452
        %v2454 = vpop.f32.mrf.mxu0
        %v2455 = vadd.f32 %v2262, %v2454
        %v2456 = vpop.f32.mrf.mxu0
        %v2457 = vadd.f32 %v2264, %v2456
        %2458 = vdwg.mxu0
        %v2523 = vunpack.c.l.b16 %v1352
        %v2524 = vunpack.c.h.b16 %v1352
        %v2525 = vunpack.c.l.b16 %v1353
        %v2526 = vunpack.c.l.b16 %v1354
        %v2527 = vunpack.c.h.b16 %v1354
        %v2528 = vunpack.c.l.b16 %v1355
        %v2529 = vunpack.c.l.b16 %v1356
        %v2530 = vunpack.c.h.b16 %v1356
        %v2531 = vunpack.c.l.b16 %v1357
        %v2532 = vunpack.c.l.b16 %v1358
        %v2533 = vunpack.c.h.b16 %v1358
        %v2534 = vunpack.c.l.b16 %v1359
        %v2535 = vunpack.c.l.b16 %v1360
        %v2536 = vunpack.c.h.b16 %v1360
        %v2537 = vunpack.c.l.b16 %v1361
        %v2538 = vunpack.c.l.b16 %v1362
        %v2539 = vunpack.c.h.b16 %v1362
        %v2540 = vunpack.c.l.b16 %v1363
        %v2541 = vunpack.c.l.b16 %v1364
        %v2542 = vunpack.c.h.b16 %v1364
        %v2543 = vunpack.c.l.b16 %v1365
        %v2544 = vunpack.c.l.b16 %v1366
        %v2545 = vunpack.c.h.b16 %v1366
        %v2546 = vunpack.c.l.b16 %v1367
        %v2547 = vunpack.c.l.b16 %v1368
        %v2548 = vunpack.c.h.b16 %v1368
        %v2549 = vunpack.c.l.b16 %v1369
        %v2550 = vunpack.c.l.b16 %v1370
        %v2551 = vunpack.c.h.b16 %v1370
        %v2552 = vunpack.c.l.b16 %v1371
        %v2553 = vunpack.c.l.b16 %v1372
        %v2554 = vunpack.c.h.b16 %v1372
        %v2555 = vunpack.c.l.b16 %v1373
        %v2556 = vunpack.c.l.b16 %v1374
        %v2557 = vunpack.c.h.b16 %v1374
        %v2558 = vunpack.c.l.b16 %v1375
        %v2559 = vunpack.c.l.b16 %v1376
        %v2560 = vunpack.c.h.b16 %v1376
        %v2561 = vunpack.c.l.b16 %v1377
        %v2562 = vunpack.c.l.b16 %v1378
        %v2563 = vunpack.c.h.b16 %v1378
        %v2564 = vunpack.c.l.b16 %v1379
        %v2565 = vunpack.c.l.b16 %v1380
        %v2566 = vunpack.c.h.b16 %v1380
        %v2567 = vunpack.c.l.b16 %v1381
        %v2568 = vunpack.c.l.b16 %v1382
        %v2569 = vunpack.c.h.b16 %v1382
        %v2570 = vunpack.c.l.b16 %v1383
        %v2571 = vunpack.c.l.b16 %v1384
        %v2572 = vunpack.c.h.b16 %v1384
        %v2573 = vunpack.c.l.b16 %v1385
        %v2574 = vunpack.c.l.b16 %v1386
        %v2575 = vunpack.c.h.b16 %v1386
        %v2576 = vunpack.c.l.b16 %v1387
        %v2577 = vunpack.c.l.b16 %v1388
        %v2578 = vunpack.c.h.b16 %v1388
        %v2579 = vunpack.c.l.b16 %v1389
        %v2580 = vunpack.c.l.b16 %v1390
        %v2581 = vunpack.c.h.b16 %v1390
        %v2582 = vunpack.c.l.b16 %v1391
        %v2583 = vunpack.c.l.b16 %v1392
        %v2584 = vunpack.c.h.b16 %v1392
        %v2585 = vunpack.c.l.b16 %v1393
        %v2586 = vunpack.c.l.b16 %v1394
        %v2587 = vunpack.c.h.b16 %v1394
        %v2588 = vunpack.c.l.b16 %v1395
        %v2589 = vunpack.c.l.b16 %v1396
        %v2590 = vunpack.c.h.b16 %v1396
        %v2591 = vunpack.c.l.b16 %v1397
        %v2592 = vunpack.c.l.b16 %v1398
        %v2593 = vunpack.c.h.b16 %v1398
        %v2594 = vunpack.c.l.b16 %v1399
        %v2595 = vunpack.c.l.b16 %v1400
        %v2596 = vunpack.c.h.b16 %v1400
        %v2597 = vunpack.c.l.b16 %v1401
        %v2598 = vunpack.c.l.b16 %v1402
        %v2599 = vunpack.c.h.b16 %v1402
        %v2600 = vunpack.c.l.b16 %v1403
        %v2601 = vunpack.c.l.b16 %v1404
        %v2602 = vunpack.c.h.b16 %v1404
        %v2603 = vunpack.c.l.b16 %v1405
        %v2604 = vunpack.c.l.b16 %v1406
        %v2605 = vunpack.c.h.b16 %v1406
        %v2606 = vunpack.c.l.b16 %v1407
        %v2607 = vunpack.c.l.b16 %v1408
        %v2608 = vunpack.c.h.b16 %v1408
        %v2609 = vunpack.c.l.b16 %v1409
        %v2610 = vunpack.c.l.b16 %v1410
        %v2611 = vunpack.c.h.b16 %v1410
        %v2612 = vunpack.c.l.b16 %v1411
        %v2613 = vunpack.c.l.b16 %v1412
        %v2614 = vunpack.c.h.b16 %v1412
        %v2615 = vunpack.c.l.b16 %v1413
        %v2616 = vunpack.c.l.b16 %v1414
        %v2617 = vunpack.c.h.b16 %v1414
        %v2618 = vunpack.c.l.b16 %v1415
        %v2619 = vpack.c.b16 %v2526, %v2523
        %v2620 = vpack.c.b16 %v2527, %v2524
        %v2621 = vpack.c.b16 %v2528, %v2525
        %v2622 = vpack.c.b16 %v2532, %v2529
        %v2623 = vpack.c.b16 %v2533, %v2530
        %v2624 = vpack.c.b16 %v2534, %v2531
        %v2625 = vpack.c.b16 %v2538, %v2535
        %v2626 = vpack.c.b16 %v2539, %v2536
        %v2627 = vpack.c.b16 %v2540, %v2537
        %v2628 = vpack.c.b16 %v2544, %v2541
        %v2629 = vpack.c.b16 %v2545, %v2542
        %v2630 = vpack.c.b16 %v2546, %v2543
        %v2631 = vpack.c.b16 %v2550, %v2547
        %v2632 = vpack.c.b16 %v2551, %v2548
        %v2633 = vpack.c.b16 %v2552, %v2549
        %v2634 = vpack.c.b16 %v2556, %v2553
        %v2635 = vpack.c.b16 %v2557, %v2554
        %v2636 = vpack.c.b16 %v2558, %v2555
        %v2637 = vpack.c.b16 %v2562, %v2559
        %v2638 = vpack.c.b16 %v2563, %v2560
        %v2639 = vpack.c.b16 %v2564, %v2561
        %v2640 = vpack.c.b16 %v2568, %v2565
        %v2641 = vpack.c.b16 %v2569, %v2566
        %v2642 = vpack.c.b16 %v2570, %v2567
        %v2643 = vpack.c.b16 %v2574, %v2571
        %v2644 = vpack.c.b16 %v2575, %v2572
        %v2645 = vpack.c.b16 %v2576, %v2573
        %v2646 = vpack.c.b16 %v2580, %v2577
        %v2647 = vpack.c.b16 %v2581, %v2578
        %v2648 = vpack.c.b16 %v2582, %v2579
        %v2649 = vpack.c.b16 %v2586, %v2583
        %v2650 = vpack.c.b16 %v2587, %v2584
        %v2651 = vpack.c.b16 %v2588, %v2585
        %v2652 = vpack.c.b16 %v2592, %v2589
        %v2653 = vpack.c.b16 %v2593, %v2590
        %v2654 = vpack.c.b16 %v2594, %v2591
        %v2655 = vpack.c.b16 %v2598, %v2595
        %v2656 = vpack.c.b16 %v2599, %v2596
        %v2657 = vpack.c.b16 %v2600, %v2597
        %v2658 = vpack.c.b16 %v2604, %v2601
        %v2659 = vpack.c.b16 %v2605, %v2602
        %v2660 = vpack.c.b16 %v2606, %v2603
        %v2661 = vpack.c.b16 %v2610, %v2607
        %v2662 = vpack.c.b16 %v2611, %v2608
        %v2663 = vpack.c.b16 %v2612, %v2609
        %v2664 = vpack.c.b16 %v2616, %v2613
        %v2665 = vpack.c.b16 %v2617, %v2614
        %v2666 = vpack.c.b16 %v2618, %v2615
        %v2763 = vunpack.c.l.b16 %v1416
        %v2764 = vunpack.c.h.b16 %v1416
        %v2765 = vunpack.c.l.b16 %v1417
        %v2766 = vunpack.c.h.b16 %v1417
        %v2767 = vunpack.c.l.b16 %v1418
        %v2768 = vunpack.c.h.b16 %v1418
        %v2769 = vunpack.c.l.b16 %v1419
        %v2770 = vunpack.c.h.b16 %v1419
        %v2771 = vunpack.c.l.b16 %v1420
        %v2772 = vunpack.c.h.b16 %v1420
        %v2773 = vunpack.c.l.b16 %v1421
        %v2774 = vunpack.c.h.b16 %v1421
        %v2775 = vunpack.c.l.b16 %v1422
        %v2776 = vunpack.c.h.b16 %v1422
        %v2777 = vunpack.c.l.b16 %v1423
        %v2778 = vunpack.c.h.b16 %v1423
        %v2779 = vunpack.c.l.b16 %v1424
        %v2780 = vunpack.c.h.b16 %v1424
        %v2781 = vunpack.c.l.b16 %v1425
        %v2782 = vunpack.c.h.b16 %v1425
        %v2783 = vunpack.c.l.b16 %v1426
        %v2784 = vunpack.c.h.b16 %v1426
        %v2785 = vunpack.c.l.b16 %v1427
        %v2786 = vunpack.c.h.b16 %v1427
        %v2787 = vunpack.c.l.b16 %v1428
        %v2788 = vunpack.c.h.b16 %v1428
        %v2789 = vunpack.c.l.b16 %v1429
        %v2790 = vunpack.c.h.b16 %v1429
        %v2791 = vunpack.c.l.b16 %v1430
        %v2792 = vunpack.c.h.b16 %v1430
        %v2793 = vunpack.c.l.b16 %v1431
        %v2794 = vunpack.c.h.b16 %v1431
        %v2795 = vunpack.c.l.b16 %v1432
        %v2796 = vunpack.c.h.b16 %v1432
        %v2797 = vunpack.c.l.b16 %v1433
        %v2798 = vunpack.c.h.b16 %v1433
        %v2799 = vunpack.c.l.b16 %v1434
        %v2800 = vunpack.c.h.b16 %v1434
        %v2801 = vunpack.c.l.b16 %v1435
        %v2802 = vunpack.c.h.b16 %v1435
        %v2803 = vunpack.c.l.b16 %v1436
        %v2804 = vunpack.c.h.b16 %v1436
        %v2805 = vunpack.c.l.b16 %v1437
        %v2806 = vunpack.c.h.b16 %v1437
        %v2807 = vunpack.c.l.b16 %v1438
        %v2808 = vunpack.c.h.b16 %v1438
        %v2809 = vunpack.c.l.b16 %v1439
        %v2810 = vunpack.c.h.b16 %v1439
        %v2811 = vunpack.c.l.b16 %v1440
        %v2812 = vunpack.c.h.b16 %v1440
        %v2813 = vunpack.c.l.b16 %v1441
        %v2814 = vunpack.c.h.b16 %v1441
        %v2815 = vunpack.c.l.b16 %v1442
        %v2816 = vunpack.c.h.b16 %v1442
        %v2817 = vunpack.c.l.b16 %v1443
        %v2818 = vunpack.c.h.b16 %v1443
        %v2819 = vunpack.c.l.b16 %v1444
        %v2820 = vunpack.c.h.b16 %v1444
        %v2821 = vunpack.c.l.b16 %v1445
        %v2822 = vunpack.c.h.b16 %v1445
        %v2823 = vunpack.c.l.b16 %v1446
        %v2824 = vunpack.c.h.b16 %v1446
        %v2825 = vunpack.c.l.b16 %v1447
        %v2826 = vunpack.c.h.b16 %v1447
        %v2827 = vunpack.c.l.b16 %v1448
        %v2828 = vunpack.c.h.b16 %v1448
        %v2829 = vunpack.c.l.b16 %v1449
        %v2830 = vunpack.c.h.b16 %v1449
        %v2831 = vunpack.c.l.b16 %v1450
        %v2832 = vunpack.c.h.b16 %v1450
        %v2833 = vunpack.c.l.b16 %v1451
        %v2834 = vunpack.c.h.b16 %v1451
        %v2835 = vunpack.c.l.b16 %v1452
        %v2836 = vunpack.c.h.b16 %v1452
        %v2837 = vunpack.c.l.b16 %v1453
        %v2838 = vunpack.c.h.b16 %v1453
        %v2839 = vunpack.c.l.b16 %v1454
        %v2840 = vunpack.c.h.b16 %v1454
        %v2841 = vunpack.c.l.b16 %v1455
        %v2842 = vunpack.c.h.b16 %v1455
        %v2843 = vunpack.c.l.b16 %v1456
        %v2844 = vunpack.c.h.b16 %v1456
        %v2845 = vunpack.c.l.b16 %v1457
        %v2846 = vunpack.c.h.b16 %v1457
        %v2847 = vunpack.c.l.b16 %v1458
        %v2848 = vunpack.c.h.b16 %v1458
        %v2849 = vunpack.c.l.b16 %v1459
        %v2850 = vunpack.c.h.b16 %v1459
        %v2851 = vunpack.c.l.b16 %v1460
        %v2852 = vunpack.c.h.b16 %v1460
        %v2853 = vunpack.c.l.b16 %v1461
        %v2854 = vunpack.c.h.b16 %v1461
        %v2855 = vunpack.c.l.b16 %v1462
        %v2856 = vunpack.c.h.b16 %v1462
        %v2857 = vunpack.c.l.b16 %v1463
        %v2858 = vunpack.c.h.b16 %v1463
        %v2859 = vpack.c.b16 %v2765, %v2763
        %v2860 = vpack.c.b16 %v2766, %v2764
        %v2861 = vpack.c.b16 %v2769, %v2767
        %v2862 = vpack.c.b16 %v2770, %v2768
        %v2863 = vpack.c.b16 %v2773, %v2771
        %v2864 = vpack.c.b16 %v2774, %v2772
        %v2865 = vpack.c.b16 %v2777, %v2775
        %v2866 = vpack.c.b16 %v2778, %v2776
        %v2867 = vpack.c.b16 %v2781, %v2779
        %v2868 = vpack.c.b16 %v2782, %v2780
        %v2869 = vpack.c.b16 %v2785, %v2783
        %v2870 = vpack.c.b16 %v2786, %v2784
        %v2871 = vpack.c.b16 %v2789, %v2787
        %v2872 = vpack.c.b16 %v2790, %v2788
        %v2873 = vpack.c.b16 %v2793, %v2791
        %v2874 = vpack.c.b16 %v2794, %v2792
        %v2875 = vpack.c.b16 %v2797, %v2795
        %v2876 = vpack.c.b16 %v2798, %v2796
        %v2877 = vpack.c.b16 %v2801, %v2799
        %v2878 = vpack.c.b16 %v2802, %v2800
        %v2879 = vpack.c.b16 %v2805, %v2803
        %v2880 = vpack.c.b16 %v2806, %v2804
        %v2881 = vpack.c.b16 %v2809, %v2807
        %v2882 = vpack.c.b16 %v2810, %v2808
        %v2883 = vpack.c.b16 %v2813, %v2811
        %v2884 = vpack.c.b16 %v2814, %v2812
        %v2885 = vpack.c.b16 %v2817, %v2815
        %v2886 = vpack.c.b16 %v2818, %v2816
        %v2887 = vpack.c.b16 %v2821, %v2819
        %v2888 = vpack.c.b16 %v2822, %v2820
        %v2889 = vpack.c.b16 %v2825, %v2823
        %v2890 = vpack.c.b16 %v2826, %v2824
        %v2891 = vpack.c.b16 %v2829, %v2827
        %v2892 = vpack.c.b16 %v2830, %v2828
        %v2893 = vpack.c.b16 %v2833, %v2831
        %v2894 = vpack.c.b16 %v2834, %v2832
        %v2895 = vpack.c.b16 %v2837, %v2835
        %v2896 = vpack.c.b16 %v2838, %v2836
        %v2897 = vpack.c.b16 %v2841, %v2839
        %v2898 = vpack.c.b16 %v2842, %v2840
        %v2899 = vpack.c.b16 %v2845, %v2843
        %v2900 = vpack.c.b16 %v2846, %v2844
        %v2901 = vpack.c.b16 %v2849, %v2847
        %v2902 = vpack.c.b16 %v2850, %v2848
        %v2903 = vpack.c.b16 %v2853, %v2851
        %v2904 = vpack.c.b16 %v2854, %v2852
        %v2905 = vpack.c.b16 %v2857, %v2855
        %v2906 = vpack.c.b16 %v2858, %v2856
        %2955 = vmatprep.subr.bf16.mxu0 %v2874
        %2956 = vmatpush1.bf16.msra.mxu0 %v2873
        %2957 = vmatprep.subr.bf16.mxu0 %v2872
        %2958 = vmatpush1.bf16.msra.mxu0 %v2871
        %2959 = vmatprep.subr.bf16.mxu0 %v2870
        %2960 = vmatpush1.bf16.msra.mxu0 %v2869
        %2961 = vmatprep.subr.bf16.mxu0 %v2868
        %2962 = vmatpush1.bf16.msra.mxu0 %v2867
        %2963 = vmatprep.subr.bf16.mxu0 %v2866
        %2964 = vmatpush1.bf16.msra.mxu0 %v2865
        %2965 = vmatprep.subr.bf16.mxu0 %v2864
        %2966 = vmatpush1.bf16.msra.mxu0 %v2863
        %2967 = vmatprep.subr.bf16.mxu0 %v2862
        %2968 = vmatpush1.bf16.msra.mxu0 %v2861
        %2969 = vmatprep.subr.bf16.mxu0 %v2860
        %2970 = vmatpush1.bf16.msra.mxu0 %v2859
        %2971 = vmatprep.subr.bf16.mxu0 %v2890
        %2972 = vmatpush2.bf16.msra.mxu0 %v2889
        %2973 = vmatprep.subr.bf16.mxu0 %v2888
        %2974 = vmatpush2.bf16.msra.mxu0 %v2887
        %2975 = vmatprep.subr.bf16.mxu0 %v2886
        %2976 = vmatpush2.bf16.msra.mxu0 %v2885
        %2977 = vmatprep.subr.bf16.mxu0 %v2884
        %2978 = vmatpush2.bf16.msra.mxu0 %v2883
        %2979 = vmatprep.subr.bf16.mxu0 %v2882
        %2980 = vmatpush2.bf16.msra.mxu0 %v2881
        %2981 = vmatprep.subr.bf16.mxu0 %v2880
        %2982 = vmatpush2.bf16.msra.mxu0 %v2879
        %2983 = vmatprep.subr.bf16.mxu0 %v2878
        %2984 = vmatpush2.bf16.msra.mxu0 %v2877
        %2985 = vmatprep.subr.bf16.mxu0 %v2876
        %2986 = vmatpush2.bf16.msra.mxu0 %v2875
        %2987 = vmatprep.mubr.bf16.mxu0 %v2620
        %2988 = vmatmul.mubr.bf16.gmra.mxu0 %v2619
        %v2989 = vpop.f32.mrf.mxu0
        %v2990 = vadd.f32 %v2301, %v2989
        %v2991 = vpop.f32.mrf.mxu0
        %v2992 = vadd.f32 %v2303, %v2991
        %v2993 = vpop.f32.mrf.mxu0
        %v2994 = vadd.f32 %v2305, %v2993
        %v2995 = vpop.f32.mrf.mxu0
        %v2996 = vadd.f32 %v2307, %v2995
        %2997 = vmatprep.mubr.bf16.mxu0 %v2623
        %2998 = vmatmul.mubr.bf16.gmra.mxu0 %v2622
        %v2999 = vpop.f32.mrf.mxu0
        %v3000 = vadd.f32 %v2311, %v2999
        %v3001 = vpop.f32.mrf.mxu0
        %v3002 = vadd.f32 %v2313, %v3001
        %v3003 = vpop.f32.mrf.mxu0
        %v3004 = vadd.f32 %v2315, %v3003
        %v3005 = vpop.f32.mrf.mxu0
        %v3006 = vadd.f32 %v2317, %v3005
        %3007 = vmatprep.mubr.bf16.mxu0 %v2626
        %3008 = vmatmul.mubr.bf16.gmra.mxu0 %v2625
        %v3009 = vpop.f32.mrf.mxu0
        %v3010 = vadd.f32 %v2321, %v3009
        %v3011 = vpop.f32.mrf.mxu0
        %v3012 = vadd.f32 %v2323, %v3011
        %v3013 = vpop.f32.mrf.mxu0
        %v3014 = vadd.f32 %v2325, %v3013
        %v3015 = vpop.f32.mrf.mxu0
        %v3016 = vadd.f32 %v2327, %v3015
        %3017 = vmatprep.mubr.bf16.mxu0 %v2629
        %3018 = vmatmul.mubr.bf16.gmra.mxu0 %v2628
        %v3019 = vpop.f32.mrf.mxu0
        %v3020 = vadd.f32 %v2331, %v3019
        %v3021 = vpop.f32.mrf.mxu0
        %v3022 = vadd.f32 %v2333, %v3021
        %v3023 = vpop.f32.mrf.mxu0
        %v3024 = vadd.f32 %v2335, %v3023
        %v3025 = vpop.f32.mrf.mxu0
        %v3026 = vadd.f32 %v2337, %v3025
        %3027 = vmatprep.mubr.bf16.mxu0 %v2632
        %3028 = vmatmul.mubr.bf16.gmra.mxu0 %v2631
        %v3029 = vpop.f32.mrf.mxu0
        %v3030 = vadd.f32 %v2341, %v3029
        %v3031 = vpop.f32.mrf.mxu0
        %v3032 = vadd.f32 %v2343, %v3031
        %v3033 = vpop.f32.mrf.mxu0
        %v3034 = vadd.f32 %v2345, %v3033
        %v3035 = vpop.f32.mrf.mxu0
        %v3036 = vadd.f32 %v2347, %v3035
        %3037 = vmatprep.mubr.bf16.mxu0 %v2635
        %3038 = vmatmul.mubr.bf16.gmra.mxu0 %v2634
        %v3039 = vpop.f32.mrf.mxu0
        %v3040 = vadd.f32 %v2351, %v3039
        %v3041 = vpop.f32.mrf.mxu0
        %v3042 = vadd.f32 %v2353, %v3041
        %v3043 = vpop.f32.mrf.mxu0
        %v3044 = vadd.f32 %v2355, %v3043
        %v3045 = vpop.f32.mrf.mxu0
        %v3046 = vadd.f32 %v2357, %v3045
        %3047 = vmatprep.mubr.bf16.mxu0 %v2638
        %3048 = vmatmul.mubr.bf16.gmra.mxu0 %v2637
        %v3049 = vpop.f32.mrf.mxu0
        %v3050 = vadd.f32 %v2361, %v3049
        %v3051 = vpop.f32.mrf.mxu0
        %v3052 = vadd.f32 %v2363, %v3051
        %v3053 = vpop.f32.mrf.mxu0
        %v3054 = vadd.f32 %v2365, %v3053
        %v3055 = vpop.f32.mrf.mxu0
        %v3056 = vadd.f32 %v2367, %v3055
        %3057 = vmatprep.mubr.bf16.mxu0 %v2641
        %3058 = vmatmul.mubr.bf16.gmra.mxu0 %v2640
        %v3059 = vpop.f32.mrf.mxu0
        %v3060 = vadd.f32 %v2371, %v3059
        %v3061 = vpop.f32.mrf.mxu0
        %v3062 = vadd.f32 %v2373, %v3061
        %v3063 = vpop.f32.mrf.mxu0
        %v3064 = vadd.f32 %v2375, %v3063
        %v3065 = vpop.f32.mrf.mxu0
        %v3066 = vadd.f32 %v2377, %v3065
        %3067 = vmatprep.mubr.bf16.mxu0 %v2644
        %3068 = vmatmul.mubr.bf16.gmra.mxu0 %v2643
        %v3069 = vpop.f32.mrf.mxu0
        %v3070 = vadd.f32 %v2381, %v3069
        %v3071 = vpop.f32.mrf.mxu0
        %v3072 = vadd.f32 %v2383, %v3071
        %v3073 = vpop.f32.mrf.mxu0
        %v3074 = vadd.f32 %v2385, %v3073
        %v3075 = vpop.f32.mrf.mxu0
        %v3076 = vadd.f32 %v2387, %v3075
        %3077 = vmatprep.mubr.bf16.mxu0 %v2647
        %3078 = vmatmul.mubr.bf16.gmra.mxu0 %v2646
        %v3079 = vpop.f32.mrf.mxu0
        %v3080 = vadd.f32 %v2391, %v3079
        %v3081 = vpop.f32.mrf.mxu0
        %v3082 = vadd.f32 %v2393, %v3081
        %v3083 = vpop.f32.mrf.mxu0
        %v3084 = vadd.f32 %v2395, %v3083
        %v3085 = vpop.f32.mrf.mxu0
        %v3086 = vadd.f32 %v2397, %v3085
        %3087 = vmatprep.mubr.bf16.mxu0 %v2650
        %3088 = vmatmul.mubr.bf16.gmra.mxu0 %v2649
        %v3089 = vpop.f32.mrf.mxu0
        %v3090 = vadd.f32 %v2401, %v3089
        %v3091 = vpop.f32.mrf.mxu0
        %v3092 = vadd.f32 %v2403, %v3091
        %v3093 = vpop.f32.mrf.mxu0
        %v3094 = vadd.f32 %v2405, %v3093
        %v3095 = vpop.f32.mrf.mxu0
        %v3096 = vadd.f32 %v2407, %v3095
        %3097 = vmatprep.mubr.bf16.mxu0 %v2653
        %3098 = vmatmul.mubr.bf16.gmra.mxu0 %v2652
        %v3099 = vpop.f32.mrf.mxu0
        %v3100 = vadd.f32 %v2411, %v3099
        %v3101 = vpop.f32.mrf.mxu0
        %v3102 = vadd.f32 %v2413, %v3101
        %v3103 = vpop.f32.mrf.mxu0
        %v3104 = vadd.f32 %v2415, %v3103
        %v3105 = vpop.f32.mrf.mxu0
        %v3106 = vadd.f32 %v2417, %v3105
        %3107 = vmatprep.mubr.bf16.mxu0 %v2656
        %3108 = vmatmul.mubr.bf16.gmra.mxu0 %v2655
        %v3109 = vpop.f32.mrf.mxu0
        %v3110 = vadd.f32 %v2421, %v3109
        %v3111 = vpop.f32.mrf.mxu0
        %v3112 = vadd.f32 %v2423, %v3111
        %v3113 = vpop.f32.mrf.mxu0
        %v3114 = vadd.f32 %v2425, %v3113
        %v3115 = vpop.f32.mrf.mxu0
        %v3116 = vadd.f32 %v2427, %v3115
        %3117 = vmatprep.mubr.bf16.mxu0 %v2659
        %3118 = vmatmul.mubr.bf16.gmra.mxu0 %v2658
        %v3119 = vpop.f32.mrf.mxu0
        %v3120 = vadd.f32 %v2431, %v3119
        %v3121 = vpop.f32.mrf.mxu0
        %v3122 = vadd.f32 %v2433, %v3121
        %v3123 = vpop.f32.mrf.mxu0
        %v3124 = vadd.f32 %v2435, %v3123
        %v3125 = vpop.f32.mrf.mxu0
        %v3126 = vadd.f32 %v2437, %v3125
        %3127 = vmatprep.mubr.bf16.mxu0 %v2662
        %3128 = vmatmul.mubr.bf16.gmra.mxu0 %v2661
        %v3129 = vpop.f32.mrf.mxu0
        %v3130 = vadd.f32 %v2441, %v3129
        %v3131 = vpop.f32.mrf.mxu0
        %v3132 = vadd.f32 %v2443, %v3131
        %v3133 = vpop.f32.mrf.mxu0
        %v3134 = vadd.f32 %v2445, %v3133
        %v3135 = vpop.f32.mrf.mxu0
        %v3136 = vadd.f32 %v2447, %v3135
        %3137 = vmatprep.mubr.bf16.mxu0 %v2665
        %3138 = vmatmul.mubr.bf16.gmra.mxu0 %v2664
        %v3139 = vpop.f32.mrf.mxu0
        %v3140 = vadd.f32 %v2451, %v3139
        %v3141 = vpop.f32.mrf.mxu0
        %v3142 = vadd.f32 %v2453, %v3141
        %v3143 = vpop.f32.mrf.mxu0
        %v3144 = vadd.f32 %v2455, %v3143
        %v3145 = vpop.f32.mrf.mxu0
        %v3146 = vadd.f32 %v2457, %v3145
        %3147 = vdwg.mxu0
        %3148 = vmatprep.subr.bf16.mxu0 %v2906
        %3149 = vmatpush1.bf16.msra.mxu0 %v2905
        %3150 = vmatprep.subr.bf16.mxu0 %v2904
        %3151 = vmatpush1.bf16.msra.mxu0 %v2903
        %3152 = vmatprep.subr.bf16.mxu0 %v2902
        %3153 = vmatpush1.bf16.msra.mxu0 %v2901
        %3154 = vmatprep.subr.bf16.mxu0 %v2900
        %3155 = vmatpush1.bf16.msra.mxu0 %v2899
        %3156 = vmatprep.subr.bf16.mxu0 %v2898
        %3157 = vmatpush1.bf16.msra.mxu0 %v2897
        %3158 = vmatprep.subr.bf16.mxu0 %v2896
        %3159 = vmatpush1.bf16.msra.mxu0 %v2895
        %3160 = vmatprep.subr.bf16.mxu0 %v2894
        %3161 = vmatpush1.bf16.msra.mxu0 %v2893
        %3162 = vmatprep.subr.bf16.mxu0 %v2892
        %3163 = vmatpush1.bf16.msra.mxu0 %v2891
        %3164 = vmatprep.subr.bf16.mxu0 0
        %3165 = vmatpush2.bf16.msra.mxu0 0
        %3166 = vmatprep.subr.bf16.mxu0 0
        %3167 = vmatpush2.bf16.msra.mxu0 0
        %3168 = vmatprep.subr.bf16.mxu0 0
        %3169 = vmatpush2.bf16.msra.mxu0 0
        %3170 = vmatprep.subr.bf16.mxu0 0
        %3171 = vmatpush2.bf16.msra.mxu0 0
        %3172 = vmatprep.subr.bf16.mxu0 0
        %3173 = vmatpush2.bf16.msra.mxu0 0
        %3174 = vmatprep.subr.bf16.mxu0 0
        %3175 = vmatpush2.bf16.msra.mxu0 0
        %3176 = vmatprep.subr.bf16.mxu0 0
        %3177 = vmatpush2.bf16.msra.mxu0 0
        %3178 = vmatprep.subr.bf16.mxu0 0
        %3179 = vmatpush2.bf16.msra.mxu0 0
        %3180 = vmatprep.mubr.bf16.mxu0 0
        %3181 = vmatmul.mubr.bf16.gmra.mxu0 %v2621
        %v3182 = vpop.f32.mrf.mxu0
        %v3183 = vadd.f32 %v2990, %v3182
        %v3184 = vpop.f32.mrf.mxu0
        %v3185 = vadd.f32 %v2992, %v3184
        %v3186 = vpop.f32.mrf.mxu0
        %v3187 = vadd.f32 %v2994, %v3186
        %v3188 = vpop.f32.mrf.mxu0
        %v3189 = vadd.f32 %v2996, %v3188
        %3190 = vmatprep.mubr.bf16.mxu0 0
        %3191 = vmatmul.mubr.bf16.gmra.mxu0 %v2624
        %v3192 = vpop.f32.mrf.mxu0
        %v3193 = vadd.f32 %v3000, %v3192
        %v3194 = vpop.f32.mrf.mxu0
        %v3195 = vadd.f32 %v3002, %v3194
        %v3196 = vpop.f32.mrf.mxu0
        %v3197 = vadd.f32 %v3004, %v3196
        %v3198 = vpop.f32.mrf.mxu0
        %v3199 = vadd.f32 %v3006, %v3198
        %3200 = vmatprep.mubr.bf16.mxu0 0
        %3201 = vmatmul.mubr.bf16.gmra.mxu0 %v2627
        %v3202 = vpop.f32.mrf.mxu0
        %v3203 = vadd.f32 %v3010, %v3202
        %v3204 = vpop.f32.mrf.mxu0
        %v3205 = vadd.f32 %v3012, %v3204
        %v3206 = vpop.f32.mrf.mxu0
        %v3207 = vadd.f32 %v3014, %v3206
        %v3208 = vpop.f32.mrf.mxu0
        %v3209 = vadd.f32 %v3016, %v3208
        %3210 = vmatprep.mubr.bf16.mxu0 0
        %3211 = vmatmul.mubr.bf16.gmra.mxu0 %v2630
        %v3212 = vpop.f32.mrf.mxu0
        %v3213 = vadd.f32 %v3020, %v3212
        %v3214 = vpop.f32.mrf.mxu0
        %v3215 = vadd.f32 %v3022, %v3214
        %v3216 = vpop.f32.mrf.mxu0
        %v3217 = vadd.f32 %v3024, %v3216
        %v3218 = vpop.f32.mrf.mxu0
        %v3219 = vadd.f32 %v3026, %v3218
        %3220 = vmatprep.mubr.bf16.mxu0 0
        %3221 = vmatmul.mubr.bf16.gmra.mxu0 %v2633
        %v3222 = vpop.f32.mrf.mxu0
        %v3223 = vadd.f32 %v3030, %v3222
        %v3224 = vpop.f32.mrf.mxu0
        %v3225 = vadd.f32 %v3032, %v3224
        %v3226 = vpop.f32.mrf.mxu0
        %v3227 = vadd.f32 %v3034, %v3226
        %v3228 = vpop.f32.mrf.mxu0
        %v3229 = vadd.f32 %v3036, %v3228
        %3230 = vmatprep.mubr.bf16.mxu0 0
        %3231 = vmatmul.mubr.bf16.gmra.mxu0 %v2636
        %v3232 = vpop.f32.mrf.mxu0
        %v3233 = vadd.f32 %v3040, %v3232
        %v3234 = vpop.f32.mrf.mxu0
        %v3235 = vadd.f32 %v3042, %v3234
        %v3236 = vpop.f32.mrf.mxu0
        %v3237 = vadd.f32 %v3044, %v3236
        %v3238 = vpop.f32.mrf.mxu0
        %v3239 = vadd.f32 %v3046, %v3238
        %3240 = vmatprep.mubr.bf16.mxu0 0
        %3241 = vmatmul.mubr.bf16.gmra.mxu0 %v2639
        %v3242 = vpop.f32.mrf.mxu0
        %v3243 = vadd.f32 %v3050, %v3242
        %v3244 = vpop.f32.mrf.mxu0
        %v3245 = vadd.f32 %v3052, %v3244
        %v3246 = vpop.f32.mrf.mxu0
        %v3247 = vadd.f32 %v3054, %v3246
        %v3248 = vpop.f32.mrf.mxu0
        %v3249 = vadd.f32 %v3056, %v3248
        %3250 = vmatprep.mubr.bf16.mxu0 0
        %3251 = vmatmul.mubr.bf16.gmra.mxu0 %v2642
        %v3252 = vpop.f32.mrf.mxu0
        %v3253 = vadd.f32 %v3060, %v3252
        %v3254 = vpop.f32.mrf.mxu0
        %v3255 = vadd.f32 %v3062, %v3254
        %v3256 = vpop.f32.mrf.mxu0
        %v3257 = vadd.f32 %v3064, %v3256
        %v3258 = vpop.f32.mrf.mxu0
        %v3259 = vadd.f32 %v3066, %v3258
        %3260 = vmatprep.mubr.bf16.mxu0 0
        %3261 = vmatmul.mubr.bf16.gmra.mxu0 %v2645
        %v3262 = vpop.f32.mrf.mxu0
        %v3263 = vadd.f32 %v3070, %v3262
        %v3264 = vpop.f32.mrf.mxu0
        %v3265 = vadd.f32 %v3072, %v3264
        %v3266 = vpop.f32.mrf.mxu0
        %v3267 = vadd.f32 %v3074, %v3266
        %v3268 = vpop.f32.mrf.mxu0
        %v3269 = vadd.f32 %v3076, %v3268
        %3270 = vmatprep.mubr.bf16.mxu0 0
        %3271 = vmatmul.mubr.bf16.gmra.mxu0 %v2648
        %v3272 = vpop.f32.mrf.mxu0
        %v3273 = vadd.f32 %v3080, %v3272
        %v3274 = vpop.f32.mrf.mxu0
        %v3275 = vadd.f32 %v3082, %v3274
        %v3276 = vpop.f32.mrf.mxu0
        %v3277 = vadd.f32 %v3084, %v3276
        %v3278 = vpop.f32.mrf.mxu0
        %v3279 = vadd.f32 %v3086, %v3278
        %3280 = vmatprep.mubr.bf16.mxu0 0
        %3281 = vmatmul.mubr.bf16.gmra.mxu0 %v2651
        %v3282 = vpop.f32.mrf.mxu0
        %v3283 = vadd.f32 %v3090, %v3282
        %v3284 = vpop.f32.mrf.mxu0
        %v3285 = vadd.f32 %v3092, %v3284
        %v3286 = vpop.f32.mrf.mxu0
        %v3287 = vadd.f32 %v3094, %v3286
        %v3288 = vpop.f32.mrf.mxu0
        %v3289 = vadd.f32 %v3096, %v3288
        %3290 = vmatprep.mubr.bf16.mxu0 0
        %3291 = vmatmul.mubr.bf16.gmra.mxu0 %v2654
        %v3292 = vpop.f32.mrf.mxu0
        %v3293 = vadd.f32 %v3100, %v3292
        %v3294 = vpop.f32.mrf.mxu0
        %v3295 = vadd.f32 %v3102, %v3294
        %v3296 = vpop.f32.mrf.mxu0
        %v3297 = vadd.f32 %v3104, %v3296
        %v3298 = vpop.f32.mrf.mxu0
        %v3299 = vadd.f32 %v3106, %v3298
        %3300 = vmatprep.mubr.bf16.mxu0 0
        %3301 = vmatmul.mubr.bf16.gmra.mxu0 %v2657
        %v3302 = vpop.f32.mrf.mxu0
        %v3303 = vadd.f32 %v3110, %v3302
        %v3304 = vpop.f32.mrf.mxu0
        %v3305 = vadd.f32 %v3112, %v3304
        %v3306 = vpop.f32.mrf.mxu0
        %v3307 = vadd.f32 %v3114, %v3306
        %v3308 = vpop.f32.mrf.mxu0
        %v3309 = vadd.f32 %v3116, %v3308
        %3310 = vmatprep.mubr.bf16.mxu0 0
        %3311 = vmatmul.mubr.bf16.gmra.mxu0 %v2660
        %v3312 = vpop.f32.mrf.mxu0
        %v3313 = vadd.f32 %v3120, %v3312
        %v3314 = vpop.f32.mrf.mxu0
        %v3315 = vadd.f32 %v3122, %v3314
        %v3316 = vpop.f32.mrf.mxu0
        %v3317 = vadd.f32 %v3124, %v3316
        %v3318 = vpop.f32.mrf.mxu0
        %v3319 = vadd.f32 %v3126, %v3318
        %3320 = vmatprep.mubr.bf16.mxu0 0
        %3321 = vmatmul.mubr.bf16.gmra.mxu0 %v2663
        %v3322 = vpop.f32.mrf.mxu0
        %v3323 = vadd.f32 %v3130, %v3322
        %v3324 = vpop.f32.mrf.mxu0
        %v3325 = vadd.f32 %v3132, %v3324
        %v3326 = vpop.f32.mrf.mxu0
        %v3327 = vadd.f32 %v3134, %v3326
        %v3328 = vpop.f32.mrf.mxu0
        %v3329 = vadd.f32 %v3136, %v3328
        %3330 = vmatprep.mubr.bf16.mxu0 0
        %3331 = vmatmul.mubr.bf16.gmra.mxu0 %v2666
        %v3332 = vpop.f32.mrf.mxu0
        %v3333 = vadd.f32 %v3140, %v3332
        %v3334 = vpop.f32.mrf.mxu0
        %v3335 = vadd.f32 %v3142, %v3334
        %v3336 = vpop.f32.mrf.mxu0
        %v3337 = vadd.f32 %v3144, %v3336
        %v3338 = vpop.f32.mrf.mxu0
        %v3339 = vadd.f32 %v3146, %v3338
        %3340 = vdwg.mxu0
        %s3341 = scalar_lea.vmem [#allocation2], 48
        %v3342 = vld [vmem:[%s3341] sm:$0xff]
        %v3343 = vld [vmem:[%s3341 + $0x8] sm:$0xf]
        %v3344 = vld [vmem:[%s3341 + $0xc] sm:$0xff]
        %v3345 = vld [vmem:[%s3341 + $0x14] sm:$0xf]
        %v3346 = vld [vmem:[%s3341 + $0x18] sm:$0xff]
        %v3347 = vld [vmem:[%s3341 + $0x20] sm:$0xf]
        %v3348 = vld [vmem:[%s3341 + $0x24] sm:$0xff]
        %v3349 = vld [vmem:[%s3341 + $0x2c] sm:$0xf]
        %v3350 = vld [vmem:[%s3341 + $0x30] sm:$0xff]
        %v3351 = vld [vmem:[%s3341 + $0x38] sm:$0xf]
        %v3352 = vld [vmem:[%s3341 + $0x3c] sm:$0xff]
        %v3353 = vld [vmem:[%s3341 + $0x44] sm:$0xf]
        %v3354 = vld [vmem:[%s3341 + $0x48] sm:$0xff]
        %v3355 = vld [vmem:[%s3341 + $0x50] sm:$0xf]
        %v3356 = vld [vmem:[%s3341 + $0x54] sm:$0xff]
        %v3357 = vld [vmem:[%s3341 + $0x5c] sm:$0xf]
        %v3358 = vld [vmem:[%s3341 + $0x60] sm:$0xff]
        %v3359 = vld [vmem:[%s3341 + $0x68] sm:$0xf]
        %v3360 = vld [vmem:[%s3341 + $0x6c] sm:$0xff]
        %v3361 = vld [vmem:[%s3341 + $0x74] sm:$0xf]
        %v3362 = vld [vmem:[%s3341 + $0x78] sm:$0xff]
        %v3363 = vld [vmem:[%s3341 + $0x80] sm:$0xf]
        %v3364 = vld [vmem:[%s3341 + $0x84] sm:$0xff]
        %v3365 = vld [vmem:[%s3341 + $0x8c] sm:$0xf]
        %v3366 = vld [vmem:[%s3341 + $0x90] sm:$0xff]
        %v3367 = vld [vmem:[%s3341 + $0x98] sm:$0xf]
        %v3368 = vld [vmem:[%s3341 + $0x9c] sm:$0xff]
        %v3369 = vld [vmem:[%s3341 + $0xa4] sm:$0xf]
        %v3370 = vld [vmem:[%s3341 + $0xa8] sm:$0xff]
        %v3371 = vld [vmem:[%s3341 + $0xb0] sm:$0xf]
        %v3372 = vld [vmem:[%s3341 + $0xb4] sm:$0xff]
        %v3373 = vld [vmem:[%s3341 + $0xbc] sm:$0xf]
        %v3374 = vld [vmem:[%s3341 + $0xc0] sm:$0xff]
        %v3375 = vld [vmem:[%s3341 + $0xc8] sm:$0xf]
        %v3376 = vld [vmem:[%s3341 + $0xcc] sm:$0xff]
        %v3377 = vld [vmem:[%s3341 + $0xd4] sm:$0xf]
        %v3378 = vld [vmem:[%s3341 + $0xd8] sm:$0xff]
        %v3379 = vld [vmem:[%s3341 + $0xe0] sm:$0xf]
        %v3380 = vld [vmem:[%s3341 + $0xe4] sm:$0xff]
        %v3381 = vld [vmem:[%s3341 + $0xec] sm:$0xf]
        %v3382 = vld [vmem:[%s3341 + $0xf0] sm:$0xff]
        %v3383 = vld [vmem:[%s3341 + $0xf8] sm:$0xf]
        %v3384 = vld [vmem:[%s3341 + $0xfc] sm:$0xff]
        %v3385 = vld [vmem:[%s3341 + $0x104] sm:$0xf]
        %v3386 = vld [vmem:[%s3341 + $0x108] sm:$0xff]
        %v3387 = vld [vmem:[%s3341 + $0x110] sm:$0xf]
        %v3388 = vld [vmem:[%s3341 + $0x114] sm:$0xff]
        %v3389 = vld [vmem:[%s3341 + $0x11c] sm:$0xf]
        %v3390 = vld [vmem:[%s3341 + $0x120] sm:$0xff]
        %v3391 = vld [vmem:[%s3341 + $0x128] sm:$0xf]
        %v3392 = vld [vmem:[%s3341 + $0x12c] sm:$0xff]
        %v3393 = vld [vmem:[%s3341 + $0x134] sm:$0xf]
        %v3394 = vld [vmem:[%s3341 + $0x138] sm:$0xff]
        %v3395 = vld [vmem:[%s3341 + $0x140] sm:$0xf]
        %v3396 = vld [vmem:[%s3341 + $0x144] sm:$0xff]
        %v3397 = vld [vmem:[%s3341 + $0x14c] sm:$0xf]
        %v3398 = vld [vmem:[%s3341 + $0x150] sm:$0xff]
        %v3399 = vld [vmem:[%s3341 + $0x158] sm:$0xf]
        %v3400 = vld [vmem:[%s3341 + $0x15c] sm:$0xff]
        %v3401 = vld [vmem:[%s3341 + $0x164] sm:$0xf]
        %v3402 = vld [vmem:[%s3341 + $0x168] sm:$0xff]
        %v3403 = vld [vmem:[%s3341 + $0x170] sm:$0xf]
        %v3404 = vld [vmem:[%s3341 + $0x174] sm:$0xff]
        %v3405 = vld [vmem:[%s3341 + $0x17c] sm:$0xf]
        %s3406 = scalar_lea.vmem [#allocation6], 768
        %v3407 = vld [vmem:[%s3406] sm:$0xff]
        %v3408 = vld [vmem:[%s3406 + $0x8] sm:$0xff]
        %v3409 = vld [vmem:[%s3406 + $0x10] sm:$0xff]
        %v3410 = vld [vmem:[%s3406 + $0x18] sm:$0xff]
        %v3411 = vld [vmem:[%s3406 + $0x20] sm:$0xff]
        %v3412 = vld [vmem:[%s3406 + $0x28] sm:$0xff]
        %v3413 = vld [vmem:[%s3406 + $0x30] sm:$0xff]
        %v3414 = vld [vmem:[%s3406 + $0x38] sm:$0xff]
        %v3415 = vld [vmem:[%s3406 + $0x40] sm:$0xff]
        %v3416 = vld [vmem:[%s3406 + $0x48] sm:$0xff]
        %v3417 = vld [vmem:[%s3406 + $0x50] sm:$0xff]
        %v3418 = vld [vmem:[%s3406 + $0x58] sm:$0xff]
        %v3419 = vld [vmem:[%s3406 + $0x60] sm:$0xff]
        %v3420 = vld [vmem:[%s3406 + $0x68] sm:$0xff]
        %v3421 = vld [vmem:[%s3406 + $0x70] sm:$0xff]
        %v3422 = vld [vmem:[%s3406 + $0x78] sm:$0xff]
        %v3423 = vld [vmem:[%s3406 + $0x80] sm:$0xff]
        %v3424 = vld [vmem:[%s3406 + $0x88] sm:$0xff]
        %v3425 = vld [vmem:[%s3406 + $0x90] sm:$0xff]
        %v3426 = vld [vmem:[%s3406 + $0x98] sm:$0xff]
        %v3427 = vld [vmem:[%s3406 + $0xa0] sm:$0xff]
        %v3428 = vld [vmem:[%s3406 + $0xa8] sm:$0xff]
        %v3429 = vld [vmem:[%s3406 + $0xb0] sm:$0xff]
        %v3430 = vld [vmem:[%s3406 + $0xb8] sm:$0xff]
        %v3431 = vld [vmem:[%s3406 + $0xc0] sm:$0xff]
        %v3432 = vld [vmem:[%s3406 + $0xc8] sm:$0xff]
        %v3433 = vld [vmem:[%s3406 + $0xd0] sm:$0xff]
        %v3434 = vld [vmem:[%s3406 + $0xd8] sm:$0xff]
        %v3435 = vld [vmem:[%s3406 + $0xe0] sm:$0xff]
        %v3436 = vld [vmem:[%s3406 + $0xe8] sm:$0xff]
        %v3437 = vld [vmem:[%s3406 + $0xf0] sm:$0xff]
        %v3438 = vld [vmem:[%s3406 + $0xf8] sm:$0xff]
        %v3439 = vld [vmem:[%s3406 + $0x100] sm:$0xff]
        %v3440 = vld [vmem:[%s3406 + $0x108] sm:$0xff]
        %v3441 = vld [vmem:[%s3406 + $0x110] sm:$0xff]
        %v3442 = vld [vmem:[%s3406 + $0x118] sm:$0xff]
        %v3443 = vld [vmem:[%s3406 + $0x120] sm:$0xff]
        %v3444 = vld [vmem:[%s3406 + $0x128] sm:$0xff]
        %v3445 = vld [vmem:[%s3406 + $0x130] sm:$0xff]
        %v3446 = vld [vmem:[%s3406 + $0x138] sm:$0xff]
        %v3447 = vld [vmem:[%s3406 + $0x140] sm:$0xff]
        %v3448 = vld [vmem:[%s3406 + $0x148] sm:$0xff]
        %v3449 = vld [vmem:[%s3406 + $0x150] sm:$0xff]
        %v3450 = vld [vmem:[%s3406 + $0x158] sm:$0xff]
        %v3451 = vld [vmem:[%s3406 + $0x160] sm:$0xff]
        %v3452 = vld [vmem:[%s3406 + $0x168] sm:$0xff]
        %v3453 = vld [vmem:[%s3406 + $0x170] sm:$0xff]
        %v3454 = vld [vmem:[%s3406 + $0x178] sm:$0xff]
        %v3519 = vunpack.c.l.b16 %v3342
        %v3520 = vunpack.c.h.b16 %v3342
        %v3521 = vunpack.c.l.b16 %v3343
        %v3522 = vunpack.c.l.b16 %v3344
        %v3523 = vunpack.c.h.b16 %v3344
        %v3524 = vunpack.c.l.b16 %v3345
        %v3525 = vunpack.c.l.b16 %v3346
        %v3526 = vunpack.c.h.b16 %v3346
        %v3527 = vunpack.c.l.b16 %v3347
        %v3528 = vunpack.c.l.b16 %v3348
        %v3529 = vunpack.c.h.b16 %v3348
        %v3530 = vunpack.c.l.b16 %v3349
        %v3531 = vunpack.c.l.b16 %v3350
        %v3532 = vunpack.c.h.b16 %v3350
        %v3533 = vunpack.c.l.b16 %v3351
        %v3534 = vunpack.c.l.b16 %v3352
        %v3535 = vunpack.c.h.b16 %v3352
        %v3536 = vunpack.c.l.b16 %v3353
        %v3537 = vunpack.c.l.b16 %v3354
        %v3538 = vunpack.c.h.b16 %v3354
        %v3539 = vunpack.c.l.b16 %v3355
        %v3540 = vunpack.c.l.b16 %v3356
        %v3541 = vunpack.c.h.b16 %v3356
        %v3542 = vunpack.c.l.b16 %v3357
        %v3543 = vunpack.c.l.b16 %v3358
        %v3544 = vunpack.c.h.b16 %v3358
        %v3545 = vunpack.c.l.b16 %v3359
        %v3546 = vunpack.c.l.b16 %v3360
        %v3547 = vunpack.c.h.b16 %v3360
        %v3548 = vunpack.c.l.b16 %v3361
        %v3549 = vunpack.c.l.b16 %v3362
        %v3550 = vunpack.c.h.b16 %v3362
        %v3551 = vunpack.c.l.b16 %v3363
        %v3552 = vunpack.c.l.b16 %v3364
        %v3553 = vunpack.c.h.b16 %v3364
        %v3554 = vunpack.c.l.b16 %v3365
        %v3555 = vunpack.c.l.b16 %v3366
        %v3556 = vunpack.c.h.b16 %v3366
        %v3557 = vunpack.c.l.b16 %v3367
        %v3558 = vunpack.c.l.b16 %v3368
        %v3559 = vunpack.c.h.b16 %v3368
        %v3560 = vunpack.c.l.b16 %v3369
        %v3561 = vunpack.c.l.b16 %v3370
        %v3562 = vunpack.c.h.b16 %v3370
        %v3563 = vunpack.c.l.b16 %v3371
        %v3564 = vunpack.c.l.b16 %v3372
        %v3565 = vunpack.c.h.b16 %v3372
        %v3566 = vunpack.c.l.b16 %v3373
        %v3567 = vunpack.c.l.b16 %v3374
        %v3568 = vunpack.c.h.b16 %v3374
        %v3569 = vunpack.c.l.b16 %v3375
        %v3570 = vunpack.c.l.b16 %v3376
        %v3571 = vunpack.c.h.b16 %v3376
        %v3572 = vunpack.c.l.b16 %v3377
        %v3573 = vunpack.c.l.b16 %v3378
        %v3574 = vunpack.c.h.b16 %v3378
        %v3575 = vunpack.c.l.b16 %v3379
        %v3576 = vunpack.c.l.b16 %v3380
        %v3577 = vunpack.c.h.b16 %v3380
        %v3578 = vunpack.c.l.b16 %v3381
        %v3579 = vunpack.c.l.b16 %v3382
        %v3580 = vunpack.c.h.b16 %v3382
        %v3581 = vunpack.c.l.b16 %v3383
        %v3582 = vunpack.c.l.b16 %v3384
        %v3583 = vunpack.c.h.b16 %v3384
        %v3584 = vunpack.c.l.b16 %v3385
        %v3585 = vunpack.c.l.b16 %v3386
        %v3586 = vunpack.c.h.b16 %v3386
        %v3587 = vunpack.c.l.b16 %v3387
        %v3588 = vunpack.c.l.b16 %v3388
        %v3589 = vunpack.c.h.b16 %v3388
        %v3590 = vunpack.c.l.b16 %v3389
        %v3591 = vunpack.c.l.b16 %v3390
        %v3592 = vunpack.c.h.b16 %v3390
        %v3593 = vunpack.c.l.b16 %v3391
        %v3594 = vunpack.c.l.b16 %v3392
        %v3595 = vunpack.c.h.b16 %v3392
        %v3596 = vunpack.c.l.b16 %v3393
        %v3597 = vunpack.c.l.b16 %v3394
        %v3598 = vunpack.c.h.b16 %v3394
        %v3599 = vunpack.c.l.b16 %v3395
        %v3600 = vunpack.c.l.b16 %v3396
        %v3601 = vunpack.c.h.b16 %v3396
        %v3602 = vunpack.c.l.b16 %v3397
        %v3603 = vunpack.c.l.b16 %v3398
        %v3604 = vunpack.c.h.b16 %v3398
        %v3605 = vunpack.c.l.b16 %v3399
        %v3606 = vunpack.c.l.b16 %v3400
        %v3607 = vunpack.c.h.b16 %v3400
        %v3608 = vunpack.c.l.b16 %v3401
        %v3609 = vunpack.c.l.b16 %v3402
        %v3610 = vunpack.c.h.b16 %v3402
        %v3611 = vunpack.c.l.b16 %v3403
        %v3612 = vunpack.c.l.b16 %v3404
        %v3613 = vunpack.c.h.b16 %v3404
        %v3614 = vunpack.c.l.b16 %v3405
        %v3615 = vpack.c.b16 %v3522, %v3519
        %v3616 = vpack.c.b16 %v3523, %v3520
        %v3617 = vpack.c.b16 %v3524, %v3521
        %v3618 = vpack.c.b16 %v3528, %v3525
        %v3619 = vpack.c.b16 %v3529, %v3526
        %v3620 = vpack.c.b16 %v3530, %v3527
        %v3621 = vpack.c.b16 %v3534, %v3531
        %v3622 = vpack.c.b16 %v3535, %v3532
        %v3623 = vpack.c.b16 %v3536, %v3533
        %v3624 = vpack.c.b16 %v3540, %v3537
        %v3625 = vpack.c.b16 %v3541, %v3538
        %v3626 = vpack.c.b16 %v3542, %v3539
        %v3627 = vpack.c.b16 %v3546, %v3543
        %v3628 = vpack.c.b16 %v3547, %v3544
        %v3629 = vpack.c.b16 %v3548, %v3545
        %v3630 = vpack.c.b16 %v3552, %v3549
        %v3631 = vpack.c.b16 %v3553, %v3550
        %v3632 = vpack.c.b16 %v3554, %v3551
        %v3633 = vpack.c.b16 %v3558, %v3555
        %v3634 = vpack.c.b16 %v3559, %v3556
        %v3635 = vpack.c.b16 %v3560, %v3557
        %v3636 = vpack.c.b16 %v3564, %v3561
        %v3637 = vpack.c.b16 %v3565, %v3562
        %v3638 = vpack.c.b16 %v3566, %v3563
        %v3639 = vpack.c.b16 %v3570, %v3567
        %v3640 = vpack.c.b16 %v3571, %v3568
        %v3641 = vpack.c.b16 %v3572, %v3569
        %v3642 = vpack.c.b16 %v3576, %v3573
        %v3643 = vpack.c.b16 %v3577, %v3574
        %v3644 = vpack.c.b16 %v3578, %v3575
        %v3645 = vpack.c.b16 %v3582, %v3579
        %v3646 = vpack.c.b16 %v3583, %v3580
        %v3647 = vpack.c.b16 %v3584, %v3581
        %v3648 = vpack.c.b16 %v3588, %v3585
        %v3649 = vpack.c.b16 %v3589, %v3586
        %v3650 = vpack.c.b16 %v3590, %v3587
        %v3651 = vpack.c.b16 %v3594, %v3591
        %v3652 = vpack.c.b16 %v3595, %v3592
        %v3653 = vpack.c.b16 %v3596, %v3593
        %v3654 = vpack.c.b16 %v3600, %v3597
        %v3655 = vpack.c.b16 %v3601, %v3598
        %v3656 = vpack.c.b16 %v3602, %v3599
        %v3657 = vpack.c.b16 %v3606, %v3603
        %v3658 = vpack.c.b16 %v3607, %v3604
        %v3659 = vpack.c.b16 %v3608, %v3605
        %v3660 = vpack.c.b16 %v3612, %v3609
        %v3661 = vpack.c.b16 %v3613, %v3610
        %v3662 = vpack.c.b16 %v3614, %v3611
        %v3759 = vunpack.c.l.b16 %v3407
        %v3760 = vunpack.c.h.b16 %v3407
        %v3761 = vunpack.c.l.b16 %v3408
        %v3762 = vunpack.c.h.b16 %v3408
        %v3763 = vunpack.c.l.b16 %v3409
        %v3764 = vunpack.c.h.b16 %v3409
        %v3765 = vunpack.c.l.b16 %v3410
        %v3766 = vunpack.c.h.b16 %v3410
        %v3767 = vunpack.c.l.b16 %v3411
        %v3768 = vunpack.c.h.b16 %v3411
        %v3769 = vunpack.c.l.b16 %v3412
        %v3770 = vunpack.c.h.b16 %v3412
        %v3771 = vunpack.c.l.b16 %v3413
        %v3772 = vunpack.c.h.b16 %v3413
        %v3773 = vunpack.c.l.b16 %v3414
        %v3774 = vunpack.c.h.b16 %v3414
        %v3775 = vunpack.c.l.b16 %v3415
        %v3776 = vunpack.c.h.b16 %v3415
        %v3777 = vunpack.c.l.b16 %v3416
        %v3778 = vunpack.c.h.b16 %v3416
        %v3779 = vunpack.c.l.b16 %v3417
        %v3780 = vunpack.c.h.b16 %v3417
        %v3781 = vunpack.c.l.b16 %v3418
        %v3782 = vunpack.c.h.b16 %v3418
        %v3783 = vunpack.c.l.b16 %v3419
        %v3784 = vunpack.c.h.b16 %v3419
        %v3785 = vunpack.c.l.b16 %v3420
        %v3786 = vunpack.c.h.b16 %v3420
        %v3787 = vunpack.c.l.b16 %v3421
        %v3788 = vunpack.c.h.b16 %v3421
        %v3789 = vunpack.c.l.b16 %v3422
        %v3790 = vunpack.c.h.b16 %v3422
        %v3791 = vunpack.c.l.b16 %v3423
        %v3792 = vunpack.c.h.b16 %v3423
        %v3793 = vunpack.c.l.b16 %v3424
        %v3794 = vunpack.c.h.b16 %v3424
        %v3795 = vunpack.c.l.b16 %v3425
        %v3796 = vunpack.c.h.b16 %v3425
        %v3797 = vunpack.c.l.b16 %v3426
        %v3798 = vunpack.c.h.b16 %v3426
        %v3799 = vunpack.c.l.b16 %v3427
        %v3800 = vunpack.c.h.b16 %v3427
        %v3801 = vunpack.c.l.b16 %v3428
        %v3802 = vunpack.c.h.b16 %v3428
        %v3803 = vunpack.c.l.b16 %v3429
        %v3804 = vunpack.c.h.b16 %v3429
        %v3805 = vunpack.c.l.b16 %v3430
        %v3806 = vunpack.c.h.b16 %v3430
        %v3807 = vunpack.c.l.b16 %v3431
        %v3808 = vunpack.c.h.b16 %v3431
        %v3809 = vunpack.c.l.b16 %v3432
        %v3810 = vunpack.c.h.b16 %v3432
        %v3811 = vunpack.c.l.b16 %v3433
        %v3812 = vunpack.c.h.b16 %v3433
        %v3813 = vunpack.c.l.b16 %v3434
        %v3814 = vunpack.c.h.b16 %v3434
        %v3815 = vunpack.c.l.b16 %v3435
        %v3816 = vunpack.c.h.b16 %v3435
        %v3817 = vunpack.c.l.b16 %v3436
        %v3818 = vunpack.c.h.b16 %v3436
        %v3819 = vunpack.c.l.b16 %v3437
        %v3820 = vunpack.c.h.b16 %v3437
        %v3821 = vunpack.c.l.b16 %v3438
        %v3822 = vunpack.c.h.b16 %v3438
        %v3823 = vunpack.c.l.b16 %v3439
        %v3824 = vunpack.c.h.b16 %v3439
        %v3825 = vunpack.c.l.b16 %v3440
        %v3826 = vunpack.c.h.b16 %v3440
        %v3827 = vunpack.c.l.b16 %v3441
        %v3828 = vunpack.c.h.b16 %v3441
        %v3829 = vunpack.c.l.b16 %v3442
        %v3830 = vunpack.c.h.b16 %v3442
        %v3831 = vunpack.c.l.b16 %v3443
        %v3832 = vunpack.c.h.b16 %v3443
        %v3833 = vunpack.c.l.b16 %v3444
        %v3834 = vunpack.c.h.b16 %v3444
        %v3835 = vunpack.c.l.b16 %v3445
        %v3836 = vunpack.c.h.b16 %v3445
        %v3837 = vunpack.c.l.b16 %v3446
        %v3838 = vunpack.c.h.b16 %v3446
        %v3839 = vunpack.c.l.b16 %v3447
        %v3840 = vunpack.c.h.b16 %v3447
        %v3841 = vunpack.c.l.b16 %v3448
        %v3842 = vunpack.c.h.b16 %v3448
        %v3843 = vunpack.c.l.b16 %v3449
        %v3844 = vunpack.c.h.b16 %v3449
        %v3845 = vunpack.c.l.b16 %v3450
        %v3846 = vunpack.c.h.b16 %v3450
        %v3847 = vunpack.c.l.b16 %v3451
        %v3848 = vunpack.c.h.b16 %v3451
        %v3849 = vunpack.c.l.b16 %v3452
        %v3850 = vunpack.c.h.b16 %v3452
        %v3851 = vunpack.c.l.b16 %v3453
        %v3852 = vunpack.c.h.b16 %v3453
        %v3853 = vunpack.c.l.b16 %v3454
        %v3854 = vunpack.c.h.b16 %v3454
        %v3855 = vpack.c.b16 %v3761, %v3759
        %v3856 = vpack.c.b16 %v3762, %v3760
        %v3857 = vpack.c.b16 %v3765, %v3763
        %v3858 = vpack.c.b16 %v3766, %v3764
        %v3859 = vpack.c.b16 %v3769, %v3767
        %v3860 = vpack.c.b16 %v3770, %v3768
        %v3861 = vpack.c.b16 %v3773, %v3771
        %v3862 = vpack.c.b16 %v3774, %v3772
        %v3863 = vpack.c.b16 %v3777, %v3775
        %v3864 = vpack.c.b16 %v3778, %v3776
        %v3865 = vpack.c.b16 %v3781, %v3779
        %v3866 = vpack.c.b16 %v3782, %v3780
        %v3867 = vpack.c.b16 %v3785, %v3783
        %v3868 = vpack.c.b16 %v3786, %v3784
        %v3869 = vpack.c.b16 %v3789, %v3787
        %v3870 = vpack.c.b16 %v3790, %v3788
        %v3871 = vpack.c.b16 %v3793, %v3791
        %v3872 = vpack.c.b16 %v3794, %v3792
        %v3873 = vpack.c.b16 %v3797, %v3795
        %v3874 = vpack.c.b16 %v3798, %v3796
        %v3875 = vpack.c.b16 %v3801, %v3799
        %v3876 = vpack.c.b16 %v3802, %v3800
        %v3877 = vpack.c.b16 %v3805, %v3803
        %v3878 = vpack.c.b16 %v3806, %v3804
        %v3879 = vpack.c.b16 %v3809, %v3807
        %v3880 = vpack.c.b16 %v3810, %v3808
        %v3881 = vpack.c.b16 %v3813, %v3811
        %v3882 = vpack.c.b16 %v3814, %v3812
        %v3883 = vpack.c.b16 %v3817, %v3815
        %v3884 = vpack.c.b16 %v3818, %v3816
        %v3885 = vpack.c.b16 %v3821, %v3819
        %v3886 = vpack.c.b16 %v3822, %v3820
        %v3887 = vpack.c.b16 %v3825, %v3823
        %v3888 = vpack.c.b16 %v3826, %v3824
        %v3889 = vpack.c.b16 %v3829, %v3827
        %v3890 = vpack.c.b16 %v3830, %v3828
        %v3891 = vpack.c.b16 %v3833, %v3831
        %v3892 = vpack.c.b16 %v3834, %v3832
        %v3893 = vpack.c.b16 %v3837, %v3835
        %v3894 = vpack.c.b16 %v3838, %v3836
        %v3895 = vpack.c.b16 %v3841, %v3839
        %v3896 = vpack.c.b16 %v3842, %v3840
        %v3897 = vpack.c.b16 %v3845, %v3843
        %v3898 = vpack.c.b16 %v3846, %v3844
        %v3899 = vpack.c.b16 %v3849, %v3847
        %v3900 = vpack.c.b16 %v3850, %v3848
        %v3901 = vpack.c.b16 %v3853, %v3851
        %v3902 = vpack.c.b16 %v3854, %v3852
        %3951 = vmatprep.subr.bf16.mxu0 %v3870
        %3952 = vmatpush1.bf16.msra.mxu0 %v3869
        %3953 = vmatprep.subr.bf16.mxu0 %v3868
        %3954 = vmatpush1.bf16.msra.mxu0 %v3867
        %3955 = vmatprep.subr.bf16.mxu0 %v3866
        %3956 = vmatpush1.bf16.msra.mxu0 %v3865
        %3957 = vmatprep.subr.bf16.mxu0 %v3864
        %3958 = vmatpush1.bf16.msra.mxu0 %v3863
        %3959 = vmatprep.subr.bf16.mxu0 %v3862
        %3960 = vmatpush1.bf16.msra.mxu0 %v3861
        %3961 = vmatprep.subr.bf16.mxu0 %v3860
        %3962 = vmatpush1.bf16.msra.mxu0 %v3859
        %3963 = vmatprep.subr.bf16.mxu0 %v3858
        %3964 = vmatpush1.bf16.msra.mxu0 %v3857
        %3965 = vmatprep.subr.bf16.mxu0 %v3856
        %3966 = vmatpush1.bf16.msra.mxu0 %v3855
        %3967 = vmatprep.subr.bf16.mxu0 %v3886
        %3968 = vmatpush2.bf16.msra.mxu0 %v3885
        %3969 = vmatprep.subr.bf16.mxu0 %v3884
        %3970 = vmatpush2.bf16.msra.mxu0 %v3883
        %3971 = vmatprep.subr.bf16.mxu0 %v3882
        %3972 = vmatpush2.bf16.msra.mxu0 %v3881
        %3973 = vmatprep.subr.bf16.mxu0 %v3880
        %3974 = vmatpush2.bf16.msra.mxu0 %v3879
        %3975 = vmatprep.subr.bf16.mxu0 %v3878
        %3976 = vmatpush2.bf16.msra.mxu0 %v3877
        %3977 = vmatprep.subr.bf16.mxu0 %v3876
        %3978 = vmatpush2.bf16.msra.mxu0 %v3875
        %3979 = vmatprep.subr.bf16.mxu0 %v3874
        %3980 = vmatpush2.bf16.msra.mxu0 %v3873
        %3981 = vmatprep.subr.bf16.mxu0 %v3872
        %3982 = vmatpush2.bf16.msra.mxu0 %v3871
        %3983 = vmatprep.mubr.bf16.mxu0 %v3616
        %3984 = vmatmul.mubr.bf16.gmra.mxu0 %v3615
        %v3985 = vpop.f32.mrf.mxu0
        %v3986 = vadd.f32 0.0, %v3985
        %v3987 = vpop.f32.mrf.mxu0
        %v3988 = vadd.f32 0.0, %v3987
        %v3989 = vpop.f32.mrf.mxu0
        %v3990 = vadd.f32 0.0, %v3989
        %v3991 = vpop.f32.mrf.mxu0
        %v3992 = vadd.f32 0.0, %v3991
        %3993 = vmatprep.mubr.bf16.mxu0 %v3619
        %3994 = vmatmul.mubr.bf16.gmra.mxu0 %v3618
        %v3995 = vpop.f32.mrf.mxu0
        %v3996 = vadd.f32 0.0, %v3995
        %v3997 = vpop.f32.mrf.mxu0
        %v3998 = vadd.f32 0.0, %v3997
        %v3999 = vpop.f32.mrf.mxu0
        %v4000 = vadd.f32 0.0, %v3999
        %v4001 = vpop.f32.mrf.mxu0
        %v4002 = vadd.f32 0.0, %v4001
        %4003 = vmatprep.mubr.bf16.mxu0 %v3622
        %4004 = vmatmul.mubr.bf16.gmra.mxu0 %v3621
        %v4005 = vpop.f32.mrf.mxu0
        %v4006 = vadd.f32 0.0, %v4005
        %v4007 = vpop.f32.mrf.mxu0
        %v4008 = vadd.f32 0.0, %v4007
        %v4009 = vpop.f32.mrf.mxu0
        %v4010 = vadd.f32 0.0, %v4009
        %v4011 = vpop.f32.mrf.mxu0
        %v4012 = vadd.f32 0.0, %v4011
        %4013 = vmatprep.mubr.bf16.mxu0 %v3625
        %4014 = vmatmul.mubr.bf16.gmra.mxu0 %v3624
        %v4015 = vpop.f32.mrf.mxu0
        %v4016 = vadd.f32 0.0, %v4015
        %v4017 = vpop.f32.mrf.mxu0
        %v4018 = vadd.f32 0.0, %v4017
        %v4019 = vpop.f32.mrf.mxu0
        %v4020 = vadd.f32 0.0, %v4019
        %v4021 = vpop.f32.mrf.mxu0
        %v4022 = vadd.f32 0.0, %v4021
        %4023 = vmatprep.mubr.bf16.mxu0 %v3628
        %4024 = vmatmul.mubr.bf16.gmra.mxu0 %v3627
        %v4025 = vpop.f32.mrf.mxu0
        %v4026 = vadd.f32 0.0, %v4025
        %v4027 = vpop.f32.mrf.mxu0
        %v4028 = vadd.f32 0.0, %v4027
        %v4029 = vpop.f32.mrf.mxu0
        %v4030 = vadd.f32 0.0, %v4029
        %v4031 = vpop.f32.mrf.mxu0
        %v4032 = vadd.f32 0.0, %v4031
        %4033 = vmatprep.mubr.bf16.mxu0 %v3631
        %4034 = vmatmul.mubr.bf16.gmra.mxu0 %v3630
        %v4035 = vpop.f32.mrf.mxu0
        %v4036 = vadd.f32 0.0, %v4035
        %v4037 = vpop.f32.mrf.mxu0
        %v4038 = vadd.f32 0.0, %v4037
        %v4039 = vpop.f32.mrf.mxu0
        %v4040 = vadd.f32 0.0, %v4039
        %v4041 = vpop.f32.mrf.mxu0
        %v4042 = vadd.f32 0.0, %v4041
        %4043 = vmatprep.mubr.bf16.mxu0 %v3634
        %4044 = vmatmul.mubr.bf16.gmra.mxu0 %v3633
        %v4045 = vpop.f32.mrf.mxu0
        %v4046 = vadd.f32 0.0, %v4045
        %v4047 = vpop.f32.mrf.mxu0
        %v4048 = vadd.f32 0.0, %v4047
        %v4049 = vpop.f32.mrf.mxu0
        %v4050 = vadd.f32 0.0, %v4049
        %v4051 = vpop.f32.mrf.mxu0
        %v4052 = vadd.f32 0.0, %v4051
        %4053 = vmatprep.mubr.bf16.mxu0 %v3637
        %4054 = vmatmul.mubr.bf16.gmra.mxu0 %v3636
        %v4055 = vpop.f32.mrf.mxu0
        %v4056 = vadd.f32 0.0, %v4055
        %v4057 = vpop.f32.mrf.mxu0
        %v4058 = vadd.f32 0.0, %v4057
        %v4059 = vpop.f32.mrf.mxu0
        %v4060 = vadd.f32 0.0, %v4059
        %v4061 = vpop.f32.mrf.mxu0
        %v4062 = vadd.f32 0.0, %v4061
        %4063 = vmatprep.mubr.bf16.mxu0 %v3640
        %4064 = vmatmul.mubr.bf16.gmra.mxu0 %v3639
        %v4065 = vpop.f32.mrf.mxu0
        %v4066 = vadd.f32 0.0, %v4065
        %v4067 = vpop.f32.mrf.mxu0
        %v4068 = vadd.f32 0.0, %v4067
        %v4069 = vpop.f32.mrf.mxu0
        %v4070 = vadd.f32 0.0, %v4069
        %v4071 = vpop.f32.mrf.mxu0
        %v4072 = vadd.f32 0.0, %v4071
        %4073 = vmatprep.mubr.bf16.mxu0 %v3643
        %4074 = vmatmul.mubr.bf16.gmra.mxu0 %v3642
        %v4075 = vpop.f32.mrf.mxu0
        %v4076 = vadd.f32 0.0, %v4075
        %v4077 = vpop.f32.mrf.mxu0
        %v4078 = vadd.f32 0.0, %v4077
        %v4079 = vpop.f32.mrf.mxu0
        %v4080 = vadd.f32 0.0, %v4079
        %v4081 = vpop.f32.mrf.mxu0
        %v4082 = vadd.f32 0.0, %v4081
        %4083 = vmatprep.mubr.bf16.mxu0 %v3646
        %4084 = vmatmul.mubr.bf16.gmra.mxu0 %v3645
        %v4085 = vpop.f32.mrf.mxu0
        %v4086 = vadd.f32 0.0, %v4085
        %v4087 = vpop.f32.mrf.mxu0
        %v4088 = vadd.f32 0.0, %v4087
        %v4089 = vpop.f32.mrf.mxu0
        %v4090 = vadd.f32 0.0, %v4089
        %v4091 = vpop.f32.mrf.mxu0
        %v4092 = vadd.f32 0.0, %v4091
        %4093 = vmatprep.mubr.bf16.mxu0 %v3649
        %4094 = vmatmul.mubr.bf16.gmra.mxu0 %v3648
        %v4095 = vpop.f32.mrf.mxu0
        %v4096 = vadd.f32 0.0, %v4095
        %v4097 = vpop.f32.mrf.mxu0
        %v4098 = vadd.f32 0.0, %v4097
        %v4099 = vpop.f32.mrf.mxu0
        %v4100 = vadd.f32 0.0, %v4099
        %v4101 = vpop.f32.mrf.mxu0
        %v4102 = vadd.f32 0.0, %v4101
        %4103 = vmatprep.mubr.bf16.mxu0 %v3652
        %4104 = vmatmul.mubr.bf16.gmra.mxu0 %v3651
        %v4105 = vpop.f32.mrf.mxu0
        %v4106 = vadd.f32 0.0, %v4105
        %v4107 = vpop.f32.mrf.mxu0
        %v4108 = vadd.f32 0.0, %v4107
        %v4109 = vpop.f32.mrf.mxu0
        %v4110 = vadd.f32 0.0, %v4109
        %v4111 = vpop.f32.mrf.mxu0
        %v4112 = vadd.f32 0.0, %v4111
        %4113 = vmatprep.mubr.bf16.mxu0 %v3655
        %4114 = vmatmul.mubr.bf16.gmra.mxu0 %v3654
        %v4115 = vpop.f32.mrf.mxu0
        %v4116 = vadd.f32 0.0, %v4115
        %v4117 = vpop.f32.mrf.mxu0
        %v4118 = vadd.f32 0.0, %v4117
        %v4119 = vpop.f32.mrf.mxu0
        %v4120 = vadd.f32 0.0, %v4119
        %v4121 = vpop.f32.mrf.mxu0
        %v4122 = vadd.f32 0.0, %v4121
        %4123 = vmatprep.mubr.bf16.mxu0 %v3658
        %4124 = vmatmul.mubr.bf16.gmra.mxu0 %v3657
        %v4125 = vpop.f32.mrf.mxu0
        %v4126 = vadd.f32 0.0, %v4125
        %v4127 = vpop.f32.mrf.mxu0
        %v4128 = vadd.f32 0.0, %v4127
        %v4129 = vpop.f32.mrf.mxu0
        %v4130 = vadd.f32 0.0, %v4129
        %v4131 = vpop.f32.mrf.mxu0
        %v4132 = vadd.f32 0.0, %v4131
        %4133 = vmatprep.mubr.bf16.mxu0 %v3661
        %4134 = vmatmul.mubr.bf16.gmra.mxu0 %v3660
        %v4135 = vpop.f32.mrf.mxu0
        %v4136 = vadd.f32 0.0, %v4135
        %v4137 = vpop.f32.mrf.mxu0
        %v4138 = vadd.f32 0.0, %v4137
        %v4139 = vpop.f32.mrf.mxu0
        %v4140 = vadd.f32 0.0, %v4139
        %v4141 = vpop.f32.mrf.mxu0
        %v4142 = vadd.f32 0.0, %v4141
        %4143 = vdwg.mxu0
        %4144 = vmatprep.subr.bf16.mxu0 %v3902
        %4145 = vmatpush1.bf16.msra.mxu0 %v3901
        %4146 = vmatprep.subr.bf16.mxu0 %v3900
        %4147 = vmatpush1.bf16.msra.mxu0 %v3899
        %4148 = vmatprep.subr.bf16.mxu0 %v3898
        %4149 = vmatpush1.bf16.msra.mxu0 %v3897
        %4150 = vmatprep.subr.bf16.mxu0 %v3896
        %4151 = vmatpush1.bf16.msra.mxu0 %v3895
        %4152 = vmatprep.subr.bf16.mxu0 %v3894
        %4153 = vmatpush1.bf16.msra.mxu0 %v3893
        %4154 = vmatprep.subr.bf16.mxu0 %v3892
        %4155 = vmatpush1.bf16.msra.mxu0 %v3891
        %4156 = vmatprep.subr.bf16.mxu0 %v3890
        %4157 = vmatpush1.bf16.msra.mxu0 %v3889
        %4158 = vmatprep.subr.bf16.mxu0 %v3888
        %4159 = vmatpush1.bf16.msra.mxu0 %v3887
        %4160 = vmatprep.subr.bf16.mxu0 0
        %4161 = vmatpush2.bf16.msra.mxu0 0
        %4162 = vmatprep.subr.bf16.mxu0 0
        %4163 = vmatpush2.bf16.msra.mxu0 0
        %4164 = vmatprep.subr.bf16.mxu0 0
        %4165 = vmatpush2.bf16.msra.mxu0 0
        %4166 = vmatprep.subr.bf16.mxu0 0
        %4167 = vmatpush2.bf16.msra.mxu0 0
        %4168 = vmatprep.subr.bf16.mxu0 0
        %4169 = vmatpush2.bf16.msra.mxu0 0
        %4170 = vmatprep.subr.bf16.mxu0 0
        %4171 = vmatpush2.bf16.msra.mxu0 0
        %4172 = vmatprep.subr.bf16.mxu0 0
        %4173 = vmatpush2.bf16.msra.mxu0 0
        %4174 = vmatprep.subr.bf16.mxu0 0
        %4175 = vmatpush2.bf16.msra.mxu0 0
        %4176 = vmatprep.mubr.bf16.mxu0 0
        %4177 = vmatmul.mubr.bf16.gmra.mxu0 %v3617
        %v4178 = vpop.f32.mrf.mxu0
        %v4179 = vadd.f32 %v3986, %v4178
        %v4180 = vpop.f32.mrf.mxu0
        %v4181 = vadd.f32 %v3988, %v4180
        %v4182 = vpop.f32.mrf.mxu0
        %v4183 = vadd.f32 %v3990, %v4182
        %v4184 = vpop.f32.mrf.mxu0
        %v4185 = vadd.f32 %v3992, %v4184
        %4186 = vmatprep.mubr.bf16.mxu0 0
        %4187 = vmatmul.mubr.bf16.gmra.mxu0 %v3620
        %v4188 = vpop.f32.mrf.mxu0
        %v4189 = vadd.f32 %v3996, %v4188
        %v4190 = vpop.f32.mrf.mxu0
        %v4191 = vadd.f32 %v3998, %v4190
        %v4192 = vpop.f32.mrf.mxu0
        %v4193 = vadd.f32 %v4000, %v4192
        %v4194 = vpop.f32.mrf.mxu0
        %v4195 = vadd.f32 %v4002, %v4194
        %4196 = vmatprep.mubr.bf16.mxu0 0
        %4197 = vmatmul.mubr.bf16.gmra.mxu0 %v3623
        %v4198 = vpop.f32.mrf.mxu0
        %v4199 = vadd.f32 %v4006, %v4198
        %v4200 = vpop.f32.mrf.mxu0
        %v4201 = vadd.f32 %v4008, %v4200
        %v4202 = vpop.f32.mrf.mxu0
        %v4203 = vadd.f32 %v4010, %v4202
        %v4204 = vpop.f32.mrf.mxu0
        %v4205 = vadd.f32 %v4012, %v4204
        %4206 = vmatprep.mubr.bf16.mxu0 0
        %4207 = vmatmul.mubr.bf16.gmra.mxu0 %v3626
        %v4208 = vpop.f32.mrf.mxu0
        %v4209 = vadd.f32 %v4016, %v4208
        %v4210 = vpop.f32.mrf.mxu0
        %v4211 = vadd.f32 %v4018, %v4210
        %v4212 = vpop.f32.mrf.mxu0
        %v4213 = vadd.f32 %v4020, %v4212
        %v4214 = vpop.f32.mrf.mxu0
        %v4215 = vadd.f32 %v4022, %v4214
        %4216 = vmatprep.mubr.bf16.mxu0 0
        %4217 = vmatmul.mubr.bf16.gmra.mxu0 %v3629
        %v4218 = vpop.f32.mrf.mxu0
        %v4219 = vadd.f32 %v4026, %v4218
        %v4220 = vpop.f32.mrf.mxu0
        %v4221 = vadd.f32 %v4028, %v4220
        %v4222 = vpop.f32.mrf.mxu0
        %v4223 = vadd.f32 %v4030, %v4222
        %v4224 = vpop.f32.mrf.mxu0
        %v4225 = vadd.f32 %v4032, %v4224
        %4226 = vmatprep.mubr.bf16.mxu0 0
        %4227 = vmatmul.mubr.bf16.gmra.mxu0 %v3632
        %v4228 = vpop.f32.mrf.mxu0
        %v4229 = vadd.f32 %v4036, %v4228
        %v4230 = vpop.f32.mrf.mxu0
        %v4231 = vadd.f32 %v4038, %v4230
        %v4232 = vpop.f32.mrf.mxu0
        %v4233 = vadd.f32 %v4040, %v4232
        %v4234 = vpop.f32.mrf.mxu0
        %v4235 = vadd.f32 %v4042, %v4234
        %4236 = vmatprep.mubr.bf16.mxu0 0
        %4237 = vmatmul.mubr.bf16.gmra.mxu0 %v3635
        %v4238 = vpop.f32.mrf.mxu0
        %v4239 = vadd.f32 %v4046, %v4238
        %v4240 = vpop.f32.mrf.mxu0
        %v4241 = vadd.f32 %v4048, %v4240
        %v4242 = vpop.f32.mrf.mxu0
        %v4243 = vadd.f32 %v4050, %v4242
        %v4244 = vpop.f32.mrf.mxu0
        %v4245 = vadd.f32 %v4052, %v4244
        %4246 = vmatprep.mubr.bf16.mxu0 0
        %4247 = vmatmul.mubr.bf16.gmra.mxu0 %v3638
        %v4248 = vpop.f32.mrf.mxu0
        %v4249 = vadd.f32 %v4056, %v4248
        %v4250 = vpop.f32.mrf.mxu0
        %v4251 = vadd.f32 %v4058, %v4250
        %v4252 = vpop.f32.mrf.mxu0
        %v4253 = vadd.f32 %v4060, %v4252
        %v4254 = vpop.f32.mrf.mxu0
        %v4255 = vadd.f32 %v4062, %v4254
        %4256 = vmatprep.mubr.bf16.mxu0 0
        %4257 = vmatmul.mubr.bf16.gmra.mxu0 %v3641
        %v4258 = vpop.f32.mrf.mxu0
        %v4259 = vadd.f32 %v4066, %v4258
        %v4260 = vpop.f32.mrf.mxu0
        %v4261 = vadd.f32 %v4068, %v4260
        %v4262 = vpop.f32.mrf.mxu0
        %v4263 = vadd.f32 %v4070, %v4262
        %v4264 = vpop.f32.mrf.mxu0
        %v4265 = vadd.f32 %v4072, %v4264
        %4266 = vmatprep.mubr.bf16.mxu0 0
        %4267 = vmatmul.mubr.bf16.gmra.mxu0 %v3644
        %v4268 = vpop.f32.mrf.mxu0
        %v4269 = vadd.f32 %v4076, %v4268
        %v4270 = vpop.f32.mrf.mxu0
        %v4271 = vadd.f32 %v4078, %v4270
        %v4272 = vpop.f32.mrf.mxu0
        %v4273 = vadd.f32 %v4080, %v4272
        %v4274 = vpop.f32.mrf.mxu0
        %v4275 = vadd.f32 %v4082, %v4274
        %4276 = vmatprep.mubr.bf16.mxu0 0
        %4277 = vmatmul.mubr.bf16.gmra.mxu0 %v3647
        %v4278 = vpop.f32.mrf.mxu0
        %v4279 = vadd.f32 %v4086, %v4278
        %v4280 = vpop.f32.mrf.mxu0
        %v4281 = vadd.f32 %v4088, %v4280
        %v4282 = vpop.f32.mrf.mxu0
        %v4283 = vadd.f32 %v4090, %v4282
        %v4284 = vpop.f32.mrf.mxu0
        %v4285 = vadd.f32 %v4092, %v4284
        %4286 = vmatprep.mubr.bf16.mxu0 0
        %4287 = vmatmul.mubr.bf16.gmra.mxu0 %v3650
        %v4288 = vpop.f32.mrf.mxu0
        %v4289 = vadd.f32 %v4096, %v4288
        %v4290 = vpop.f32.mrf.mxu0
        %v4291 = vadd.f32 %v4098, %v4290
        %v4292 = vpop.f32.mrf.mxu0
        %v4293 = vadd.f32 %v4100, %v4292
        %v4294 = vpop.f32.mrf.mxu0
        %v4295 = vadd.f32 %v4102, %v4294
        %4296 = vmatprep.mubr.bf16.mxu0 0
        %4297 = vmatmul.mubr.bf16.gmra.mxu0 %v3653
        %v4298 = vpop.f32.mrf.mxu0
        %v4299 = vadd.f32 %v4106, %v4298
        %v4300 = vpop.f32.mrf.mxu0
        %v4301 = vadd.f32 %v4108, %v4300
        %v4302 = vpop.f32.mrf.mxu0
        %v4303 = vadd.f32 %v4110, %v4302
        %v4304 = vpop.f32.mrf.mxu0
        %v4305 = vadd.f32 %v4112, %v4304
        %4306 = vmatprep.mubr.bf16.mxu0 0
        %4307 = vmatmul.mubr.bf16.gmra.mxu0 %v3656
        %v4308 = vpop.f32.mrf.mxu0
        %v4309 = vadd.f32 %v4116, %v4308
        %v4310 = vpop.f32.mrf.mxu0
        %v4311 = vadd.f32 %v4118, %v4310
        %v4312 = vpop.f32.mrf.mxu0
        %v4313 = vadd.f32 %v4120, %v4312
        %v4314 = vpop.f32.mrf.mxu0
        %v4315 = vadd.f32 %v4122, %v4314
        %4316 = vmatprep.mubr.bf16.mxu0 0
        %4317 = vmatmul.mubr.bf16.gmra.mxu0 %v3659
        %v4318 = vpop.f32.mrf.mxu0
        %v4319 = vadd.f32 %v4126, %v4318
        %v4320 = vpop.f32.mrf.mxu0
        %v4321 = vadd.f32 %v4128, %v4320
        %v4322 = vpop.f32.mrf.mxu0
        %v4323 = vadd.f32 %v4130, %v4322
        %v4324 = vpop.f32.mrf.mxu0
        %v4325 = vadd.f32 %v4132, %v4324
        %4326 = vmatprep.mubr.bf16.mxu0 0
        %4327 = vmatmul.mubr.bf16.gmra.mxu0 %v3662
        %v4328 = vpop.f32.mrf.mxu0
        %v4329 = vadd.f32 %v4136, %v4328
        %v4330 = vpop.f32.mrf.mxu0
        %v4331 = vadd.f32 %v4138, %v4330
        %v4332 = vpop.f32.mrf.mxu0
        %v4333 = vadd.f32 %v4140, %v4332
        %v4334 = vpop.f32.mrf.mxu0
        %v4335 = vadd.f32 %v4142, %v4334
        %4336 = vdwg.mxu0
        %v4337 = vadd.f32 %v3183, %v4179
        %v4338 = vadd.f32 %v3185, %v4181
        %v4339 = vadd.f32 %v3187, %v4183
        %v4340 = vadd.f32 %v3189, %v4185
        %v4341 = vadd.f32 %v3193, %v4189
        %v4342 = vadd.f32 %v3195, %v4191
        %v4343 = vadd.f32 %v3197, %v4193
        %v4344 = vadd.f32 %v3199, %v4195
        %v4345 = vadd.f32 %v3203, %v4199
        %v4346 = vadd.f32 %v3205, %v4201
        %v4347 = vadd.f32 %v3207, %v4203
        %v4348 = vadd.f32 %v3209, %v4205
        %v4349 = vadd.f32 %v3213, %v4209
        %v4350 = vadd.f32 %v3215, %v4211
        %v4351 = vadd.f32 %v3217, %v4213
        %v4352 = vadd.f32 %v3219, %v4215
        %v4353 = vadd.f32 %v3223, %v4219
        %v4354 = vadd.f32 %v3225, %v4221
        %v4355 = vadd.f32 %v3227, %v4223
        %v4356 = vadd.f32 %v3229, %v4225
        %v4357 = vadd.f32 %v3233, %v4229
        %v4358 = vadd.f32 %v3235, %v4231
        %v4359 = vadd.f32 %v3237, %v4233
        %v4360 = vadd.f32 %v3239, %v4235
        %v4361 = vadd.f32 %v3243, %v4239
        %v4362 = vadd.f32 %v3245, %v4241
        %v4363 = vadd.f32 %v3247, %v4243
        %v4364 = vadd.f32 %v3249, %v4245
        %v4365 = vadd.f32 %v3253, %v4249
        %v4366 = vadd.f32 %v3255, %v4251
        %v4367 = vadd.f32 %v3257, %v4253
        %v4368 = vadd.f32 %v3259, %v4255
        %v4369 = vadd.f32 %v3263, %v4259
        %v4370 = vadd.f32 %v3265, %v4261
        %v4371 = vadd.f32 %v3267, %v4263
        %v4372 = vadd.f32 %v3269, %v4265
        %v4373 = vadd.f32 %v3273, %v4269
        %v4374 = vadd.f32 %v3275, %v4271
        %v4375 = vadd.f32 %v3277, %v4273
        %v4376 = vadd.f32 %v3279, %v4275
        %v4377 = vadd.f32 %v3283, %v4279
        %v4378 = vadd.f32 %v3285, %v4281
        %v4379 = vadd.f32 %v3287, %v4283
        %v4380 = vadd.f32 %v3289, %v4285
        %v4381 = vadd.f32 %v3293, %v4289
        %v4382 = vadd.f32 %v3295, %v4291
        %v4383 = vadd.f32 %v3297, %v4293
        %v4384 = vadd.f32 %v3299, %v4295
        %v4385 = vadd.f32 %v3303, %v4299
        %v4386 = vadd.f32 %v3305, %v4301
        %v4387 = vadd.f32 %v3307, %v4303
        %v4388 = vadd.f32 %v3309, %v4305
        %v4389 = vadd.f32 %v3313, %v4309
        %v4390 = vadd.f32 %v3315, %v4311
        %v4391 = vadd.f32 %v3317, %v4313
        %v4392 = vadd.f32 %v3319, %v4315
        %v4393 = vadd.f32 %v3323, %v4319
        %v4394 = vadd.f32 %v3325, %v4321
        %v4395 = vadd.f32 %v3327, %v4323
        %v4396 = vadd.f32 %v3329, %v4325
        %v4397 = vadd.f32 %v3333, %v4329
        %v4398 = vadd.f32 %v3335, %v4331
        %v4399 = vadd.f32 %v3337, %v4333
        %v4400 = vadd.f32 %v3339, %v4335
        %v4401 = vld [vmem:[%s3] sm:$0x1]
        %v4402 = vld [vmem:[%s4] sm:$0x1]
        %v4403 = vadd.f32 %v4337, %v4339
        %v4404 = vadd.f32 %v4403, %v4341
        %v4405 = vadd.f32 %v4404, %v4343
        %v4406 = vadd.f32 %v4405, %v4345
        %v4407 = vadd.f32 %v4406, %v4347
        %v4408 = vadd.f32 %v4407, %v4349
        %v4409 = vadd.f32 %v4408, %v4351
        %v4410 = vadd.f32 %v4409, %v4353
        %v4411 = vadd.f32 %v4410, %v4355
        %v4412 = vadd.f32 %v4411, %v4357
        %v4413 = vadd.f32 %v4412, %v4359
        %v4414 = vadd.f32 %v4413, %v4361
        %v4415 = vadd.f32 %v4414, %v4363
        %v4416 = vadd.f32 %v4415, %v4365
        %v4417 = vadd.f32 %v4416, %v4367
        %v4418 = vadd.f32 %v4417, %v4369
        %v4419 = vadd.f32 %v4418, %v4371
        %v4420 = vadd.f32 %v4419, %v4373
        %v4421 = vadd.f32 %v4420, %v4375
        %v4422 = vadd.f32 %v4421, %v4377
        %v4423 = vadd.f32 %v4422, %v4379
        %v4424 = vadd.f32 %v4423, %v4381
        %v4425 = vadd.f32 %v4424, %v4383
        %v4426 = vadd.f32 %v4425, %v4385
        %v4427 = vadd.f32 %v4426, %v4387
        %v4428 = vadd.f32 %v4427, %v4389
        %v4429 = vadd.f32 %v4428, %v4391
        %v4430 = vadd.f32 %v4429, %v4393
        %v4431 = vadd.f32 %v4430, %v4395
        %v4432 = vadd.f32 %v4431, %v4397
        %v4433 = vadd.f32 %v4432, %v4399
        %v4434 = vrot.slane %v4433, 4
        %v4435 = vadd.f32 %v4433, %v4434
        %v4436 = vrot.slane %v4435, 2
        %v4437 = vadd.f32 %v4435, %v4436
        %v4438 = vrot.slane %v4437, 1
        %v4439 = vadd.f32 %v4437, %v4438
        %v4440 = vmul.f32 %v4439, 0.00390625
        %v4441 = vmul.f32 %v4337, %v4337
        %v4442 = vmul.f32 %v4339, %v4339
        %v4443 = vmul.f32 %v4341, %v4341
        %v4444 = vmul.f32 %v4343, %v4343
        %v4445 = vmul.f32 %v4345, %v4345
        %v4446 = vmul.f32 %v4347, %v4347
        %v4447 = vmul.f32 %v4349, %v4349
        %v4448 = vmul.f32 %v4351, %v4351
        %v4449 = vmul.f32 %v4353, %v4353
        %v4450 = vmul.f32 %v4355, %v4355
        %v4451 = vmul.f32 %v4357, %v4357
        %v4452 = vmul.f32 %v4359, %v4359
        %v4453 = vmul.f32 %v4361, %v4361
        %v4454 = vmul.f32 %v4363, %v4363
        %v4455 = vmul.f32 %v4365, %v4365
        %v4456 = vmul.f32 %v4367, %v4367
        %v4457 = vmul.f32 %v4369, %v4369
        %v4458 = vmul.f32 %v4371, %v4371
        %v4459 = vmul.f32 %v4373, %v4373
        %v4460 = vmul.f32 %v4375, %v4375
        %v4461 = vmul.f32 %v4377, %v4377
        %v4462 = vmul.f32 %v4379, %v4379
        %v4463 = vmul.f32 %v4381, %v4381
        %v4464 = vmul.f32 %v4383, %v4383
        %v4465 = vmul.f32 %v4385, %v4385
        %v4466 = vmul.f32 %v4387, %v4387
        %v4467 = vmul.f32 %v4389, %v4389
        %v4468 = vmul.f32 %v4391, %v4391
        %v4469 = vmul.f32 %v4393, %v4393
        %v4470 = vmul.f32 %v4395, %v4395
        %v4471 = vmul.f32 %v4397, %v4397
        %v4472 = vmul.f32 %v4399, %v4399
        %v4473 = vadd.f32 %v4441, %v4442
        %v4474 = vadd.f32 %v4473, %v4443
        %v4475 = vadd.f32 %v4474, %v4444
        %v4476 = vadd.f32 %v4475, %v4445
        %v4477 = vadd.f32 %v4476, %v4446
        %v4478 = vadd.f32 %v4477, %v4447
        %v4479 = vadd.f32 %v4478, %v4448
        %v4480 = vadd.f32 %v4479, %v4449
        %v4481 = vadd.f32 %v4480, %v4450
        %v4482 = vadd.f32 %v4481, %v4451
        %v4483 = vadd.f32 %v4482, %v4452
        %v4484 = vadd.f32 %v4483, %v4453
        %v4485 = vadd.f32 %v4484, %v4454
        %v4486 = vadd.f32 %v4485, %v4455
        %v4487 = vadd.f32 %v4486, %v4456
        %v4488 = vadd.f32 %v4487, %v4457
        %v4489 = vadd.f32 %v4488, %v4458
        %v4490 = vadd.f32 %v4489, %v4459
        %v4491 = vadd.f32 %v4490, %v4460
        %v4492 = vadd.f32 %v4491, %v4461
        %v4493 = vadd.f32 %v4492, %v4462
        %v4494 = vadd.f32 %v4493, %v4463
        %v4495 = vadd.f32 %v4494, %v4464
        %v4496 = vadd.f32 %v4495, %v4465
        %v4497 = vadd.f32 %v4496, %v4466
        %v4498 = vadd.f32 %v4497, %v4467
        %v4499 = vadd.f32 %v4498, %v4468
        %v4500 = vadd.f32 %v4499, %v4469
        %v4501 = vadd.f32 %v4500, %v4470
        %v4502 = vadd.f32 %v4501, %v4471
        %v4503 = vadd.f32 %v4502, %v4472
        %v4504 = vrot.slane %v4503, 4
        %v4505 = vadd.f32 %v4503, %v4504
        %v4506 = vrot.slane %v4505, 2
        %v4507 = vadd.f32 %v4505, %v4506
        %v4508 = vrot.slane %v4507, 1
        %v4509 = vadd.f32 %v4507, %v4508
        %v4510 = vmul.f32 %v4509, 0.00390625
        %v4511 = vmul.f32 %v4440, %v4440
        %v4512 = vsub.f32 %v4510, %v4511
        %v4513 = vmax.f32 %v4512, 0.0
        %v4514 = vsub.f32 %v4337, %v4440
        %v4515 = vsub.f32 %v4339, %v4440
        %v4516 = vsub.f32 %v4341, %v4440
        %v4517 = vsub.f32 %v4343, %v4440
        %v4518 = vsub.f32 %v4345, %v4440
        %v4519 = vsub.f32 %v4347, %v4440
        %v4520 = vsub.f32 %v4349, %v4440
        %v4521 = vsub.f32 %v4351, %v4440
        %v4522 = vsub.f32 %v4353, %v4440
        %v4523 = vsub.f32 %v4355, %v4440
        %v4524 = vsub.f32 %v4357, %v4440
        %v4525 = vsub.f32 %v4359, %v4440
        %v4526 = vsub.f32 %v4361, %v4440
        %v4527 = vsub.f32 %v4363, %v4440
        %v4528 = vsub.f32 %v4365, %v4440
        %v4529 = vsub.f32 %v4367, %v4440
        %v4530 = vsub.f32 %v4369, %v4440
        %v4531 = vsub.f32 %v4371, %v4440
        %v4532 = vsub.f32 %v4373, %v4440
        %v4533 = vsub.f32 %v4375, %v4440
        %v4534 = vsub.f32 %v4377, %v4440
        %v4535 = vsub.f32 %v4379, %v4440
        %v4536 = vsub.f32 %v4381, %v4440
        %v4537 = vsub.f32 %v4383, %v4440
        %v4538 = vsub.f32 %v4385, %v4440
        %v4539 = vsub.f32 %v4387, %v4440
        %v4540 = vsub.f32 %v4389, %v4440
        %v4541 = vsub.f32 %v4391, %v4440
        %v4542 = vsub.f32 %v4393, %v4440
        %v4543 = vsub.f32 %v4395, %v4440
        %v4544 = vsub.f32 %v4397, %v4440
        %v4545 = vsub.f32 %v4399, %v4440
        %v4546 = vadd.f32 %v4513, 1e-05
        %v4547 = vrsqrt.pop %v4546
        %v4548 = vmul.f32 %v4514, %v4547
        %v4549 = vmul.f32 %v4515, %v4547
        %v4550 = vmul.f32 %v4516, %v4547
        %v4551 = vmul.f32 %v4517, %v4547
        %v4552 = vmul.f32 %v4518, %v4547
        %v4553 = vmul.f32 %v4519, %v4547
        %v4554 = vmul.f32 %v4520, %v4547
        %v4555 = vmul.f32 %v4521, %v4547
        %v4556 = vmul.f32 %v4522, %v4547
        %v4557 = vmul.f32 %v4523, %v4547
        %v4558 = vmul.f32 %v4524, %v4547
        %v4559 = vmul.f32 %v4525, %v4547
        %v4560 = vmul.f32 %v4526, %v4547
        %v4561 = vmul.f32 %v4527, %v4547
        %v4562 = vmul.f32 %v4528, %v4547
        %v4563 = vmul.f32 %v4529, %v4547
        %v4564 = vmul.f32 %v4530, %v4547
        %v4565 = vmul.f32 %v4531, %v4547
        %v4566 = vmul.f32 %v4532, %v4547
        %v4567 = vmul.f32 %v4533, %v4547
        %v4568 = vmul.f32 %v4534, %v4547
        %v4569 = vmul.f32 %v4535, %v4547
        %v4570 = vmul.f32 %v4536, %v4547
        %v4571 = vmul.f32 %v4537, %v4547
        %v4572 = vmul.f32 %v4538, %v4547
        %v4573 = vmul.f32 %v4539, %v4547
        %v4574 = vmul.f32 %v4540, %v4547
        %v4575 = vmul.f32 %v4541, %v4547
        %v4576 = vmul.f32 %v4542, %v4547
        %v4577 = vmul.f32 %v4543, %v4547
        %v4578 = vmul.f32 %v4544, %v4547
        %v4579 = vmul.f32 %v4545, %v4547
        %v4581 = vlaneseq
        %v4582 = vshrl.u32 %v4581, 7
        %v4583 = vsub.s32 0, %v4582
        %v4584 = vrot.slane %v4401, %v4583
        %v4586 = vmul.f32 %v4548, %v4584
        %v4587 = vmul.f32 %v4549, %v4584
        %v4588 = vmul.f32 %v4550, %v4584
        %v4589 = vmul.f32 %v4551, %v4584
        %v4590 = vmul.f32 %v4552, %v4584
        %v4591 = vmul.f32 %v4553, %v4584
        %v4592 = vmul.f32 %v4554, %v4584
        %v4593 = vmul.f32 %v4555, %v4584
        %v4594 = vmul.f32 %v4556, %v4584
        %v4595 = vmul.f32 %v4557, %v4584
        %v4596 = vmul.f32 %v4558, %v4584
        %v4597 = vmul.f32 %v4559, %v4584
        %v4598 = vmul.f32 %v4560, %v4584
        %v4599 = vmul.f32 %v4561, %v4584
        %v4600 = vmul.f32 %v4562, %v4584
        %v4601 = vmul.f32 %v4563, %v4584
        %v4602 = vmul.f32 %v4564, %v4584
        %v4603 = vmul.f32 %v4565, %v4584
        %v4604 = vmul.f32 %v4566, %v4584
        %v4605 = vmul.f32 %v4567, %v4584
        %v4606 = vmul.f32 %v4568, %v4584
        %v4607 = vmul.f32 %v4569, %v4584
        %v4608 = vmul.f32 %v4570, %v4584
        %v4609 = vmul.f32 %v4571, %v4584
        %v4610 = vmul.f32 %v4572, %v4584
        %v4611 = vmul.f32 %v4573, %v4584
        %v4612 = vmul.f32 %v4574, %v4584
        %v4613 = vmul.f32 %v4575, %v4584
        %v4614 = vmul.f32 %v4576, %v4584
        %v4615 = vmul.f32 %v4577, %v4584
        %v4616 = vmul.f32 %v4578, %v4584
        %v4617 = vmul.f32 %v4579, %v4584
        %v4619 = vlaneseq
        %v4620 = vshrl.u32 %v4619, 7
        %v4621 = vsub.s32 0, %v4620
        %v4622 = vrot.slane %v4402, %v4621
        %v4624 = vadd.f32 %v4586, %v4622
        %v4625 = vadd.f32 %v4587, %v4622
        %v4626 = vadd.f32 %v4588, %v4622
        %v4627 = vadd.f32 %v4589, %v4622
        %v4628 = vadd.f32 %v4590, %v4622
        %v4629 = vadd.f32 %v4591, %v4622
        %v4630 = vadd.f32 %v4592, %v4622
        %v4631 = vadd.f32 %v4593, %v4622
        %v4632 = vadd.f32 %v4594, %v4622
        %v4633 = vadd.f32 %v4595, %v4622
        %v4634 = vadd.f32 %v4596, %v4622
        %v4635 = vadd.f32 %v4597, %v4622
        %v4636 = vadd.f32 %v4598, %v4622
        %v4637 = vadd.f32 %v4599, %v4622
        %v4638 = vadd.f32 %v4600, %v4622
        %v4639 = vadd.f32 %v4601, %v4622
        %v4640 = vadd.f32 %v4602, %v4622
        %v4641 = vadd.f32 %v4603, %v4622
        %v4642 = vadd.f32 %v4604, %v4622
        %v4643 = vadd.f32 %v4605, %v4622
        %v4644 = vadd.f32 %v4606, %v4622
        %v4645 = vadd.f32 %v4607, %v4622
        %v4646 = vadd.f32 %v4608, %v4622
        %v4647 = vadd.f32 %v4609, %v4622
        %v4648 = vadd.f32 %v4610, %v4622
        %v4649 = vadd.f32 %v4611, %v4622
        %v4650 = vadd.f32 %v4612, %v4622
        %v4651 = vadd.f32 %v4613, %v4622
        %v4652 = vadd.f32 %v4614, %v4622
        %v4653 = vadd.f32 %v4615, %v4622
        %v4654 = vadd.f32 %v4616, %v4622
        %v4655 = vadd.f32 %v4617, %v4622
        %v4656 = vld [vmem:[%s5] sm:$0x1]
        %v4657 = vld [vmem:[%s6] sm:$0x1]
        %v4658 = vadd.f32 %v4338, %v4340
        %v4659 = vadd.f32 %v4658, %v4342
        %v4660 = vadd.f32 %v4659, %v4344
        %v4661 = vadd.f32 %v4660, %v4346
        %v4662 = vadd.f32 %v4661, %v4348
        %v4663 = vadd.f32 %v4662, %v4350
        %v4664 = vadd.f32 %v4663, %v4352
        %v4665 = vadd.f32 %v4664, %v4354
        %v4666 = vadd.f32 %v4665, %v4356
        %v4667 = vadd.f32 %v4666, %v4358
        %v4668 = vadd.f32 %v4667, %v4360
        %v4669 = vadd.f32 %v4668, %v4362
        %v4670 = vadd.f32 %v4669, %v4364
        %v4671 = vadd.f32 %v4670, %v4366
        %v4672 = vadd.f32 %v4671, %v4368
        %v4673 = vadd.f32 %v4672, %v4370
        %v4674 = vadd.f32 %v4673, %v4372
        %v4675 = vadd.f32 %v4674, %v4374
        %v4676 = vadd.f32 %v4675, %v4376
        %v4677 = vadd.f32 %v4676, %v4378
        %v4678 = vadd.f32 %v4677, %v4380
        %v4679 = vadd.f32 %v4678, %v4382
        %v4680 = vadd.f32 %v4679, %v4384
        %v4681 = vadd.f32 %v4680, %v4386
        %v4682 = vadd.f32 %v4681, %v4388
        %v4683 = vadd.f32 %v4682, %v4390
        %v4684 = vadd.f32 %v4683, %v4392
        %v4685 = vadd.f32 %v4684, %v4394
        %v4686 = vadd.f32 %v4685, %v4396
        %v4687 = vadd.f32 %v4686, %v4398
        %v4688 = vadd.f32 %v4687, %v4400
        %v4689 = vrot.slane %v4688, 4
        %v4690 = vadd.f32 %v4688, %v4689
        %v4691 = vrot.slane %v4690, 2
        %v4692 = vadd.f32 %v4690, %v4691
        %v4693 = vrot.slane %v4692, 1
        %v4694 = vadd.f32 %v4692, %v4693
        %v4695 = vmul.f32 %v4694, 0.00390625
        %v4696 = vmul.f32 %v4338, %v4338
        %v4697 = vmul.f32 %v4340, %v4340
        %v4698 = vmul.f32 %v4342, %v4342
        %v4699 = vmul.f32 %v4344, %v4344
        %v4700 = vmul.f32 %v4346, %v4346
        %v4701 = vmul.f32 %v4348, %v4348
        %v4702 = vmul.f32 %v4350, %v4350
        %v4703 = vmul.f32 %v4352, %v4352
        %v4704 = vmul.f32 %v4354, %v4354
        %v4705 = vmul.f32 %v4356, %v4356
        %v4706 = vmul.f32 %v4358, %v4358
        %v4707 = vmul.f32 %v4360, %v4360
        %v4708 = vmul.f32 %v4362, %v4362
        %v4709 = vmul.f32 %v4364, %v4364
        %v4710 = vmul.f32 %v4366, %v4366
        %v4711 = vmul.f32 %v4368, %v4368
        %v4712 = vmul.f32 %v4370, %v4370
        %v4713 = vmul.f32 %v4372, %v4372
        %v4714 = vmul.f32 %v4374, %v4374
        %v4715 = vmul.f32 %v4376, %v4376
        %v4716 = vmul.f32 %v4378, %v4378
        %v4717 = vmul.f32 %v4380, %v4380
        %v4718 = vmul.f32 %v4382, %v4382
        %v4719 = vmul.f32 %v4384, %v4384
        %v4720 = vmul.f32 %v4386, %v4386
        %v4721 = vmul.f32 %v4388, %v4388
        %v4722 = vmul.f32 %v4390, %v4390
        %v4723 = vmul.f32 %v4392, %v4392
        %v4724 = vmul.f32 %v4394, %v4394
        %v4725 = vmul.f32 %v4396, %v4396
        %v4726 = vmul.f32 %v4398, %v4398
        %v4727 = vmul.f32 %v4400, %v4400
        %v4728 = vadd.f32 %v4696, %v4697
        %v4729 = vadd.f32 %v4728, %v4698
        %v4730 = vadd.f32 %v4729, %v4699
        %v4731 = vadd.f32 %v4730, %v4700
        %v4732 = vadd.f32 %v4731, %v4701
        %v4733 = vadd.f32 %v4732, %v4702
        %v4734 = vadd.f32 %v4733, %v4703
        %v4735 = vadd.f32 %v4734, %v4704
        %v4736 = vadd.f32 %v4735, %v4705
        %v4737 = vadd.f32 %v4736, %v4706
        %v4738 = vadd.f32 %v4737, %v4707
        %v4739 = vadd.f32 %v4738, %v4708
        %v4740 = vadd.f32 %v4739, %v4709
        %v4741 = vadd.f32 %v4740, %v4710
        %v4742 = vadd.f32 %v4741, %v4711
        %v4743 = vadd.f32 %v4742, %v4712
        %v4744 = vadd.f32 %v4743, %v4713
        %v4745 = vadd.f32 %v4744, %v4714
        %v4746 = vadd.f32 %v4745, %v4715
        %v4747 = vadd.f32 %v4746, %v4716
        %v4748 = vadd.f32 %v4747, %v4717
        %v4749 = vadd.f32 %v4748, %v4718
        %v4750 = vadd.f32 %v4749, %v4719
        %v4751 = vadd.f32 %v4750, %v4720
        %v4752 = vadd.f32 %v4751, %v4721
        %v4753 = vadd.f32 %v4752, %v4722
        %v4754 = vadd.f32 %v4753, %v4723
        %v4755 = vadd.f32 %v4754, %v4724
        %v4756 = vadd.f32 %v4755, %v4725
        %v4757 = vadd.f32 %v4756, %v4726
        %v4758 = vadd.f32 %v4757, %v4727
        %v4759 = vrot.slane %v4758, 4
        %v4760 = vadd.f32 %v4758, %v4759
        %v4761 = vrot.slane %v4760, 2
        %v4762 = vadd.f32 %v4760, %v4761
        %v4763 = vrot.slane %v4762, 1
        %v4764 = vadd.f32 %v4762, %v4763
        %v4765 = vmul.f32 %v4764, 0.00390625
        %v4766 = vmul.f32 %v4695, %v4695
        %v4767 = vsub.f32 %v4765, %v4766
        %v4768 = vmax.f32 %v4767, 0.0
        %v4769 = vsub.f32 %v4338, %v4695
        %v4770 = vsub.f32 %v4340, %v4695
        %v4771 = vsub.f32 %v4342, %v4695
        %v4772 = vsub.f32 %v4344, %v4695
        %v4773 = vsub.f32 %v4346, %v4695
        %v4774 = vsub.f32 %v4348, %v4695
        %v4775 = vsub.f32 %v4350, %v4695
        %v4776 = vsub.f32 %v4352, %v4695
        %v4777 = vsub.f32 %v4354, %v4695
        %v4778 = vsub.f32 %v4356, %v4695
        %v4779 = vsub.f32 %v4358, %v4695
        %v4780 = vsub.f32 %v4360, %v4695
        %v4781 = vsub.f32 %v4362, %v4695
        %v4782 = vsub.f32 %v4364, %v4695
        %v4783 = vsub.f32 %v4366, %v4695
        %v4784 = vsub.f32 %v4368, %v4695
        %v4785 = vsub.f32 %v4370, %v4695
        %v4786 = vsub.f32 %v4372, %v4695
        %v4787 = vsub.f32 %v4374, %v4695
        %v4788 = vsub.f32 %v4376, %v4695
        %v4789 = vsub.f32 %v4378, %v4695
        %v4790 = vsub.f32 %v4380, %v4695
        %v4791 = vsub.f32 %v4382, %v4695
        %v4792 = vsub.f32 %v4384, %v4695
        %v4793 = vsub.f32 %v4386, %v4695
        %v4794 = vsub.f32 %v4388, %v4695
        %v4795 = vsub.f32 %v4390, %v4695
        %v4796 = vsub.f32 %v4392, %v4695
        %v4797 = vsub.f32 %v4394, %v4695
        %v4798 = vsub.f32 %v4396, %v4695
        %v4799 = vsub.f32 %v4398, %v4695
        %v4800 = vsub.f32 %v4400, %v4695
        %v4801 = vadd.f32 %v4768, 1e-05
        %v4802 = vrsqrt.pop %v4801
        %v4803 = vmul.f32 %v4769, %v4802
        %v4804 = vmul.f32 %v4770, %v4802
        %v4805 = vmul.f32 %v4771, %v4802
        %v4806 = vmul.f32 %v4772, %v4802
        %v4807 = vmul.f32 %v4773, %v4802
        %v4808 = vmul.f32 %v4774, %v4802
        %v4809 = vmul.f32 %v4775, %v4802
        %v4810 = vmul.f32 %v4776, %v4802
        %v4811 = vmul.f32 %v4777, %v4802
        %v4812 = vmul.f32 %v4778, %v4802
        %v4813 = vmul.f32 %v4779, %v4802
        %v4814 = vmul.f32 %v4780, %v4802
        %v4815 = vmul.f32 %v4781, %v4802
        %v4816 = vmul.f32 %v4782, %v4802
        %v4817 = vmul.f32 %v4783, %v4802
        %v4818 = vmul.f32 %v4784, %v4802
        %v4819 = vmul.f32 %v4785, %v4802
        %v4820 = vmul.f32 %v4786, %v4802
        %v4821 = vmul.f32 %v4787, %v4802
        %v4822 = vmul.f32 %v4788, %v4802
        %v4823 = vmul.f32 %v4789, %v4802
        %v4824 = vmul.f32 %v4790, %v4802
        %v4825 = vmul.f32 %v4791, %v4802
        %v4826 = vmul.f32 %v4792, %v4802
        %v4827 = vmul.f32 %v4793, %v4802
        %v4828 = vmul.f32 %v4794, %v4802
        %v4829 = vmul.f32 %v4795, %v4802
        %v4830 = vmul.f32 %v4796, %v4802
        %v4831 = vmul.f32 %v4797, %v4802
        %v4832 = vmul.f32 %v4798, %v4802
        %v4833 = vmul.f32 %v4799, %v4802
        %v4834 = vmul.f32 %v4800, %v4802
        %v4836 = vlaneseq
        %v4837 = vshrl.u32 %v4836, 7
        %v4838 = vsub.s32 0, %v4837
        %v4839 = vrot.slane %v4656, %v4838
        %v4841 = vmul.f32 %v4803, %v4839
        %v4842 = vmul.f32 %v4804, %v4839
        %v4843 = vmul.f32 %v4805, %v4839
        %v4844 = vmul.f32 %v4806, %v4839
        %v4845 = vmul.f32 %v4807, %v4839
        %v4846 = vmul.f32 %v4808, %v4839
        %v4847 = vmul.f32 %v4809, %v4839
        %v4848 = vmul.f32 %v4810, %v4839
        %v4849 = vmul.f32 %v4811, %v4839
        %v4850 = vmul.f32 %v4812, %v4839
        %v4851 = vmul.f32 %v4813, %v4839
        %v4852 = vmul.f32 %v4814, %v4839
        %v4853 = vmul.f32 %v4815, %v4839
        %v4854 = vmul.f32 %v4816, %v4839
        %v4855 = vmul.f32 %v4817, %v4839
        %v4856 = vmul.f32 %v4818, %v4839
        %v4857 = vmul.f32 %v4819, %v4839
        %v4858 = vmul.f32 %v4820, %v4839
        %v4859 = vmul.f32 %v4821, %v4839
        %v4860 = vmul.f32 %v4822, %v4839
        %v4861 = vmul.f32 %v4823, %v4839
        %v4862 = vmul.f32 %v4824, %v4839
        %v4863 = vmul.f32 %v4825, %v4839
        %v4864 = vmul.f32 %v4826, %v4839
        %v4865 = vmul.f32 %v4827, %v4839
        %v4866 = vmul.f32 %v4828, %v4839
        %v4867 = vmul.f32 %v4829, %v4839
        %v4868 = vmul.f32 %v4830, %v4839
        %v4869 = vmul.f32 %v4831, %v4839
        %v4870 = vmul.f32 %v4832, %v4839
        %v4871 = vmul.f32 %v4833, %v4839
        %v4872 = vmul.f32 %v4834, %v4839
        %v4874 = vlaneseq
        %v4875 = vshrl.u32 %v4874, 7
        %v4876 = vsub.s32 0, %v4875
        %v4877 = vrot.slane %v4657, %v4876
        %v4879 = vadd.f32 %v4841, %v4877
        %v4880 = vadd.f32 %v4842, %v4877
        %v4881 = vadd.f32 %v4843, %v4877
        %v4882 = vadd.f32 %v4844, %v4877
        %v4883 = vadd.f32 %v4845, %v4877
        %v4884 = vadd.f32 %v4846, %v4877
        %v4885 = vadd.f32 %v4847, %v4877
        %v4886 = vadd.f32 %v4848, %v4877
        %v4887 = vadd.f32 %v4849, %v4877
        %v4888 = vadd.f32 %v4850, %v4877
        %v4889 = vadd.f32 %v4851, %v4877
        %v4890 = vadd.f32 %v4852, %v4877
        %v4891 = vadd.f32 %v4853, %v4877
        %v4892 = vadd.f32 %v4854, %v4877
        %v4893 = vadd.f32 %v4855, %v4877
        %v4894 = vadd.f32 %v4856, %v4877
        %v4895 = vadd.f32 %v4857, %v4877
        %v4896 = vadd.f32 %v4858, %v4877
        %v4897 = vadd.f32 %v4859, %v4877
        %v4898 = vadd.f32 %v4860, %v4877
        %v4899 = vadd.f32 %v4861, %v4877
        %v4900 = vadd.f32 %v4862, %v4877
        %v4901 = vadd.f32 %v4863, %v4877
        %v4902 = vadd.f32 %v4864, %v4877
        %v4903 = vadd.f32 %v4865, %v4877
        %v4904 = vadd.f32 %v4866, %v4877
        %v4905 = vadd.f32 %v4867, %v4877
        %v4906 = vadd.f32 %v4868, %v4877
        %v4907 = vadd.f32 %v4869, %v4877
        %v4908 = vadd.f32 %v4870, %v4877
        %v4909 = vadd.f32 %v4871, %v4877
        %v4910 = vadd.f32 %v4872, %v4877
        %v4911 = vmax.f32 %v4624, 0.0
        %v4912 = vmax.f32 %v4625, 0.0
        %v4913 = vmax.f32 %v4626, 0.0
        %v4914 = vmax.f32 %v4627, 0.0
        %v4915 = vmax.f32 %v4628, 0.0
        %v4916 = vmax.f32 %v4629, 0.0
        %v4917 = vmax.f32 %v4630, 0.0
        %v4918 = vmax.f32 %v4631, 0.0
        %v4919 = vmax.f32 %v4632, 0.0
        %v4920 = vmax.f32 %v4633, 0.0
        %v4921 = vmax.f32 %v4634, 0.0
        %v4922 = vmax.f32 %v4635, 0.0
        %v4923 = vmax.f32 %v4636, 0.0
        %v4924 = vmax.f32 %v4637, 0.0
        %v4925 = vmax.f32 %v4638, 0.0
        %v4926 = vmax.f32 %v4639, 0.0
        %v4927 = vmax.f32 %v4640, 0.0
        %v4928 = vmax.f32 %v4641, 0.0
        %v4929 = vmax.f32 %v4642, 0.0
        %v4930 = vmax.f32 %v4643, 0.0
        %v4931 = vmax.f32 %v4644, 0.0
        %v4932 = vmax.f32 %v4645, 0.0
        %v4933 = vmax.f32 %v4646, 0.0
        %v4934 = vmax.f32 %v4647, 0.0
        %v4935 = vmax.f32 %v4648, 0.0
        %v4936 = vmax.f32 %v4649, 0.0
        %v4937 = vmax.f32 %v4650, 0.0
        %v4938 = vmax.f32 %v4651, 0.0
        %v4939 = vmax.f32 %v4652, 0.0
        %v4940 = vmax.f32 %v4653, 0.0
        %v4941 = vmax.f32 %v4654, 0.0
        %v4942 = vmax.f32 %v4655, 0.0
        %v4943 = vpack.c.bf16 %v4912, %v4911
        %v4944 = vpack.c.bf16 %v4914, %v4913
        %v4945 = vpack.c.bf16 %v4916, %v4915
        %v4946 = vpack.c.bf16 %v4918, %v4917
        %v4947 = vpack.c.bf16 %v4920, %v4919
        %v4948 = vpack.c.bf16 %v4922, %v4921
        %v4949 = vpack.c.bf16 %v4924, %v4923
        %v4950 = vpack.c.bf16 %v4926, %v4925
        %v4951 = vpack.c.bf16 %v4928, %v4927
        %v4952 = vpack.c.bf16 %v4930, %v4929
        %v4953 = vpack.c.bf16 %v4932, %v4931
        %v4954 = vpack.c.bf16 %v4934, %v4933
        %v4955 = vpack.c.bf16 %v4936, %v4935
        %v4956 = vpack.c.bf16 %v4938, %v4937
        %v4957 = vpack.c.bf16 %v4940, %v4939
        %v4958 = vpack.c.bf16 %v4942, %v4941
        %v4975 = vunpack.c.l.b16 %v4943
        %v4976 = vunpack.c.h.b16 %v4943
        %v4977 = vunpack.c.l.b16 %v4944
        %v4978 = vunpack.c.h.b16 %v4944
        %v4979 = vunpack.c.l.b16 %v4945
        %v4980 = vunpack.c.h.b16 %v4945
        %v4981 = vunpack.c.l.b16 %v4946
        %v4982 = vunpack.c.h.b16 %v4946
        %v4983 = vunpack.c.l.b16 %v4947
        %v4984 = vunpack.c.h.b16 %v4947
        %v4985 = vunpack.c.l.b16 %v4948
        %v4986 = vunpack.c.h.b16 %v4948
        %v4987 = vunpack.c.l.b16 %v4949
        %v4988 = vunpack.c.h.b16 %v4949
        %v4989 = vunpack.c.l.b16 %v4950
        %v4990 = vunpack.c.h.b16 %v4950
        %v4991 = vunpack.c.l.b16 %v4951
        %v4992 = vunpack.c.h.b16 %v4951
        %v4993 = vunpack.c.l.b16 %v4952
        %v4994 = vunpack.c.h.b16 %v4952
        %v4995 = vunpack.c.l.b16 %v4953
        %v4996 = vunpack.c.h.b16 %v4953
        %v4997 = vunpack.c.l.b16 %v4954
        %v4998 = vunpack.c.h.b16 %v4954
        %v4999 = vunpack.c.l.b16 %v4955
        %v5000 = vunpack.c.h.b16 %v4955
        %v5001 = vunpack.c.l.b16 %v4956
        %v5002 = vunpack.c.h.b16 %v4956
        %v5003 = vunpack.c.l.b16 %v4957
        %v5004 = vunpack.c.h.b16 %v4957
        %v5005 = vunpack.c.l.b16 %v4958
        %v5006 = vunpack.c.h.b16 %v4958
        %v5007 = vpack.c.b16 %v4975, %v4975
        %v5008 = vpack.c.b16 %v4976, %v4976
        %v5009 = vpack.c.b16 %v4977, %v4977
        %v5010 = vpack.c.b16 %v4978, %v4978
        %v5011 = vpack.c.b16 %v4979, %v4979
        %v5012 = vpack.c.b16 %v4980, %v4980
        %v5013 = vpack.c.b16 %v4981, %v4981
        %v5014 = vpack.c.b16 %v4982, %v4982
        %v5015 = vpack.c.b16 %v4983, %v4983
        %v5016 = vpack.c.b16 %v4984, %v4984
        %v5017 = vpack.c.b16 %v4985, %v4985
        %v5018 = vpack.c.b16 %v4986, %v4986
        %v5019 = vpack.c.b16 %v4987, %v4987
        %v5020 = vpack.c.b16 %v4988, %v4988
        %v5021 = vpack.c.b16 %v4989, %v4989
        %v5022 = vpack.c.b16 %v4990, %v4990
        %v5023 = vpack.c.b16 %v4991, %v4991
        %v5024 = vpack.c.b16 %v4992, %v4992
        %v5025 = vpack.c.b16 %v4993, %v4993
        %v5026 = vpack.c.b16 %v4994, %v4994
        %v5027 = vpack.c.b16 %v4995, %v4995
        %v5028 = vpack.c.b16 %v4996, %v4996
        %v5029 = vpack.c.b16 %v4997, %v4997
        %v5030 = vpack.c.b16 %v4998, %v4998
        %v5031 = vpack.c.b16 %v4999, %v4999
        %v5032 = vpack.c.b16 %v5000, %v5000
        %v5033 = vpack.c.b16 %v5001, %v5001
        %v5034 = vpack.c.b16 %v5002, %v5002
        %v5035 = vpack.c.b16 %v5003, %v5003
        %v5036 = vpack.c.b16 %v5004, %v5004
        %v5037 = vpack.c.b16 %v5005, %v5005
        %v5038 = vpack.c.b16 %v5006, %v5006
        %5071 = vst [vmem:[%s417 + $0x4] sm:$0xf] %v5007
        %5072 = vst [vmem:[%s417 + $0x10] sm:$0xf] %v5008
        %5073 = vst [vmem:[%s417 + $0x1c] sm:$0xf] %v5009
        %5074 = vst [vmem:[%s417 + $0x28] sm:$0xf] %v5010
        %5075 = vst [vmem:[%s417 + $0x34] sm:$0xf] %v5011
        %5076 = vst [vmem:[%s417 + $0x40] sm:$0xf] %v5012
        %5077 = vst [vmem:[%s417 + $0x4c] sm:$0xf] %v5013
        %5078 = vst [vmem:[%s417 + $0x58] sm:$0xf] %v5014
        %5079 = vst [vmem:[%s417 + $0x64] sm:$0xf] %v5015
        %5080 = vst [vmem:[%s417 + $0x70] sm:$0xf] %v5016
        %5081 = vst [vmem:[%s417 + $0x7c] sm:$0xf] %v5017
        %5082 = vst [vmem:[%s417 + $0x88] sm:$0xf] %v5018
        %5083 = vst [vmem:[%s417 + $0x94] sm:$0xf] %v5019
        %5084 = vst [vmem:[%s417 + $0xa0] sm:$0xf] %v5020
        %5085 = vst [vmem:[%s417 + $0xac] sm:$0xf] %v5021
        %5086 = vst [vmem:[%s417 + $0xb8] sm:$0xf] %v5022
        %5087 = vst [vmem:[%s417 + $0xc4] sm:$0xf] %v5023
        %5088 = vst [vmem:[%s417 + $0xd0] sm:$0xf] %v5024
        %5089 = vst [vmem:[%s417 + $0xdc] sm:$0xf] %v5025
        %5090 = vst [vmem:[%s417 + $0xe8] sm:$0xf] %v5026
        %5091 = vst [vmem:[%s417 + $0xf4] sm:$0xf] %v5027
        %5092 = vst [vmem:[%s417 + $0x100] sm:$0xf] %v5028
        %5093 = vst [vmem:[%s417 + $0x10c] sm:$0xf] %v5029
        %5094 = vst [vmem:[%s417 + $0x118] sm:$0xf] %v5030
        %5095 = vst [vmem:[%s417 + $0x124] sm:$0xf] %v5031
        %5096 = vst [vmem:[%s417 + $0x130] sm:$0xf] %v5032
        %5097 = vst [vmem:[%s417 + $0x13c] sm:$0xf] %v5033
        %5098 = vst [vmem:[%s417 + $0x148] sm:$0xf] %v5034
        %5099 = vst [vmem:[%s417 + $0x154] sm:$0xf] %v5035
        %5100 = vst [vmem:[%s417 + $0x160] sm:$0xf] %v5036
        %5101 = vst [vmem:[%s417 + $0x16c] sm:$0xf] %v5037
        %5102 = vst [vmem:[%s417 + $0x178] sm:$0xf] %v5038
        %v5104 = vshrl.u32 %v5007, 16
        %v5106 = vrot.slane %v5104, 7
        %v5107 = vshll.u32 %v5007, 16
        %v5109 = vor.u32 %v5106, %v5107
        %v5110 = vrot.slane %v5106, 4
        %v5112 = vshrl.u32 %v5008, 16
        %v5114 = vrot.slane %v5112, 7
        %v5115 = vshll.u32 %v5008, 16
        %v5117 = vor.u32 %v5114, %v5115
        %v5118 = vsel %vm752, %v5110, %v5117
        %v5120 = vshrl.u32 %v5009, 16
        %v5122 = vrot.slane %v5120, 7
        %v5123 = vshll.u32 %v5009, 16
        %v5125 = vor.u32 %v5122, %v5123
        %v5126 = vrot.slane %v5122, 4
        %v5128 = vshrl.u32 %v5010, 16
        %v5130 = vrot.slane %v5128, 7
        %v5131 = vshll.u32 %v5010, 16
        %v5133 = vor.u32 %v5130, %v5131
        %v5134 = vsel %vm752, %v5126, %v5133
        %v5136 = vshrl.u32 %v5011, 16
        %v5138 = vrot.slane %v5136, 7
        %v5139 = vshll.u32 %v5011, 16
        %v5141 = vor.u32 %v5138, %v5139
        %v5142 = vrot.slane %v5138, 4
        %v5144 = vshrl.u32 %v5012, 16
        %v5146 = vrot.slane %v5144, 7
        %v5147 = vshll.u32 %v5012, 16
        %v5149 = vor.u32 %v5146, %v5147
        %v5150 = vsel %vm752, %v5142, %v5149
        %v5152 = vshrl.u32 %v5013, 16
        %v5154 = vrot.slane %v5152, 7
        %v5155 = vshll.u32 %v5013, 16
        %v5157 = vor.u32 %v5154, %v5155
        %v5158 = vrot.slane %v5154, 4
        %v5160 = vshrl.u32 %v5014, 16
        %v5162 = vrot.slane %v5160, 7
        %v5163 = vshll.u32 %v5014, 16
        %v5165 = vor.u32 %v5162, %v5163
        %v5166 = vsel %vm752, %v5158, %v5165
        %v5168 = vshrl.u32 %v5015, 16
        %v5170 = vrot.slane %v5168, 7
        %v5171 = vshll.u32 %v5015, 16
        %v5173 = vor.u32 %v5170, %v5171
        %v5174 = vrot.slane %v5170, 4
        %v5176 = vshrl.u32 %v5016, 16
        %v5178 = vrot.slane %v5176, 7
        %v5179 = vshll.u32 %v5016, 16
        %v5181 = vor.u32 %v5178, %v5179
        %v5182 = vsel %vm752, %v5174, %v5181
        %v5184 = vshrl.u32 %v5017, 16
        %v5186 = vrot.slane %v5184, 7
        %v5187 = vshll.u32 %v5017, 16
        %v5189 = vor.u32 %v5186, %v5187
        %v5190 = vrot.slane %v5186, 4
        %v5192 = vshrl.u32 %v5018, 16
        %v5194 = vrot.slane %v5192, 7
        %v5195 = vshll.u32 %v5018, 16
        %v5197 = vor.u32 %v5194, %v5195
        %v5198 = vsel %vm752, %v5190, %v5197
        %v5200 = vshrl.u32 %v5019, 16
        %v5202 = vrot.slane %v5200, 7
        %v5203 = vshll.u32 %v5019, 16
        %v5205 = vor.u32 %v5202, %v5203
        %v5206 = vrot.slane %v5202, 4
        %v5208 = vshrl.u32 %v5020, 16
        %v5210 = vrot.slane %v5208, 7
        %v5211 = vshll.u32 %v5020, 16
        %v5213 = vor.u32 %v5210, %v5211
        %v5214 = vsel %vm752, %v5206, %v5213
        %v5216 = vshrl.u32 %v5021, 16
        %v5218 = vrot.slane %v5216, 7
        %v5219 = vshll.u32 %v5021, 16
        %v5221 = vor.u32 %v5218, %v5219
        %v5222 = vrot.slane %v5218, 4
        %v5224 = vshrl.u32 %v5022, 16
        %v5226 = vrot.slane %v5224, 7
        %v5227 = vshll.u32 %v5022, 16
        %v5229 = vor.u32 %v5226, %v5227
        %v5230 = vsel %vm752, %v5222, %v5229
        %v5232 = vshrl.u32 %v5023, 16
        %v5234 = vrot.slane %v5232, 7
        %v5235 = vshll.u32 %v5023, 16
        %v5237 = vor.u32 %v5234, %v5235
        %v5238 = vrot.slane %v5234, 4
        %v5240 = vshrl.u32 %v5024, 16
        %v5242 = vrot.slane %v5240, 7
        %v5243 = vshll.u32 %v5024, 16
        %v5245 = vor.u32 %v5242, %v5243
        %v5246 = vsel %vm752, %v5238, %v5245
        %v5248 = vshrl.u32 %v5025, 16
        %v5250 = vrot.slane %v5248, 7
        %v5251 = vshll.u32 %v5025, 16
        %v5253 = vor.u32 %v5250, %v5251
        %v5254 = vrot.slane %v5250, 4
        %v5256 = vshrl.u32 %v5026, 16
        %v5258 = vrot.slane %v5256, 7
        %v5259 = vshll.u32 %v5026, 16
        %v5261 = vor.u32 %v5258, %v5259
        %v5262 = vsel %vm752, %v5254, %v5261
        %v5264 = vshrl.u32 %v5027, 16
        %v5266 = vrot.slane %v5264, 7
        %v5267 = vshll.u32 %v5027, 16
        %v5269 = vor.u32 %v5266, %v5267
        %v5270 = vrot.slane %v5266, 4
        %v5272 = vshrl.u32 %v5028, 16
        %v5274 = vrot.slane %v5272, 7
        %v5275 = vshll.u32 %v5028, 16
        %v5277 = vor.u32 %v5274, %v5275
        %v5278 = vsel %vm752, %v5270, %v5277
        %v5280 = vshrl.u32 %v5029, 16
        %v5282 = vrot.slane %v5280, 7
        %v5283 = vshll.u32 %v5029, 16
        %v5285 = vor.u32 %v5282, %v5283
        %v5286 = vrot.slane %v5282, 4
        %v5288 = vshrl.u32 %v5030, 16
        %v5290 = vrot.slane %v5288, 7
        %v5291 = vshll.u32 %v5030, 16
        %v5293 = vor.u32 %v5290, %v5291
        %v5294 = vsel %vm752, %v5286, %v5293
        %v5296 = vshrl.u32 %v5031, 16
        %v5298 = vrot.slane %v5296, 7
        %v5299 = vshll.u32 %v5031, 16
        %v5301 = vor.u32 %v5298, %v5299
        %v5302 = vrot.slane %v5298, 4
        %v5304 = vshrl.u32 %v5032, 16
        %v5306 = vrot.slane %v5304, 7
        %v5307 = vshll.u32 %v5032, 16
        %v5309 = vor.u32 %v5306, %v5307
        %v5310 = vsel %vm752, %v5302, %v5309
        %v5312 = vshrl.u32 %v5033, 16
        %v5314 = vrot.slane %v5312, 7
        %v5315 = vshll.u32 %v5033, 16
        %v5317 = vor.u32 %v5314, %v5315
        %v5318 = vrot.slane %v5314, 4
        %v5320 = vshrl.u32 %v5034, 16
        %v5322 = vrot.slane %v5320, 7
        %v5323 = vshll.u32 %v5034, 16
        %v5325 = vor.u32 %v5322, %v5323
        %v5326 = vsel %vm752, %v5318, %v5325
        %v5328 = vshrl.u32 %v5035, 16
        %v5330 = vrot.slane %v5328, 7
        %v5331 = vshll.u32 %v5035, 16
        %v5333 = vor.u32 %v5330, %v5331
        %v5334 = vrot.slane %v5330, 4
        %v5336 = vshrl.u32 %v5036, 16
        %v5338 = vrot.slane %v5336, 7
        %v5339 = vshll.u32 %v5036, 16
        %v5341 = vor.u32 %v5338, %v5339
        %v5342 = vsel %vm752, %v5334, %v5341
        %v5344 = vshrl.u32 %v5037, 16
        %v5346 = vrot.slane %v5344, 7
        %v5347 = vshll.u32 %v5037, 16
        %v5349 = vor.u32 %v5346, %v5347
        %v5350 = vrot.slane %v5346, 4
        %v5352 = vshrl.u32 %v5038, 16
        %v5354 = vrot.slane %v5352, 7
        %v5355 = vshll.u32 %v5038, 16
        %v5357 = vor.u32 %v5354, %v5355
        %v5358 = vsel %vm752, %v5350, %v5357
        %v5391 = vld [vmem:[%s417] sm:$0xf]
        %v5392 = vsel %vm1043, %v5109, %v5391
        %5393 = vst [vmem:[%s417] sm:$0xf] %v5392
        %5394 = vst [vmem:[%s417 + $0xc] sm:$0xf] %v5118
        %v5395 = vld [vmem:[%s417 + $0x18] sm:$0xf]
        %v5396 = vsel %vm1043, %v5125, %v5395
        %5397 = vst [vmem:[%s417 + $0x18] sm:$0xf] %v5396
        %5398 = vst [vmem:[%s417 + $0x24] sm:$0xf] %v5134
        %v5399 = vld [vmem:[%s417 + $0x30] sm:$0xf]
        %v5400 = vsel %vm1043, %v5141, %v5399
        %5401 = vst [vmem:[%s417 + $0x30] sm:$0xf] %v5400
        %5402 = vst [vmem:[%s417 + $0x3c] sm:$0xf] %v5150
        %v5403 = vld [vmem:[%s417 + $0x48] sm:$0xf]
        %v5404 = vsel %vm1043, %v5157, %v5403
        %5405 = vst [vmem:[%s417 + $0x48] sm:$0xf] %v5404
        %5406 = vst [vmem:[%s417 + $0x54] sm:$0xf] %v5166
        %v5407 = vld [vmem:[%s417 + $0x60] sm:$0xf]
        %v5408 = vsel %vm1043, %v5173, %v5407
        %5409 = vst [vmem:[%s417 + $0x60] sm:$0xf] %v5408
        %5410 = vst [vmem:[%s417 + $0x6c] sm:$0xf] %v5182
        %v5411 = vld [vmem:[%s417 + $0x78] sm:$0xf]
        %v5412 = vsel %vm1043, %v5189, %v5411
        %5413 = vst [vmem:[%s417 + $0x78] sm:$0xf] %v5412
        %5414 = vst [vmem:[%s417 + $0x84] sm:$0xf] %v5198
        %v5415 = vld [vmem:[%s417 + $0x90] sm:$0xf]
        %v5416 = vsel %vm1043, %v5205, %v5415
        %5417 = vst [vmem:[%s417 + $0x90] sm:$0xf] %v5416
        %5418 = vst [vmem:[%s417 + $0x9c] sm:$0xf] %v5214
        %v5419 = vld [vmem:[%s417 + $0xa8] sm:$0xf]
        %v5420 = vsel %vm1043, %v5221, %v5419
        %5421 = vst [vmem:[%s417 + $0xa8] sm:$0xf] %v5420
        %5422 = vst [vmem:[%s417 + $0xb4] sm:$0xf] %v5230
        %v5423 = vld [vmem:[%s417 + $0xc0] sm:$0xf]
        %v5424 = vsel %vm1043, %v5237, %v5423
        %5425 = vst [vmem:[%s417 + $0xc0] sm:$0xf] %v5424
        %5426 = vst [vmem:[%s417 + $0xcc] sm:$0xf] %v5246
        %v5427 = vld [vmem:[%s417 + $0xd8] sm:$0xf]
        %v5428 = vsel %vm1043, %v5253, %v5427
        %5429 = vst [vmem:[%s417 + $0xd8] sm:$0xf] %v5428
        %5430 = vst [vmem:[%s417 + $0xe4] sm:$0xf] %v5262
        %v5431 = vld [vmem:[%s417 + $0xf0] sm:$0xf]
        %v5432 = vsel %vm1043, %v5269, %v5431
        %5433 = vst [vmem:[%s417 + $0xf0] sm:$0xf] %v5432
        %5434 = vst [vmem:[%s417 + $0xfc] sm:$0xf] %v5278
        %v5435 = vld [vmem:[%s417 + $0x108] sm:$0xf]
        %v5436 = vsel %vm1043, %v5285, %v5435
        %5437 = vst [vmem:[%s417 + $0x108] sm:$0xf] %v5436
        %5438 = vst [vmem:[%s417 + $0x114] sm:$0xf] %v5294
        %v5439 = vld [vmem:[%s417 + $0x120] sm:$0xf]
        %v5440 = vsel %vm1043, %v5301, %v5439
        %5441 = vst [vmem:[%s417 + $0x120] sm:$0xf] %v5440
        %5442 = vst [vmem:[%s417 + $0x12c] sm:$0xf] %v5310
        %v5443 = vld [vmem:[%s417 + $0x138] sm:$0xf]
        %v5444 = vsel %vm1043, %v5317, %v5443
        %5445 = vst [vmem:[%s417 + $0x138] sm:$0xf] %v5444
        %5446 = vst [vmem:[%s417 + $0x144] sm:$0xf] %v5326
        %v5447 = vld [vmem:[%s417 + $0x150] sm:$0xf]
        %v5448 = vsel %vm1043, %v5333, %v5447
        %5449 = vst [vmem:[%s417 + $0x150] sm:$0xf] %v5448
        %5450 = vst [vmem:[%s417 + $0x15c] sm:$0xf] %v5342
        %v5451 = vld [vmem:[%s417 + $0x168] sm:$0xf]
        %v5452 = vsel %vm1043, %v5349, %v5451
        %5453 = vst [vmem:[%s417 + $0x168] sm:$0xf] %v5452
        %5454 = vst [vmem:[%s417 + $0x174] sm:$0xf] %v5358
        %v5455 = vrot.slane %v5104, 4
        %v5456 = vrot.slane %v5107, 5
        %v5457 = vor.u32 %v5455, %v5456
        %v5458 = vrot.slane %v5457, 4
        %v5459 = vrot.slane %v5115, 5
        %v5460 = vsel %vm1110, %v5458, %v5459
        %v5461 = vrot.slane %v5112, 4
        %v5462 = vor.u32 %v5461, %v5459
        %v5463 = vrot.slane %v5462, 4
        %v5464 = vrot.slane %v5120, 4
        %v5465 = vrot.slane %v5123, 5
        %v5466 = vor.u32 %v5464, %v5465
        %v5467 = vrot.slane %v5466, 4
        %v5468 = vrot.slane %v5131, 5
        %v5469 = vsel %vm1110, %v5467, %v5468
        %v5470 = vrot.slane %v5128, 4
        %v5471 = vor.u32 %v5470, %v5468
        %v5472 = vrot.slane %v5471, 4
        %v5473 = vrot.slane %v5136, 4
        %v5474 = vrot.slane %v5139, 5
        %v5475 = vor.u32 %v5473, %v5474
        %v5476 = vrot.slane %v5475, 4
        %v5477 = vrot.slane %v5147, 5
        %v5478 = vsel %vm1110, %v5476, %v5477
        %v5479 = vrot.slane %v5144, 4
        %v5480 = vor.u32 %v5479, %v5477
        %v5481 = vrot.slane %v5480, 4
        %v5482 = vrot.slane %v5152, 4
        %v5483 = vrot.slane %v5155, 5
        %v5484 = vor.u32 %v5482, %v5483
        %v5485 = vrot.slane %v5484, 4
        %v5486 = vrot.slane %v5163, 5
        %v5487 = vsel %vm1110, %v5485, %v5486
        %v5488 = vrot.slane %v5160, 4
        %v5489 = vor.u32 %v5488, %v5486
        %v5490 = vrot.slane %v5489, 4
        %v5491 = vrot.slane %v5168, 4
        %v5492 = vrot.slane %v5171, 5
        %v5493 = vor.u32 %v5491, %v5492
        %v5494 = vrot.slane %v5493, 4
        %v5495 = vrot.slane %v5179, 5
        %v5496 = vsel %vm1110, %v5494, %v5495
        %v5497 = vrot.slane %v5176, 4
        %v5498 = vor.u32 %v5497, %v5495
        %v5499 = vrot.slane %v5498, 4
        %v5500 = vrot.slane %v5184, 4
        %v5501 = vrot.slane %v5187, 5
        %v5502 = vor.u32 %v5500, %v5501
        %v5503 = vrot.slane %v5502, 4
        %v5504 = vrot.slane %v5195, 5
        %v5505 = vsel %vm1110, %v5503, %v5504
        %v5506 = vrot.slane %v5192, 4
        %v5507 = vor.u32 %v5506, %v5504
        %v5508 = vrot.slane %v5507, 4
        %v5509 = vrot.slane %v5200, 4
        %v5510 = vrot.slane %v5203, 5
        %v5511 = vor.u32 %v5509, %v5510
        %v5512 = vrot.slane %v5511, 4
        %v5513 = vrot.slane %v5211, 5
        %v5514 = vsel %vm1110, %v5512, %v5513
        %v5515 = vrot.slane %v5208, 4
        %v5516 = vor.u32 %v5515, %v5513
        %v5517 = vrot.slane %v5516, 4
        %v5518 = vrot.slane %v5216, 4
        %v5519 = vrot.slane %v5219, 5
        %v5520 = vor.u32 %v5518, %v5519
        %v5521 = vrot.slane %v5520, 4
        %v5522 = vrot.slane %v5227, 5
        %v5523 = vsel %vm1110, %v5521, %v5522
        %v5524 = vrot.slane %v5224, 4
        %v5525 = vor.u32 %v5524, %v5522
        %v5526 = vrot.slane %v5525, 4
        %v5527 = vrot.slane %v5232, 4
        %v5528 = vrot.slane %v5235, 5
        %v5529 = vor.u32 %v5527, %v5528
        %v5530 = vrot.slane %v5529, 4
        %v5531 = vrot.slane %v5243, 5
        %v5532 = vsel %vm1110, %v5530, %v5531
        %v5533 = vrot.slane %v5240, 4
        %v5534 = vor.u32 %v5533, %v5531
        %v5535 = vrot.slane %v5534, 4
        %v5536 = vrot.slane %v5248, 4
        %v5537 = vrot.slane %v5251, 5
        %v5538 = vor.u32 %v5536, %v5537
        %v5539 = vrot.slane %v5538, 4
        %v5540 = vrot.slane %v5259, 5
        %v5541 = vsel %vm1110, %v5539, %v5540
        %v5542 = vrot.slane %v5256, 4
        %v5543 = vor.u32 %v5542, %v5540
        %v5544 = vrot.slane %v5543, 4
        %v5545 = vrot.slane %v5264, 4
        %v5546 = vrot.slane %v5267, 5
        %v5547 = vor.u32 %v5545, %v5546
        %v5548 = vrot.slane %v5547, 4
        %v5549 = vrot.slane %v5275, 5
        %v5550 = vsel %vm1110, %v5548, %v5549
        %v5551 = vrot.slane %v5272, 4
        %v5552 = vor.u32 %v5551, %v5549
        %v5553 = vrot.slane %v5552, 4
        %v5554 = vrot.slane %v5280, 4
        %v5555 = vrot.slane %v5283, 5
        %v5556 = vor.u32 %v5554, %v5555
        %v5557 = vrot.slane %v5556, 4
        %v5558 = vrot.slane %v5291, 5
        %v5559 = vsel %vm1110, %v5557, %v5558
        %v5560 = vrot.slane %v5288, 4
        %v5561 = vor.u32 %v5560, %v5558
        %v5562 = vrot.slane %v5561, 4
        %v5563 = vrot.slane %v5296, 4
        %v5564 = vrot.slane %v5299, 5
        %v5565 = vor.u32 %v5563, %v5564
        %v5566 = vrot.slane %v5565, 4
        %v5567 = vrot.slane %v5307, 5
        %v5568 = vsel %vm1110, %v5566, %v5567
        %v5569 = vrot.slane %v5304, 4
        %v5570 = vor.u32 %v5569, %v5567
        %v5571 = vrot.slane %v5570, 4
        %v5572 = vrot.slane %v5312, 4
        %v5573 = vrot.slane %v5315, 5
        %v5574 = vor.u32 %v5572, %v5573
        %v5575 = vrot.slane %v5574, 4
        %v5576 = vrot.slane %v5323, 5
        %v5577 = vsel %vm1110, %v5575, %v5576
        %v5578 = vrot.slane %v5320, 4
        %v5579 = vor.u32 %v5578, %v5576
        %v5580 = vrot.slane %v5579, 4
        %v5581 = vrot.slane %v5328, 4
        %v5582 = vrot.slane %v5331, 5
        %v5583 = vor.u32 %v5581, %v5582
        %v5584 = vrot.slane %v5583, 4
        %v5585 = vrot.slane %v5339, 5
        %v5586 = vsel %vm1110, %v5584, %v5585
        %v5587 = vrot.slane %v5336, 4
        %v5588 = vor.u32 %v5587, %v5585
        %v5589 = vrot.slane %v5588, 4
        %v5590 = vrot.slane %v5344, 4
        %v5591 = vrot.slane %v5347, 5
        %v5592 = vor.u32 %v5590, %v5591
        %v5593 = vrot.slane %v5592, 4
        %v5594 = vrot.slane %v5355, 5
        %v5595 = vsel %vm1110, %v5593, %v5594
        %v5596 = vrot.slane %v5352, 4
        %v5597 = vor.u32 %v5596, %v5594
        %v5598 = vrot.slane %v5597, 4
        %5631 = vst [vmem:[%s417 + $0x8] sm:$0xf] %v5460
        %v5632 = vld [vmem:[%s417 + $0x14] sm:$0xf]
        %v5633 = vsel %vm1288, %v5463, %v5632
        %5634 = vst [vmem:[%s417 + $0x14] sm:$0xf] %v5633
        %5635 = vst [vmem:[%s417 + $0x20] sm:$0xf] %v5469
        %v5636 = vld [vmem:[%s417 + $0x2c] sm:$0xf]
        %v5637 = vsel %vm1288, %v5472, %v5636
        %5638 = vst [vmem:[%s417 + $0x2c] sm:$0xf] %v5637
        %5639 = vst [vmem:[%s417 + $0x38] sm:$0xf] %v5478
        %v5640 = vld [vmem:[%s417 + $0x44] sm:$0xf]
        %v5641 = vsel %vm1288, %v5481, %v5640
        %5642 = vst [vmem:[%s417 + $0x44] sm:$0xf] %v5641
        %5643 = vst [vmem:[%s417 + $0x50] sm:$0xf] %v5487
        %v5644 = vld [vmem:[%s417 + $0x5c] sm:$0xf]
        %v5645 = vsel %vm1288, %v5490, %v5644
        %5646 = vst [vmem:[%s417 + $0x5c] sm:$0xf] %v5645
        %5647 = vst [vmem:[%s417 + $0x68] sm:$0xf] %v5496
        %v5648 = vld [vmem:[%s417 + $0x74] sm:$0xf]
        %v5649 = vsel %vm1288, %v5499, %v5648
        %5650 = vst [vmem:[%s417 + $0x74] sm:$0xf] %v5649
        %5651 = vst [vmem:[%s417 + $0x80] sm:$0xf] %v5505
        %v5652 = vld [vmem:[%s417 + $0x8c] sm:$0xf]
        %v5653 = vsel %vm1288, %v5508, %v5652
        %5654 = vst [vmem:[%s417 + $0x8c] sm:$0xf] %v5653
        %5655 = vst [vmem:[%s417 + $0x98] sm:$0xf] %v5514
        %v5656 = vld [vmem:[%s417 + $0xa4] sm:$0xf]
        %v5657 = vsel %vm1288, %v5517, %v5656
        %5658 = vst [vmem:[%s417 + $0xa4] sm:$0xf] %v5657
        %5659 = vst [vmem:[%s417 + $0xb0] sm:$0xf] %v5523
        %v5660 = vld [vmem:[%s417 + $0xbc] sm:$0xf]
        %v5661 = vsel %vm1288, %v5526, %v5660
        %5662 = vst [vmem:[%s417 + $0xbc] sm:$0xf] %v5661
        %5663 = vst [vmem:[%s417 + $0xc8] sm:$0xf] %v5532
        %v5664 = vld [vmem:[%s417 + $0xd4] sm:$0xf]
        %v5665 = vsel %vm1288, %v5535, %v5664
        %5666 = vst [vmem:[%s417 + $0xd4] sm:$0xf] %v5665
        %5667 = vst [vmem:[%s417 + $0xe0] sm:$0xf] %v5541
        %v5668 = vld [vmem:[%s417 + $0xec] sm:$0xf]
        %v5669 = vsel %vm1288, %v5544, %v5668
        %5670 = vst [vmem:[%s417 + $0xec] sm:$0xf] %v5669
        %5671 = vst [vmem:[%s417 + $0xf8] sm:$0xf] %v5550
        %v5672 = vld [vmem:[%s417 + $0x104] sm:$0xf]
        %v5673 = vsel %vm1288, %v5553, %v5672
        %5674 = vst [vmem:[%s417 + $0x104] sm:$0xf] %v5673
        %5675 = vst [vmem:[%s417 + $0x110] sm:$0xf] %v5559
        %v5676 = vld [vmem:[%s417 + $0x11c] sm:$0xf]
        %v5677 = vsel %vm1288, %v5562, %v5676
        %5678 = vst [vmem:[%s417 + $0x11c] sm:$0xf] %v5677
        %5679 = vst [vmem:[%s417 + $0x128] sm:$0xf] %v5568
        %v5680 = vld [vmem:[%s417 + $0x134] sm:$0xf]
        %v5681 = vsel %vm1288, %v5571, %v5680
        %5682 = vst [vmem:[%s417 + $0x134] sm:$0xf] %v5681
        %5683 = vst [vmem:[%s417 + $0x140] sm:$0xf] %v5577
        %v5684 = vld [vmem:[%s417 + $0x14c] sm:$0xf]
        %v5685 = vsel %vm1288, %v5580, %v5684
        %5686 = vst [vmem:[%s417 + $0x14c] sm:$0xf] %v5685
        %5687 = vst [vmem:[%s417 + $0x158] sm:$0xf] %v5586
        %v5688 = vld [vmem:[%s417 + $0x164] sm:$0xf]
        %v5689 = vsel %vm1288, %v5589, %v5688
        %5690 = vst [vmem:[%s417 + $0x164] sm:$0xf] %v5689
        %5691 = vst [vmem:[%s417 + $0x170] sm:$0xf] %v5595
        %v5692 = vld [vmem:[%s417 + $0x17c] sm:$0xf]
        %v5693 = vsel %vm1288, %v5598, %v5692
        %5694 = vst [vmem:[%s417 + $0x17c] sm:$0xf] %v5693
        %v5695 = vld [vmem:[#allocation2] sm:$0xff]
        %v5696 = vld [vmem:[#allocation2 + $0x8] sm:$0xf]
        %v5697 = vld [vmem:[#allocation2 + $0xc] sm:$0xff]
        %v5698 = vld [vmem:[#allocation2 + $0x14] sm:$0xf]
        %v5699 = vld [vmem:[#allocation2 + $0x18] sm:$0xff]
        %v5700 = vld [vmem:[#allocation2 + $0x20] sm:$0xf]
        %v5701 = vld [vmem:[#allocation2 + $0x24] sm:$0xff]
        %v5702 = vld [vmem:[#allocation2 + $0x2c] sm:$0xf]
        %v5703 = vld [vmem:[#allocation2 + $0x30] sm:$0xff]
        %v5704 = vld [vmem:[#allocation2 + $0x38] sm:$0xf]
        %v5705 = vld [vmem:[#allocation2 + $0x3c] sm:$0xff]
        %v5706 = vld [vmem:[#allocation2 + $0x44] sm:$0xf]
        %v5707 = vld [vmem:[#allocation2 + $0x48] sm:$0xff]
        %v5708 = vld [vmem:[#allocation2 + $0x50] sm:$0xf]
        %v5709 = vld [vmem:[#allocation2 + $0x54] sm:$0xff]
        %v5710 = vld [vmem:[#allocation2 + $0x5c] sm:$0xf]
        %v5711 = vld [vmem:[#allocation2 + $0x60] sm:$0xff]
        %v5712 = vld [vmem:[#allocation2 + $0x68] sm:$0xf]
        %v5713 = vld [vmem:[#allocation2 + $0x6c] sm:$0xff]
        %v5714 = vld [vmem:[#allocation2 + $0x74] sm:$0xf]
        %v5715 = vld [vmem:[#allocation2 + $0x78] sm:$0xff]
        %v5716 = vld [vmem:[#allocation2 + $0x80] sm:$0xf]
        %v5717 = vld [vmem:[#allocation2 + $0x84] sm:$0xff]
        %v5718 = vld [vmem:[#allocation2 + $0x8c] sm:$0xf]
        %v5719 = vld [vmem:[#allocation2 + $0x90] sm:$0xff]
        %v5720 = vld [vmem:[#allocation2 + $0x98] sm:$0xf]
        %v5721 = vld [vmem:[#allocation2 + $0x9c] sm:$0xff]
        %v5722 = vld [vmem:[#allocation2 + $0xa4] sm:$0xf]
        %v5723 = vld [vmem:[#allocation2 + $0xa8] sm:$0xff]
        %v5724 = vld [vmem:[#allocation2 + $0xb0] sm:$0xf]
        %v5725 = vld [vmem:[#allocation2 + $0xb4] sm:$0xff]
        %v5726 = vld [vmem:[#allocation2 + $0xbc] sm:$0xf]
        %v5727 = vld [vmem:[#allocation2 + $0xc0] sm:$0xff]
        %v5728 = vld [vmem:[#allocation2 + $0xc8] sm:$0xf]
        %v5729 = vld [vmem:[#allocation2 + $0xcc] sm:$0xff]
        %v5730 = vld [vmem:[#allocation2 + $0xd4] sm:$0xf]
        %v5731 = vld [vmem:[#allocation2 + $0xd8] sm:$0xff]
        %v5732 = vld [vmem:[#allocation2 + $0xe0] sm:$0xf]
        %v5733 = vld [vmem:[#allocation2 + $0xe4] sm:$0xff]
        %v5734 = vld [vmem:[#allocation2 + $0xec] sm:$0xf]
        %v5735 = vld [vmem:[#allocation2 + $0xf0] sm:$0xff]
        %v5736 = vld [vmem:[#allocation2 + $0xf8] sm:$0xf]
        %v5737 = vld [vmem:[#allocation2 + $0xfc] sm:$0xff]
        %v5738 = vld [vmem:[#allocation2 + $0x104] sm:$0xf]
        %v5739 = vld [vmem:[#allocation2 + $0x108] sm:$0xff]
        %v5740 = vld [vmem:[#allocation2 + $0x110] sm:$0xf]
        %v5741 = vld [vmem:[#allocation2 + $0x114] sm:$0xff]
        %v5742 = vld [vmem:[#allocation2 + $0x11c] sm:$0xf]
        %v5743 = vld [vmem:[#allocation2 + $0x120] sm:$0xff]
        %v5744 = vld [vmem:[#allocation2 + $0x128] sm:$0xf]
        %v5745 = vld [vmem:[#allocation2 + $0x12c] sm:$0xff]
        %v5746 = vld [vmem:[#allocation2 + $0x134] sm:$0xf]
        %v5747 = vld [vmem:[#allocation2 + $0x138] sm:$0xff]
        %v5748 = vld [vmem:[#allocation2 + $0x140] sm:$0xf]
        %v5749 = vld [vmem:[#allocation2 + $0x144] sm:$0xff]
        %v5750 = vld [vmem:[#allocation2 + $0x14c] sm:$0xf]
        %v5751 = vld [vmem:[#allocation2 + $0x150] sm:$0xff]
        %v5752 = vld [vmem:[#allocation2 + $0x158] sm:$0xf]
        %v5753 = vld [vmem:[#allocation2 + $0x15c] sm:$0xff]
        %v5754 = vld [vmem:[#allocation2 + $0x164] sm:$0xf]
        %v5755 = vld [vmem:[#allocation2 + $0x168] sm:$0xff]
        %v5756 = vld [vmem:[#allocation2 + $0x170] sm:$0xf]
        %v5757 = vld [vmem:[#allocation2 + $0x174] sm:$0xff]
        %v5758 = vld [vmem:[#allocation2 + $0x17c] sm:$0xf]
        %v5759 = vld [vmem:[#allocation8] sm:$0xf]
        %v5760 = vld [vmem:[#allocation8 + $0x4] sm:$0xf]
        %v5761 = vld [vmem:[#allocation8 + $0x8] sm:$0xf]
        %v5762 = vld [vmem:[#allocation8 + $0xc] sm:$0xf]
        %v5763 = vld [vmem:[#allocation8 + $0x10] sm:$0xf]
        %v5764 = vld [vmem:[#allocation8 + $0x14] sm:$0xf]
        %v5765 = vld [vmem:[#allocation8 + $0x18] sm:$0xf]
        %v5766 = vld [vmem:[#allocation8 + $0x1c] sm:$0xf]
        %v5767 = vld [vmem:[#allocation8 + $0x20] sm:$0xf]
        %v5768 = vld [vmem:[#allocation8 + $0x24] sm:$0xf]
        %v5769 = vld [vmem:[#allocation8 + $0x28] sm:$0xf]
        %v5770 = vld [vmem:[#allocation8 + $0x2c] sm:$0xf]
        %v5771 = vld [vmem:[#allocation8 + $0x30] sm:$0xf]
        %v5772 = vld [vmem:[#allocation8 + $0x34] sm:$0xf]
        %v5773 = vld [vmem:[#allocation8 + $0x38] sm:$0xf]
        %v5774 = vld [vmem:[#allocation8 + $0x3c] sm:$0xf]
        %v5775 = vld [vmem:[#allocation8 + $0x40] sm:$0xf]
        %v5776 = vld [vmem:[#allocation8 + $0x44] sm:$0xf]
        %v5777 = vld [vmem:[#allocation8 + $0x48] sm:$0xf]
        %v5778 = vld [vmem:[#allocation8 + $0x4c] sm:$0xf]
        %v5779 = vld [vmem:[#allocation8 + $0x50] sm:$0xf]
        %v5780 = vld [vmem:[#allocation8 + $0x54] sm:$0xf]
        %v5781 = vld [vmem:[#allocation8 + $0x58] sm:$0xf]
        %v5782 = vld [vmem:[#allocation8 + $0x5c] sm:$0xf]
        %v5783 = vld [vmem:[#allocation8 + $0x60] sm:$0xf]
        %v5784 = vld [vmem:[#allocation8 + $0x64] sm:$0xf]
        %v5785 = vld [vmem:[#allocation8 + $0x68] sm:$0xf]
        %v5786 = vld [vmem:[#allocation8 + $0x6c] sm:$0xf]
        %v5787 = vld [vmem:[#allocation8 + $0x70] sm:$0xf]
        %v5788 = vld [vmem:[#allocation8 + $0x74] sm:$0xf]
        %v5789 = vld [vmem:[#allocation8 + $0x78] sm:$0xf]
        %v5790 = vld [vmem:[#allocation8 + $0x7c] sm:$0xf]
        %v5791 = vld [vmem:[#allocation8 + $0x80] sm:$0xf]
        %v5792 = vld [vmem:[#allocation8 + $0x84] sm:$0xf]
        %v5793 = vld [vmem:[#allocation8 + $0x88] sm:$0xf]
        %v5794 = vld [vmem:[#allocation8 + $0x8c] sm:$0xf]
        %v5795 = vld [vmem:[#allocation8 + $0x90] sm:$0xf]
        %v5796 = vld [vmem:[#allocation8 + $0x94] sm:$0xf]
        %v5797 = vld [vmem:[#allocation8 + $0x98] sm:$0xf]
        %v5798 = vld [vmem:[#allocation8 + $0x9c] sm:$0xf]
        %v5799 = vld [vmem:[#allocation8 + $0xa0] sm:$0xf]
        %v5800 = vld [vmem:[#allocation8 + $0xa4] sm:$0xf]
        %v5801 = vld [vmem:[#allocation8 + $0xa8] sm:$0xf]
        %v5802 = vld [vmem:[#allocation8 + $0xac] sm:$0xf]
        %v5803 = vld [vmem:[#allocation8 + $0xb0] sm:$0xf]
        %v5804 = vld [vmem:[#allocation8 + $0xb4] sm:$0xf]
        %v5805 = vld [vmem:[#allocation8 + $0xb8] sm:$0xf]
        %v5806 = vld [vmem:[#allocation8 + $0xbc] sm:$0xf]
        %v5807 = vld [vmem:[%s417] sm:$0xff]
        %v5808 = vld [vmem:[%s417 + $0x8] sm:$0xf]
        %v5809 = vld [vmem:[%s417 + $0xc] sm:$0xff]
        %v5810 = vld [vmem:[%s417 + $0x14] sm:$0xf]
        %v5811 = vld [vmem:[%s417 + $0x18] sm:$0xff]
        %v5812 = vld [vmem:[%s417 + $0x20] sm:$0xf]
        %v5813 = vld [vmem:[%s417 + $0x24] sm:$0xff]
        %v5814 = vld [vmem:[%s417 + $0x2c] sm:$0xf]
        %v5815 = vld [vmem:[%s417 + $0x30] sm:$0xff]
        %v5816 = vld [vmem:[%s417 + $0x38] sm:$0xf]
        %v5817 = vld [vmem:[%s417 + $0x3c] sm:$0xff]
        %v5818 = vld [vmem:[%s417 + $0x44] sm:$0xf]
        %v5819 = vld [vmem:[%s417 + $0x48] sm:$0xff]
        %v5820 = vld [vmem:[%s417 + $0x50] sm:$0xf]
        %v5821 = vld [vmem:[%s417 + $0x54] sm:$0xff]
        %v5822 = vld [vmem:[%s417 + $0x5c] sm:$0xf]
        %v5823 = vld [vmem:[%s417 + $0x60] sm:$0xff]
        %v5824 = vld [vmem:[%s417 + $0x68] sm:$0xf]
        %v5825 = vld [vmem:[%s417 + $0x6c] sm:$0xff]
        %v5826 = vld [vmem:[%s417 + $0x74] sm:$0xf]
        %v5827 = vld [vmem:[%s417 + $0x78] sm:$0xff]
        %v5828 = vld [vmem:[%s417 + $0x80] sm:$0xf]
        %v5829 = vld [vmem:[%s417 + $0x84] sm:$0xff]
        %v5830 = vld [vmem:[%s417 + $0x8c] sm:$0xf]
        %v5831 = vld [vmem:[%s417 + $0x90] sm:$0xff]
        %v5832 = vld [vmem:[%s417 + $0x98] sm:$0xf]
        %v5833 = vld [vmem:[%s417 + $0x9c] sm:$0xff]
        %v5834 = vld [vmem:[%s417 + $0xa4] sm:$0xf]
        %v5835 = vld [vmem:[%s417 + $0xa8] sm:$0xff]
        %v5836 = vld [vmem:[%s417 + $0xb0] sm:$0xf]
        %v5837 = vld [vmem:[%s417 + $0xb4] sm:$0xff]
        %v5838 = vld [vmem:[%s417 + $0xbc] sm:$0xf]
        %v5839 = vld [vmem:[%s417 + $0xc0] sm:$0xff]
        %v5840 = vld [vmem:[%s417 + $0xc8] sm:$0xf]
        %v5841 = vld [vmem:[%s417 + $0xcc] sm:$0xff]
        %v5842 = vld [vmem:[%s417 + $0xd4] sm:$0xf]
        %v5843 = vld [vmem:[%s417 + $0xd8] sm:$0xff]
        %v5844 = vld [vmem:[%s417 + $0xe0] sm:$0xf]
        %v5845 = vld [vmem:[%s417 + $0xe4] sm:$0xff]
        %v5846 = vld [vmem:[%s417 + $0xec] sm:$0xf]
        %v5847 = vld [vmem:[%s417 + $0xf0] sm:$0xff]
        %v5848 = vld [vmem:[%s417 + $0xf8] sm:$0xf]
        %v5849 = vld [vmem:[%s417 + $0xfc] sm:$0xff]
        %v5850 = vld [vmem:[%s417 + $0x104] sm:$0xf]
        %v5851 = vld [vmem:[%s417 + $0x108] sm:$0xff]
        %v5852 = vld [vmem:[%s417 + $0x110] sm:$0xf]
        %v5853 = vld [vmem:[%s417 + $0x114] sm:$0xff]
        %v5854 = vld [vmem:[%s417 + $0x11c] sm:$0xf]
        %v5855 = vld [vmem:[%s417 + $0x120] sm:$0xff]
        %v5856 = vld [vmem:[%s417 + $0x128] sm:$0xf]
        %v5857 = vld [vmem:[%s417 + $0x12c] sm:$0xff]
        %v5858 = vld [vmem:[%s417 + $0x134] sm:$0xf]
        %v5859 = vld [vmem:[%s417 + $0x138] sm:$0xff]
        %v5860 = vld [vmem:[%s417 + $0x140] sm:$0xf]
        %v5861 = vld [vmem:[%s417 + $0x144] sm:$0xff]
        %v5862 = vld [vmem:[%s417 + $0x14c] sm:$0xf]
        %v5863 = vld [vmem:[%s417 + $0x150] sm:$0xff]
        %v5864 = vld [vmem:[%s417 + $0x158] sm:$0xf]
        %v5865 = vld [vmem:[%s417 + $0x15c] sm:$0xff]
        %v5866 = vld [vmem:[%s417 + $0x164] sm:$0xf]
        %v5867 = vld [vmem:[%s417 + $0x168] sm:$0xff]
        %v5868 = vld [vmem:[%s417 + $0x170] sm:$0xf]
        %v5869 = vld [vmem:[%s417 + $0x174] sm:$0xff]
        %v5870 = vld [vmem:[%s417 + $0x17c] sm:$0xf]
        %s5871 = scalar_lea.vmem [#allocation8], 192
        %v5872 = vld [vmem:[%s5871] sm:$0xf]
        %v5873 = vld [vmem:[%s5871 + $0x4] sm:$0xf]
        %v5874 = vld [vmem:[%s5871 + $0x8] sm:$0xf]
        %v5875 = vld [vmem:[%s5871 + $0xc] sm:$0xf]
        %v5876 = vld [vmem:[%s5871 + $0x10] sm:$0xf]
        %v5877 = vld [vmem:[%s5871 + $0x14] sm:$0xf]
        %v5878 = vld [vmem:[%s5871 + $0x18] sm:$0xf]
        %v5879 = vld [vmem:[%s5871 + $0x1c] sm:$0xf]
        %v5880 = vld [vmem:[%s5871 + $0x20] sm:$0xf]
        %v5881 = vld [vmem:[%s5871 + $0x24] sm:$0xf]
        %v5882 = vld [vmem:[%s5871 + $0x28] sm:$0xf]
        %v5883 = vld [vmem:[%s5871 + $0x2c] sm:$0xf]
        %v5884 = vld [vmem:[%s5871 + $0x30] sm:$0xf]
        %v5885 = vld [vmem:[%s5871 + $0x34] sm:$0xf]
        %v5886 = vld [vmem:[%s5871 + $0x38] sm:$0xf]
        %v5887 = vld [vmem:[%s5871 + $0x3c] sm:$0xf]
        %v5888 = vld [vmem:[%s5871 + $0x40] sm:$0xf]
        %v5889 = vld [vmem:[%s5871 + $0x44] sm:$0xf]
        %v5890 = vld [vmem:[%s5871 + $0x48] sm:$0xf]
        %v5891 = vld [vmem:[%s5871 + $0x4c] sm:$0xf]
        %v5892 = vld [vmem:[%s5871 + $0x50] sm:$0xf]
        %v5893 = vld [vmem:[%s5871 + $0x54] sm:$0xf]
        %v5894 = vld [vmem:[%s5871 + $0x58] sm:$0xf]
        %v5895 = vld [vmem:[%s5871 + $0x5c] sm:$0xf]
        %v5896 = vld [vmem:[%s5871 + $0x60] sm:$0xf]
        %v5897 = vld [vmem:[%s5871 + $0x64] sm:$0xf]
        %v5898 = vld [vmem:[%s5871 + $0x68] sm:$0xf]
        %v5899 = vld [vmem:[%s5871 + $0x6c] sm:$0xf]
        %v5900 = vld [vmem:[%s5871 + $0x70] sm:$0xf]
        %v5901 = vld [vmem:[%s5871 + $0x74] sm:$0xf]
        %v5902 = vld [vmem:[%s5871 + $0x78] sm:$0xf]
        %v5903 = vld [vmem:[%s5871 + $0x7c] sm:$0xf]
        %v5904 = vld [vmem:[%s5871 + $0x80] sm:$0xf]
        %v5905 = vld [vmem:[%s5871 + $0x84] sm:$0xf]
        %v5906 = vld [vmem:[%s5871 + $0x88] sm:$0xf]
        %v5907 = vld [vmem:[%s5871 + $0x8c] sm:$0xf]
        %v5908 = vld [vmem:[%s5871 + $0x90] sm:$0xf]
        %v5909 = vld [vmem:[%s5871 + $0x94] sm:$0xf]
        %v5910 = vld [vmem:[%s5871 + $0x98] sm:$0xf]
        %v5911 = vld [vmem:[%s5871 + $0x9c] sm:$0xf]
        %v5912 = vld [vmem:[%s5871 + $0xa0] sm:$0xf]
        %v5913 = vld [vmem:[%s5871 + $0xa4] sm:$0xf]
        %v5914 = vld [vmem:[%s5871 + $0xa8] sm:$0xf]
        %v5915 = vld [vmem:[%s5871 + $0xac] sm:$0xf]
        %v5916 = vld [vmem:[%s5871 + $0xb0] sm:$0xf]
        %v5917 = vld [vmem:[%s5871 + $0xb4] sm:$0xf]
        %v5918 = vld [vmem:[%s5871 + $0xb8] sm:$0xf]
        %v5919 = vld [vmem:[%s5871 + $0xbc] sm:$0xf]
        %v5984 = vunpack.c.l.b16 %v5807
        %v5985 = vunpack.c.h.b16 %v5807
        %v5986 = vunpack.c.l.b16 %v5808
        %v5987 = vunpack.c.l.b16 %v5809
        %v5988 = vunpack.c.h.b16 %v5809
        %v5989 = vunpack.c.l.b16 %v5810
        %v5990 = vunpack.c.l.b16 %v5811
        %v5991 = vunpack.c.h.b16 %v5811
        %v5992 = vunpack.c.l.b16 %v5812
        %v5993 = vunpack.c.l.b16 %v5813
        %v5994 = vunpack.c.h.b16 %v5813
        %v5995 = vunpack.c.l.b16 %v5814
        %v5996 = vunpack.c.l.b16 %v5815
        %v5997 = vunpack.c.h.b16 %v5815
        %v5998 = vunpack.c.l.b16 %v5816
        %v5999 = vunpack.c.l.b16 %v5817
        %v6000 = vunpack.c.h.b16 %v5817
        %v6001 = vunpack.c.l.b16 %v5818
        %v6002 = vunpack.c.l.b16 %v5819
        %v6003 = vunpack.c.h.b16 %v5819
        %v6004 = vunpack.c.l.b16 %v5820
        %v6005 = vunpack.c.l.b16 %v5821
        %v6006 = vunpack.c.h.b16 %v5821
        %v6007 = vunpack.c.l.b16 %v5822
        %v6008 = vunpack.c.l.b16 %v5823
        %v6009 = vunpack.c.h.b16 %v5823
        %v6010 = vunpack.c.l.b16 %v5824
        %v6011 = vunpack.c.l.b16 %v5825
        %v6012 = vunpack.c.h.b16 %v5825
        %v6013 = vunpack.c.l.b16 %v5826
        %v6014 = vunpack.c.l.b16 %v5827
        %v6015 = vunpack.c.h.b16 %v5827
        %v6016 = vunpack.c.l.b16 %v5828
        %v6017 = vunpack.c.l.b16 %v5829
        %v6018 = vunpack.c.h.b16 %v5829
        %v6019 = vunpack.c.l.b16 %v5830
        %v6020 = vunpack.c.l.b16 %v5831
        %v6021 = vunpack.c.h.b16 %v5831
        %v6022 = vunpack.c.l.b16 %v5832
        %v6023 = vunpack.c.l.b16 %v5833
        %v6024 = vunpack.c.h.b16 %v5833
        %v6025 = vunpack.c.l.b16 %v5834
        %v6026 = vunpack.c.l.b16 %v5835
        %v6027 = vunpack.c.h.b16 %v5835
        %v6028 = vunpack.c.l.b16 %v5836
        %v6029 = vunpack.c.l.b16 %v5837
        %v6030 = vunpack.c.h.b16 %v5837
        %v6031 = vunpack.c.l.b16 %v5838
        %v6032 = vunpack.c.l.b16 %v5839
        %v6033 = vunpack.c.h.b16 %v5839
        %v6034 = vunpack.c.l.b16 %v5840
        %v6035 = vunpack.c.l.b16 %v5841
        %v6036 = vunpack.c.h.b16 %v5841
        %v6037 = vunpack.c.l.b16 %v5842
        %v6038 = vunpack.c.l.b16 %v5843
        %v6039 = vunpack.c.h.b16 %v5843
        %v6040 = vunpack.c.l.b16 %v5844
        %v6041 = vunpack.c.l.b16 %v5845
        %v6042 = vunpack.c.h.b16 %v5845
        %v6043 = vunpack.c.l.b16 %v5846
        %v6044 = vunpack.c.l.b16 %v5847
        %v6045 = vunpack.c.h.b16 %v5847
        %v6046 = vunpack.c.l.b16 %v5848
        %v6047 = vunpack.c.l.b16 %v5849
        %v6048 = vunpack.c.h.b16 %v5849
        %v6049 = vunpack.c.l.b16 %v5850
        %v6050 = vunpack.c.l.b16 %v5851
        %v6051 = vunpack.c.h.b16 %v5851
        %v6052 = vunpack.c.l.b16 %v5852
        %v6053 = vunpack.c.l.b16 %v5853
        %v6054 = vunpack.c.h.b16 %v5853
        %v6055 = vunpack.c.l.b16 %v5854
        %v6056 = vunpack.c.l.b16 %v5855
        %v6057 = vunpack.c.h.b16 %v5855
        %v6058 = vunpack.c.l.b16 %v5856
        %v6059 = vunpack.c.l.b16 %v5857
        %v6060 = vunpack.c.h.b16 %v5857
        %v6061 = vunpack.c.l.b16 %v5858
        %v6062 = vunpack.c.l.b16 %v5859
        %v6063 = vunpack.c.h.b16 %v5859
        %v6064 = vunpack.c.l.b16 %v5860
        %v6065 = vunpack.c.l.b16 %v5861
        %v6066 = vunpack.c.h.b16 %v5861
        %v6067 = vunpack.c.l.b16 %v5862
        %v6068 = vunpack.c.l.b16 %v5863
        %v6069 = vunpack.c.h.b16 %v5863
        %v6070 = vunpack.c.l.b16 %v5864
        %v6071 = vunpack.c.l.b16 %v5865
        %v6072 = vunpack.c.h.b16 %v5865
        %v6073 = vunpack.c.l.b16 %v5866
        %v6074 = vunpack.c.l.b16 %v5867
        %v6075 = vunpack.c.h.b16 %v5867
        %v6076 = vunpack.c.l.b16 %v5868
        %v6077 = vunpack.c.l.b16 %v5869
        %v6078 = vunpack.c.h.b16 %v5869
        %v6079 = vunpack.c.l.b16 %v5870
        %v6080 = vpack.c.b16 %v5987, %v5984
        %v6081 = vpack.c.b16 %v5988, %v5985
        %v6082 = vpack.c.b16 %v5989, %v5986
        %v6083 = vpack.c.b16 %v5993, %v5990
        %v6084 = vpack.c.b16 %v5994, %v5991
        %v6085 = vpack.c.b16 %v5995, %v5992
        %v6086 = vpack.c.b16 %v5999, %v5996
        %v6087 = vpack.c.b16 %v6000, %v5997
        %v6088 = vpack.c.b16 %v6001, %v5998
        %v6089 = vpack.c.b16 %v6005, %v6002
        %v6090 = vpack.c.b16 %v6006, %v6003
        %v6091 = vpack.c.b16 %v6007, %v6004
        %v6092 = vpack.c.b16 %v6011, %v6008
        %v6093 = vpack.c.b16 %v6012, %v6009
        %v6094 = vpack.c.b16 %v6013, %v6010
        %v6095 = vpack.c.b16 %v6017, %v6014
        %v6096 = vpack.c.b16 %v6018, %v6015
        %v6097 = vpack.c.b16 %v6019, %v6016
        %v6098 = vpack.c.b16 %v6023, %v6020
        %v6099 = vpack.c.b16 %v6024, %v6021
        %v6100 = vpack.c.b16 %v6025, %v6022
        %v6101 = vpack.c.b16 %v6029, %v6026
        %v6102 = vpack.c.b16 %v6030, %v6027
        %v6103 = vpack.c.b16 %v6031, %v6028
        %v6104 = vpack.c.b16 %v6035, %v6032
        %v6105 = vpack.c.b16 %v6036, %v6033
        %v6106 = vpack.c.b16 %v6037, %v6034
        %v6107 = vpack.c.b16 %v6041, %v6038
        %v6108 = vpack.c.b16 %v6042, %v6039
        %v6109 = vpack.c.b16 %v6043, %v6040
        %v6110 = vpack.c.b16 %v6047, %v6044
        %v6111 = vpack.c.b16 %v6048, %v6045
        %v6112 = vpack.c.b16 %v6049, %v6046
        %v6113 = vpack.c.b16 %v6053, %v6050
        %v6114 = vpack.c.b16 %v6054, %v6051
        %v6115 = vpack.c.b16 %v6055, %v6052
        %v6116 = vpack.c.b16 %v6059, %v6056
        %v6117 = vpack.c.b16 %v6060, %v6057
        %v6118 = vpack.c.b16 %v6061, %v6058
        %v6119 = vpack.c.b16 %v6065, %v6062
        %v6120 = vpack.c.b16 %v6066, %v6063
        %v6121 = vpack.c.b16 %v6067, %v6064
        %v6122 = vpack.c.b16 %v6071, %v6068
        %v6123 = vpack.c.b16 %v6072, %v6069
        %v6124 = vpack.c.b16 %v6073, %v6070
        %v6125 = vpack.c.b16 %v6077, %v6074
        %v6126 = vpack.c.b16 %v6078, %v6075
        %v6127 = vpack.c.b16 %v6079, %v6076
        %v6224 = vunpack.c.l.b16 %v5872
        %v6225 = vunpack.c.l.b16 %v5873
        %v6226 = vunpack.c.l.b16 %v5874
        %v6227 = vunpack.c.l.b16 %v5875
        %v6228 = vunpack.c.l.b16 %v5876
        %v6229 = vunpack.c.l.b16 %v5877
        %v6230 = vunpack.c.l.b16 %v5878
        %v6231 = vunpack.c.l.b16 %v5879
        %v6232 = vunpack.c.l.b16 %v5880
        %v6233 = vunpack.c.l.b16 %v5881
        %v6234 = vunpack.c.l.b16 %v5882
        %v6235 = vunpack.c.l.b16 %v5883
        %v6236 = vunpack.c.l.b16 %v5884
        %v6237 = vunpack.c.l.b16 %v5885
        %v6238 = vunpack.c.l.b16 %v5886
        %v6239 = vunpack.c.l.b16 %v5887
        %v6240 = vunpack.c.l.b16 %v5888
        %v6241 = vunpack.c.l.b16 %v5889
        %v6242 = vunpack.c.l.b16 %v5890
        %v6243 = vunpack.c.l.b16 %v5891
        %v6244 = vunpack.c.l.b16 %v5892
        %v6245 = vunpack.c.l.b16 %v5893
        %v6246 = vunpack.c.l.b16 %v5894
        %v6247 = vunpack.c.l.b16 %v5895
        %v6248 = vunpack.c.l.b16 %v5896
        %v6249 = vunpack.c.l.b16 %v5897
        %v6250 = vunpack.c.l.b16 %v5898
        %v6251 = vunpack.c.l.b16 %v5899
        %v6252 = vunpack.c.l.b16 %v5900
        %v6253 = vunpack.c.l.b16 %v5901
        %v6254 = vunpack.c.l.b16 %v5902
        %v6255 = vunpack.c.l.b16 %v5903
        %v6256 = vunpack.c.l.b16 %v5904
        %v6257 = vunpack.c.l.b16 %v5905
        %v6258 = vunpack.c.l.b16 %v5906
        %v6259 = vunpack.c.l.b16 %v5907
        %v6260 = vunpack.c.l.b16 %v5908
        %v6261 = vunpack.c.l.b16 %v5909
        %v6262 = vunpack.c.l.b16 %v5910
        %v6263 = vunpack.c.l.b16 %v5911
        %v6264 = vunpack.c.l.b16 %v5912
        %v6265 = vunpack.c.l.b16 %v5913
        %v6266 = vunpack.c.l.b16 %v5914
        %v6267 = vunpack.c.l.b16 %v5915
        %v6268 = vunpack.c.l.b16 %v5916
        %v6269 = vunpack.c.l.b16 %v5917
        %v6270 = vunpack.c.l.b16 %v5918
        %v6271 = vunpack.c.l.b16 %v5919
        %v6272 = vpack.c.b16 %v6225, %v6224
        %v6273 = vpack.c.b16 %v6227, %v6226
        %v6274 = vpack.c.b16 %v6229, %v6228
        %v6275 = vpack.c.b16 %v6231, %v6230
        %v6276 = vpack.c.b16 %v6233, %v6232
        %v6277 = vpack.c.b16 %v6235, %v6234
        %v6278 = vpack.c.b16 %v6237, %v6236
        %v6279 = vpack.c.b16 %v6239, %v6238
        %v6280 = vpack.c.b16 %v6241, %v6240
        %v6281 = vpack.c.b16 %v6243, %v6242
        %v6282 = vpack.c.b16 %v6245, %v6244
        %v6283 = vpack.c.b16 %v6247, %v6246
        %v6284 = vpack.c.b16 %v6249, %v6248
        %v6285 = vpack.c.b16 %v6251, %v6250
        %v6286 = vpack.c.b16 %v6253, %v6252
        %v6287 = vpack.c.b16 %v6255, %v6254
        %v6288 = vpack.c.b16 %v6257, %v6256
        %v6289 = vpack.c.b16 %v6259, %v6258
        %v6290 = vpack.c.b16 %v6261, %v6260
        %v6291 = vpack.c.b16 %v6263, %v6262
        %v6292 = vpack.c.b16 %v6265, %v6264
        %v6293 = vpack.c.b16 %v6267, %v6266
        %v6294 = vpack.c.b16 %v6269, %v6268
        %v6295 = vpack.c.b16 %v6271, %v6270
        %6320 = vmatprep.subr.bf16.mxu0 0
        %6321 = vmatpush1.bf16.msra.mxu0 %v6279
        %6322 = vmatprep.subr.bf16.mxu0 0
        %6323 = vmatpush1.bf16.msra.mxu0 %v6278
        %6324 = vmatprep.subr.bf16.mxu0 0
        %6325 = vmatpush1.bf16.msra.mxu0 %v6277
        %6326 = vmatprep.subr.bf16.mxu0 0
        %6327 = vmatpush1.bf16.msra.mxu0 %v6276
        %6328 = vmatprep.subr.bf16.mxu0 0
        %6329 = vmatpush1.bf16.msra.mxu0 %v6275
        %6330 = vmatprep.subr.bf16.mxu0 0
        %6331 = vmatpush1.bf16.msra.mxu0 %v6274
        %6332 = vmatprep.subr.bf16.mxu0 0
        %6333 = vmatpush1.bf16.msra.mxu0 %v6273
        %6334 = vmatprep.subr.bf16.mxu0 0
        %6335 = vmatpush1.bf16.msra.mxu0 %v6272
        %6336 = vmatprep.subr.bf16.mxu0 0
        %6337 = vmatpush2.bf16.msra.mxu0 %v6287
        %6338 = vmatprep.subr.bf16.mxu0 0
        %6339 = vmatpush2.bf16.msra.mxu0 %v6286
        %6340 = vmatprep.subr.bf16.mxu0 0
        %6341 = vmatpush2.bf16.msra.mxu0 %v6285
        %6342 = vmatprep.subr.bf16.mxu0 0
        %6343 = vmatpush2.bf16.msra.mxu0 %v6284
        %6344 = vmatprep.subr.bf16.mxu0 0
        %6345 = vmatpush2.bf16.msra.mxu0 %v6283
        %6346 = vmatprep.subr.bf16.mxu0 0
        %6347 = vmatpush2.bf16.msra.mxu0 %v6282
        %6348 = vmatprep.subr.bf16.mxu0 0
        %6349 = vmatpush2.bf16.msra.mxu0 %v6281
        %6350 = vmatprep.subr.bf16.mxu0 0
        %6351 = vmatpush2.bf16.msra.mxu0 %v6280
        %6352 = vmatprep.mubr.bf16.mxu0 %v6081
        %6353 = vmatmul.mubr.bf16.gmra.mxu0 %v6080
        %v6354 = vpop.f32.mrf.mxu0
        %v6355 = vadd.f32 0.0, %v6354
        %v6356 = vpop.f32.mrf.mxu0
        %v6357 = vpop.f32.mrf.mxu0
        %v6358 = vadd.f32 0.0, %v6357
        %v6359 = vpop.f32.mrf.mxu0
        %6360 = vmatprep.mubr.bf16.mxu0 %v6084
        %6361 = vmatmul.mubr.bf16.gmra.mxu0 %v6083
        %v6362 = vpop.f32.mrf.mxu0
        %v6363 = vadd.f32 0.0, %v6362
        %v6364 = vpop.f32.mrf.mxu0
        %v6365 = vpop.f32.mrf.mxu0
        %v6366 = vadd.f32 0.0, %v6365
        %v6367 = vpop.f32.mrf.mxu0
        %6368 = vmatprep.mubr.bf16.mxu0 %v6087
        %6369 = vmatmul.mubr.bf16.gmra.mxu0 %v6086
        %v6370 = vpop.f32.mrf.mxu0
        %v6371 = vadd.f32 0.0, %v6370
        %v6372 = vpop.f32.mrf.mxu0
        %v6373 = vpop.f32.mrf.mxu0
        %v6374 = vadd.f32 0.0, %v6373
        %v6375 = vpop.f32.mrf.mxu0
        %6376 = vmatprep.mubr.bf16.mxu0 %v6090
        %6377 = vmatmul.mubr.bf16.gmra.mxu0 %v6089
        %v6378 = vpop.f32.mrf.mxu0
        %v6379 = vadd.f32 0.0, %v6378
        %v6380 = vpop.f32.mrf.mxu0
        %v6381 = vpop.f32.mrf.mxu0
        %v6382 = vadd.f32 0.0, %v6381
        %v6383 = vpop.f32.mrf.mxu0
        %6384 = vmatprep.mubr.bf16.mxu0 %v6093
        %6385 = vmatmul.mubr.bf16.gmra.mxu0 %v6092
        %v6386 = vpop.f32.mrf.mxu0
        %v6387 = vadd.f32 0.0, %v6386
        %v6388 = vpop.f32.mrf.mxu0
        %v6389 = vpop.f32.mrf.mxu0
        %v6390 = vadd.f32 0.0, %v6389
        %v6391 = vpop.f32.mrf.mxu0
        %6392 = vmatprep.mubr.bf16.mxu0 %v6096
        %6393 = vmatmul.mubr.bf16.gmra.mxu0 %v6095
        %v6394 = vpop.f32.mrf.mxu0
        %v6395 = vadd.f32 0.0, %v6394
        %v6396 = vpop.f32.mrf.mxu0
        %v6397 = vpop.f32.mrf.mxu0
        %v6398 = vadd.f32 0.0, %v6397
        %v6399 = vpop.f32.mrf.mxu0
        %6400 = vmatprep.mubr.bf16.mxu0 %v6099
        %6401 = vmatmul.mubr.bf16.gmra.mxu0 %v6098
        %v6402 = vpop.f32.mrf.mxu0
        %v6403 = vadd.f32 0.0, %v6402
        %v6404 = vpop.f32.mrf.mxu0
        %v6405 = vpop.f32.mrf.mxu0
        %v6406 = vadd.f32 0.0, %v6405
        %v6407 = vpop.f32.mrf.mxu0
        %6408 = vmatprep.mubr.bf16.mxu0 %v6102
        %6409 = vmatmul.mubr.bf16.gmra.mxu0 %v6101
        %v6410 = vpop.f32.mrf.mxu0
        %v6411 = vadd.f32 0.0, %v6410
        %v6412 = vpop.f32.mrf.mxu0
        %v6413 = vpop.f32.mrf.mxu0
        %v6414 = vadd.f32 0.0, %v6413
        %v6415 = vpop.f32.mrf.mxu0
        %6416 = vmatprep.mubr.bf16.mxu0 %v6105
        %6417 = vmatmul.mubr.bf16.gmra.mxu0 %v6104
        %v6418 = vpop.f32.mrf.mxu0
        %v6419 = vadd.f32 0.0, %v6418
        %v6420 = vpop.f32.mrf.mxu0
        %v6421 = vpop.f32.mrf.mxu0
        %v6422 = vadd.f32 0.0, %v6421
        %v6423 = vpop.f32.mrf.mxu0
        %6424 = vmatprep.mubr.bf16.mxu0 %v6108
        %6425 = vmatmul.mubr.bf16.gmra.mxu0 %v6107
        %v6426 = vpop.f32.mrf.mxu0
        %v6427 = vadd.f32 0.0, %v6426
        %v6428 = vpop.f32.mrf.mxu0
        %v6429 = vpop.f32.mrf.mxu0
        %v6430 = vadd.f32 0.0, %v6429
        %v6431 = vpop.f32.mrf.mxu0
        %6432 = vmatprep.mubr.bf16.mxu0 %v6111
        %6433 = vmatmul.mubr.bf16.gmra.mxu0 %v6110
        %v6434 = vpop.f32.mrf.mxu0
        %v6435 = vadd.f32 0.0, %v6434
        %v6436 = vpop.f32.mrf.mxu0
        %v6437 = vpop.f32.mrf.mxu0
        %v6438 = vadd.f32 0.0, %v6437
        %v6439 = vpop.f32.mrf.mxu0
        %6440 = vmatprep.mubr.bf16.mxu0 %v6114
        %6441 = vmatmul.mubr.bf16.gmra.mxu0 %v6113
        %v6442 = vpop.f32.mrf.mxu0
        %v6443 = vadd.f32 0.0, %v6442
        %v6444 = vpop.f32.mrf.mxu0
        %v6445 = vpop.f32.mrf.mxu0
        %v6446 = vadd.f32 0.0, %v6445
        %v6447 = vpop.f32.mrf.mxu0
        %6448 = vmatprep.mubr.bf16.mxu0 %v6117
        %6449 = vmatmul.mubr.bf16.gmra.mxu0 %v6116
        %v6450 = vpop.f32.mrf.mxu0
        %v6451 = vadd.f32 0.0, %v6450
        %v6452 = vpop.f32.mrf.mxu0
        %v6453 = vpop.f32.mrf.mxu0
        %v6454 = vadd.f32 0.0, %v6453
        %v6455 = vpop.f32.mrf.mxu0
        %6456 = vmatprep.mubr.bf16.mxu0 %v6120
        %6457 = vmatmul.mubr.bf16.gmra.mxu0 %v6119
        %v6458 = vpop.f32.mrf.mxu0
        %v6459 = vadd.f32 0.0, %v6458
        %v6460 = vpop.f32.mrf.mxu0
        %v6461 = vpop.f32.mrf.mxu0
        %v6462 = vadd.f32 0.0, %v6461
        %v6463 = vpop.f32.mrf.mxu0
        %6464 = vmatprep.mubr.bf16.mxu0 %v6123
        %6465 = vmatmul.mubr.bf16.gmra.mxu0 %v6122
        %v6466 = vpop.f32.mrf.mxu0
        %v6467 = vadd.f32 0.0, %v6466
        %v6468 = vpop.f32.mrf.mxu0
        %v6469 = vpop.f32.mrf.mxu0
        %v6470 = vadd.f32 0.0, %v6469
        %v6471 = vpop.f32.mrf.mxu0
        %6472 = vmatprep.mubr.bf16.mxu0 %v6126
        %6473 = vmatmul.mubr.bf16.gmra.mxu0 %v6125
        %v6474 = vpop.f32.mrf.mxu0
        %v6475 = vadd.f32 0.0, %v6474
        %v6476 = vpop.f32.mrf.mxu0
        %v6477 = vpop.f32.mrf.mxu0
        %v6478 = vadd.f32 0.0, %v6477
        %v6479 = vpop.f32.mrf.mxu0
        %6480 = vdwg.mxu0
        %6481 = vmatprep.subr.bf16.mxu0 0
        %6482 = vmatpush1.bf16.msra.mxu0 %v6295
        %6483 = vmatprep.subr.bf16.mxu0 0
        %6484 = vmatpush1.bf16.msra.mxu0 %v6294
        %6485 = vmatprep.subr.bf16.mxu0 0
        %6486 = vmatpush1.bf16.msra.mxu0 %v6293
        %6487 = vmatprep.subr.bf16.mxu0 0
        %6488 = vmatpush1.bf16.msra.mxu0 %v6292
        %6489 = vmatprep.subr.bf16.mxu0 0
        %6490 = vmatpush1.bf16.msra.mxu0 %v6291
        %6491 = vmatprep.subr.bf16.mxu0 0
        %6492 = vmatpush1.bf16.msra.mxu0 %v6290
        %6493 = vmatprep.subr.bf16.mxu0 0
        %6494 = vmatpush1.bf16.msra.mxu0 %v6289
        %6495 = vmatprep.subr.bf16.mxu0 0
        %6496 = vmatpush1.bf16.msra.mxu0 %v6288
        %6497 = vmatprep.subr.bf16.mxu0 0
        %6498 = vmatpush2.bf16.msra.mxu0 0
        %6499 = vmatprep.subr.bf16.mxu0 0
        %6500 = vmatpush2.bf16.msra.mxu0 0
        %6501 = vmatprep.subr.bf16.mxu0 0
        %6502 = vmatpush2.bf16.msra.mxu0 0
        %6503 = vmatprep.subr.bf16.mxu0 0
        %6504 = vmatpush2.bf16.msra.mxu0 0
        %6505 = vmatprep.subr.bf16.mxu0 0
        %6506 = vmatpush2.bf16.msra.mxu0 0
        %6507 = vmatprep.subr.bf16.mxu0 0
        %6508 = vmatpush2.bf16.msra.mxu0 0
        %6509 = vmatprep.subr.bf16.mxu0 0
        %6510 = vmatpush2.bf16.msra.mxu0 0
        %6511 = vmatprep.subr.bf16.mxu0 0
        %6512 = vmatpush2.bf16.msra.mxu0 0
        %6513 = vmatprep.mubr.bf16.mxu0 0
        %6514 = vmatmul.mubr.bf16.gmra.mxu0 %v6082
        %v6515 = vpop.f32.mrf.mxu0
        %v6516 = vadd.f32 %v6355, %v6515
        %v6517 = vpop.f32.mrf.mxu0
        %v6518 = vpop.f32.mrf.mxu0
        %v6519 = vadd.f32 %v6358, %v6518
        %v6520 = vpop.f32.mrf.mxu0
        %6521 = vmatprep.mubr.bf16.mxu0 0
        %6522 = vmatmul.mubr.bf16.gmra.mxu0 %v6085
        %v6523 = vpop.f32.mrf.mxu0
        %v6524 = vadd.f32 %v6363, %v6523
        %v6525 = vpop.f32.mrf.mxu0
        %v6526 = vpop.f32.mrf.mxu0
        %v6527 = vadd.f32 %v6366, %v6526
        %v6528 = vpop.f32.mrf.mxu0
        %6529 = vmatprep.mubr.bf16.mxu0 0
        %6530 = vmatmul.mubr.bf16.gmra.mxu0 %v6088
        %v6531 = vpop.f32.mrf.mxu0
        %v6532 = vadd.f32 %v6371, %v6531
        %v6533 = vpop.f32.mrf.mxu0
        %v6534 = vpop.f32.mrf.mxu0
        %v6535 = vadd.f32 %v6374, %v6534
        %v6536 = vpop.f32.mrf.mxu0
        %6537 = vmatprep.mubr.bf16.mxu0 0
        %6538 = vmatmul.mubr.bf16.gmra.mxu0 %v6091
        %v6539 = vpop.f32.mrf.mxu0
        %v6540 = vadd.f32 %v6379, %v6539
        %v6541 = vpop.f32.mrf.mxu0
        %v6542 = vpop.f32.mrf.mxu0
        %v6543 = vadd.f32 %v6382, %v6542
        %v6544 = vpop.f32.mrf.mxu0
        %6545 = vmatprep.mubr.bf16.mxu0 0
        %6546 = vmatmul.mubr.bf16.gmra.mxu0 %v6094
        %v6547 = vpop.f32.mrf.mxu0
        %v6548 = vadd.f32 %v6387, %v6547
        %v6549 = vpop.f32.mrf.mxu0
        %v6550 = vpop.f32.mrf.mxu0
        %v6551 = vadd.f32 %v6390, %v6550
        %v6552 = vpop.f32.mrf.mxu0
        %6553 = vmatprep.mubr.bf16.mxu0 0
        %6554 = vmatmul.mubr.bf16.gmra.mxu0 %v6097
        %v6555 = vpop.f32.mrf.mxu0
        %v6556 = vadd.f32 %v6395, %v6555
        %v6557 = vpop.f32.mrf.mxu0
        %v6558 = vpop.f32.mrf.mxu0
        %v6559 = vadd.f32 %v6398, %v6558
        %v6560 = vpop.f32.mrf.mxu0
        %6561 = vmatprep.mubr.bf16.mxu0 0
        %6562 = vmatmul.mubr.bf16.gmra.mxu0 %v6100
        %v6563 = vpop.f32.mrf.mxu0
        %v6564 = vadd.f32 %v6403, %v6563
        %v6565 = vpop.f32.mrf.mxu0
        %v6566 = vpop.f32.mrf.mxu0
        %v6567 = vadd.f32 %v6406, %v6566
        %v6568 = vpop.f32.mrf.mxu0
        %6569 = vmatprep.mubr.bf16.mxu0 0
        %6570 = vmatmul.mubr.bf16.gmra.mxu0 %v6103
        %v6571 = vpop.f32.mrf.mxu0
        %v6572 = vadd.f32 %v6411, %v6571
        %v6573 = vpop.f32.mrf.mxu0
        %v6574 = vpop.f32.mrf.mxu0
        %v6575 = vadd.f32 %v6414, %v6574
        %v6576 = vpop.f32.mrf.mxu0
        %6577 = vmatprep.mubr.bf16.mxu0 0
        %6578 = vmatmul.mubr.bf16.gmra.mxu0 %v6106
        %v6579 = vpop.f32.mrf.mxu0
        %v6580 = vadd.f32 %v6419, %v6579
        %v6581 = vpop.f32.mrf.mxu0
        %v6582 = vpop.f32.mrf.mxu0
        %v6583 = vadd.f32 %v6422, %v6582
        %v6584 = vpop.f32.mrf.mxu0
        %6585 = vmatprep.mubr.bf16.mxu0 0
        %6586 = vmatmul.mubr.bf16.gmra.mxu0 %v6109
        %v6587 = vpop.f32.mrf.mxu0
        %v6588 = vadd.f32 %v6427, %v6587
        %v6589 = vpop.f32.mrf.mxu0
        %v6590 = vpop.f32.mrf.mxu0
        %v6591 = vadd.f32 %v6430, %v6590
        %v6592 = vpop.f32.mrf.mxu0
        %6593 = vmatprep.mubr.bf16.mxu0 0
        %6594 = vmatmul.mubr.bf16.gmra.mxu0 %v6112
        %v6595 = vpop.f32.mrf.mxu0
        %v6596 = vadd.f32 %v6435, %v6595
        %v6597 = vpop.f32.mrf.mxu0
        %v6598 = vpop.f32.mrf.mxu0
        %v6599 = vadd.f32 %v6438, %v6598
        %v6600 = vpop.f32.mrf.mxu0
        %6601 = vmatprep.mubr.bf16.mxu0 0
        %6602 = vmatmul.mubr.bf16.gmra.mxu0 %v6115
        %v6603 = vpop.f32.mrf.mxu0
        %v6604 = vadd.f32 %v6443, %v6603
        %v6605 = vpop.f32.mrf.mxu0
        %v6606 = vpop.f32.mrf.mxu0
        %v6607 = vadd.f32 %v6446, %v6606
        %v6608 = vpop.f32.mrf.mxu0
        %6609 = vmatprep.mubr.bf16.mxu0 0
        %6610 = vmatmul.mubr.bf16.gmra.mxu0 %v6118
        %v6611 = vpop.f32.mrf.mxu0
        %v6612 = vadd.f32 %v6451, %v6611
        %v6613 = vpop.f32.mrf.mxu0
        %v6614 = vpop.f32.mrf.mxu0
        %v6615 = vadd.f32 %v6454, %v6614
        %v6616 = vpop.f32.mrf.mxu0
        %6617 = vmatprep.mubr.bf16.mxu0 0
        %6618 = vmatmul.mubr.bf16.gmra.mxu0 %v6121
        %v6619 = vpop.f32.mrf.mxu0
        %v6620 = vadd.f32 %v6459, %v6619
        %v6621 = vpop.f32.mrf.mxu0
        %v6622 = vpop.f32.mrf.mxu0
        %v6623 = vadd.f32 %v6462, %v6622
        %v6624 = vpop.f32.mrf.mxu0
        %6625 = vmatprep.mubr.bf16.mxu0 0
        %6626 = vmatmul.mubr.bf16.gmra.mxu0 %v6124
        %v6627 = vpop.f32.mrf.mxu0
        %v6628 = vadd.f32 %v6467, %v6627
        %v6629 = vpop.f32.mrf.mxu0
        %v6630 = vpop.f32.mrf.mxu0
        %v6631 = vadd.f32 %v6470, %v6630
        %v6632 = vpop.f32.mrf.mxu0
        %6633 = vmatprep.mubr.bf16.mxu0 0
        %6634 = vmatmul.mubr.bf16.gmra.mxu0 %v6127
        %v6635 = vpop.f32.mrf.mxu0
        %v6636 = vadd.f32 %v6475, %v6635
        %v6637 = vpop.f32.mrf.mxu0
        %v6638 = vpop.f32.mrf.mxu0
        %v6639 = vadd.f32 %v6478, %v6638
        %v6640 = vpop.f32.mrf.mxu0
        %6641 = vdwg.mxu0
        %v6706 = vunpack.c.l.b16 %v5695
        %v6707 = vunpack.c.h.b16 %v5695
        %v6708 = vunpack.c.l.b16 %v5696
        %v6709 = vunpack.c.l.b16 %v5697
        %v6710 = vunpack.c.h.b16 %v5697
        %v6711 = vunpack.c.l.b16 %v5698
        %v6712 = vunpack.c.l.b16 %v5699
        %v6713 = vunpack.c.h.b16 %v5699
        %v6714 = vunpack.c.l.b16 %v5700
        %v6715 = vunpack.c.l.b16 %v5701
        %v6716 = vunpack.c.h.b16 %v5701
        %v6717 = vunpack.c.l.b16 %v5702
        %v6718 = vunpack.c.l.b16 %v5703
        %v6719 = vunpack.c.h.b16 %v5703
        %v6720 = vunpack.c.l.b16 %v5704
        %v6721 = vunpack.c.l.b16 %v5705
        %v6722 = vunpack.c.h.b16 %v5705
        %v6723 = vunpack.c.l.b16 %v5706
        %v6724 = vunpack.c.l.b16 %v5707
        %v6725 = vunpack.c.h.b16 %v5707
        %v6726 = vunpack.c.l.b16 %v5708
        %v6727 = vunpack.c.l.b16 %v5709
        %v6728 = vunpack.c.h.b16 %v5709
        %v6729 = vunpack.c.l.b16 %v5710
        %v6730 = vunpack.c.l.b16 %v5711
        %v6731 = vunpack.c.h.b16 %v5711
        %v6732 = vunpack.c.l.b16 %v5712
        %v6733 = vunpack.c.l.b16 %v5713
        %v6734 = vunpack.c.h.b16 %v5713
        %v6735 = vunpack.c.l.b16 %v5714
        %v6736 = vunpack.c.l.b16 %v5715
        %v6737 = vunpack.c.h.b16 %v5715
        %v6738 = vunpack.c.l.b16 %v5716
        %v6739 = vunpack.c.l.b16 %v5717
        %v6740 = vunpack.c.h.b16 %v5717
        %v6741 = vunpack.c.l.b16 %v5718
        %v6742 = vunpack.c.l.b16 %v5719
        %v6743 = vunpack.c.h.b16 %v5719
        %v6744 = vunpack.c.l.b16 %v5720
        %v6745 = vunpack.c.l.b16 %v5721
        %v6746 = vunpack.c.h.b16 %v5721
        %v6747 = vunpack.c.l.b16 %v5722
        %v6748 = vunpack.c.l.b16 %v5723
        %v6749 = vunpack.c.h.b16 %v5723
        %v6750 = vunpack.c.l.b16 %v5724
        %v6751 = vunpack.c.l.b16 %v5725
        %v6752 = vunpack.c.h.b16 %v5725
        %v6753 = vunpack.c.l.b16 %v5726
        %v6754 = vunpack.c.l.b16 %v5727
        %v6755 = vunpack.c.h.b16 %v5727
        %v6756 = vunpack.c.l.b16 %v5728
        %v6757 = vunpack.c.l.b16 %v5729
        %v6758 = vunpack.c.h.b16 %v5729
        %v6759 = vunpack.c.l.b16 %v5730
        %v6760 = vunpack.c.l.b16 %v5731
        %v6761 = vunpack.c.h.b16 %v5731
        %v6762 = vunpack.c.l.b16 %v5732
        %v6763 = vunpack.c.l.b16 %v5733
        %v6764 = vunpack.c.h.b16 %v5733
        %v6765 = vunpack.c.l.b16 %v5734
        %v6766 = vunpack.c.l.b16 %v5735
        %v6767 = vunpack.c.h.b16 %v5735
        %v6768 = vunpack.c.l.b16 %v5736
        %v6769 = vunpack.c.l.b16 %v5737
        %v6770 = vunpack.c.h.b16 %v5737
        %v6771 = vunpack.c.l.b16 %v5738
        %v6772 = vunpack.c.l.b16 %v5739
        %v6773 = vunpack.c.h.b16 %v5739
        %v6774 = vunpack.c.l.b16 %v5740
        %v6775 = vunpack.c.l.b16 %v5741
        %v6776 = vunpack.c.h.b16 %v5741
        %v6777 = vunpack.c.l.b16 %v5742
        %v6778 = vunpack.c.l.b16 %v5743
        %v6779 = vunpack.c.h.b16 %v5743
        %v6780 = vunpack.c.l.b16 %v5744
        %v6781 = vunpack.c.l.b16 %v5745
        %v6782 = vunpack.c.h.b16 %v5745
        %v6783 = vunpack.c.l.b16 %v5746
        %v6784 = vunpack.c.l.b16 %v5747
        %v6785 = vunpack.c.h.b16 %v5747
        %v6786 = vunpack.c.l.b16 %v5748
        %v6787 = vunpack.c.l.b16 %v5749
        %v6788 = vunpack.c.h.b16 %v5749
        %v6789 = vunpack.c.l.b16 %v5750
        %v6790 = vunpack.c.l.b16 %v5751
        %v6791 = vunpack.c.h.b16 %v5751
        %v6792 = vunpack.c.l.b16 %v5752
        %v6793 = vunpack.c.l.b16 %v5753
        %v6794 = vunpack.c.h.b16 %v5753
        %v6795 = vunpack.c.l.b16 %v5754
        %v6796 = vunpack.c.l.b16 %v5755
        %v6797 = vunpack.c.h.b16 %v5755
        %v6798 = vunpack.c.l.b16 %v5756
        %v6799 = vunpack.c.l.b16 %v5757
        %v6800 = vunpack.c.h.b16 %v5757
        %v6801 = vunpack.c.l.b16 %v5758
        %v6802 = vpack.c.b16 %v6709, %v6706
        %v6803 = vpack.c.b16 %v6710, %v6707
        %v6804 = vpack.c.b16 %v6711, %v6708
        %v6805 = vpack.c.b16 %v6715, %v6712
        %v6806 = vpack.c.b16 %v6716, %v6713
        %v6807 = vpack.c.b16 %v6717, %v6714
        %v6808 = vpack.c.b16 %v6721, %v6718
        %v6809 = vpack.c.b16 %v6722, %v6719
        %v6810 = vpack.c.b16 %v6723, %v6720
        %v6811 = vpack.c.b16 %v6727, %v6724
        %v6812 = vpack.c.b16 %v6728, %v6725
        %v6813 = vpack.c.b16 %v6729, %v6726
        %v6814 = vpack.c.b16 %v6733, %v6730
        %v6815 = vpack.c.b16 %v6734, %v6731
        %v6816 = vpack.c.b16 %v6735, %v6732
        %v6817 = vpack.c.b16 %v6739, %v6736
        %v6818 = vpack.c.b16 %v6740, %v6737
        %v6819 = vpack.c.b16 %v6741, %v6738
        %v6820 = vpack.c.b16 %v6745, %v6742
        %v6821 = vpack.c.b16 %v6746, %v6743
        %v6822 = vpack.c.b16 %v6747, %v6744
        %v6823 = vpack.c.b16 %v6751, %v6748
        %v6824 = vpack.c.b16 %v6752, %v6749
        %v6825 = vpack.c.b16 %v6753, %v6750
        %v6826 = vpack.c.b16 %v6757, %v6754
        %v6827 = vpack.c.b16 %v6758, %v6755
        %v6828 = vpack.c.b16 %v6759, %v6756
        %v6829 = vpack.c.b16 %v6763, %v6760
        %v6830 = vpack.c.b16 %v6764, %v6761
        %v6831 = vpack.c.b16 %v6765, %v6762
        %v6832 = vpack.c.b16 %v6769, %v6766
        %v6833 = vpack.c.b16 %v6770, %v6767
        %v6834 = vpack.c.b16 %v6771, %v6768
        %v6835 = vpack.c.b16 %v6775, %v6772
        %v6836 = vpack.c.b16 %v6776, %v6773
        %v6837 = vpack.c.b16 %v6777, %v6774
        %v6838 = vpack.c.b16 %v6781, %v6778
        %v6839 = vpack.c.b16 %v6782, %v6779
        %v6840 = vpack.c.b16 %v6783, %v6780
        %v6841 = vpack.c.b16 %v6787, %v6784
        %v6842 = vpack.c.b16 %v6788, %v6785
        %v6843 = vpack.c.b16 %v6789, %v6786
        %v6844 = vpack.c.b16 %v6793, %v6790
        %v6845 = vpack.c.b16 %v6794, %v6791
        %v6846 = vpack.c.b16 %v6795, %v6792
        %v6847 = vpack.c.b16 %v6799, %v6796
        %v6848 = vpack.c.b16 %v6800, %v6797
        %v6849 = vpack.c.b16 %v6801, %v6798
        %v6946 = vunpack.c.l.b16 %v5759
        %v6947 = vunpack.c.l.b16 %v5760
        %v6948 = vunpack.c.l.b16 %v5761
        %v6949 = vunpack.c.l.b16 %v5762
        %v6950 = vunpack.c.l.b16 %v5763
        %v6951 = vunpack.c.l.b16 %v5764
        %v6952 = vunpack.c.l.b16 %v5765
        %v6953 = vunpack.c.l.b16 %v5766
        %v6954 = vunpack.c.l.b16 %v5767
        %v6955 = vunpack.c.l.b16 %v5768
        %v6956 = vunpack.c.l.b16 %v5769
        %v6957 = vunpack.c.l.b16 %v5770
        %v6958 = vunpack.c.l.b16 %v5771
        %v6959 = vunpack.c.l.b16 %v5772
        %v6960 = vunpack.c.l.b16 %v5773
        %v6961 = vunpack.c.l.b16 %v5774
        %v6962 = vunpack.c.l.b16 %v5775
        %v6963 = vunpack.c.l.b16 %v5776
        %v6964 = vunpack.c.l.b16 %v5777
        %v6965 = vunpack.c.l.b16 %v5778
        %v6966 = vunpack.c.l.b16 %v5779
        %v6967 = vunpack.c.l.b16 %v5780
        %v6968 = vunpack.c.l.b16 %v5781
        %v6969 = vunpack.c.l.b16 %v5782
        %v6970 = vunpack.c.l.b16 %v5783
        %v6971 = vunpack.c.l.b16 %v5784
        %v6972 = vunpack.c.l.b16 %v5785
        %v6973 = vunpack.c.l.b16 %v5786
        %v6974 = vunpack.c.l.b16 %v5787
        %v6975 = vunpack.c.l.b16 %v5788
        %v6976 = vunpack.c.l.b16 %v5789
        %v6977 = vunpack.c.l.b16 %v5790
        %v6978 = vunpack.c.l.b16 %v5791
        %v6979 = vunpack.c.l.b16 %v5792
        %v6980 = vunpack.c.l.b16 %v5793
        %v6981 = vunpack.c.l.b16 %v5794
        %v6982 = vunpack.c.l.b16 %v5795
        %v6983 = vunpack.c.l.b16 %v5796
        %v6984 = vunpack.c.l.b16 %v5797
        %v6985 = vunpack.c.l.b16 %v5798
        %v6986 = vunpack.c.l.b16 %v5799
        %v6987 = vunpack.c.l.b16 %v5800
        %v6988 = vunpack.c.l.b16 %v5801
        %v6989 = vunpack.c.l.b16 %v5802
        %v6990 = vunpack.c.l.b16 %v5803
        %v6991 = vunpack.c.l.b16 %v5804
        %v6992 = vunpack.c.l.b16 %v5805
        %v6993 = vunpack.c.l.b16 %v5806
        %v6994 = vpack.c.b16 %v6947, %v6946
        %v6995 = vpack.c.b16 %v6949, %v6948
        %v6996 = vpack.c.b16 %v6951, %v6950
        %v6997 = vpack.c.b16 %v6953, %v6952
        %v6998 = vpack.c.b16 %v6955, %v6954
        %v6999 = vpack.c.b16 %v6957, %v6956
        %v7000 = vpack.c.b16 %v6959, %v6958
        %v7001 = vpack.c.b16 %v6961, %v6960
        %v7002 = vpack.c.b16 %v6963, %v6962
        %v7003 = vpack.c.b16 %v6965, %v6964
        %v7004 = vpack.c.b16 %v6967, %v6966
        %v7005 = vpack.c.b16 %v6969, %v6968
        %v7006 = vpack.c.b16 %v6971, %v6970
        %v7007 = vpack.c.b16 %v6973, %v6972
        %v7008 = vpack.c.b16 %v6975, %v6974
        %v7009 = vpack.c.b16 %v6977, %v6976
        %v7010 = vpack.c.b16 %v6979, %v6978
        %v7011 = vpack.c.b16 %v6981, %v6980
        %v7012 = vpack.c.b16 %v6983, %v6982
        %v7013 = vpack.c.b16 %v6985, %v6984
        %v7014 = vpack.c.b16 %v6987, %v6986
        %v7015 = vpack.c.b16 %v6989, %v6988
        %v7016 = vpack.c.b16 %v6991, %v6990
        %v7017 = vpack.c.b16 %v6993, %v6992
        %7042 = vmatprep.subr.bf16.mxu0 0
        %7043 = vmatpush1.bf16.msra.mxu0 %v7001
        %7044 = vmatprep.subr.bf16.mxu0 0
        %7045 = vmatpush1.bf16.msra.mxu0 %v7000
        %7046 = vmatprep.subr.bf16.mxu0 0
        %7047 = vmatpush1.bf16.msra.mxu0 %v6999
        %7048 = vmatprep.subr.bf16.mxu0 0
        %7049 = vmatpush1.bf16.msra.mxu0 %v6998
        %7050 = vmatprep.subr.bf16.mxu0 0
        %7051 = vmatpush1.bf16.msra.mxu0 %v6997
        %7052 = vmatprep.subr.bf16.mxu0 0
        %7053 = vmatpush1.bf16.msra.mxu0 %v6996
        %7054 = vmatprep.subr.bf16.mxu0 0
        %7055 = vmatpush1.bf16.msra.mxu0 %v6995
        %7056 = vmatprep.subr.bf16.mxu0 0
        %7057 = vmatpush1.bf16.msra.mxu0 %v6994
        %7058 = vmatprep.subr.bf16.mxu0 0
        %7059 = vmatpush2.bf16.msra.mxu0 %v7009
        %7060 = vmatprep.subr.bf16.mxu0 0
        %7061 = vmatpush2.bf16.msra.mxu0 %v7008
        %7062 = vmatprep.subr.bf16.mxu0 0
        %7063 = vmatpush2.bf16.msra.mxu0 %v7007
        %7064 = vmatprep.subr.bf16.mxu0 0
        %7065 = vmatpush2.bf16.msra.mxu0 %v7006
        %7066 = vmatprep.subr.bf16.mxu0 0
        %7067 = vmatpush2.bf16.msra.mxu0 %v7005
        %7068 = vmatprep.subr.bf16.mxu0 0
        %7069 = vmatpush2.bf16.msra.mxu0 %v7004
        %7070 = vmatprep.subr.bf16.mxu0 0
        %7071 = vmatpush2.bf16.msra.mxu0 %v7003
        %7072 = vmatprep.subr.bf16.mxu0 0
        %7073 = vmatpush2.bf16.msra.mxu0 %v7002
        %7074 = vmatprep.mubr.bf16.mxu0 %v6803
        %7075 = vmatmul.mubr.bf16.gmra.mxu0 %v6802
        %v7076 = vpop.f32.mrf.mxu0
        %v7077 = vadd.f32 %v6516, %v7076
        %v7078 = vpop.f32.mrf.mxu0
        %v7079 = vpop.f32.mrf.mxu0
        %v7080 = vadd.f32 %v6519, %v7079
        %v7081 = vpop.f32.mrf.mxu0
        %7082 = vmatprep.mubr.bf16.mxu0 %v6806
        %7083 = vmatmul.mubr.bf16.gmra.mxu0 %v6805
        %v7084 = vpop.f32.mrf.mxu0
        %v7085 = vadd.f32 %v6524, %v7084
        %v7086 = vpop.f32.mrf.mxu0
        %v7087 = vpop.f32.mrf.mxu0
        %v7088 = vadd.f32 %v6527, %v7087
        %v7089 = vpop.f32.mrf.mxu0
        %7090 = vmatprep.mubr.bf16.mxu0 %v6809
        %7091 = vmatmul.mubr.bf16.gmra.mxu0 %v6808
        %v7092 = vpop.f32.mrf.mxu0
        %v7093 = vadd.f32 %v6532, %v7092
        %v7094 = vpop.f32.mrf.mxu0
        %v7095 = vpop.f32.mrf.mxu0
        %v7096 = vadd.f32 %v6535, %v7095
        %v7097 = vpop.f32.mrf.mxu0
        %7098 = vmatprep.mubr.bf16.mxu0 %v6812
        %7099 = vmatmul.mubr.bf16.gmra.mxu0 %v6811
        %v7100 = vpop.f32.mrf.mxu0
        %v7101 = vadd.f32 %v6540, %v7100
        %v7102 = vpop.f32.mrf.mxu0
        %v7103 = vpop.f32.mrf.mxu0
        %v7104 = vadd.f32 %v6543, %v7103
        %v7105 = vpop.f32.mrf.mxu0
        %7106 = vmatprep.mubr.bf16.mxu0 %v6815
        %7107 = vmatmul.mubr.bf16.gmra.mxu0 %v6814
        %v7108 = vpop.f32.mrf.mxu0
        %v7109 = vadd.f32 %v6548, %v7108
        %v7110 = vpop.f32.mrf.mxu0
        %v7111 = vpop.f32.mrf.mxu0
        %v7112 = vadd.f32 %v6551, %v7111
        %v7113 = vpop.f32.mrf.mxu0
        %7114 = vmatprep.mubr.bf16.mxu0 %v6818
        %7115 = vmatmul.mubr.bf16.gmra.mxu0 %v6817
        %v7116 = vpop.f32.mrf.mxu0
        %v7117 = vadd.f32 %v6556, %v7116
        %v7118 = vpop.f32.mrf.mxu0
        %v7119 = vpop.f32.mrf.mxu0
        %v7120 = vadd.f32 %v6559, %v7119
        %v7121 = vpop.f32.mrf.mxu0
        %7122 = vmatprep.mubr.bf16.mxu0 %v6821
        %7123 = vmatmul.mubr.bf16.gmra.mxu0 %v6820
        %v7124 = vpop.f32.mrf.mxu0
        %v7125 = vadd.f32 %v6564, %v7124
        %v7126 = vpop.f32.mrf.mxu0
        %v7127 = vpop.f32.mrf.mxu0
        %v7128 = vadd.f32 %v6567, %v7127
        %v7129 = vpop.f32.mrf.mxu0
        %7130 = vmatprep.mubr.bf16.mxu0 %v6824
        %7131 = vmatmul.mubr.bf16.gmra.mxu0 %v6823
        %v7132 = vpop.f32.mrf.mxu0
        %v7133 = vadd.f32 %v6572, %v7132
        %v7134 = vpop.f32.mrf.mxu0
        %v7135 = vpop.f32.mrf.mxu0
        %v7136 = vadd.f32 %v6575, %v7135
        %v7137 = vpop.f32.mrf.mxu0
        %7138 = vmatprep.mubr.bf16.mxu0 %v6827
        %7139 = vmatmul.mubr.bf16.gmra.mxu0 %v6826
        %v7140 = vpop.f32.mrf.mxu0
        %v7141 = vadd.f32 %v6580, %v7140
        %v7142 = vpop.f32.mrf.mxu0
        %v7143 = vpop.f32.mrf.mxu0
        %v7144 = vadd.f32 %v6583, %v7143
        %v7145 = vpop.f32.mrf.mxu0
        %7146 = vmatprep.mubr.bf16.mxu0 %v6830
        %7147 = vmatmul.mubr.bf16.gmra.mxu0 %v6829
        %v7148 = vpop.f32.mrf.mxu0
        %v7149 = vadd.f32 %v6588, %v7148
        %v7150 = vpop.f32.mrf.mxu0
        %v7151 = vpop.f32.mrf.mxu0
        %v7152 = vadd.f32 %v6591, %v7151
        %v7153 = vpop.f32.mrf.mxu0
        %7154 = vmatprep.mubr.bf16.mxu0 %v6833
        %7155 = vmatmul.mubr.bf16.gmra.mxu0 %v6832
        %v7156 = vpop.f32.mrf.mxu0
        %v7157 = vadd.f32 %v6596, %v7156
        %v7158 = vpop.f32.mrf.mxu0
        %v7159 = vpop.f32.mrf.mxu0
        %v7160 = vadd.f32 %v6599, %v7159
        %v7161 = vpop.f32.mrf.mxu0
        %7162 = vmatprep.mubr.bf16.mxu0 %v6836
        %7163 = vmatmul.mubr.bf16.gmra.mxu0 %v6835
        %v7164 = vpop.f32.mrf.mxu0
        %v7165 = vadd.f32 %v6604, %v7164
        %v7166 = vpop.f32.mrf.mxu0
        %v7167 = vpop.f32.mrf.mxu0
        %v7168 = vadd.f32 %v6607, %v7167
        %v7169 = vpop.f32.mrf.mxu0
        %7170 = vmatprep.mubr.bf16.mxu0 %v6839
        %7171 = vmatmul.mubr.bf16.gmra.mxu0 %v6838
        %v7172 = vpop.f32.mrf.mxu0
        %v7173 = vadd.f32 %v6612, %v7172
        %v7174 = vpop.f32.mrf.mxu0
        %v7175 = vpop.f32.mrf.mxu0
        %v7176 = vadd.f32 %v6615, %v7175
        %v7177 = vpop.f32.mrf.mxu0
        %7178 = vmatprep.mubr.bf16.mxu0 %v6842
        %7179 = vmatmul.mubr.bf16.gmra.mxu0 %v6841
        %v7180 = vpop.f32.mrf.mxu0
        %v7181 = vadd.f32 %v6620, %v7180
        %v7182 = vpop.f32.mrf.mxu0
        %v7183 = vpop.f32.mrf.mxu0
        %v7184 = vadd.f32 %v6623, %v7183
        %v7185 = vpop.f32.mrf.mxu0
        %7186 = vmatprep.mubr.bf16.mxu0 %v6845
        %7187 = vmatmul.mubr.bf16.gmra.mxu0 %v6844
        %v7188 = vpop.f32.mrf.mxu0
        %v7189 = vadd.f32 %v6628, %v7188
        %v7190 = vpop.f32.mrf.mxu0
        %v7191 = vpop.f32.mrf.mxu0
        %v7192 = vadd.f32 %v6631, %v7191
        %v7193 = vpop.f32.mrf.mxu0
        %7194 = vmatprep.mubr.bf16.mxu0 %v6848
        %7195 = vmatmul.mubr.bf16.gmra.mxu0 %v6847
        %v7196 = vpop.f32.mrf.mxu0
        %v7197 = vadd.f32 %v6636, %v7196
        %v7198 = vpop.f32.mrf.mxu0
        %v7199 = vpop.f32.mrf.mxu0
        %v7200 = vadd.f32 %v6639, %v7199
        %v7201 = vpop.f32.mrf.mxu0
        %7202 = vdwg.mxu0
        %7203 = vmatprep.subr.bf16.mxu0 0
        %7204 = vmatpush1.bf16.msra.mxu0 %v7017
        %7205 = vmatprep.subr.bf16.mxu0 0
        %7206 = vmatpush1.bf16.msra.mxu0 %v7016
        %7207 = vmatprep.subr.bf16.mxu0 0
        %7208 = vmatpush1.bf16.msra.mxu0 %v7015
        %7209 = vmatprep.subr.bf16.mxu0 0
        %7210 = vmatpush1.bf16.msra.mxu0 %v7014
        %7211 = vmatprep.subr.bf16.mxu0 0
        %7212 = vmatpush1.bf16.msra.mxu0 %v7013
        %7213 = vmatprep.subr.bf16.mxu0 0
        %7214 = vmatpush1.bf16.msra.mxu0 %v7012
        %7215 = vmatprep.subr.bf16.mxu0 0
        %7216 = vmatpush1.bf16.msra.mxu0 %v7011
        %7217 = vmatprep.subr.bf16.mxu0 0
        %7218 = vmatpush1.bf16.msra.mxu0 %v7010
        %7219 = vmatprep.subr.bf16.mxu0 0
        %7220 = vmatpush2.bf16.msra.mxu0 0
        %7221 = vmatprep.subr.bf16.mxu0 0
        %7222 = vmatpush2.bf16.msra.mxu0 0
        %7223 = vmatprep.subr.bf16.mxu0 0
        %7224 = vmatpush2.bf16.msra.mxu0 0
        %7225 = vmatprep.subr.bf16.mxu0 0
        %7226 = vmatpush2.bf16.msra.mxu0 0
        %7227 = vmatprep.subr.bf16.mxu0 0
        %7228 = vmatpush2.bf16.msra.mxu0 0
        %7229 = vmatprep.subr.bf16.mxu0 0
        %7230 = vmatpush2.bf16.msra.mxu0 0
        %7231 = vmatprep.subr.bf16.mxu0 0
        %7232 = vmatpush2.bf16.msra.mxu0 0
        %7233 = vmatprep.subr.bf16.mxu0 0
        %7234 = vmatpush2.bf16.msra.mxu0 0
        %7235 = vmatprep.mubr.bf16.mxu0 0
        %7236 = vmatmul.mubr.bf16.gmra.mxu0 %v6804
        %v7237 = vpop.f32.mrf.mxu0
        %v7238 = vadd.f32 %v7077, %v7237
        %v7239 = vpop.f32.mrf.mxu0
        %v7240 = vpop.f32.mrf.mxu0
        %v7241 = vadd.f32 %v7080, %v7240
        %v7242 = vpop.f32.mrf.mxu0
        %7243 = vmatprep.mubr.bf16.mxu0 0
        %7244 = vmatmul.mubr.bf16.gmra.mxu0 %v6807
        %v7245 = vpop.f32.mrf.mxu0
        %v7246 = vadd.f32 %v7085, %v7245
        %v7247 = vpop.f32.mrf.mxu0
        %v7248 = vpop.f32.mrf.mxu0
        %v7249 = vadd.f32 %v7088, %v7248
        %v7250 = vpop.f32.mrf.mxu0
        %7251 = vmatprep.mubr.bf16.mxu0 0
        %7252 = vmatmul.mubr.bf16.gmra.mxu0 %v6810
        %v7253 = vpop.f32.mrf.mxu0
        %v7254 = vadd.f32 %v7093, %v7253
        %v7255 = vpop.f32.mrf.mxu0
        %v7256 = vpop.f32.mrf.mxu0
        %v7257 = vadd.f32 %v7096, %v7256
        %v7258 = vpop.f32.mrf.mxu0
        %7259 = vmatprep.mubr.bf16.mxu0 0
        %7260 = vmatmul.mubr.bf16.gmra.mxu0 %v6813
        %v7261 = vpop.f32.mrf.mxu0
        %v7262 = vadd.f32 %v7101, %v7261
        %v7263 = vpop.f32.mrf.mxu0
        %v7264 = vpop.f32.mrf.mxu0
        %v7265 = vadd.f32 %v7104, %v7264
        %v7266 = vpop.f32.mrf.mxu0
        %7267 = vmatprep.mubr.bf16.mxu0 0
        %7268 = vmatmul.mubr.bf16.gmra.mxu0 %v6816
        %v7269 = vpop.f32.mrf.mxu0
        %v7270 = vadd.f32 %v7109, %v7269
        %v7271 = vpop.f32.mrf.mxu0
        %v7272 = vpop.f32.mrf.mxu0
        %v7273 = vadd.f32 %v7112, %v7272
        %v7274 = vpop.f32.mrf.mxu0
        %7275 = vmatprep.mubr.bf16.mxu0 0
        %7276 = vmatmul.mubr.bf16.gmra.mxu0 %v6819
        %v7277 = vpop.f32.mrf.mxu0
        %v7278 = vadd.f32 %v7117, %v7277
        %v7279 = vpop.f32.mrf.mxu0
        %v7280 = vpop.f32.mrf.mxu0
        %v7281 = vadd.f32 %v7120, %v7280
        %v7282 = vpop.f32.mrf.mxu0
        %7283 = vmatprep.mubr.bf16.mxu0 0
        %7284 = vmatmul.mubr.bf16.gmra.mxu0 %v6822
        %v7285 = vpop.f32.mrf.mxu0
        %v7286 = vadd.f32 %v7125, %v7285
        %v7287 = vpop.f32.mrf.mxu0
        %v7288 = vpop.f32.mrf.mxu0
        %v7289 = vadd.f32 %v7128, %v7288
        %v7290 = vpop.f32.mrf.mxu0
        %7291 = vmatprep.mubr.bf16.mxu0 0
        %7292 = vmatmul.mubr.bf16.gmra.mxu0 %v6825
        %v7293 = vpop.f32.mrf.mxu0
        %v7294 = vadd.f32 %v7133, %v7293
        %v7295 = vpop.f32.mrf.mxu0
        %v7296 = vpop.f32.mrf.mxu0
        %v7297 = vadd.f32 %v7136, %v7296
        %v7298 = vpop.f32.mrf.mxu0
        %7299 = vmatprep.mubr.bf16.mxu0 0
        %7300 = vmatmul.mubr.bf16.gmra.mxu0 %v6828
        %v7301 = vpop.f32.mrf.mxu0
        %v7302 = vadd.f32 %v7141, %v7301
        %v7303 = vpop.f32.mrf.mxu0
        %v7304 = vpop.f32.mrf.mxu0
        %v7305 = vadd.f32 %v7144, %v7304
        %v7306 = vpop.f32.mrf.mxu0
        %7307 = vmatprep.mubr.bf16.mxu0 0
        %7308 = vmatmul.mubr.bf16.gmra.mxu0 %v6831
        %v7309 = vpop.f32.mrf.mxu0
        %v7310 = vadd.f32 %v7149, %v7309
        %v7311 = vpop.f32.mrf.mxu0
        %v7312 = vpop.f32.mrf.mxu0
        %v7313 = vadd.f32 %v7152, %v7312
        %v7314 = vpop.f32.mrf.mxu0
        %7315 = vmatprep.mubr.bf16.mxu0 0
        %7316 = vmatmul.mubr.bf16.gmra.mxu0 %v6834
        %v7317 = vpop.f32.mrf.mxu0
        %v7318 = vadd.f32 %v7157, %v7317
        %v7319 = vpop.f32.mrf.mxu0
        %v7320 = vpop.f32.mrf.mxu0
        %v7321 = vadd.f32 %v7160, %v7320
        %v7322 = vpop.f32.mrf.mxu0
        %7323 = vmatprep.mubr.bf16.mxu0 0
        %7324 = vmatmul.mubr.bf16.gmra.mxu0 %v6837
        %v7325 = vpop.f32.mrf.mxu0
        %v7326 = vadd.f32 %v7165, %v7325
        %v7327 = vpop.f32.mrf.mxu0
        %v7328 = vpop.f32.mrf.mxu0
        %v7329 = vadd.f32 %v7168, %v7328
        %v7330 = vpop.f32.mrf.mxu0
        %7331 = vmatprep.mubr.bf16.mxu0 0
        %7332 = vmatmul.mubr.bf16.gmra.mxu0 %v6840
        %v7333 = vpop.f32.mrf.mxu0
        %v7334 = vadd.f32 %v7173, %v7333
        %v7335 = vpop.f32.mrf.mxu0
        %v7336 = vpop.f32.mrf.mxu0
        %v7337 = vadd.f32 %v7176, %v7336
        %v7338 = vpop.f32.mrf.mxu0
        %7339 = vmatprep.mubr.bf16.mxu0 0
        %7340 = vmatmul.mubr.bf16.gmra.mxu0 %v6843
        %v7341 = vpop.f32.mrf.mxu0
        %v7342 = vadd.f32 %v7181, %v7341
        %v7343 = vpop.f32.mrf.mxu0
        %v7344 = vpop.f32.mrf.mxu0
        %v7345 = vadd.f32 %v7184, %v7344
        %v7346 = vpop.f32.mrf.mxu0
        %7347 = vmatprep.mubr.bf16.mxu0 0
        %7348 = vmatmul.mubr.bf16.gmra.mxu0 %v6846
        %v7349 = vpop.f32.mrf.mxu0
        %v7350 = vadd.f32 %v7189, %v7349
        %v7351 = vpop.f32.mrf.mxu0
        %v7352 = vpop.f32.mrf.mxu0
        %v7353 = vadd.f32 %v7192, %v7352
        %v7354 = vpop.f32.mrf.mxu0
        %7355 = vmatprep.mubr.bf16.mxu0 0
        %7356 = vmatmul.mubr.bf16.gmra.mxu0 %v6849
        %v7357 = vpop.f32.mrf.mxu0
        %v7358 = vadd.f32 %v7197, %v7357
        %v7359 = vpop.f32.mrf.mxu0
        %v7360 = vpop.f32.mrf.mxu0
        %v7361 = vadd.f32 %v7200, %v7360
        %v7362 = vpop.f32.mrf.mxu0
        %7363 = vdwg.mxu0
        %v7364 = vld [vmem:[%s3341] sm:$0xff]
        %v7365 = vld [vmem:[%s3341 + $0x8] sm:$0xf]
        %v7366 = vld [vmem:[%s3341 + $0xc] sm:$0xff]
        %v7367 = vld [vmem:[%s3341 + $0x14] sm:$0xf]
        %v7368 = vld [vmem:[%s3341 + $0x18] sm:$0xff]
        %v7369 = vld [vmem:[%s3341 + $0x20] sm:$0xf]
        %v7370 = vld [vmem:[%s3341 + $0x24] sm:$0xff]
        %v7371 = vld [vmem:[%s3341 + $0x2c] sm:$0xf]
        %v7372 = vld [vmem:[%s3341 + $0x30] sm:$0xff]
        %v7373 = vld [vmem:[%s3341 + $0x38] sm:$0xf]
        %v7374 = vld [vmem:[%s3341 + $0x3c] sm:$0xff]
        %v7375 = vld [vmem:[%s3341 + $0x44] sm:$0xf]
        %v7376 = vld [vmem:[%s3341 + $0x48] sm:$0xff]
        %v7377 = vld [vmem:[%s3341 + $0x50] sm:$0xf]
        %v7378 = vld [vmem:[%s3341 + $0x54] sm:$0xff]
        %v7379 = vld [vmem:[%s3341 + $0x5c] sm:$0xf]
        %v7380 = vld [vmem:[%s3341 + $0x60] sm:$0xff]
        %v7381 = vld [vmem:[%s3341 + $0x68] sm:$0xf]
        %v7382 = vld [vmem:[%s3341 + $0x6c] sm:$0xff]
        %v7383 = vld [vmem:[%s3341 + $0x74] sm:$0xf]
        %v7384 = vld [vmem:[%s3341 + $0x78] sm:$0xff]
        %v7385 = vld [vmem:[%s3341 + $0x80] sm:$0xf]
        %v7386 = vld [vmem:[%s3341 + $0x84] sm:$0xff]
        %v7387 = vld [vmem:[%s3341 + $0x8c] sm:$0xf]
        %v7388 = vld [vmem:[%s3341 + $0x90] sm:$0xff]
        %v7389 = vld [vmem:[%s3341 + $0x98] sm:$0xf]
        %v7390 = vld [vmem:[%s3341 + $0x9c] sm:$0xff]
        %v7391 = vld [vmem:[%s3341 + $0xa4] sm:$0xf]
        %v7392 = vld [vmem:[%s3341 + $0xa8] sm:$0xff]
        %v7393 = vld [vmem:[%s3341 + $0xb0] sm:$0xf]
        %v7394 = vld [vmem:[%s3341 + $0xb4] sm:$0xff]
        %v7395 = vld [vmem:[%s3341 + $0xbc] sm:$0xf]
        %v7396 = vld [vmem:[%s3341 + $0xc0] sm:$0xff]
        %v7397 = vld [vmem:[%s3341 + $0xc8] sm:$0xf]
        %v7398 = vld [vmem:[%s3341 + $0xcc] sm:$0xff]
        %v7399 = vld [vmem:[%s3341 + $0xd4] sm:$0xf]
        %v7400 = vld [vmem:[%s3341 + $0xd8] sm:$0xff]
        %v7401 = vld [vmem:[%s3341 + $0xe0] sm:$0xf]
        %v7402 = vld [vmem:[%s3341 + $0xe4] sm:$0xff]
        %v7403 = vld [vmem:[%s3341 + $0xec] sm:$0xf]
        %v7404 = vld [vmem:[%s3341 + $0xf0] sm:$0xff]
        %v7405 = vld [vmem:[%s3341 + $0xf8] sm:$0xf]
        %v7406 = vld [vmem:[%s3341 + $0xfc] sm:$0xff]
        %v7407 = vld [vmem:[%s3341 + $0x104] sm:$0xf]
        %v7408 = vld [vmem:[%s3341 + $0x108] sm:$0xff]
        %v7409 = vld [vmem:[%s3341 + $0x110] sm:$0xf]
        %v7410 = vld [vmem:[%s3341 + $0x114] sm:$0xff]
        %v7411 = vld [vmem:[%s3341 + $0x11c] sm:$0xf]
        %v7412 = vld [vmem:[%s3341 + $0x120] sm:$0xff]
        %v7413 = vld [vmem:[%s3341 + $0x128] sm:$0xf]
        %v7414 = vld [vmem:[%s3341 + $0x12c] sm:$0xff]
        %v7415 = vld [vmem:[%s3341 + $0x134] sm:$0xf]
        %v7416 = vld [vmem:[%s3341 + $0x138] sm:$0xff]
        %v7417 = vld [vmem:[%s3341 + $0x140] sm:$0xf]
        %v7418 = vld [vmem:[%s3341 + $0x144] sm:$0xff]
        %v7419 = vld [vmem:[%s3341 + $0x14c] sm:$0xf]
        %v7420 = vld [vmem:[%s3341 + $0x150] sm:$0xff]
        %v7421 = vld [vmem:[%s3341 + $0x158] sm:$0xf]
        %v7422 = vld [vmem:[%s3341 + $0x15c] sm:$0xff]
        %v7423 = vld [vmem:[%s3341 + $0x164] sm:$0xf]
        %v7424 = vld [vmem:[%s3341 + $0x168] sm:$0xff]
        %v7425 = vld [vmem:[%s3341 + $0x170] sm:$0xf]
        %v7426 = vld [vmem:[%s3341 + $0x174] sm:$0xff]
        %v7427 = vld [vmem:[%s3341 + $0x17c] sm:$0xf]
        %s7428 = scalar_lea.vmem [#allocation8], 384
        %v7429 = vld [vmem:[%s7428] sm:$0xf]
        %v7430 = vld [vmem:[%s7428 + $0x4] sm:$0xf]
        %v7431 = vld [vmem:[%s7428 + $0x8] sm:$0xf]
        %v7432 = vld [vmem:[%s7428 + $0xc] sm:$0xf]
        %v7433 = vld [vmem:[%s7428 + $0x10] sm:$0xf]
        %v7434 = vld [vmem:[%s7428 + $0x14] sm:$0xf]
        %v7435 = vld [vmem:[%s7428 + $0x18] sm:$0xf]
        %v7436 = vld [vmem:[%s7428 + $0x1c] sm:$0xf]
        %v7437 = vld [vmem:[%s7428 + $0x20] sm:$0xf]
        %v7438 = vld [vmem:[%s7428 + $0x24] sm:$0xf]
        %v7439 = vld [vmem:[%s7428 + $0x28] sm:$0xf]
        %v7440 = vld [vmem:[%s7428 + $0x2c] sm:$0xf]
        %v7441 = vld [vmem:[%s7428 + $0x30] sm:$0xf]
        %v7442 = vld [vmem:[%s7428 + $0x34] sm:$0xf]
        %v7443 = vld [vmem:[%s7428 + $0x38] sm:$0xf]
        %v7444 = vld [vmem:[%s7428 + $0x3c] sm:$0xf]
        %v7445 = vld [vmem:[%s7428 + $0x40] sm:$0xf]
        %v7446 = vld [vmem:[%s7428 + $0x44] sm:$0xf]
        %v7447 = vld [vmem:[%s7428 + $0x48] sm:$0xf]
        %v7448 = vld [vmem:[%s7428 + $0x4c] sm:$0xf]
        %v7449 = vld [vmem:[%s7428 + $0x50] sm:$0xf]
        %v7450 = vld [vmem:[%s7428 + $0x54] sm:$0xf]
        %v7451 = vld [vmem:[%s7428 + $0x58] sm:$0xf]
        %v7452 = vld [vmem:[%s7428 + $0x5c] sm:$0xf]
        %v7453 = vld [vmem:[%s7428 + $0x60] sm:$0xf]
        %v7454 = vld [vmem:[%s7428 + $0x64] sm:$0xf]
        %v7455 = vld [vmem:[%s7428 + $0x68] sm:$0xf]
        %v7456 = vld [vmem:[%s7428 + $0x6c] sm:$0xf]
        %v7457 = vld [vmem:[%s7428 + $0x70] sm:$0xf]
        %v7458 = vld [vmem:[%s7428 + $0x74] sm:$0xf]
        %v7459 = vld [vmem:[%s7428 + $0x78] sm:$0xf]
        %v7460 = vld [vmem:[%s7428 + $0x7c] sm:$0xf]
        %v7461 = vld [vmem:[%s7428 + $0x80] sm:$0xf]
        %v7462 = vld [vmem:[%s7428 + $0x84] sm:$0xf]
        %v7463 = vld [vmem:[%s7428 + $0x88] sm:$0xf]
        %v7464 = vld [vmem:[%s7428 + $0x8c] sm:$0xf]
        %v7465 = vld [vmem:[%s7428 + $0x90] sm:$0xf]
        %v7466 = vld [vmem:[%s7428 + $0x94] sm:$0xf]
        %v7467 = vld [vmem:[%s7428 + $0x98] sm:$0xf]
        %v7468 = vld [vmem:[%s7428 + $0x9c] sm:$0xf]
        %v7469 = vld [vmem:[%s7428 + $0xa0] sm:$0xf]
        %v7470 = vld [vmem:[%s7428 + $0xa4] sm:$0xf]
        %v7471 = vld [vmem:[%s7428 + $0xa8] sm:$0xf]
        %v7472 = vld [vmem:[%s7428 + $0xac] sm:$0xf]
        %v7473 = vld [vmem:[%s7428 + $0xb0] sm:$0xf]
        %v7474 = vld [vmem:[%s7428 + $0xb4] sm:$0xf]
        %v7475 = vld [vmem:[%s7428 + $0xb8] sm:$0xf]
        %v7476 = vld [vmem:[%s7428 + $0xbc] sm:$0xf]
        %v7541 = vunpack.c.l.b16 %v7364
        %v7542 = vunpack.c.h.b16 %v7364
        %v7543 = vunpack.c.l.b16 %v7365
        %v7544 = vunpack.c.l.b16 %v7366
        %v7545 = vunpack.c.h.b16 %v7366
        %v7546 = vunpack.c.l.b16 %v7367
        %v7547 = vunpack.c.l.b16 %v7368
        %v7548 = vunpack.c.h.b16 %v7368
        %v7549 = vunpack.c.l.b16 %v7369
        %v7550 = vunpack.c.l.b16 %v7370
        %v7551 = vunpack.c.h.b16 %v7370
        %v7552 = vunpack.c.l.b16 %v7371
        %v7553 = vunpack.c.l.b16 %v7372
        %v7554 = vunpack.c.h.b16 %v7372
        %v7555 = vunpack.c.l.b16 %v7373
        %v7556 = vunpack.c.l.b16 %v7374
        %v7557 = vunpack.c.h.b16 %v7374
        %v7558 = vunpack.c.l.b16 %v7375
        %v7559 = vunpack.c.l.b16 %v7376
        %v7560 = vunpack.c.h.b16 %v7376
        %v7561 = vunpack.c.l.b16 %v7377
        %v7562 = vunpack.c.l.b16 %v7378
        %v7563 = vunpack.c.h.b16 %v7378
        %v7564 = vunpack.c.l.b16 %v7379
        %v7565 = vunpack.c.l.b16 %v7380
        %v7566 = vunpack.c.h.b16 %v7380
        %v7567 = vunpack.c.l.b16 %v7381
        %v7568 = vunpack.c.l.b16 %v7382
        %v7569 = vunpack.c.h.b16 %v7382
        %v7570 = vunpack.c.l.b16 %v7383
        %v7571 = vunpack.c.l.b16 %v7384
        %v7572 = vunpack.c.h.b16 %v7384
        %v7573 = vunpack.c.l.b16 %v7385
        %v7574 = vunpack.c.l.b16 %v7386
        %v7575 = vunpack.c.h.b16 %v7386
        %v7576 = vunpack.c.l.b16 %v7387
        %v7577 = vunpack.c.l.b16 %v7388
        %v7578 = vunpack.c.h.b16 %v7388
        %v7579 = vunpack.c.l.b16 %v7389
        %v7580 = vunpack.c.l.b16 %v7390
        %v7581 = vunpack.c.h.b16 %v7390
        %v7582 = vunpack.c.l.b16 %v7391
        %v7583 = vunpack.c.l.b16 %v7392
        %v7584 = vunpack.c.h.b16 %v7392
        %v7585 = vunpack.c.l.b16 %v7393
        %v7586 = vunpack.c.l.b16 %v7394
        %v7587 = vunpack.c.h.b16 %v7394
        %v7588 = vunpack.c.l.b16 %v7395
        %v7589 = vunpack.c.l.b16 %v7396
        %v7590 = vunpack.c.h.b16 %v7396
        %v7591 = vunpack.c.l.b16 %v7397
        %v7592 = vunpack.c.l.b16 %v7398
        %v7593 = vunpack.c.h.b16 %v7398
        %v7594 = vunpack.c.l.b16 %v7399
        %v7595 = vunpack.c.l.b16 %v7400
        %v7596 = vunpack.c.h.b16 %v7400
        %v7597 = vunpack.c.l.b16 %v7401
        %v7598 = vunpack.c.l.b16 %v7402
        %v7599 = vunpack.c.h.b16 %v7402
        %v7600 = vunpack.c.l.b16 %v7403
        %v7601 = vunpack.c.l.b16 %v7404
        %v7602 = vunpack.c.h.b16 %v7404
        %v7603 = vunpack.c.l.b16 %v7405
        %v7604 = vunpack.c.l.b16 %v7406
        %v7605 = vunpack.c.h.b16 %v7406
        %v7606 = vunpack.c.l.b16 %v7407
        %v7607 = vunpack.c.l.b16 %v7408
        %v7608 = vunpack.c.h.b16 %v7408
        %v7609 = vunpack.c.l.b16 %v7409
        %v7610 = vunpack.c.l.b16 %v7410
        %v7611 = vunpack.c.h.b16 %v7410
        %v7612 = vunpack.c.l.b16 %v7411
        %v7613 = vunpack.c.l.b16 %v7412
        %v7614 = vunpack.c.h.b16 %v7412
        %v7615 = vunpack.c.l.b16 %v7413
        %v7616 = vunpack.c.l.b16 %v7414
        %v7617 = vunpack.c.h.b16 %v7414
        %v7618 = vunpack.c.l.b16 %v7415
        %v7619 = vunpack.c.l.b16 %v7416
        %v7620 = vunpack.c.h.b16 %v7416
        %v7621 = vunpack.c.l.b16 %v7417
        %v7622 = vunpack.c.l.b16 %v7418
        %v7623 = vunpack.c.h.b16 %v7418
        %v7624 = vunpack.c.l.b16 %v7419
        %v7625 = vunpack.c.l.b16 %v7420
        %v7626 = vunpack.c.h.b16 %v7420
        %v7627 = vunpack.c.l.b16 %v7421
        %v7628 = vunpack.c.l.b16 %v7422
        %v7629 = vunpack.c.h.b16 %v7422
        %v7630 = vunpack.c.l.b16 %v7423
        %v7631 = vunpack.c.l.b16 %v7424
        %v7632 = vunpack.c.h.b16 %v7424
        %v7633 = vunpack.c.l.b16 %v7425
        %v7634 = vunpack.c.l.b16 %v7426
        %v7635 = vunpack.c.h.b16 %v7426
        %v7636 = vunpack.c.l.b16 %v7427
        %v7637 = vpack.c.b16 %v7544, %v7541
        %v7638 = vpack.c.b16 %v7545, %v7542
        %v7639 = vpack.c.b16 %v7546, %v7543
        %v7640 = vpack.c.b16 %v7550, %v7547
        %v7641 = vpack.c.b16 %v7551, %v7548
        %v7642 = vpack.c.b16 %v7552, %v7549
        %v7643 = vpack.c.b16 %v7556, %v7553
        %v7644 = vpack.c.b16 %v7557, %v7554
        %v7645 = vpack.c.b16 %v7558, %v7555
        %v7646 = vpack.c.b16 %v7562, %v7559
        %v7647 = vpack.c.b16 %v7563, %v7560
        %v7648 = vpack.c.b16 %v7564, %v7561
        %v7649 = vpack.c.b16 %v7568, %v7565
        %v7650 = vpack.c.b16 %v7569, %v7566
        %v7651 = vpack.c.b16 %v7570, %v7567
        %v7652 = vpack.c.b16 %v7574, %v7571
        %v7653 = vpack.c.b16 %v7575, %v7572
        %v7654 = vpack.c.b16 %v7576, %v7573
        %v7655 = vpack.c.b16 %v7580, %v7577
        %v7656 = vpack.c.b16 %v7581, %v7578
        %v7657 = vpack.c.b16 %v7582, %v7579
        %v7658 = vpack.c.b16 %v7586, %v7583
        %v7659 = vpack.c.b16 %v7587, %v7584
        %v7660 = vpack.c.b16 %v7588, %v7585
        %v7661 = vpack.c.b16 %v7592, %v7589
        %v7662 = vpack.c.b16 %v7593, %v7590
        %v7663 = vpack.c.b16 %v7594, %v7591
        %v7664 = vpack.c.b16 %v7598, %v7595
        %v7665 = vpack.c.b16 %v7599, %v7596
        %v7666 = vpack.c.b16 %v7600, %v7597
        %v7667 = vpack.c.b16 %v7604, %v7601
        %v7668 = vpack.c.b16 %v7605, %v7602
        %v7669 = vpack.c.b16 %v7606, %v7603
        %v7670 = vpack.c.b16 %v7610, %v7607
        %v7671 = vpack.c.b16 %v7611, %v7608
        %v7672 = vpack.c.b16 %v7612, %v7609
        %v7673 = vpack.c.b16 %v7616, %v7613
        %v7674 = vpack.c.b16 %v7617, %v7614
        %v7675 = vpack.c.b16 %v7618, %v7615
        %v7676 = vpack.c.b16 %v7622, %v7619
        %v7677 = vpack.c.b16 %v7623, %v7620
        %v7678 = vpack.c.b16 %v7624, %v7621
        %v7679 = vpack.c.b16 %v7628, %v7625
        %v7680 = vpack.c.b16 %v7629, %v7626
        %v7681 = vpack.c.b16 %v7630, %v7627
        %v7682 = vpack.c.b16 %v7634, %v7631
        %v7683 = vpack.c.b16 %v7635, %v7632
        %v7684 = vpack.c.b16 %v7636, %v7633
        %v7781 = vunpack.c.l.b16 %v7429
        %v7782 = vunpack.c.l.b16 %v7430
        %v7783 = vunpack.c.l.b16 %v7431
        %v7784 = vunpack.c.l.b16 %v7432
        %v7785 = vunpack.c.l.b16 %v7433
        %v7786 = vunpack.c.l.b16 %v7434
        %v7787 = vunpack.c.l.b16 %v7435
        %v7788 = vunpack.c.l.b16 %v7436
        %v7789 = vunpack.c.l.b16 %v7437
        %v7790 = vunpack.c.l.b16 %v7438
        %v7791 = vunpack.c.l.b16 %v7439
        %v7792 = vunpack.c.l.b16 %v7440
        %v7793 = vunpack.c.l.b16 %v7441
        %v7794 = vunpack.c.l.b16 %v7442
        %v7795 = vunpack.c.l.b16 %v7443
        %v7796 = vunpack.c.l.b16 %v7444
        %v7797 = vunpack.c.l.b16 %v7445
        %v7798 = vunpack.c.l.b16 %v7446
        %v7799 = vunpack.c.l.b16 %v7447
        %v7800 = vunpack.c.l.b16 %v7448
        %v7801 = vunpack.c.l.b16 %v7449
        %v7802 = vunpack.c.l.b16 %v7450
        %v7803 = vunpack.c.l.b16 %v7451
        %v7804 = vunpack.c.l.b16 %v7452
        %v7805 = vunpack.c.l.b16 %v7453
        %v7806 = vunpack.c.l.b16 %v7454
        %v7807 = vunpack.c.l.b16 %v7455
        %v7808 = vunpack.c.l.b16 %v7456
        %v7809 = vunpack.c.l.b16 %v7457
        %v7810 = vunpack.c.l.b16 %v7458
        %v7811 = vunpack.c.l.b16 %v7459
        %v7812 = vunpack.c.l.b16 %v7460
        %v7813 = vunpack.c.l.b16 %v7461
        %v7814 = vunpack.c.l.b16 %v7462
        %v7815 = vunpack.c.l.b16 %v7463
        %v7816 = vunpack.c.l.b16 %v7464
        %v7817 = vunpack.c.l.b16 %v7465
        %v7818 = vunpack.c.l.b16 %v7466
        %v7819 = vunpack.c.l.b16 %v7467
        %v7820 = vunpack.c.l.b16 %v7468
        %v7821 = vunpack.c.l.b16 %v7469
        %v7822 = vunpack.c.l.b16 %v7470
        %v7823 = vunpack.c.l.b16 %v7471
        %v7824 = vunpack.c.l.b16 %v7472
        %v7825 = vunpack.c.l.b16 %v7473
        %v7826 = vunpack.c.l.b16 %v7474
        %v7827 = vunpack.c.l.b16 %v7475
        %v7828 = vunpack.c.l.b16 %v7476
        %v7829 = vpack.c.b16 %v7782, %v7781
        %v7830 = vpack.c.b16 %v7784, %v7783
        %v7831 = vpack.c.b16 %v7786, %v7785
        %v7832 = vpack.c.b16 %v7788, %v7787
        %v7833 = vpack.c.b16 %v7790, %v7789
        %v7834 = vpack.c.b16 %v7792, %v7791
        %v7835 = vpack.c.b16 %v7794, %v7793
        %v7836 = vpack.c.b16 %v7796, %v7795
        %v7837 = vpack.c.b16 %v7798, %v7797
        %v7838 = vpack.c.b16 %v7800, %v7799
        %v7839 = vpack.c.b16 %v7802, %v7801
        %v7840 = vpack.c.b16 %v7804, %v7803
        %v7841 = vpack.c.b16 %v7806, %v7805
        %v7842 = vpack.c.b16 %v7808, %v7807
        %v7843 = vpack.c.b16 %v7810, %v7809
        %v7844 = vpack.c.b16 %v7812, %v7811
        %v7845 = vpack.c.b16 %v7814, %v7813
        %v7846 = vpack.c.b16 %v7816, %v7815
        %v7847 = vpack.c.b16 %v7818, %v7817
        %v7848 = vpack.c.b16 %v7820, %v7819
        %v7849 = vpack.c.b16 %v7822, %v7821
        %v7850 = vpack.c.b16 %v7824, %v7823
        %v7851 = vpack.c.b16 %v7826, %v7825
        %v7852 = vpack.c.b16 %v7828, %v7827
        %7877 = vmatprep.subr.bf16.mxu0 0
        %7878 = vmatpush1.bf16.msra.mxu0 %v7836
        %7879 = vmatprep.subr.bf16.mxu0 0
        %7880 = vmatpush1.bf16.msra.mxu0 %v7835
        %7881 = vmatprep.subr.bf16.mxu0 0
        %7882 = vmatpush1.bf16.msra.mxu0 %v7834
        %7883 = vmatprep.subr.bf16.mxu0 0
        %7884 = vmatpush1.bf16.msra.mxu0 %v7833
        %7885 = vmatprep.subr.bf16.mxu0 0
        %7886 = vmatpush1.bf16.msra.mxu0 %v7832
        %7887 = vmatprep.subr.bf16.mxu0 0
        %7888 = vmatpush1.bf16.msra.mxu0 %v7831
        %7889 = vmatprep.subr.bf16.mxu0 0
        %7890 = vmatpush1.bf16.msra.mxu0 %v7830
        %7891 = vmatprep.subr.bf16.mxu0 0
        %7892 = vmatpush1.bf16.msra.mxu0 %v7829
        %7893 = vmatprep.subr.bf16.mxu0 0
        %7894 = vmatpush2.bf16.msra.mxu0 %v7844
        %7895 = vmatprep.subr.bf16.mxu0 0
        %7896 = vmatpush2.bf16.msra.mxu0 %v7843
        %7897 = vmatprep.subr.bf16.mxu0 0
        %7898 = vmatpush2.bf16.msra.mxu0 %v7842
        %7899 = vmatprep.subr.bf16.mxu0 0
        %7900 = vmatpush2.bf16.msra.mxu0 %v7841
        %7901 = vmatprep.subr.bf16.mxu0 0
        %7902 = vmatpush2.bf16.msra.mxu0 %v7840
        %7903 = vmatprep.subr.bf16.mxu0 0
        %7904 = vmatpush2.bf16.msra.mxu0 %v7839
        %7905 = vmatprep.subr.bf16.mxu0 0
        %7906 = vmatpush2.bf16.msra.mxu0 %v7838
        %7907 = vmatprep.subr.bf16.mxu0 0
        %7908 = vmatpush2.bf16.msra.mxu0 %v7837
        %7909 = vmatprep.mubr.bf16.mxu0 %v7638
        %7910 = vmatmul.mubr.bf16.gmra.mxu0 %v7637
        %v7911 = vpop.f32.mrf.mxu0
        %v7912 = vadd.f32 0.0, %v7911
        %v7913 = vpop.f32.mrf.mxu0
        %v7914 = vpop.f32.mrf.mxu0
        %v7915 = vadd.f32 0.0, %v7914
        %v7916 = vpop.f32.mrf.mxu0
        %7917 = vmatprep.mubr.bf16.mxu0 %v7641
        %7918 = vmatmul.mubr.bf16.gmra.mxu0 %v7640
        %v7919 = vpop.f32.mrf.mxu0
        %v7920 = vadd.f32 0.0, %v7919
        %v7921 = vpop.f32.mrf.mxu0
        %v7922 = vpop.f32.mrf.mxu0
        %v7923 = vadd.f32 0.0, %v7922
        %v7924 = vpop.f32.mrf.mxu0
        %7925 = vmatprep.mubr.bf16.mxu0 %v7644
        %7926 = vmatmul.mubr.bf16.gmra.mxu0 %v7643
        %v7927 = vpop.f32.mrf.mxu0
        %v7928 = vadd.f32 0.0, %v7927
        %v7929 = vpop.f32.mrf.mxu0
        %v7930 = vpop.f32.mrf.mxu0
        %v7931 = vadd.f32 0.0, %v7930
        %v7932 = vpop.f32.mrf.mxu0
        %7933 = vmatprep.mubr.bf16.mxu0 %v7647
        %7934 = vmatmul.mubr.bf16.gmra.mxu0 %v7646
        %v7935 = vpop.f32.mrf.mxu0
        %v7936 = vadd.f32 0.0, %v7935
        %v7937 = vpop.f32.mrf.mxu0
        %v7938 = vpop.f32.mrf.mxu0
        %v7939 = vadd.f32 0.0, %v7938
        %v7940 = vpop.f32.mrf.mxu0
        %7941 = vmatprep.mubr.bf16.mxu0 %v7650
        %7942 = vmatmul.mubr.bf16.gmra.mxu0 %v7649
        %v7943 = vpop.f32.mrf.mxu0
        %v7944 = vadd.f32 0.0, %v7943
        %v7945 = vpop.f32.mrf.mxu0
        %v7946 = vpop.f32.mrf.mxu0
        %v7947 = vadd.f32 0.0, %v7946
        %v7948 = vpop.f32.mrf.mxu0
        %7949 = vmatprep.mubr.bf16.mxu0 %v7653
        %7950 = vmatmul.mubr.bf16.gmra.mxu0 %v7652
        %v7951 = vpop.f32.mrf.mxu0
        %v7952 = vadd.f32 0.0, %v7951
        %v7953 = vpop.f32.mrf.mxu0
        %v7954 = vpop.f32.mrf.mxu0
        %v7955 = vadd.f32 0.0, %v7954
        %v7956 = vpop.f32.mrf.mxu0
        %7957 = vmatprep.mubr.bf16.mxu0 %v7656
        %7958 = vmatmul.mubr.bf16.gmra.mxu0 %v7655
        %v7959 = vpop.f32.mrf.mxu0
        %v7960 = vadd.f32 0.0, %v7959
        %v7961 = vpop.f32.mrf.mxu0
        %v7962 = vpop.f32.mrf.mxu0
        %v7963 = vadd.f32 0.0, %v7962
        %v7964 = vpop.f32.mrf.mxu0
        %7965 = vmatprep.mubr.bf16.mxu0 %v7659
        %7966 = vmatmul.mubr.bf16.gmra.mxu0 %v7658
        %v7967 = vpop.f32.mrf.mxu0
        %v7968 = vadd.f32 0.0, %v7967
        %v7969 = vpop.f32.mrf.mxu0
        %v7970 = vpop.f32.mrf.mxu0
        %v7971 = vadd.f32 0.0, %v7970
        %v7972 = vpop.f32.mrf.mxu0
        %7973 = vmatprep.mubr.bf16.mxu0 %v7662
        %7974 = vmatmul.mubr.bf16.gmra.mxu0 %v7661
        %v7975 = vpop.f32.mrf.mxu0
        %v7976 = vadd.f32 0.0, %v7975
        %v7977 = vpop.f32.mrf.mxu0
        %v7978 = vpop.f32.mrf.mxu0
        %v7979 = vadd.f32 0.0, %v7978
        %v7980 = vpop.f32.mrf.mxu0
        %7981 = vmatprep.mubr.bf16.mxu0 %v7665
        %7982 = vmatmul.mubr.bf16.gmra.mxu0 %v7664
        %v7983 = vpop.f32.mrf.mxu0
        %v7984 = vadd.f32 0.0, %v7983
        %v7985 = vpop.f32.mrf.mxu0
        %v7986 = vpop.f32.mrf.mxu0
        %v7987 = vadd.f32 0.0, %v7986
        %v7988 = vpop.f32.mrf.mxu0
        %7989 = vmatprep.mubr.bf16.mxu0 %v7668
        %7990 = vmatmul.mubr.bf16.gmra.mxu0 %v7667
        %v7991 = vpop.f32.mrf.mxu0
        %v7992 = vadd.f32 0.0, %v7991
        %v7993 = vpop.f32.mrf.mxu0
        %v7994 = vpop.f32.mrf.mxu0
        %v7995 = vadd.f32 0.0, %v7994
        %v7996 = vpop.f32.mrf.mxu0
        %7997 = vmatprep.mubr.bf16.mxu0 %v7671
        %7998 = vmatmul.mubr.bf16.gmra.mxu0 %v7670
        %v7999 = vpop.f32.mrf.mxu0
        %v8000 = vadd.f32 0.0, %v7999
        %v8001 = vpop.f32.mrf.mxu0
        %v8002 = vpop.f32.mrf.mxu0
        %v8003 = vadd.f32 0.0, %v8002
        %v8004 = vpop.f32.mrf.mxu0
        %8005 = vmatprep.mubr.bf16.mxu0 %v7674
        %8006 = vmatmul.mubr.bf16.gmra.mxu0 %v7673
        %v8007 = vpop.f32.mrf.mxu0
        %v8008 = vadd.f32 0.0, %v8007
        %v8009 = vpop.f32.mrf.mxu0
        %v8010 = vpop.f32.mrf.mxu0
        %v8011 = vadd.f32 0.0, %v8010
        %v8012 = vpop.f32.mrf.mxu0
        %8013 = vmatprep.mubr.bf16.mxu0 %v7677
        %8014 = vmatmul.mubr.bf16.gmra.mxu0 %v7676
        %v8015 = vpop.f32.mrf.mxu0
        %v8016 = vadd.f32 0.0, %v8015
        %v8017 = vpop.f32.mrf.mxu0
        %v8018 = vpop.f32.mrf.mxu0
        %v8019 = vadd.f32 0.0, %v8018
        %v8020 = vpop.f32.mrf.mxu0
        %8021 = vmatprep.mubr.bf16.mxu0 %v7680
        %8022 = vmatmul.mubr.bf16.gmra.mxu0 %v7679
        %v8023 = vpop.f32.mrf.mxu0
        %v8024 = vadd.f32 0.0, %v8023
        %v8025 = vpop.f32.mrf.mxu0
        %v8026 = vpop.f32.mrf.mxu0
        %v8027 = vadd.f32 0.0, %v8026
        %v8028 = vpop.f32.mrf.mxu0
        %8029 = vmatprep.mubr.bf16.mxu0 %v7683
        %8030 = vmatmul.mubr.bf16.gmra.mxu0 %v7682
        %v8031 = vpop.f32.mrf.mxu0
        %v8032 = vadd.f32 0.0, %v8031
        %v8033 = vpop.f32.mrf.mxu0
        %v8034 = vpop.f32.mrf.mxu0
        %v8035 = vadd.f32 0.0, %v8034
        %v8036 = vpop.f32.mrf.mxu0
        %8037 = vdwg.mxu0
        %8038 = vmatprep.subr.bf16.mxu0 0
        %8039 = vmatpush1.bf16.msra.mxu0 %v7852
        %8040 = vmatprep.subr.bf16.mxu0 0
        %8041 = vmatpush1.bf16.msra.mxu0 %v7851
        %8042 = vmatprep.subr.bf16.mxu0 0
        %8043 = vmatpush1.bf16.msra.mxu0 %v7850
        %8044 = vmatprep.subr.bf16.mxu0 0
        %8045 = vmatpush1.bf16.msra.mxu0 %v7849
        %8046 = vmatprep.subr.bf16.mxu0 0
        %8047 = vmatpush1.bf16.msra.mxu0 %v7848
        %8048 = vmatprep.subr.bf16.mxu0 0
        %8049 = vmatpush1.bf16.msra.mxu0 %v7847
        %8050 = vmatprep.subr.bf16.mxu0 0
        %8051 = vmatpush1.bf16.msra.mxu0 %v7846
        %8052 = vmatprep.subr.bf16.mxu0 0
        %8053 = vmatpush1.bf16.msra.mxu0 %v7845
        %8054 = vmatprep.subr.bf16.mxu0 0
        %8055 = vmatpush2.bf16.msra.mxu0 0
        %8056 = vmatprep.subr.bf16.mxu0 0
        %8057 = vmatpush2.bf16.msra.mxu0 0
        %8058 = vmatprep.subr.bf16.mxu0 0
        %8059 = vmatpush2.bf16.msra.mxu0 0
        %8060 = vmatprep.subr.bf16.mxu0 0
        %8061 = vmatpush2.bf16.msra.mxu0 0
        %8062 = vmatprep.subr.bf16.mxu0 0
        %8063 = vmatpush2.bf16.msra.mxu0 0
        %8064 = vmatprep.subr.bf16.mxu0 0
        %8065 = vmatpush2.bf16.msra.mxu0 0
        %8066 = vmatprep.subr.bf16.mxu0 0
        %8067 = vmatpush2.bf16.msra.mxu0 0
        %8068 = vmatprep.subr.bf16.mxu0 0
        %8069 = vmatpush2.bf16.msra.mxu0 0
        %8070 = vmatprep.mubr.bf16.mxu0 0
        %8071 = vmatmul.mubr.bf16.gmra.mxu0 %v7639
        %v8072 = vpop.f32.mrf.mxu0
        %v8073 = vadd.f32 %v7912, %v8072
        %v8074 = vpop.f32.mrf.mxu0
        %v8075 = vpop.f32.mrf.mxu0
        %v8076 = vadd.f32 %v7915, %v8075
        %v8077 = vpop.f32.mrf.mxu0
        %8078 = vmatprep.mubr.bf16.mxu0 0
        %8079 = vmatmul.mubr.bf16.gmra.mxu0 %v7642
        %v8080 = vpop.f32.mrf.mxu0
        %v8081 = vadd.f32 %v7920, %v8080
        %v8082 = vpop.f32.mrf.mxu0
        %v8083 = vpop.f32.mrf.mxu0
        %v8084 = vadd.f32 %v7923, %v8083
        %v8085 = vpop.f32.mrf.mxu0
        %8086 = vmatprep.mubr.bf16.mxu0 0
        %8087 = vmatmul.mubr.bf16.gmra.mxu0 %v7645
        %v8088 = vpop.f32.mrf.mxu0
        %v8089 = vadd.f32 %v7928, %v8088
        %v8090 = vpop.f32.mrf.mxu0
        %v8091 = vpop.f32.mrf.mxu0
        %v8092 = vadd.f32 %v7931, %v8091
        %v8093 = vpop.f32.mrf.mxu0
        %8094 = vmatprep.mubr.bf16.mxu0 0
        %8095 = vmatmul.mubr.bf16.gmra.mxu0 %v7648
        %v8096 = vpop.f32.mrf.mxu0
        %v8097 = vadd.f32 %v7936, %v8096
        %v8098 = vpop.f32.mrf.mxu0
        %v8099 = vpop.f32.mrf.mxu0
        %v8100 = vadd.f32 %v7939, %v8099
        %v8101 = vpop.f32.mrf.mxu0
        %8102 = vmatprep.mubr.bf16.mxu0 0
        %8103 = vmatmul.mubr.bf16.gmra.mxu0 %v7651
        %v8104 = vpop.f32.mrf.mxu0
        %v8105 = vadd.f32 %v7944, %v8104
        %v8106 = vpop.f32.mrf.mxu0
        %v8107 = vpop.f32.mrf.mxu0
        %v8108 = vadd.f32 %v7947, %v8107
        %v8109 = vpop.f32.mrf.mxu0
        %8110 = vmatprep.mubr.bf16.mxu0 0
        %8111 = vmatmul.mubr.bf16.gmra.mxu0 %v7654
        %v8112 = vpop.f32.mrf.mxu0
        %v8113 = vadd.f32 %v7952, %v8112
        %v8114 = vpop.f32.mrf.mxu0
        %v8115 = vpop.f32.mrf.mxu0
        %v8116 = vadd.f32 %v7955, %v8115
        %v8117 = vpop.f32.mrf.mxu0
        %8118 = vmatprep.mubr.bf16.mxu0 0
        %8119 = vmatmul.mubr.bf16.gmra.mxu0 %v7657
        %v8120 = vpop.f32.mrf.mxu0
        %v8121 = vadd.f32 %v7960, %v8120
        %v8122 = vpop.f32.mrf.mxu0
        %v8123 = vpop.f32.mrf.mxu0
        %v8124 = vadd.f32 %v7963, %v8123
        %v8125 = vpop.f32.mrf.mxu0
        %8126 = vmatprep.mubr.bf16.mxu0 0
        %8127 = vmatmul.mubr.bf16.gmra.mxu0 %v7660
        %v8128 = vpop.f32.mrf.mxu0
        %v8129 = vadd.f32 %v7968, %v8128
        %v8130 = vpop.f32.mrf.mxu0
        %v8131 = vpop.f32.mrf.mxu0
        %v8132 = vadd.f32 %v7971, %v8131
        %v8133 = vpop.f32.mrf.mxu0
        %8134 = vmatprep.mubr.bf16.mxu0 0
        %8135 = vmatmul.mubr.bf16.gmra.mxu0 %v7663
        %v8136 = vpop.f32.mrf.mxu0
        %v8137 = vadd.f32 %v7976, %v8136
        %v8138 = vpop.f32.mrf.mxu0
        %v8139 = vpop.f32.mrf.mxu0
        %v8140 = vadd.f32 %v7979, %v8139
        %v8141 = vpop.f32.mrf.mxu0
        %8142 = vmatprep.mubr.bf16.mxu0 0
        %8143 = vmatmul.mubr.bf16.gmra.mxu0 %v7666
        %v8144 = vpop.f32.mrf.mxu0
        %v8145 = vadd.f32 %v7984, %v8144
        %v8146 = vpop.f32.mrf.mxu0
        %v8147 = vpop.f32.mrf.mxu0
        %v8148 = vadd.f32 %v7987, %v8147
        %v8149 = vpop.f32.mrf.mxu0
        %8150 = vmatprep.mubr.bf16.mxu0 0
        %8151 = vmatmul.mubr.bf16.gmra.mxu0 %v7669
        %v8152 = vpop.f32.mrf.mxu0
        %v8153 = vadd.f32 %v7992, %v8152
        %v8154 = vpop.f32.mrf.mxu0
        %v8155 = vpop.f32.mrf.mxu0
        %v8156 = vadd.f32 %v7995, %v8155
        %v8157 = vpop.f32.mrf.mxu0
        %8158 = vmatprep.mubr.bf16.mxu0 0
        %8159 = vmatmul.mubr.bf16.gmra.mxu0 %v7672
        %v8160 = vpop.f32.mrf.mxu0
        %v8161 = vadd.f32 %v8000, %v8160
        %v8162 = vpop.f32.mrf.mxu0
        %v8163 = vpop.f32.mrf.mxu0
        %v8164 = vadd.f32 %v8003, %v8163
        %v8165 = vpop.f32.mrf.mxu0
        %8166 = vmatprep.mubr.bf16.mxu0 0
        %8167 = vmatmul.mubr.bf16.gmra.mxu0 %v7675
        %v8168 = vpop.f32.mrf.mxu0
        %v8169 = vadd.f32 %v8008, %v8168
        %v8170 = vpop.f32.mrf.mxu0
        %v8171 = vpop.f32.mrf.mxu0
        %v8172 = vadd.f32 %v8011, %v8171
        %v8173 = vpop.f32.mrf.mxu0
        %8174 = vmatprep.mubr.bf16.mxu0 0
        %8175 = vmatmul.mubr.bf16.gmra.mxu0 %v7678
        %v8176 = vpop.f32.mrf.mxu0
        %v8177 = vadd.f32 %v8016, %v8176
        %v8178 = vpop.f32.mrf.mxu0
        %v8179 = vpop.f32.mrf.mxu0
        %v8180 = vadd.f32 %v8019, %v8179
        %v8181 = vpop.f32.mrf.mxu0
        %8182 = vmatprep.mubr.bf16.mxu0 0
        %8183 = vmatmul.mubr.bf16.gmra.mxu0 %v7681
        %v8184 = vpop.f32.mrf.mxu0
        %v8185 = vadd.f32 %v8024, %v8184
        %v8186 = vpop.f32.mrf.mxu0
        %v8187 = vpop.f32.mrf.mxu0
        %v8188 = vadd.f32 %v8027, %v8187
        %v8189 = vpop.f32.mrf.mxu0
        %8190 = vmatprep.mubr.bf16.mxu0 0
        %8191 = vmatmul.mubr.bf16.gmra.mxu0 %v7684
        %v8192 = vpop.f32.mrf.mxu0
        %v8193 = vadd.f32 %v8032, %v8192
        %v8194 = vpop.f32.mrf.mxu0
        %v8195 = vpop.f32.mrf.mxu0
        %v8196 = vadd.f32 %v8035, %v8195
        %v8197 = vpop.f32.mrf.mxu0
        %8198 = vdwg.mxu0
        %v8199 = vadd.f32 %v7238, %v8073
        %v8200 = vadd.f32 %v7241, %v8076
        %v8201 = vadd.f32 %v7246, %v8081
        %v8202 = vadd.f32 %v7249, %v8084
        %v8203 = vadd.f32 %v7254, %v8089
        %v8204 = vadd.f32 %v7257, %v8092
        %v8205 = vadd.f32 %v7262, %v8097
        %v8206 = vadd.f32 %v7265, %v8100
        %v8207 = vadd.f32 %v7270, %v8105
        %v8208 = vadd.f32 %v7273, %v8108
        %v8209 = vadd.f32 %v7278, %v8113
        %v8210 = vadd.f32 %v7281, %v8116
        %v8211 = vadd.f32 %v7286, %v8121
        %v8212 = vadd.f32 %v7289, %v8124
        %v8213 = vadd.f32 %v7294, %v8129
        %v8214 = vadd.f32 %v7297, %v8132
        %v8215 = vadd.f32 %v7302, %v8137
        %v8216 = vadd.f32 %v7305, %v8140
        %v8217 = vadd.f32 %v7310, %v8145
        %v8218 = vadd.f32 %v7313, %v8148
        %v8219 = vadd.f32 %v7318, %v8153
        %v8220 = vadd.f32 %v7321, %v8156
        %v8221 = vadd.f32 %v7326, %v8161
        %v8222 = vadd.f32 %v7329, %v8164
        %v8223 = vadd.f32 %v7334, %v8169
        %v8224 = vadd.f32 %v7337, %v8172
        %v8225 = vadd.f32 %v7342, %v8177
        %v8226 = vadd.f32 %v7345, %v8180
        %v8227 = vadd.f32 %v7350, %v8185
        %v8228 = vadd.f32 %v7353, %v8188
        %v8229 = vadd.f32 %v7358, %v8193
        %v8230 = vadd.f32 %v7361, %v8196
        %v8231 = vld [vmem:[%s8] sm:$0x1]
        %v8232 = vld [vmem:[%s9] sm:$0x1]
        %v8233 = vadd.f32 %v8199, %v8200
        %v8234 = vadd.f32 %v8233, %v8201
        %v8235 = vadd.f32 %v8234, %v8202
        %v8236 = vadd.f32 %v8235, %v8203
        %v8237 = vadd.f32 %v8236, %v8204
        %v8238 = vadd.f32 %v8237, %v8205
        %v8239 = vadd.f32 %v8238, %v8206
        %v8240 = vadd.f32 %v8239, %v8207
        %v8241 = vadd.f32 %v8240, %v8208
        %v8242 = vadd.f32 %v8241, %v8209
        %v8243 = vadd.f32 %v8242, %v8210
        %v8244 = vadd.f32 %v8243, %v8211
        %v8245 = vadd.f32 %v8244, %v8212
        %v8246 = vadd.f32 %v8245, %v8213
        %v8247 = vadd.f32 %v8246, %v8214
        %v8248 = vadd.f32 %v8247, %v8215
        %v8249 = vadd.f32 %v8248, %v8216
        %v8250 = vadd.f32 %v8249, %v8217
        %v8251 = vadd.f32 %v8250, %v8218
        %v8252 = vadd.f32 %v8251, %v8219
        %v8253 = vadd.f32 %v8252, %v8220
        %v8254 = vadd.f32 %v8253, %v8221
        %v8255 = vadd.f32 %v8254, %v8222
        %v8256 = vadd.f32 %v8255, %v8223
        %v8257 = vadd.f32 %v8256, %v8224
        %v8258 = vadd.f32 %v8257, %v8225
        %v8259 = vadd.f32 %v8258, %v8226
        %v8260 = vadd.f32 %v8259, %v8227
        %v8261 = vadd.f32 %v8260, %v8228
        %v8262 = vadd.f32 %v8261, %v8229
        %v8263 = vadd.f32 %v8262, %v8230
        %v8264 = vrot.slane %v8263, 4
        %v8265 = vadd.f32 %v8263, %v8264
        %v8266 = vrot.slane %v8265, 2
        %v8267 = vadd.f32 %v8265, %v8266
        %v8268 = vrot.slane %v8267, 1
        %v8269 = vadd.f32 %v8267, %v8268
        %v8270 = vmul.f32 %v8269, 0.00390625
        %v8271 = vmul.f32 %v8199, %v8199
        %v8272 = vmul.f32 %v8200, %v8200
        %v8273 = vmul.f32 %v8201, %v8201
        %v8274 = vmul.f32 %v8202, %v8202
        %v8275 = vmul.f32 %v8203, %v8203
        %v8276 = vmul.f32 %v8204, %v8204
        %v8277 = vmul.f32 %v8205, %v8205
        %v8278 = vmul.f32 %v8206, %v8206
        %v8279 = vmul.f32 %v8207, %v8207
        %v8280 = vmul.f32 %v8208, %v8208
        %v8281 = vmul.f32 %v8209, %v8209
        %v8282 = vmul.f32 %v8210, %v8210
        %v8283 = vmul.f32 %v8211, %v8211
        %v8284 = vmul.f32 %v8212, %v8212
        %v8285 = vmul.f32 %v8213, %v8213
        %v8286 = vmul.f32 %v8214, %v8214
        %v8287 = vmul.f32 %v8215, %v8215
        %v8288 = vmul.f32 %v8216, %v8216
        %v8289 = vmul.f32 %v8217, %v8217
        %v8290 = vmul.f32 %v8218, %v8218
        %v8291 = vmul.f32 %v8219, %v8219
        %v8292 = vmul.f32 %v8220, %v8220
        %v8293 = vmul.f32 %v8221, %v8221
        %v8294 = vmul.f32 %v8222, %v8222
        %v8295 = vmul.f32 %v8223, %v8223
        %v8296 = vmul.f32 %v8224, %v8224
        %v8297 = vmul.f32 %v8225, %v8225
        %v8298 = vmul.f32 %v8226, %v8226
        %v8299 = vmul.f32 %v8227, %v8227
        %v8300 = vmul.f32 %v8228, %v8228
        %v8301 = vmul.f32 %v8229, %v8229
        %v8302 = vmul.f32 %v8230, %v8230
        %v8303 = vadd.f32 %v8271, %v8272
        %v8304 = vadd.f32 %v8303, %v8273
        %v8305 = vadd.f32 %v8304, %v8274
        %v8306 = vadd.f32 %v8305, %v8275
        %v8307 = vadd.f32 %v8306, %v8276
        %v8308 = vadd.f32 %v8307, %v8277
        %v8309 = vadd.f32 %v8308, %v8278
        %v8310 = vadd.f32 %v8309, %v8279
        %v8311 = vadd.f32 %v8310, %v8280
        %v8312 = vadd.f32 %v8311, %v8281
        %v8313 = vadd.f32 %v8312, %v8282
        %v8314 = vadd.f32 %v8313, %v8283
        %v8315 = vadd.f32 %v8314, %v8284
        %v8316 = vadd.f32 %v8315, %v8285
        %v8317 = vadd.f32 %v8316, %v8286
        %v8318 = vadd.f32 %v8317, %v8287
        %v8319 = vadd.f32 %v8318, %v8288
        %v8320 = vadd.f32 %v8319, %v8289
        %v8321 = vadd.f32 %v8320, %v8290
        %v8322 = vadd.f32 %v8321, %v8291
        %v8323 = vadd.f32 %v8322, %v8292
        %v8324 = vadd.f32 %v8323, %v8293
        %v8325 = vadd.f32 %v8324, %v8294
        %v8326 = vadd.f32 %v8325, %v8295
        %v8327 = vadd.f32 %v8326, %v8296
        %v8328 = vadd.f32 %v8327, %v8297
        %v8329 = vadd.f32 %v8328, %v8298
        %v8330 = vadd.f32 %v8329, %v8299
        %v8331 = vadd.f32 %v8330, %v8300
        %v8332 = vadd.f32 %v8331, %v8301
        %v8333 = vadd.f32 %v8332, %v8302
        %v8334 = vrot.slane %v8333, 4
        %v8335 = vadd.f32 %v8333, %v8334
        %v8336 = vrot.slane %v8335, 2
        %v8337 = vadd.f32 %v8335, %v8336
        %v8338 = vrot.slane %v8337, 1
        %v8339 = vadd.f32 %v8337, %v8338
        %v8340 = vmul.f32 %v8339, 0.00390625
        %v8341 = vmul.f32 %v8270, %v8270
        %v8342 = vsub.f32 %v8340, %v8341
        %v8343 = vmax.f32 %v8342, 0.0
        %v8344 = vsub.f32 %v8199, %v8270
        %v8345 = vsub.f32 %v8200, %v8270
        %v8346 = vsub.f32 %v8201, %v8270
        %v8347 = vsub.f32 %v8202, %v8270
        %v8348 = vsub.f32 %v8203, %v8270
        %v8349 = vsub.f32 %v8204, %v8270
        %v8350 = vsub.f32 %v8205, %v8270
        %v8351 = vsub.f32 %v8206, %v8270
        %v8352 = vsub.f32 %v8207, %v8270
        %v8353 = vsub.f32 %v8208, %v8270
        %v8354 = vsub.f32 %v8209, %v8270
        %v8355 = vsub.f32 %v8210, %v8270
        %v8356 = vsub.f32 %v8211, %v8270
        %v8357 = vsub.f32 %v8212, %v8270
        %v8358 = vsub.f32 %v8213, %v8270
        %v8359 = vsub.f32 %v8214, %v8270
        %v8360 = vsub.f32 %v8215, %v8270
        %v8361 = vsub.f32 %v8216, %v8270
        %v8362 = vsub.f32 %v8217, %v8270
        %v8363 = vsub.f32 %v8218, %v8270
        %v8364 = vsub.f32 %v8219, %v8270
        %v8365 = vsub.f32 %v8220, %v8270
        %v8366 = vsub.f32 %v8221, %v8270
        %v8367 = vsub.f32 %v8222, %v8270
        %v8368 = vsub.f32 %v8223, %v8270
        %v8369 = vsub.f32 %v8224, %v8270
        %v8370 = vsub.f32 %v8225, %v8270
        %v8371 = vsub.f32 %v8226, %v8270
        %v8372 = vsub.f32 %v8227, %v8270
        %v8373 = vsub.f32 %v8228, %v8270
        %v8374 = vsub.f32 %v8229, %v8270
        %v8375 = vsub.f32 %v8230, %v8270
        %v8376 = vadd.f32 %v8343, 1e-05
        %v8377 = vrsqrt.pop %v8376
        %v8378 = vmul.f32 %v8344, %v8377
        %v8379 = vmul.f32 %v8345, %v8377
        %v8380 = vmul.f32 %v8346, %v8377
        %v8381 = vmul.f32 %v8347, %v8377
        %v8382 = vmul.f32 %v8348, %v8377
        %v8383 = vmul.f32 %v8349, %v8377
        %v8384 = vmul.f32 %v8350, %v8377
        %v8385 = vmul.f32 %v8351, %v8377
        %v8386 = vmul.f32 %v8352, %v8377
        %v8387 = vmul.f32 %v8353, %v8377
        %v8388 = vmul.f32 %v8354, %v8377
        %v8389 = vmul.f32 %v8355, %v8377
        %v8390 = vmul.f32 %v8356, %v8377
        %v8391 = vmul.f32 %v8357, %v8377
        %v8392 = vmul.f32 %v8358, %v8377
        %v8393 = vmul.f32 %v8359, %v8377
        %v8394 = vmul.f32 %v8360, %v8377
        %v8395 = vmul.f32 %v8361, %v8377
        %v8396 = vmul.f32 %v8362, %v8377
        %v8397 = vmul.f32 %v8363, %v8377
        %v8398 = vmul.f32 %v8364, %v8377
        %v8399 = vmul.f32 %v8365, %v8377
        %v8400 = vmul.f32 %v8366, %v8377
        %v8401 = vmul.f32 %v8367, %v8377
        %v8402 = vmul.f32 %v8368, %v8377
        %v8403 = vmul.f32 %v8369, %v8377
        %v8404 = vmul.f32 %v8370, %v8377
        %v8405 = vmul.f32 %v8371, %v8377
        %v8406 = vmul.f32 %v8372, %v8377
        %v8407 = vmul.f32 %v8373, %v8377
        %v8408 = vmul.f32 %v8374, %v8377
        %v8409 = vmul.f32 %v8375, %v8377
        %v8411 = vlaneseq
        %v8412 = vshrl.u32 %v8411, 7
        %v8413 = vsub.s32 0, %v8412
        %v8414 = vrot.slane %v8231, %v8413
        %v8416 = vmul.f32 %v8378, %v8414
        %v8417 = vmul.f32 %v8379, %v8414
        %v8418 = vmul.f32 %v8380, %v8414
        %v8419 = vmul.f32 %v8381, %v8414
        %v8420 = vmul.f32 %v8382, %v8414
        %v8421 = vmul.f32 %v8383, %v8414
        %v8422 = vmul.f32 %v8384, %v8414
        %v8423 = vmul.f32 %v8385, %v8414
        %v8424 = vmul.f32 %v8386, %v8414
        %v8425 = vmul.f32 %v8387, %v8414
        %v8426 = vmul.f32 %v8388, %v8414
        %v8427 = vmul.f32 %v8389, %v8414
        %v8428 = vmul.f32 %v8390, %v8414
        %v8429 = vmul.f32 %v8391, %v8414
        %v8430 = vmul.f32 %v8392, %v8414
        %v8431 = vmul.f32 %v8393, %v8414
        %v8432 = vmul.f32 %v8394, %v8414
        %v8433 = vmul.f32 %v8395, %v8414
        %v8434 = vmul.f32 %v8396, %v8414
        %v8435 = vmul.f32 %v8397, %v8414
        %v8436 = vmul.f32 %v8398, %v8414
        %v8437 = vmul.f32 %v8399, %v8414
        %v8438 = vmul.f32 %v8400, %v8414
        %v8439 = vmul.f32 %v8401, %v8414
        %v8440 = vmul.f32 %v8402, %v8414
        %v8441 = vmul.f32 %v8403, %v8414
        %v8442 = vmul.f32 %v8404, %v8414
        %v8443 = vmul.f32 %v8405, %v8414
        %v8444 = vmul.f32 %v8406, %v8414
        %v8445 = vmul.f32 %v8407, %v8414
        %v8446 = vmul.f32 %v8408, %v8414
        %v8447 = vmul.f32 %v8409, %v8414
        %v8449 = vlaneseq
        %v8450 = vshrl.u32 %v8449, 7
        %v8451 = vsub.s32 0, %v8450
        %v8452 = vrot.slane %v8232, %v8451
        %v8454 = vadd.f32 %v8416, %v8452
        %v8455 = vadd.f32 %v8417, %v8452
        %v8456 = vadd.f32 %v8418, %v8452
        %v8457 = vadd.f32 %v8419, %v8452
        %v8458 = vadd.f32 %v8420, %v8452
        %v8459 = vadd.f32 %v8421, %v8452
        %v8460 = vadd.f32 %v8422, %v8452
        %v8461 = vadd.f32 %v8423, %v8452
        %v8462 = vadd.f32 %v8424, %v8452
        %v8463 = vadd.f32 %v8425, %v8452
        %v8464 = vadd.f32 %v8426, %v8452
        %v8465 = vadd.f32 %v8427, %v8452
        %v8466 = vadd.f32 %v8428, %v8452
        %v8467 = vadd.f32 %v8429, %v8452
        %v8468 = vadd.f32 %v8430, %v8452
        %v8469 = vadd.f32 %v8431, %v8452
        %v8470 = vadd.f32 %v8432, %v8452
        %v8471 = vadd.f32 %v8433, %v8452
        %v8472 = vadd.f32 %v8434, %v8452
        %v8473 = vadd.f32 %v8435, %v8452
        %v8474 = vadd.f32 %v8436, %v8452
        %v8475 = vadd.f32 %v8437, %v8452
        %v8476 = vadd.f32 %v8438, %v8452
        %v8477 = vadd.f32 %v8439, %v8452
        %v8478 = vadd.f32 %v8440, %v8452
        %v8479 = vadd.f32 %v8441, %v8452
        %v8480 = vadd.f32 %v8442, %v8452
        %v8481 = vadd.f32 %v8443, %v8452
        %v8482 = vadd.f32 %v8444, %v8452
        %v8483 = vadd.f32 %v8445, %v8452
        %v8484 = vadd.f32 %v8446, %v8452
        %v8485 = vadd.f32 %v8447, %v8452
        %v8486 = vadd.f32 %v4879, %v8454
        %v8487 = vadd.f32 %v4880, %v8455
        %v8488 = vadd.f32 %v4881, %v8456
        %v8489 = vadd.f32 %v4882, %v8457
        %v8490 = vadd.f32 %v4883, %v8458
        %v8491 = vadd.f32 %v4884, %v8459
        %v8492 = vadd.f32 %v4885, %v8460
        %v8493 = vadd.f32 %v4886, %v8461
        %v8494 = vadd.f32 %v4887, %v8462
        %v8495 = vadd.f32 %v4888, %v8463
        %v8496 = vadd.f32 %v4889, %v8464
        %v8497 = vadd.f32 %v4890, %v8465
        %v8498 = vadd.f32 %v4891, %v8466
        %v8499 = vadd.f32 %v4892, %v8467
        %v8500 = vadd.f32 %v4893, %v8468
        %v8501 = vadd.f32 %v4894, %v8469
        %v8502 = vadd.f32 %v4895, %v8470
        %v8503 = vadd.f32 %v4896, %v8471
        %v8504 = vadd.f32 %v4897, %v8472
        %v8505 = vadd.f32 %v4898, %v8473
        %v8506 = vadd.f32 %v4899, %v8474
        %v8507 = vadd.f32 %v4900, %v8475
        %v8508 = vadd.f32 %v4901, %v8476
        %v8509 = vadd.f32 %v4902, %v8477
        %v8510 = vadd.f32 %v4903, %v8478
        %v8511 = vadd.f32 %v4904, %v8479
        %v8512 = vadd.f32 %v4905, %v8480
        %v8513 = vadd.f32 %v4906, %v8481
        %v8514 = vadd.f32 %v4907, %v8482
        %v8515 = vadd.f32 %v4908, %v8483
        %v8516 = vadd.f32 %v4909, %v8484
        %v8517 = vadd.f32 %v4910, %v8485
        %v8518 = vmax.f32 %v8486, 0.0
        %v8519 = vmax.f32 %v8487, 0.0
        %v8520 = vmax.f32 %v8488, 0.0
        %v8521 = vmax.f32 %v8489, 0.0
        %v8522 = vmax.f32 %v8490, 0.0
        %v8523 = vmax.f32 %v8491, 0.0
        %v8524 = vmax.f32 %v8492, 0.0
        %v8525 = vmax.f32 %v8493, 0.0
        %v8526 = vmax.f32 %v8494, 0.0
        %v8527 = vmax.f32 %v8495, 0.0
        %v8528 = vmax.f32 %v8496, 0.0
        %v8529 = vmax.f32 %v8497, 0.0
        %v8530 = vmax.f32 %v8498, 0.0
        %v8531 = vmax.f32 %v8499, 0.0
        %v8532 = vmax.f32 %v8500, 0.0
        %v8533 = vmax.f32 %v8501, 0.0
        %v8534 = vmax.f32 %v8502, 0.0
        %v8535 = vmax.f32 %v8503, 0.0
        %v8536 = vmax.f32 %v8504, 0.0
        %v8537 = vmax.f32 %v8505, 0.0
        %v8538 = vmax.f32 %v8506, 0.0
        %v8539 = vmax.f32 %v8507, 0.0
        %v8540 = vmax.f32 %v8508, 0.0
        %v8541 = vmax.f32 %v8509, 0.0
        %v8542 = vmax.f32 %v8510, 0.0
        %v8543 = vmax.f32 %v8511, 0.0
        %v8544 = vmax.f32 %v8512, 0.0
        %v8545 = vmax.f32 %v8513, 0.0
        %v8546 = vmax.f32 %v8514, 0.0
        %v8547 = vmax.f32 %v8515, 0.0
        %v8548 = vmax.f32 %v8516, 0.0
        %v8549 = vmax.f32 %v8517, 0.0
        %8550 = vst [vmem:[%s406] sm:$0xff] %v8518
        %8551 = vst [vmem:[%s406 + $0x8] sm:$0xff] %v8519
        %8552 = vst [vmem:[%s406 + $0x10] sm:$0xff] %v8520
        %8553 = vst [vmem:[%s406 + $0x18] sm:$0xff] %v8521
        %8554 = vst [vmem:[%s406 + $0x20] sm:$0xff] %v8522
        %8555 = vst [vmem:[%s406 + $0x28] sm:$0xff] %v8523
        %8556 = vst [vmem:[%s406 + $0x30] sm:$0xff] %v8524
        %8557 = vst [vmem:[%s406 + $0x38] sm:$0xff] %v8525
        %8558 = vst [vmem:[%s406 + $0x40] sm:$0xff] %v8526
        %8559 = vst [vmem:[%s406 + $0x48] sm:$0xff] %v8527
        %8560 = vst [vmem:[%s406 + $0x50] sm:$0xff] %v8528
        %8561 = vst [vmem:[%s406 + $0x58] sm:$0xff] %v8529
        %8562 = vst [vmem:[%s406 + $0x60] sm:$0xff] %v8530
        %8563 = vst [vmem:[%s406 + $0x68] sm:$0xff] %v8531
        %8564 = vst [vmem:[%s406 + $0x70] sm:$0xff] %v8532
        %8565 = vst [vmem:[%s406 + $0x78] sm:$0xff] %v8533
        %8566 = vst [vmem:[%s406 + $0x80] sm:$0xff] %v8534
        %8567 = vst [vmem:[%s406 + $0x88] sm:$0xff] %v8535
        %8568 = vst [vmem:[%s406 + $0x90] sm:$0xff] %v8536
        %8569 = vst [vmem:[%s406 + $0x98] sm:$0xff] %v8537
        %8570 = vst [vmem:[%s406 + $0xa0] sm:$0xff] %v8538
        %8571 = vst [vmem:[%s406 + $0xa8] sm:$0xff] %v8539
        %8572 = vst [vmem:[%s406 + $0xb0] sm:$0xff] %v8540
        %8573 = vst [vmem:[%s406 + $0xb8] sm:$0xff] %v8541
        %8574 = vst [vmem:[%s406 + $0xc0] sm:$0xff] %v8542
        %8575 = vst [vmem:[%s406 + $0xc8] sm:$0xff] %v8543
        %8576 = vst [vmem:[%s406 + $0xd0] sm:$0xff] %v8544
        %8577 = vst [vmem:[%s406 + $0xd8] sm:$0xff] %v8545
        %8578 = vst [vmem:[%s406 + $0xe0] sm:$0xff] %v8546
        %8579 = vst [vmem:[%s406 + $0xe8] sm:$0xff] %v8547
        %8580 = vst [vmem:[%s406 + $0xf0] sm:$0xff] %v8548
        %8581 = vst [vmem:[%s406 + $0xf8] sm:$0xff] %v8549
        %s8582 = sand.u32 %s251, 1
        %s8583 = scalar_lea.sflag [#allocation5], %s8582
        %s8584 = sand.u32 %s251, 1
        %s8585 = smul.addr %s8584, 256
        %s8586 = scalar_lea.vmem [#allocation9], %s8585
        // Predicated region
        $region73: #{tpu_custom_call.1} parent=59 // pred_check
          %p8587 = pneg %p261
        $region74: #{tpu_custom_call.1} parent=59 // pred_check_branch
          %8589 = sbr.rel (%p8587) target = $region76
        $region75: #{tpu_custom_call.1} parent=59 // pred_region
          %s8591 = ssub.s32 4096, 4096
          %8592 = vsyncadd %s8583, %s8591
          %s8593 = smul.addr %s28, 32
          %s8594 = smul.addr %s8593, 128
          %s8595 = scalar_lea.hbm %s10, %s8594
          %s8596 = sshll.u32 %s8586, 4
          %s8597 = int_to_ptr.vmem [resolvable:$true] %s8596
          %8602 = dma.vmem_to_hbm [thread:$0]  %s8597, 4096, %s8595, %s8583, 128, 128, 8
        $region76: #{tpu_custom_call.1} parent=59 // pred_fallthru
          _
      $region60: #{tpu_custom_call.1} parent=5 // pred_fallthru
        _
      %p8603 = scmp.le.s32.totalorder 2, %s23
      // Predicated region
      $region77: #{tpu_custom_call.1} parent=5 // pred_check
        %p8604 = pneg %p8603
      $region78: #{tpu_custom_call.1} parent=5 // pred_check_branch
        %8606 = sbr.rel (%p8604) target = $region80
      $region79: #{tpu_custom_call.1} parent=5 // pred_region
        %s8607 = ssub.s32 %s23, 2
        // Predicated region
        $region81: #{tpu_custom_call.1} parent=79 // pred_check
          %p8608 = pneg %p267
        $region82: #{tpu_custom_call.1} parent=79 // pred_check_branch
          %8610 = sbr.rel (%p8608) target = $region84
        $region83: #{tpu_custom_call.1} parent=79 // pred_region
          %s8611 = sand.u32 %s252, 1
          %s8612 = scalar_lea.sflag [#allocation5], %s8611
          %s8613 = sand.u32 %s252, 1
          %s8614 = smul.addr %s8613, 256
          %s8615 = scalar_lea.vmem [#allocation9], %s8614
          %8616 = dma.done %s8612, 4096
        $region84: #{tpu_custom_call.1} parent=79 // pred_fallthru
          _
      $region80: #{tpu_custom_call.1} parent=5 // pred_fallthru
        _
    $region6: #{tpu_custom_call.1} parent=1 // loop_footer
      %s27 = sadd.s32 1, %s23
    $region7: #{tpu_custom_call.1} parent=1 // loop_footer_branch
      %22 = sbr.rel target = $region3
    $region8: #{tpu_custom_call.1} parent=1 // loop_exit
      _
    %8617 = vsyncpa [#allocation4], 1
    %s8618 = scalar_lea.sflag [#allocation4], 1
    %8619 = vsyncpa %s8618, 1
    %8620 = vsyncpa [#allocation7], 1
    %8621 = vsyncpa [#allocation5], 1
    %s8622 = scalar_lea.sflag [#allocation5], 1
    %8623 = vsyncpa %s8622, 1

</llo_original>
